<compile_context>
chip_gen: v7x
topology: tpu7x:2x2x1
jax: 0.10.0
libtpu: 0.0.40
codegen_flags: <defaults>
</compile_context>

<pallas_src>
import jax
import jax.numpy as jnp
from jax.experimental import pallas as pl
from jax.experimental.pallas import tpu as pltpu


_CO1 = 16                      # channels produced by the first ConvTranspose
_OUT_H = 28                    # final spatial size
_OUT_SP = _OUT_H * _OUT_H      # 784 output positions (NCHW row-major lanes)
_LANE = 128
_SP_PAD = 896                  # 784 padded to 7*128 so per-channel slices are 128-aligned
_N_CHUNK = _SP_PAD // _LANE    # 7 output lane chunks (last one ragged: 16 valid lanes)


# ---------------------------------------------------------------------------
# Fused decoder kernel (whole forward for one batch tile)
# ---------------------------------------------------------------------------
def _decoder_kernel(z_ref, wc_ref, bc_ref, w2v_ref, b2_ref, out_ref):
    """Whole Decoder forward, fused in VMEM.

    z_ref   : (bt, 2)      f32 VMEM  latent input tile
    wc_ref  : (2, 16*896)  f32 VMEM  Linear folded into ConvT1, expanded to 28x28 lanes
    bc_ref  : (1, 16*896)  f32 VMEM  folded bias, expanded to 28x28 lanes
    w2v_ref : (1, 16*896)  f32 VMEM  ConvT2 tap weight per output lane (w2[co, Y%2, X%2])
    b2_ref  : (1,)         f32 SMEM  ConvT2 bias scalar
    out_ref : (bt, 784)    f32 VMEM  tanh output, lanes already in NCHW (Y*28+X) order
    """
    bt = z_ref.shape[0]
    z = z_ref[...]                                        # (bt, 2)
    # Hoist the per-row latent lane-broadcasts out of the loops
    # (broadcast_in_dim is not CSE'd by JAX).
    z0 = jnp.broadcast_to(z[:, 0:1], (bt, _LANE))
    z1 = jnp.broadcast_to(z[:, 1:2], (bt, _LANE))
    b2 = b2_ref[0]

    for c in range(_N_CHUNK):                             # 128-lane output chunks
        lo = c * _LANE
        w = min(_LANE, _OUT_SP - lo)                      # ragged final chunk: 16 lanes
        acc = None
        for co in range(_CO1):                            # fused stage1 -> ReLU -> ConvT2 accumulate
            s = co * _SP_PAD + lo                         # static, 128-aligned slice start
            hpre = (z0 * wc_ref[0:1, s:s + _LANE]
                    + z1 * wc_ref[1:2, s:s + _LANE]
                    + bc_ref[0:1, s:s + _LANE])
            t = jnp.maximum(hpre, 0.0) * w2v_ref[0:1, s:s + _LANE]
            acc = t if acc is None else acc + t
        # Padded lanes (>= 784 per channel) carry zero weights, so they never reach a store.
        out_ref[:, lo:lo + w] = jnp.tanh(acc[:, :w] + b2)


# ---------------------------------------------------------------------------
# Parameters: PyTorch layouts + one-time packing for the kernel
# ---------------------------------------------------------------------------
def init_torch_params(key):
    """Deterministic random parameters in the exact PyTorch layouts of Decoder."""
    ks = jax.random.split(key, 6)

    def w(k, shape, scale):
        return jax.random.normal(k, shape, dtype=jnp.float32) * scale

    return {
        "linear_w":  w(ks[0], (32 * 7 * 7, 2), 0.1),    # nn.Linear(2, 1568).weight  (out, in)
        "linear_b":  w(ks[1], (32 * 7 * 7,), 0.01),
        "conv1_t_w": w(ks[2], (32, 16, 2, 2), 0.1),     # nn.ConvTranspose2d(32,16,2,2).weight
        "conv1_t_b": w(ks[3], (16,), 0.01),
        "conv2_t_w": w(ks[4], (16, 1, 2, 2), 0.1),      # nn.ConvTranspose2d(16,1,2,2).weight
        "conv2_t_b": w(ks[5], (1,), 0.01),
    }


def pack_decoder_params(p):
    """One-time packing: fold Linear into ConvT1, expand everything onto the final
    28x28 output grid (NCHW lane order), pad each channel's 784 lanes to 896."""
    hi = jax.lax.Precision.HIGHEST
    w1 = p["linear_w"].reshape(32, 7, 7, 2)      # [ci, h, w, k]  (NCHW order of .view(-1,32,7,7))
    b1 = p["linear_b"].reshape(32, 7, 7)
    wt1, bt1 = p["conv1_t_w"], p["conv1_t_b"]    # (32, 16, 2, 2), (16,)

    # Compose Linear with ConvT1 (both linear, applied before the ReLU):
    # hpre[b, co, 2h+i, 2w+j] = sum_ci linear(z)[b, ci, h, w] * wt1[ci, co, i, j] + bias
    wc = jnp.einsum("chwk,coij->kohiwj", w1, wt1, precision=hi).reshape(2, _CO1, 14, 14)
    bc = jnp.einsum("chw,coij->ohiwj", b1, wt1, precision=hi).reshape(_CO1, 14, 14)
    bc = bc + bt1[:, None, None]

    # Expand the 14x14 pre-ReLU maps onto final 28x28 coordinates (value at (Y,X)
    # is the 14x14 value at (Y//2, X//2)) so kernel lanes are already NCHW-ordered.
    wc = jnp.repeat(jnp.repeat(wc, 2, axis=2), 2, axis=3)            # (2, 16, 28, 28)
    bc = jnp.repeat(jnp.repeat(bc, 2, axis=1), 2, axis=2)            # (16, 28, 28)

    # Pre-broadcast ConvT2 (k=2, s=2, Cout=1) taps per output lane:
    # w2v[co, Y, X] = conv2_t_w[co, 0, Y%2, X%2]
    w2v = jnp.tile(p["conv2_t_w"].reshape(_CO1, 2, 2), (1, 14, 14))  # (16, 28, 28)

    pad = _SP_PAD - _OUT_SP                                          # 112 zero lanes / channel
    wc = jnp.pad(wc.reshape(2, _CO1, _OUT_SP), ((0, 0), (0, 0), (0, pad)))
    bc = jnp.pad(bc.reshape(_CO1, _OUT_SP), ((0, 0), (0, pad)))
    w2v = jnp.pad(w2v.reshape(_CO1, _OUT_SP), ((0, 0), (0, pad)))

    return {
        "wc":  wc.reshape(2, _CO1 * _SP_PAD),
        "bc":  bc.reshape(1, _CO1 * _SP_PAD),
        "w2v": w2v.reshape(1, _CO1 * _SP_PAD),
        "bt2": p["conv2_t_b"].reshape(1),
    }


# ---------------------------------------------------------------------------
# Forward pass
# ---------------------------------------------------------------------------
def _batch_tile(B):
    # Tiny batches: one full block (the kernel is dispatch-bound; a grid buys nothing).
    if B <= 8:
        return B
    # 64-row tiles keep every per-channel (bt, 128) intermediate + the accumulator
    # comfortably inside the 64-vreg file while amortizing the ~0.35us per-step
    # overhead; on v7x the "parallel" batch axis shards steps across both TensorCores
    # and the <1 MiB per-step footprint is far under the 64 MiB VMEM budget.
    for bt in (64, 32, 16, 8):
        if B % bt == 0:
            return bt
    return B   # odd batch size: fall back to a single block


@jax.jit
def decoder_forward(packed, z):
    B = z.shape[0]
    bt = _batch_tile(B)
    out_flat = pl.pallas_call(
        _decoder_kernel,
        out_shape=jax.ShapeDtypeStruct((B, _OUT_SP), jnp.float32),
        grid=(B // bt,),
        in_specs=[
            pl.BlockSpec((bt, 2), lambda i: (i, 0)),               # z: streams with batch
            pl.BlockSpec((2, _CO1 * _SP_PAD), lambda i: (0, 0)),   # folded stage-1 weight: resident
            pl.BlockSpec((1, _CO1 * _SP_PAD), lambda i: (0, 0)),   # folded stage-1 bias: resident
            pl.BlockSpec((1, _CO1 * _SP_PAD), lambda i: (0, 0)),   # pre-broadcast ConvT2 taps: resident
            pl.BlockSpec(memory_space=pltpu.MemorySpace.SMEM),     # ConvT2 bias scalar
        ],
        out_specs=pl.BlockSpec((bt, _OUT_SP), lambda i: (i, 0)),
        compiler_params=pltpu.CompilerParams(dimension_semantics=("parallel",)),
    )(z, packed["wc"], packed["bc"], packed["w2v"], packed["bt2"])
    # Lanes are already in NCHW (Y*28+X) order: pure dim-split reshape of contiguous
    # rows -> no data movement and no extra dispatch (replaces the old transpose).
    return out_flat.reshape(B, 1, _OUT_H, _OUT_H)


# ---------------------------------------------------------------------------
# Layer-by-layer PyTorch-faithful reference (plain JAX, f32-accurate)
# ---------------------------------------------------------------------------
def _reference_decoder(p, z):
    hi = jax.lax.Precision.HIGHEST
    B = z.shape[0]
    a = jnp.einsum("bk,jk->bj", z, p["linear_w"], precision=hi) + p["linear_b"]
    a = a.reshape(B, 32, 7, 7)
    h = jnp.einsum("bchw,coij->bohiwj", a, p["conv1_t_w"], precision=hi)
    h = h.reshape(B, 16, 14, 14) + p["conv1_t_b"][None, :, None, None]
    h = jnp.maximum(h, 0.0)
    y = jnp.einsum("bchw,coij->bohiwj", h, p["conv2_t_w"], precision=hi)
    y = y.reshape(B, 1, 28, 28) + p["conv2_t_b"][None, :, None, None]
    return jnp.tanh(y)


# ---------------------------------------------------------------------------
if __name__ == "__main__":
    key = jax.random.PRNGKey(0)
    pkey, zkey = jax.random.split(key)

    torch_params = init_torch_params(pkey)
    packed = pack_decoder_params(torch_params)

    # Primary small-shape test (latent dim 2 per the Decoder spec).
    B = 2
    z = jax.random.normal(zkey, (B, 2), dtype=jnp.float32)
    out = jax.block_until_ready(decoder_forward(packed, z))
    assert out.shape == (B, 1, 28, 28), out.shape
    assert out.dtype == jnp.float32
    ref = _reference_decoder(torch_params, z)
    max_err = float(jnp.max(jnp.abs(out - ref)))
    assert max_err < 1e-3, f"max abs error vs reference (B=2): {max_err}"

    # Larger batch exercising the parallel batch grid (2 steps of 64 rows).
    B2 = 128
    z2 = jax.random.normal(jax.random.PRNGKey(1), (B2, 2), dtype=jnp.float32)
    out2 = jax.block_until_ready(decoder_forward(packed, z2))
    ref2 = _reference_decoder(torch_params, z2)
    max_err2 = float(jnp.max(jnp.abs(out2 - ref2)))
    assert out2.shape == (B2, 1, 28, 28)
    assert max_err2 < 1e-3, f"max abs error vs reference (B=128): {max_err2}"

    print("KERNEL_OK")
</pallas_src>

<mosaic_0001>
module attributes {stable_mosaic.version = 11 : i64} {
  func.func @_decoder_kernel(%arg0: i32, %arg1: memref<2x2xf32, #tpu.memory_space<vmem>>, %arg2: memref<2x14336xf32, #tpu.memory_space<vmem>>, %arg3: memref<1x14336xf32, #tpu.memory_space<vmem>>, %arg4: memref<1x14336xf32, #tpu.memory_space<vmem>>, %arg5: memref<1xf32, #tpu.memory_space<smem>>, %arg6: memref<2x784xf32, #tpu.memory_space<vmem>>) attributes {dimension_semantics = [#tpu.dimension_semantics<parallel>], iteration_bounds = array<i64: 1>, scalar_prefetch = 0 : i64, scratch_operands = 0 : i64, tpu.core_type = #tpu.core_type<tc>, window_params = [{transform_indices = @transform_0, window_bounds = array<i64: 2, 2>}, {pipeline_mode = #tpu.pipeline_mode<synchronous>, transform_indices = @transform_1, window_bounds = array<i64: 2, 14336>}, {pipeline_mode = #tpu.pipeline_mode<synchronous>, transform_indices = @transform_2, window_bounds = array<i64: 1, 14336>}, {pipeline_mode = #tpu.pipeline_mode<synchronous>, transform_indices = @transform_3, window_bounds = array<i64: 1, 14336>}, {transform_indices = @transform_4, window_bounds = array<i64: 1>}, {transform_indices = @transform_5, window_bounds = array<i64: 2, 784>}]} {
    %c0 = arith.constant 0 : index
    %c0_0 = arith.constant 0 : index
    %0 = vector.load %arg1[%c0, %c0_0] : memref<2x2xf32, #tpu.memory_space<vmem>>, vector<2x2xf32>
    %1 = vector.extract_strided_slice %0 {offsets = [0, 0], sizes = [2, 1], strides = [1, 1]} : vector<2x2xf32> to vector<2x1xf32>
    %2 = vector.shape_cast %1 : vector<2x1xf32> to vector<2x1xf32>
    %3 = vector.broadcast %2 : vector<2x1xf32> to vector<2x128xf32>
    %4 = vector.extract_strided_slice %0 {offsets = [0, 1], sizes = [2, 1], strides = [1, 1]} : vector<2x2xf32> to vector<2x1xf32>
    %5 = vector.shape_cast %4 : vector<2x1xf32> to vector<2x1xf32>
    %6 = vector.broadcast %5 : vector<2x1xf32> to vector<2x128xf32>
    %c0_1 = arith.constant 0 : index
    %7 = memref.load %arg5[%c0_1] : memref<1xf32, #tpu.memory_space<smem>>
    %c0_2 = arith.constant 0 : index
    %c0_3 = arith.constant 0 : index
    %8 = vector.load %arg2[%c0_2, %c0_3] : memref<2x14336xf32, #tpu.memory_space<vmem>>, vector<1x128xf32>
    %9 = vector.broadcast %8 : vector<1x128xf32> to vector<2x128xf32>
    %10 = arith.mulf %3, %9 : vector<2x128xf32>
    %c1 = arith.constant 1 : index
    %c0_4 = arith.constant 0 : index
    %11 = vector.load %arg2[%c1, %c0_4] : memref<2x14336xf32, #tpu.memory_space<vmem>>, vector<1x128xf32>
    %12 = vector.broadcast %11 : vector<1x128xf32> to vector<2x128xf32>
    %13 = arith.mulf %6, %12 : vector<2x128xf32>
    %14 = arith.addf %10, %13 : vector<2x128xf32>
    %c0_5 = arith.constant 0 : index
    %c0_6 = arith.constant 0 : index
    %15 = vector.load %arg3[%c0_5, %c0_6] : memref<1x14336xf32, #tpu.memory_space<vmem>>, vector<1x128xf32>
    %16 = vector.broadcast %15 : vector<1x128xf32> to vector<2x128xf32>
    %17 = arith.addf %14, %16 : vector<2x128xf32>
    %cst = arith.constant 0.000000e+00 : f32
    %18 = vector.broadcast %cst : f32 to vector<2x128xf32>
    %19 = arith.maximumf %17, %18 : vector<2x128xf32>
    %c0_7 = arith.constant 0 : index
    %c0_8 = arith.constant 0 : index
    %20 = vector.load %arg4[%c0_7, %c0_8] : memref<1x14336xf32, #tpu.memory_space<vmem>>, vector<1x128xf32>
    %21 = vector.broadcast %20 : vector<1x128xf32> to vector<2x128xf32>
    %22 = arith.mulf %19, %21 : vector<2x128xf32>
    %c0_9 = arith.constant 0 : index
    %c896 = arith.constant 896 : index
    %23 = vector.load %arg2[%c0_9, %c896] : memref<2x14336xf32, #tpu.memory_space<vmem>>, vector<1x128xf32>
    %24 = vector.broadcast %23 : vector<1x128xf32> to vector<2x128xf32>
    %25 = arith.mulf %3, %24 : vector<2x128xf32>
    %c1_10 = arith.constant 1 : index
    %c896_11 = arith.constant 896 : index
    %26 = vector.load %arg2[%c1_10, %c896_11] : memref<2x14336xf32, #tpu.memory_space<vmem>>, vector<1x128xf32>
    %27 = vector.broadcast %26 : vector<1x128xf32> to vector<2x128xf32>
    %28 = arith.mulf %6, %27 : vector<2x128xf32>
    %29 = arith.addf %25, %28 : vector<2x128xf32>
    %c0_12 = arith.constant 0 : index
    %c896_13 = arith.constant 896 : index
    %30 = vector.load %arg3[%c0_12, %c896_13] : memref<1x14336xf32, #tpu.memory_space<vmem>>, vector<1x128xf32>
    %31 = vector.broadcast %30 : vector<1x128xf32> to vector<2x128xf32>
    %32 = arith.addf %29, %31 : vector<2x128xf32>
    %cst_14 = arith.constant 0.000000e+00 : f32
    %33 = vector.broadcast %cst_14 : f32 to vector<2x128xf32>
    %34 = arith.maximumf %32, %33 : vector<2x128xf32>
    %c0_15 = arith.constant 0 : index
    %c896_16 = arith.constant 896 : index
    %35 = vector.load %arg4[%c0_15, %c896_16] : memref<1x14336xf32, #tpu.memory_space<vmem>>, vector<1x128xf32>
    %36 = vector.broadcast %35 : vector<1x128xf32> to vector<2x128xf32>
    %37 = arith.mulf %34, %36 : vector<2x128xf32>
    %38 = arith.addf %22, %37 : vector<2x128xf32>
    %c0_17 = arith.constant 0 : index
    %c1792 = arith.constant 1792 : index
    %39 = vector.load %arg2[%c0_17, %c1792] : memref<2x14336xf32, #tpu.memory_space<vmem>>, vector<1x128xf32>
    %40 = vector.broadcast %39 : vector<1x128xf32> to vector<2x128xf32>
    %41 = arith.mulf %3, %40 : vector<2x128xf32>
    %c1_18 = arith.constant 1 : index
    %c1792_19 = arith.constant 1792 : index
    %42 = vector.load %arg2[%c1_18, %c1792_19] : memref<2x14336xf32, #tpu.memory_space<vmem>>, vector<1x128xf32>
    %43 = vector.broadcast %42 : vector<1x128xf32> to vector<2x128xf32>
    %44 = arith.mulf %6, %43 : vector<2x128xf32>
    %45 = arith.addf %41, %44 : vector<2x128xf32>
    %c0_20 = arith.constant 0 : index
    %c1792_21 = arith.constant 1792 : index
    %46 = vector.load %arg3[%c0_20, %c1792_21] : memref<1x14336xf32, #tpu.memory_space<vmem>>, vector<1x128xf32>
    %47 = vector.broadcast %46 : vector<1x128xf32> to vector<2x128xf32>
    %48 = arith.addf %45, %47 : vector<2x128xf32>
    %cst_22 = arith.constant 0.000000e+00 : f32
    %49 = vector.broadcast %cst_22 : f32 to vector<2x128xf32>
    %50 = arith.maximumf %48, %49 : vector<2x128xf32>
    %c0_23 = arith.constant 0 : index
    %c1792_24 = arith.constant 1792 : index
    %51 = vector.load %arg4[%c0_23, %c1792_24] : memref<1x14336xf32, #tpu.memory_space<vmem>>, vector<1x128xf32>
    %52 = vector.broadcast %51 : vector<1x128xf32> to vector<2x128xf32>
    %53 = arith.mulf %50, %52 : vector<2x128xf32>
    %54 = arith.addf %38, %53 : vector<2x128xf32>
    %c0_25 = arith.constant 0 : index
    %c2688 = arith.constant 2688 : index
    %55 = vector.load %arg2[%c0_25, %c2688] : memref<2x14336xf32, #tpu.memory_space<vmem>>, vector<1x128xf32>
    %56 = vector.broadcast %55 : vector<1x128xf32> to vector<2x128xf32>
    %57 = arith.mulf %3, %56 : vector<2x128xf32>
    %c1_26 = arith.constant 1 : index
    %c2688_27 = arith.constant 2688 : index
    %58 = vector.load %arg2[%c1_26, %c2688_27] : memref<2x14336xf32, #tpu.memory_space<vmem>>, vector<1x128xf32>
    %59 = vector.broadcast %58 : vector<1x128xf32> to vector<2x128xf32>
    %60 = arith.mulf %6, %59 : vector<2x128xf32>
    %61 = arith.addf %57, %60 : vector<2x128xf32>
    %c0_28 = arith.constant 0 : index
    %c2688_29 = arith.constant 2688 : index
    %62 = vector.load %arg3[%c0_28, %c2688_29] : memref<1x14336xf32, #tpu.memory_space<vmem>>, vector<1x128xf32>
    %63 = vector.broadcast %62 : vector<1x128xf32> to vector<2x128xf32>
    %64 = arith.addf %61, %63 : vector<2x128xf32>
    %cst_30 = arith.constant 0.000000e+00 : f32
    %65 = vector.broadcast %cst_30 : f32 to vector<2x128xf32>
    %66 = arith.maximumf %64, %65 : vector<2x128xf32>
    %c0_31 = arith.constant 0 : index
    %c2688_32 = arith.constant 2688 : index
    %67 = vector.load %arg4[%c0_31, %c2688_32] : memref<1x14336xf32, #tpu.memory_space<vmem>>, vector<1x128xf32>
    %68 = vector.broadcast %67 : vector<1x128xf32> to vector<2x128xf32>
    %69 = arith.mulf %66, %68 : vector<2x128xf32>
    %70 = arith.addf %54, %69 : vector<2x128xf32>
    %c0_33 = arith.constant 0 : index
    %c3584 = arith.constant 3584 : index
    %71 = vector.load %arg2[%c0_33, %c3584] : memref<2x14336xf32, #tpu.memory_space<vmem>>, vector<1x128xf32>
    %72 = vector.broadcast %71 : vector<1x128xf32> to vector<2x128xf32>
    %73 = arith.mulf %3, %72 : vector<2x128xf32>
    %c1_34 = arith.constant 1 : index
    %c3584_35 = arith.constant 3584 : index
    %74 = vector.load %arg2[%c1_34, %c3584_35] : memref<2x14336xf32, #tpu.memory_space<vmem>>, vector<1x128xf32>
    %75 = vector.broadcast %74 : vector<1x128xf32> to vector<2x128xf32>
    %76 = arith.mulf %6, %75 : vector<2x128xf32>
    %77 = arith.addf %73, %76 : vector<2x128xf32>
    %c0_36 = arith.constant 0 : index
    %c3584_37 = arith.constant 3584 : index
    %78 = vector.load %arg3[%c0_36, %c3584_37] : memref<1x14336xf32, #tpu.memory_space<vmem>>, vector<1x128xf32>
    %79 = vector.broadcast %78 : vector<1x128xf32> to vector<2x128xf32>
    %80 = arith.addf %77, %79 : vector<2x128xf32>
    %cst_38 = arith.constant 0.000000e+00 : f32
    %81 = vector.broadcast %cst_38 : f32 to vector<2x128xf32>
    %82 = arith.maximumf %80, %81 : vector<2x128xf32>
    %c0_39 = arith.constant 0 : index
    %c3584_40 = arith.constant 3584 : index
    %83 = vector.load %arg4[%c0_39, %c3584_40] : memref<1x14336xf32, #tpu.memory_space<vmem>>, vector<1x128xf32>
    %84 = vector.broadcast %83 : vector<1x128xf32> to vector<2x128xf32>
    %85 = arith.mulf %82, %84 : vector<2x128xf32>
    %86 = arith.addf %70, %85 : vector<2x128xf32>
    %c0_41 = arith.constant 0 : index
    %c4480 = arith.constant 4480 : index
    %87 = vector.load %arg2[%c0_41, %c4480] : memref<2x14336xf32, #tpu.memory_space<vmem>>, vector<1x128xf32>
    %88 = vector.broadcast %87 : vector<1x128xf32> to vector<2x128xf32>
    %89 = arith.mulf %3, %88 : vector<2x128xf32>
    %c1_42 = arith.constant 1 : index
    %c4480_43 = arith.constant 4480 : index
    %90 = vector.load %arg2[%c1_42, %c4480_43] : memref<2x14336xf32, #tpu.memory_space<vmem>>, vector<1x128xf32>
    %91 = vector.broadcast %90 : vector<1x128xf32> to vector<2x128xf32>
    %92 = arith.mulf %6, %91 : vector<2x128xf32>
    %93 = arith.addf %89, %92 : vector<2x128xf32>
    %c0_44 = arith.constant 0 : index
    %c4480_45 = arith.constant 4480 : index
    %94 = vector.load %arg3[%c0_44, %c4480_45] : memref<1x14336xf32, #tpu.memory_space<vmem>>, vector<1x128xf32>
    %95 = vector.broadcast %94 : vector<1x128xf32> to vector<2x128xf32>
    %96 = arith.addf %93, %95 : vector<2x128xf32>
    %cst_46 = arith.constant 0.000000e+00 : f32
    %97 = vector.broadcast %cst_46 : f32 to vector<2x128xf32>
    %98 = arith.maximumf %96, %97 : vector<2x128xf32>
    %c0_47 = arith.constant 0 : index
    %c4480_48 = arith.constant 4480 : index
    %99 = vector.load %arg4[%c0_47, %c4480_48] : memref<1x14336xf32, #tpu.memory_space<vmem>>, vector<1x128xf32>
    %100 = vector.broadcast %99 : vector<1x128xf32> to vector<2x128xf32>
    %101 = arith.mulf %98, %100 : vector<2x128xf32>
    %102 = arith.addf %86, %101 : vector<2x128xf32>
    %c0_49 = arith.constant 0 : index
    %c5376 = arith.constant 5376 : index
    %103 = vector.load %arg2[%c0_49, %c5376] : memref<2x14336xf32, #tpu.memory_space<vmem>>, vector<1x128xf32>
    %104 = vector.broadcast %103 : vector<1x128xf32> to vector<2x128xf32>
    %105 = arith.mulf %3, %104 : vector<2x128xf32>
    %c1_50 = arith.constant 1 : index
    %c5376_51 = arith.constant 5376 : index
    %106 = vector.load %arg2[%c1_50, %c5376_51] : memref<2x14336xf32, #tpu.memory_space<vmem>>, vector<1x128xf32>
    %107 = vector.broadcast %106 : vector<1x128xf32> to vector<2x128xf32>
    %108 = arith.mulf %6, %107 : vector<2x128xf32>
    %109 = arith.addf %105, %108 : vector<2x128xf32>
    %c0_52 = arith.constant 0 : index
    %c5376_53 = arith.constant 5376 : index
    %110 = vector.load %arg3[%c0_52, %c5376_53] : memref<1x14336xf32, #tpu.memory_space<vmem>>, vector<1x128xf32>
    %111 = vector.broadcast %110 : vector<1x128xf32> to vector<2x128xf32>
    %112 = arith.addf %109, %111 : vector<2x128xf32>
    %cst_54 = arith.constant 0.000000e+00 : f32
    %113 = vector.broadcast %cst_54 : f32 to vector<2x128xf32>
    %114 = arith.maximumf %112, %113 : vector<2x128xf32>
    %c0_55 = arith.constant 0 : index
    %c5376_56 = arith.constant 5376 : index
    %115 = vector.load %arg4[%c0_55, %c5376_56] : memref<1x14336xf32, #tpu.memory_space<vmem>>, vector<1x128xf32>
    %116 = vector.broadcast %115 : vector<1x128xf32> to vector<2x128xf32>
    %117 = arith.mulf %114, %116 : vector<2x128xf32>
    %118 = arith.addf %102, %117 : vector<2x128xf32>
    %c0_57 = arith.constant 0 : index
    %c6272 = arith.constant 6272 : index
    %119 = vector.load %arg2[%c0_57, %c6272] : memref<2x14336xf32, #tpu.memory_space<vmem>>, vector<1x128xf32>
    %120 = vector.broadcast %119 : vector<1x128xf32> to vector<2x128xf32>
    %121 = arith.mulf %3, %120 : vector<2x128xf32>
    %c1_58 = arith.constant 1 : index
    %c6272_59 = arith.constant 6272 : index
    %122 = vector.load %arg2[%c1_58, %c6272_59] : memref<2x14336xf32, #tpu.memory_space<vmem>>, vector<1x128xf32>
    %123 = vector.broadcast %122 : vector<1x128xf32> to vector<2x128xf32>
    %124 = arith.mulf %6, %123 : vector<2x128xf32>
    %125 = arith.addf %121, %124 : vector<2x128xf32>
    %c0_60 = arith.constant 0 : index
    %c6272_61 = arith.constant 6272 : index
    %126 = vector.load %arg3[%c0_60, %c6272_61] : memref<1x14336xf32, #tpu.memory_space<vmem>>, vector<1x128xf32>
    %127 = vector.broadcast %126 : vector<1x128xf32> to vector<2x128xf32>
    %128 = arith.addf %125, %127 : vector<2x128xf32>
    %cst_62 = arith.constant 0.000000e+00 : f32
    %129 = vector.broadcast %cst_62 : f32 to vector<2x128xf32>
    %130 = arith.maximumf %128, %129 : vector<2x128xf32>
    %c0_63 = arith.constant 0 : index
    %c6272_64 = arith.constant 6272 : index
    %131 = vector.load %arg4[%c0_63, %c6272_64] : memref<1x14336xf32, #tpu.memory_space<vmem>>, vector<1x128xf32>
    %132 = vector.broadcast %131 : vector<1x128xf32> to vector<2x128xf32>
    %133 = arith.mulf %130, %132 : vector<2x128xf32>
    %134 = arith.addf %118, %133 : vector<2x128xf32>
    %c0_65 = arith.constant 0 : index
    %c7168 = arith.constant 7168 : index
    %135 = vector.load %arg2[%c0_65, %c7168] : memref<2x14336xf32, #tpu.memory_space<vmem>>, vector<1x128xf32>
    %136 = vector.broadcast %135 : vector<1x128xf32> to vector<2x128xf32>
    %137 = arith.mulf %3, %136 : vector<2x128xf32>
    %c1_66 = arith.constant 1 : index
    %c7168_67 = arith.constant 7168 : index
    %138 = vector.load %arg2[%c1_66, %c7168_67] : memref<2x14336xf32, #tpu.memory_space<vmem>>, vector<1x128xf32>
    %139 = vector.broadcast %138 : vector<1x128xf32> to vector<2x128xf32>
    %140 = arith.mulf %6, %139 : vector<2x128xf32>
    %141 = arith.addf %137, %140 : vector<2x128xf32>
    %c0_68 = arith.constant 0 : index
    %c7168_69 = arith.constant 7168 : index
    %142 = vector.load %arg3[%c0_68, %c7168_69] : memref<1x14336xf32, #tpu.memory_space<vmem>>, vector<1x128xf32>
    %143 = vector.broadcast %142 : vector<1x128xf32> to vector<2x128xf32>
    %144 = arith.addf %141, %143 : vector<2x128xf32>
    %cst_70 = arith.constant 0.000000e+00 : f32
    %145 = vector.broadcast %cst_70 : f32 to vector<2x128xf32>
    %146 = arith.maximumf %144, %145 : vector<2x128xf32>
    %c0_71 = arith.constant 0 : index
    %c7168_72 = arith.constant 7168 : index
    %147 = vector.load %arg4[%c0_71, %c7168_72] : memref<1x14336xf32, #tpu.memory_space<vmem>>, vector<1x128xf32>
    %148 = vector.broadcast %147 : vector<1x128xf32> to vector<2x128xf32>
    %149 = arith.mulf %146, %148 : vector<2x128xf32>
    %150 = arith.addf %134, %149 : vector<2x128xf32>
    %c0_73 = arith.constant 0 : index
    %c8064 = arith.constant 8064 : index
    %151 = vector.load %arg2[%c0_73, %c8064] : memref<2x14336xf32, #tpu.memory_space<vmem>>, vector<1x128xf32>
    %152 = vector.broadcast %151 : vector<1x128xf32> to vector<2x128xf32>
    %153 = arith.mulf %3, %152 : vector<2x128xf32>
    %c1_74 = arith.constant 1 : index
    %c8064_75 = arith.constant 8064 : index
    %154 = vector.load %arg2[%c1_74, %c8064_75] : memref<2x14336xf32, #tpu.memory_space<vmem>>, vector<1x128xf32>
    %155 = vector.broadcast %154 : vector<1x128xf32> to vector<2x128xf32>
    %156 = arith.mulf %6, %155 : vector<2x128xf32>
    %157 = arith.addf %153, %156 : vector<2x128xf32>
    %c0_76 = arith.constant 0 : index
    %c8064_77 = arith.constant 8064 : index
    %158 = vector.load %arg3[%c0_76, %c8064_77] : memref<1x14336xf32, #tpu.memory_space<vmem>>, vector<1x128xf32>
    %159 = vector.broadcast %158 : vector<1x128xf32> to vector<2x128xf32>
    %160 = arith.addf %157, %159 : vector<2x128xf32>
    %cst_78 = arith.constant 0.000000e+00 : f32
    %161 = vector.broadcast %cst_78 : f32 to vector<2x128xf32>
    %162 = arith.maximumf %160, %161 : vector<2x128xf32>
    %c0_79 = arith.constant 0 : index
    %c8064_80 = arith.constant 8064 : index
    %163 = vector.load %arg4[%c0_79, %c8064_80] : memref<1x14336xf32, #tpu.memory_space<vmem>>, vector<1x128xf32>
    %164 = vector.broadcast %163 : vector<1x128xf32> to vector<2x128xf32>
    %165 = arith.mulf %162, %164 : vector<2x128xf32>
    %166 = arith.addf %150, %165 : vector<2x128xf32>
    %c0_81 = arith.constant 0 : index
    %c8960 = arith.constant 8960 : index
    %167 = vector.load %arg2[%c0_81, %c8960] : memref<2x14336xf32, #tpu.memory_space<vmem>>, vector<1x128xf32>
    %168 = vector.broadcast %167 : vector<1x128xf32> to vector<2x128xf32>
    %169 = arith.mulf %3, %168 : vector<2x128xf32>
    %c1_82 = arith.constant 1 : index
    %c8960_83 = arith.constant 8960 : index
    %170 = vector.load %arg2[%c1_82, %c8960_83] : memref<2x14336xf32, #tpu.memory_space<vmem>>, vector<1x128xf32>
    %171 = vector.broadcast %170 : vector<1x128xf32> to vector<2x128xf32>
    %172 = arith.mulf %6, %171 : vector<2x128xf32>
    %173 = arith.addf %169, %172 : vector<2x128xf32>
    %c0_84 = arith.constant 0 : index
    %c8960_85 = arith.constant 8960 : index
    %174 = vector.load %arg3[%c0_84, %c8960_85] : memref<1x14336xf32, #tpu.memory_space<vmem>>, vector<1x128xf32>
    %175 = vector.broadcast %174 : vector<1x128xf32> to vector<2x128xf32>
    %176 = arith.addf %173, %175 : vector<2x128xf32>
    %cst_86 = arith.constant 0.000000e+00 : f32
    %177 = vector.broadcast %cst_86 : f32 to vector<2x128xf32>
    %178 = arith.maximumf %176, %177 : vector<2x128xf32>
    %c0_87 = arith.constant 0 : index
    %c8960_88 = arith.constant 8960 : index
    %179 = vector.load %arg4[%c0_87, %c8960_88] : memref<1x14336xf32, #tpu.memory_space<vmem>>, vector<1x128xf32>
    %180 = vector.broadcast %179 : vector<1x128xf32> to vector<2x128xf32>
    %181 = arith.mulf %178, %180 : vector<2x128xf32>
    %182 = arith.addf %166, %181 : vector<2x128xf32>
    %c0_89 = arith.constant 0 : index
    %c9856 = arith.constant 9856 : index
    %183 = vector.load %arg2[%c0_89, %c9856] : memref<2x14336xf32, #tpu.memory_space<vmem>>, vector<1x128xf32>
    %184 = vector.broadcast %183 : vector<1x128xf32> to vector<2x128xf32>
    %185 = arith.mulf %3, %184 : vector<2x128xf32>
    %c1_90 = arith.constant 1 : index
    %c9856_91 = arith.constant 9856 : index
    %186 = vector.load %arg2[%c1_90, %c9856_91] : memref<2x14336xf32, #tpu.memory_space<vmem>>, vector<1x128xf32>
    %187 = vector.broadcast %186 : vector<1x128xf32> to vector<2x128xf32>
    %188 = arith.mulf %6, %187 : vector<2x128xf32>
    %189 = arith.addf %185, %188 : vector<2x128xf32>
    %c0_92 = arith.constant 0 : index
    %c9856_93 = arith.constant 9856 : index
    %190 = vector.load %arg3[%c0_92, %c9856_93] : memref<1x14336xf32, #tpu.memory_space<vmem>>, vector<1x128xf32>
    %191 = vector.broadcast %190 : vector<1x128xf32> to vector<2x128xf32>
    %192 = arith.addf %189, %191 : vector<2x128xf32>
    %cst_94 = arith.constant 0.000000e+00 : f32
    %193 = vector.broadcast %cst_94 : f32 to vector<2x128xf32>
    %194 = arith.maximumf %192, %193 : vector<2x128xf32>
    %c0_95 = arith.constant 0 : index
    %c9856_96 = arith.constant 9856 : index
    %195 = vector.load %arg4[%c0_95, %c9856_96] : memref<1x14336xf32, #tpu.memory_space<vmem>>, vector<1x128xf32>
    %196 = vector.broadcast %195 : vector<1x128xf32> to vector<2x128xf32>
    %197 = arith.mulf %194, %196 : vector<2x128xf32>
    %198 = arith.addf %182, %197 : vector<2x128xf32>
    %c0_97 = arith.constant 0 : index
    %c10752 = arith.constant 10752 : index
    %199 = vector.load %arg2[%c0_97, %c10752] : memref<2x14336xf32, #tpu.memory_space<vmem>>, vector<1x128xf32>
    %200 = vector.broadcast %199 : vector<1x128xf32> to vector<2x128xf32>
    %201 = arith.mulf %3, %200 : vector<2x128xf32>
    %c1_98 = arith.constant 1 : index
    %c10752_99 = arith.constant 10752 : index
    %202 = vector.load %arg2[%c1_98, %c10752_99] : memref<2x14336xf32, #tpu.memory_space<vmem>>, vector<1x128xf32>
    %203 = vector.broadcast %202 : vector<1x128xf32> to vector<2x128xf32>
    %204 = arith.mulf %6, %203 : vector<2x128xf32>
    %205 = arith.addf %201, %204 : vector<2x128xf32>
    %c0_100 = arith.constant 0 : index
    %c10752_101 = arith.constant 10752 : index
    %206 = vector.load %arg3[%c0_100, %c10752_101] : memref<1x14336xf32, #tpu.memory_space<vmem>>, vector<1x128xf32>
    %207 = vector.broadcast %206 : vector<1x128xf32> to vector<2x128xf32>
    %208 = arith.addf %205, %207 : vector<2x128xf32>
    %cst_102 = arith.constant 0.000000e+00 : f32
    %209 = vector.broadcast %cst_102 : f32 to vector<2x128xf32>
    %210 = arith.maximumf %208, %209 : vector<2x128xf32>
    %c0_103 = arith.constant 0 : index
    %c10752_104 = arith.constant 10752 : index
    %211 = vector.load %arg4[%c0_103, %c10752_104] : memref<1x14336xf32, #tpu.memory_space<vmem>>, vector<1x128xf32>
    %212 = vector.broadcast %211 : vector<1x128xf32> to vector<2x128xf32>
    %213 = arith.mulf %210, %212 : vector<2x128xf32>
    %214 = arith.addf %198, %213 : vector<2x128xf32>
    %c0_105 = arith.constant 0 : index
    %c11648 = arith.constant 11648 : index
    %215 = vector.load %arg2[%c0_105, %c11648] : memref<2x14336xf32, #tpu.memory_space<vmem>>, vector<1x128xf32>
    %216 = vector.broadcast %215 : vector<1x128xf32> to vector<2x128xf32>
    %217 = arith.mulf %3, %216 : vector<2x128xf32>
    %c1_106 = arith.constant 1 : index
    %c11648_107 = arith.constant 11648 : index
    %218 = vector.load %arg2[%c1_106, %c11648_107] : memref<2x14336xf32, #tpu.memory_space<vmem>>, vector<1x128xf32>
    %219 = vector.broadcast %218 : vector<1x128xf32> to vector<2x128xf32>
    %220 = arith.mulf %6, %219 : vector<2x128xf32>
    %221 = arith.addf %217, %220 : vector<2x128xf32>
    %c0_108 = arith.constant 0 : index
    %c11648_109 = arith.constant 11648 : index
    %222 = vector.load %arg3[%c0_108, %c11648_109] : memref<1x14336xf32, #tpu.memory_space<vmem>>, vector<1x128xf32>
    %223 = vector.broadcast %222 : vector<1x128xf32> to vector<2x128xf32>
    %224 = arith.addf %221, %223 : vector<2x128xf32>
    %cst_110 = arith.constant 0.000000e+00 : f32
    %225 = vector.broadcast %cst_110 : f32 to vector<2x128xf32>
    %226 = arith.maximumf %224, %225 : vector<2x128xf32>
    %c0_111 = arith.constant 0 : index
    %c11648_112 = arith.constant 11648 : index
    %227 = vector.load %arg4[%c0_111, %c11648_112] : memref<1x14336xf32, #tpu.memory_space<vmem>>, vector<1x128xf32>
    %228 = vector.broadcast %227 : vector<1x128xf32> to vector<2x128xf32>
    %229 = arith.mulf %226, %228 : vector<2x128xf32>
    %230 = arith.addf %214, %229 : vector<2x128xf32>
    %c0_113 = arith.constant 0 : index
    %c12544 = arith.constant 12544 : index
    %231 = vector.load %arg2[%c0_113, %c12544] : memref<2x14336xf32, #tpu.memory_space<vmem>>, vector<1x128xf32>
    %232 = vector.broadcast %231 : vector<1x128xf32> to vector<2x128xf32>
    %233 = arith.mulf %3, %232 : vector<2x128xf32>
    %c1_114 = arith.constant 1 : index
    %c12544_115 = arith.constant 12544 : index
    %234 = vector.load %arg2[%c1_114, %c12544_115] : memref<2x14336xf32, #tpu.memory_space<vmem>>, vector<1x128xf32>
    %235 = vector.broadcast %234 : vector<1x128xf32> to vector<2x128xf32>
    %236 = arith.mulf %6, %235 : vector<2x128xf32>
    %237 = arith.addf %233, %236 : vector<2x128xf32>
    %c0_116 = arith.constant 0 : index
    %c12544_117 = arith.constant 12544 : index
    %238 = vector.load %arg3[%c0_116, %c12544_117] : memref<1x14336xf32, #tpu.memory_space<vmem>>, vector<1x128xf32>
    %239 = vector.broadcast %238 : vector<1x128xf32> to vector<2x128xf32>
    %240 = arith.addf %237, %239 : vector<2x128xf32>
    %cst_118 = arith.constant 0.000000e+00 : f32
    %241 = vector.broadcast %cst_118 : f32 to vector<2x128xf32>
    %242 = arith.maximumf %240, %241 : vector<2x128xf32>
    %c0_119 = arith.constant 0 : index
    %c12544_120 = arith.constant 12544 : index
    %243 = vector.load %arg4[%c0_119, %c12544_120] : memref<1x14336xf32, #tpu.memory_space<vmem>>, vector<1x128xf32>
    %244 = vector.broadcast %243 : vector<1x128xf32> to vector<2x128xf32>
    %245 = arith.mulf %242, %244 : vector<2x128xf32>
    %246 = arith.addf %230, %245 : vector<2x128xf32>
    %c0_121 = arith.constant 0 : index
    %c13440 = arith.constant 13440 : index
    %247 = vector.load %arg2[%c0_121, %c13440] : memref<2x14336xf32, #tpu.memory_space<vmem>>, vector<1x128xf32>
    %248 = vector.broadcast %247 : vector<1x128xf32> to vector<2x128xf32>
    %249 = arith.mulf %3, %248 : vector<2x128xf32>
    %c1_122 = arith.constant 1 : index
    %c13440_123 = arith.constant 13440 : index
    %250 = vector.load %arg2[%c1_122, %c13440_123] : memref<2x14336xf32, #tpu.memory_space<vmem>>, vector<1x128xf32>
    %251 = vector.broadcast %250 : vector<1x128xf32> to vector<2x128xf32>
    %252 = arith.mulf %6, %251 : vector<2x128xf32>
    %253 = arith.addf %249, %252 : vector<2x128xf32>
    %c0_124 = arith.constant 0 : index
    %c13440_125 = arith.constant 13440 : index
    %254 = vector.load %arg3[%c0_124, %c13440_125] : memref<1x14336xf32, #tpu.memory_space<vmem>>, vector<1x128xf32>
    %255 = vector.broadcast %254 : vector<1x128xf32> to vector<2x128xf32>
    %256 = arith.addf %253, %255 : vector<2x128xf32>
    %cst_126 = arith.constant 0.000000e+00 : f32
    %257 = vector.broadcast %cst_126 : f32 to vector<2x128xf32>
    %258 = arith.maximumf %256, %257 : vector<2x128xf32>
    %c0_127 = arith.constant 0 : index
    %c13440_128 = arith.constant 13440 : index
    %259 = vector.load %arg4[%c0_127, %c13440_128] : memref<1x14336xf32, #tpu.memory_space<vmem>>, vector<1x128xf32>
    %260 = vector.broadcast %259 : vector<1x128xf32> to vector<2x128xf32>
    %261 = arith.mulf %258, %260 : vector<2x128xf32>
    %262 = arith.addf %246, %261 : vector<2x128xf32>
    %263 = vector.broadcast %7 : f32 to vector<2x128xf32>
    %264 = arith.addf %262, %263 : vector<2x128xf32>
    %265 = math.tanh %264 : vector<2x128xf32>
    %c0_129 = arith.constant 0 : index
    %c0_130 = arith.constant 0 : index
    %266 = vector.load %arg6[%c0_129, %c0_130] : memref<2x784xf32, #tpu.memory_space<vmem>>, vector<2x128xf32>
    tpu.vector_store %arg6[%c0_129, %c0_130], %265 {strides = array<i32>} : memref<2x784xf32, #tpu.memory_space<vmem>>, vector<2x128xf32>,
    %c0_131 = arith.constant 0 : index
    %c128 = arith.constant 128 : index
    %267 = vector.load %arg2[%c0_131, %c128] : memref<2x14336xf32, #tpu.memory_space<vmem>>, vector<1x128xf32>
    %268 = vector.broadcast %267 : vector<1x128xf32> to vector<2x128xf32>
    %269 = arith.mulf %3, %268 : vector<2x128xf32>
    %c1_132 = arith.constant 1 : index
    %c128_133 = arith.constant 128 : index
    %270 = vector.load %arg2[%c1_132, %c128_133] : memref<2x14336xf32, #tpu.memory_space<vmem>>, vector<1x128xf32>
    %271 = vector.broadcast %270 : vector<1x128xf32> to vector<2x128xf32>
    %272 = arith.mulf %6, %271 : vector<2x128xf32>
    %273 = arith.addf %269, %272 : vector<2x128xf32>
    %c0_134 = arith.constant 0 : index
    %c128_135 = arith.constant 128 : index
    %274 = vector.load %arg3[%c0_134, %c128_135] : memref<1x14336xf32, #tpu.memory_space<vmem>>, vector<1x128xf32>
    %275 = vector.broadcast %274 : vector<1x128xf32> to vector<2x128xf32>
    %276 = arith.addf %273, %275 : vector<2x128xf32>
    %cst_136 = arith.constant 0.000000e+00 : f32
    %277 = vector.broadcast %cst_136 : f32 to vector<2x128xf32>
    %278 = arith.maximumf %276, %277 : vector<2x128xf32>
    %c0_137 = arith.constant 0 : index
    %c128_138 = arith.constant 128 : index
    %279 = vector.load %arg4[%c0_137, %c128_138] : memref<1x14336xf32, #tpu.memory_space<vmem>>, vector<1x128xf32>
    %280 = vector.broadcast %279 : vector<1x128xf32> to vector<2x128xf32>
    %281 = arith.mulf %278, %280 : vector<2x128xf32>
    %c0_139 = arith.constant 0 : index
    %c1024 = arith.constant 1024 : index
    %282 = vector.load %arg2[%c0_139, %c1024] : memref<2x14336xf32, #tpu.memory_space<vmem>>, vector<1x128xf32>
    %283 = vector.broadcast %282 : vector<1x128xf32> to vector<2x128xf32>
    %284 = arith.mulf %3, %283 : vector<2x128xf32>
    %c1_140 = arith.constant 1 : index
    %c1024_141 = arith.constant 1024 : index
    %285 = vector.load %arg2[%c1_140, %c1024_141] : memref<2x14336xf32, #tpu.memory_space<vmem>>, vector<1x128xf32>
    %286 = vector.broadcast %285 : vector<1x128xf32> to vector<2x128xf32>
    %287 = arith.mulf %6, %286 : vector<2x128xf32>
    %288 = arith.addf %284, %287 : vector<2x128xf32>
    %c0_142 = arith.constant 0 : index
    %c1024_143 = arith.constant 1024 : index
    %289 = vector.load %arg3[%c0_142, %c1024_143] : memref<1x14336xf32, #tpu.memory_space<vmem>>, vector<1x128xf32>
    %290 = vector.broadcast %289 : vector<1x128xf32> to vector<2x128xf32>
    %291 = arith.addf %288, %290 : vector<2x128xf32>
    %cst_144 = arith.constant 0.000000e+00 : f32
    %292 = vector.broadcast %cst_144 : f32 to vector<2x128xf32>
    %293 = arith.maximumf %291, %292 : vector<2x128xf32>
    %c0_145 = arith.constant 0 : index
    %c1024_146 = arith.constant 1024 : index
    %294 = vector.load %arg4[%c0_145, %c1024_146] : memref<1x14336xf32, #tpu.memory_space<vmem>>, vector<1x128xf32>
    %295 = vector.broadcast %294 : vector<1x128xf32> to vector<2x128xf32>
    %296 = arith.mulf %293, %295 : vector<2x128xf32>
    %297 = arith.addf %281, %296 : vector<2x128xf32>
    %c0_147 = arith.constant 0 : index
    %c1920 = arith.constant 1920 : index
    %298 = vector.load %arg2[%c0_147, %c1920] : memref<2x14336xf32, #tpu.memory_space<vmem>>, vector<1x128xf32>
    %299 = vector.broadcast %298 : vector<1x128xf32> to vector<2x128xf32>
    %300 = arith.mulf %3, %299 : vector<2x128xf32>
    %c1_148 = arith.constant 1 : index
    %c1920_149 = arith.constant 1920 : index
    %301 = vector.load %arg2[%c1_148, %c1920_149] : memref<2x14336xf32, #tpu.memory_space<vmem>>, vector<1x128xf32>
    %302 = vector.broadcast %301 : vector<1x128xf32> to vector<2x128xf32>
    %303 = arith.mulf %6, %302 : vector<2x128xf32>
    %304 = arith.addf %300, %303 : vector<2x128xf32>
    %c0_150 = arith.constant 0 : index
    %c1920_151 = arith.constant 1920 : index
    %305 = vector.load %arg3[%c0_150, %c1920_151] : memref<1x14336xf32, #tpu.memory_space<vmem>>, vector<1x128xf32>
    %306 = vector.broadcast %305 : vector<1x128xf32> to vector<2x128xf32>
    %307 = arith.addf %304, %306 : vector<2x128xf32>
    %cst_152 = arith.constant 0.000000e+00 : f32
    %308 = vector.broadcast %cst_152 : f32 to vector<2x128xf32>
    %309 = arith.maximumf %307, %308 : vector<2x128xf32>
    %c0_153 = arith.constant 0 : index
    %c1920_154 = arith.constant 1920 : index
    %310 = vector.load %arg4[%c0_153, %c1920_154] : memref<1x14336xf32, #tpu.memory_space<vmem>>, vector<1x128xf32>
    %311 = vector.broadcast %310 : vector<1x128xf32> to vector<2x128xf32>
    %312 = arith.mulf %309, %311 : vector<2x128xf32>
    %313 = arith.addf %297, %312 : vector<2x128xf32>
    %c0_155 = arith.constant 0 : index
    %c2816 = arith.constant 2816 : index
    %314 = vector.load %arg2[%c0_155, %c2816] : memref<2x14336xf32, #tpu.memory_space<vmem>>, vector<1x128xf32>
    %315 = vector.broadcast %314 : vector<1x128xf32> to vector<2x128xf32>
    %316 = arith.mulf %3, %315 : vector<2x128xf32>
    %c1_156 = arith.constant 1 : index
    %c2816_157 = arith.constant 2816 : index
    %317 = vector.load %arg2[%c1_156, %c2816_157] : memref<2x14336xf32, #tpu.memory_space<vmem>>, vector<1x128xf32>
    %318 = vector.broadcast %317 : vector<1x128xf32> to vector<2x128xf32>
    %319 = arith.mulf %6, %318 : vector<2x128xf32>
    %320 = arith.addf %316, %319 : vector<2x128xf32>
    %c0_158 = arith.constant 0 : index
    %c2816_159 = arith.constant 2816 : index
    %321 = vector.load %arg3[%c0_158, %c2816_159] : memref<1x14336xf32, #tpu.memory_space<vmem>>, vector<1x128xf32>
    %322 = vector.broadcast %321 : vector<1x128xf32> to vector<2x128xf32>
    %323 = arith.addf %320, %322 : vector<2x128xf32>
    %cst_160 = arith.constant 0.000000e+00 : f32
    %324 = vector.broadcast %cst_160 : f32 to vector<2x128xf32>
    %325 = arith.maximumf %323, %324 : vector<2x128xf32>
    %c0_161 = arith.constant 0 : index
    %c2816_162 = arith.constant 2816 : index
    %326 = vector.load %arg4[%c0_161, %c2816_162] : memref<1x14336xf32, #tpu.memory_space<vmem>>, vector<1x128xf32>
    %327 = vector.broadcast %326 : vector<1x128xf32> to vector<2x128xf32>
    %328 = arith.mulf %325, %327 : vector<2x128xf32>
    %329 = arith.addf %313, %328 : vector<2x128xf32>
    %c0_163 = arith.constant 0 : index
    %c3712 = arith.constant 3712 : index
    %330 = vector.load %arg2[%c0_163, %c3712] : memref<2x14336xf32, #tpu.memory_space<vmem>>, vector<1x128xf32>
    %331 = vector.broadcast %330 : vector<1x128xf32> to vector<2x128xf32>
    %332 = arith.mulf %3, %331 : vector<2x128xf32>
    %c1_164 = arith.constant 1 : index
    %c3712_165 = arith.constant 3712 : index
    %333 = vector.load %arg2[%c1_164, %c3712_165] : memref<2x14336xf32, #tpu.memory_space<vmem>>, vector<1x128xf32>
    %334 = vector.broadcast %333 : vector<1x128xf32> to vector<2x128xf32>
    %335 = arith.mulf %6, %334 : vector<2x128xf32>
    %336 = arith.addf %332, %335 : vector<2x128xf32>
    %c0_166 = arith.constant 0 : index
    %c3712_167 = arith.constant 3712 : index
    %337 = vector.load %arg3[%c0_166, %c3712_167] : memref<1x14336xf32, #tpu.memory_space<vmem>>, vector<1x128xf32>
    %338 = vector.broadcast %337 : vector<1x128xf32> to vector<2x128xf32>
    %339 = arith.addf %336, %338 : vector<2x128xf32>
    %cst_168 = arith.constant 0.000000e+00 : f32
    %340 = vector.broadcast %cst_168 : f32 to vector<2x128xf32>
    %341 = arith.maximumf %339, %340 : vector<2x128xf32>
    %c0_169 = arith.constant 0 : index
    %c3712_170 = arith.constant 3712 : index
    %342 = vector.load %arg4[%c0_169, %c3712_170] : memref<1x14336xf32, #tpu.memory_space<vmem>>, vector<1x128xf32>
    %343 = vector.broadcast %342 : vector<1x128xf32> to vector<2x128xf32>
    %344 = arith.mulf %341, %343 : vector<2x128xf32>
    %345 = arith.addf %329, %344 : vector<2x128xf32>
    %c0_171 = arith.constant 0 : index
    %c4608 = arith.constant 4608 : index
    %346 = vector.load %arg2[%c0_171, %c4608] : memref<2x14336xf32, #tpu.memory_space<vmem>>, vector<1x128xf32>
    %347 = vector.broadcast %346 : vector<1x128xf32> to vector<2x128xf32>
    %348 = arith.mulf %3, %347 : vector<2x128xf32>
    %c1_172 = arith.constant 1 : index
    %c4608_173 = arith.constant 4608 : index
    %349 = vector.load %arg2[%c1_172, %c4608_173] : memref<2x14336xf32, #tpu.memory_space<vmem>>, vector<1x128xf32>
    %350 = vector.broadcast %349 : vector<1x128xf32> to vector<2x128xf32>
    %351 = arith.mulf %6, %350 : vector<2x128xf32>
    %352 = arith.addf %348, %351 : vector<2x128xf32>
    %c0_174 = arith.constant 0 : index
    %c4608_175 = arith.constant 4608 : index
    %353 = vector.load %arg3[%c0_174, %c4608_175] : memref<1x14336xf32, #tpu.memory_space<vmem>>, vector<1x128xf32>
    %354 = vector.broadcast %353 : vector<1x128xf32> to vector<2x128xf32>
    %355 = arith.addf %352, %354 : vector<2x128xf32>
    %cst_176 = arith.constant 0.000000e+00 : f32
    %356 = vector.broadcast %cst_176 : f32 to vector<2x128xf32>
    %357 = arith.maximumf %355, %356 : vector<2x128xf32>
    %c0_177 = arith.constant 0 : index
    %c4608_178 = arith.constant 4608 : index
    %358 = vector.load %arg4[%c0_177, %c4608_178] : memref<1x14336xf32, #tpu.memory_space<vmem>>, vector<1x128xf32>
    %359 = vector.broadcast %358 : vector<1x128xf32> to vector<2x128xf32>
    %360 = arith.mulf %357, %359 : vector<2x128xf32>
    %361 = arith.addf %345, %360 : vector<2x128xf32>
    %c0_179 = arith.constant 0 : index
    %c5504 = arith.constant 5504 : index
    %362 = vector.load %arg2[%c0_179, %c5504] : memref<2x14336xf32, #tpu.memory_space<vmem>>, vector<1x128xf32>
    %363 = vector.broadcast %362 : vector<1x128xf32> to vector<2x128xf32>
    %364 = arith.mulf %3, %363 : vector<2x128xf32>
    %c1_180 = arith.constant 1 : index
    %c5504_181 = arith.constant 5504 : index
    %365 = vector.load %arg2[%c1_180, %c5504_181] : memref<2x14336xf32, #tpu.memory_space<vmem>>, vector<1x128xf32>
    %366 = vector.broadcast %365 : vector<1x128xf32> to vector<2x128xf32>
    %367 = arith.mulf %6, %366 : vector<2x128xf32>
    %368 = arith.addf %364, %367 : vector<2x128xf32>
    %c0_182 = arith.constant 0 : index
    %c5504_183 = arith.constant 5504 : index
    %369 = vector.load %arg3[%c0_182, %c5504_183] : memref<1x14336xf32, #tpu.memory_space<vmem>>, vector<1x128xf32>
    %370 = vector.broadcast %369 : vector<1x128xf32> to vector<2x128xf32>
    %371 = arith.addf %368, %370 : vector<2x128xf32>
    %cst_184 = arith.constant 0.000000e+00 : f32
    %372 = vector.broadcast %cst_184 : f32 to vector<2x128xf32>
    %373 = arith.maximumf %371, %372 : vector<2x128xf32>
    %c0_185 = arith.constant 0 : index
    %c5504_186 = arith.constant 5504 : index
    %374 = vector.load %arg4[%c0_185, %c5504_186] : memref<1x14336xf32, #tpu.memory_space<vmem>>, vector<1x128xf32>
    %375 = vector.broadcast %374 : vector<1x128xf32> to vector<2x128xf32>
    %376 = arith.mulf %373, %375 : vector<2x128xf32>
    %377 = arith.addf %361, %376 : vector<2x128xf32>
    %c0_187 = arith.constant 0 : index
    %c6400 = arith.constant 6400 : index
    %378 = vector.load %arg2[%c0_187, %c6400] : memref<2x14336xf32, #tpu.memory_space<vmem>>, vector<1x128xf32>
    %379 = vector.broadcast %378 : vector<1x128xf32> to vector<2x128xf32>
    %380 = arith.mulf %3, %379 : vector<2x128xf32>
    %c1_188 = arith.constant 1 : index
    %c6400_189 = arith.constant 6400 : index
    %381 = vector.load %arg2[%c1_188, %c6400_189] : memref<2x14336xf32, #tpu.memory_space<vmem>>, vector<1x128xf32>
    %382 = vector.broadcast %381 : vector<1x128xf32> to vector<2x128xf32>
    %383 = arith.mulf %6, %382 : vector<2x128xf32>
    %384 = arith.addf %380, %383 : vector<2x128xf32>
    %c0_190 = arith.constant 0 : index
    %c6400_191 = arith.constant 6400 : index
    %385 = vector.load %arg3[%c0_190, %c6400_191] : memref<1x14336xf32, #tpu.memory_space<vmem>>, vector<1x128xf32>
    %386 = vector.broadcast %385 : vector<1x128xf32> to vector<2x128xf32>
    %387 = arith.addf %384, %386 : vector<2x128xf32>
    %cst_192 = arith.constant 0.000000e+00 : f32
    %388 = vector.broadcast %cst_192 : f32 to vector<2x128xf32>
    %389 = arith.maximumf %387, %388 : vector<2x128xf32>
    %c0_193 = arith.constant 0 : index
    %c6400_194 = arith.constant 6400 : index
    %390 = vector.load %arg4[%c0_193, %c6400_194] : memref<1x14336xf32, #tpu.memory_space<vmem>>, vector<1x128xf32>
    %391 = vector.broadcast %390 : vector<1x128xf32> to vector<2x128xf32>
    %392 = arith.mulf %389, %391 : vector<2x128xf32>
    %393 = arith.addf %377, %392 : vector<2x128xf32>
    %c0_195 = arith.constant 0 : index
    %c7296 = arith.constant 7296 : index
    %394 = vector.load %arg2[%c0_195, %c7296] : memref<2x14336xf32, #tpu.memory_space<vmem>>, vector<1x128xf32>
    %395 = vector.broadcast %394 : vector<1x128xf32> to vector<2x128xf32>
    %396 = arith.mulf %3, %395 : vector<2x128xf32>
    %c1_196 = arith.constant 1 : index
    %c7296_197 = arith.constant 7296 : index
    %397 = vector.load %arg2[%c1_196, %c7296_197] : memref<2x14336xf32, #tpu.memory_space<vmem>>, vector<1x128xf32>
    %398 = vector.broadcast %397 : vector<1x128xf32> to vector<2x128xf32>
    %399 = arith.mulf %6, %398 : vector<2x128xf32>
    %400 = arith.addf %396, %399 : vector<2x128xf32>
    %c0_198 = arith.constant 0 : index
    %c7296_199 = arith.constant 7296 : index
    %401 = vector.load %arg3[%c0_198, %c7296_199] : memref<1x14336xf32, #tpu.memory_space<vmem>>, vector<1x128xf32>
    %402 = vector.broadcast %401 : vector<1x128xf32> to vector<2x128xf32>
    %403 = arith.addf %400, %402 : vector<2x128xf32>
    %cst_200 = arith.constant 0.000000e+00 : f32
    %404 = vector.broadcast %cst_200 : f32 to vector<2x128xf32>
    %405 = arith.maximumf %403, %404 : vector<2x128xf32>
    %c0_201 = arith.constant 0 : index
    %c7296_202 = arith.constant 7296 : index
    %406 = vector.load %arg4[%c0_201, %c7296_202] : memref<1x14336xf32, #tpu.memory_space<vmem>>, vector<1x128xf32>
    %407 = vector.broadcast %406 : vector<1x128xf32> to vector<2x128xf32>
    %408 = arith.mulf %405, %407 : vector<2x128xf32>
    %409 = arith.addf %393, %408 : vector<2x128xf32>
    %c0_203 = arith.constant 0 : index
    %c8192 = arith.constant 8192 : index
    %410 = vector.load %arg2[%c0_203, %c8192] : memref<2x14336xf32, #tpu.memory_space<vmem>>, vector<1x128xf32>
    %411 = vector.broadcast %410 : vector<1x128xf32> to vector<2x128xf32>
    %412 = arith.mulf %3, %411 : vector<2x128xf32>
    %c1_204 = arith.constant 1 : index
    %c8192_205 = arith.constant 8192 : index
    %413 = vector.load %arg2[%c1_204, %c8192_205] : memref<2x14336xf32, #tpu.memory_space<vmem>>, vector<1x128xf32>
    %414 = vector.broadcast %413 : vector<1x128xf32> to vector<2x128xf32>
    %415 = arith.mulf %6, %414 : vector<2x128xf32>
    %416 = arith.addf %412, %415 : vector<2x128xf32>
    %c0_206 = arith.constant 0 : index
    %c8192_207 = arith.constant 8192 : index
    %417 = vector.load %arg3[%c0_206, %c8192_207] : memref<1x14336xf32, #tpu.memory_space<vmem>>, vector<1x128xf32>
    %418 = vector.broadcast %417 : vector<1x128xf32> to vector<2x128xf32>
    %419 = arith.addf %416, %418 : vector<2x128xf32>
    %cst_208 = arith.constant 0.000000e+00 : f32
    %420 = vector.broadcast %cst_208 : f32 to vector<2x128xf32>
    %421 = arith.maximumf %419, %420 : vector<2x128xf32>
    %c0_209 = arith.constant 0 : index
    %c8192_210 = arith.constant 8192 : index
    %422 = vector.load %arg4[%c0_209, %c8192_210] : memref<1x14336xf32, #tpu.memory_space<vmem>>, vector<1x128xf32>
    %423 = vector.broadcast %422 : vector<1x128xf32> to vector<2x128xf32>
    %424 = arith.mulf %421, %423 : vector<2x128xf32>
    %425 = arith.addf %409, %424 : vector<2x128xf32>
    %c0_211 = arith.constant 0 : index
    %c9088 = arith.constant 9088 : index
    %426 = vector.load %arg2[%c0_211, %c9088] : memref<2x14336xf32, #tpu.memory_space<vmem>>, vector<1x128xf32>
    %427 = vector.broadcast %426 : vector<1x128xf32> to vector<2x128xf32>
    %428 = arith.mulf %3, %427 : vector<2x128xf32>
    %c1_212 = arith.constant 1 : index
    %c9088_213 = arith.constant 9088 : index
    %429 = vector.load %arg2[%c1_212, %c9088_213] : memref<2x14336xf32, #tpu.memory_space<vmem>>, vector<1x128xf32>
    %430 = vector.broadcast %429 : vector<1x128xf32> to vector<2x128xf32>
    %431 = arith.mulf %6, %430 : vector<2x128xf32>
    %432 = arith.addf %428, %431 : vector<2x128xf32>
    %c0_214 = arith.constant 0 : index
    %c9088_215 = arith.constant 9088 : index
    %433 = vector.load %arg3[%c0_214, %c9088_215] : memref<1x14336xf32, #tpu.memory_space<vmem>>, vector<1x128xf32>
    %434 = vector.broadcast %433 : vector<1x128xf32> to vector<2x128xf32>
    %435 = arith.addf %432, %434 : vector<2x128xf32>
    %cst_216 = arith.constant 0.000000e+00 : f32
    %436 = vector.broadcast %cst_216 : f32 to vector<2x128xf32>
    %437 = arith.maximumf %435, %436 : vector<2x128xf32>
    %c0_217 = arith.constant 0 : index
    %c9088_218 = arith.constant 9088 : index
    %438 = vector.load %arg4[%c0_217, %c9088_218] : memref<1x14336xf32, #tpu.memory_space<vmem>>, vector<1x128xf32>
    %439 = vector.broadcast %438 : vector<1x128xf32> to vector<2x128xf32>
    %440 = arith.mulf %437, %439 : vector<2x128xf32>
    %441 = arith.addf %425, %440 : vector<2x128xf32>
    %c0_219 = arith.constant 0 : index
    %c9984 = arith.constant 9984 : index
    %442 = vector.load %arg2[%c0_219, %c9984] : memref<2x14336xf32, #tpu.memory_space<vmem>>, vector<1x128xf32>
    %443 = vector.broadcast %442 : vector<1x128xf32> to vector<2x128xf32>
    %444 = arith.mulf %3, %443 : vector<2x128xf32>
    %c1_220 = arith.constant 1 : index
    %c9984_221 = arith.constant 9984 : index
    %445 = vector.load %arg2[%c1_220, %c9984_221] : memref<2x14336xf32, #tpu.memory_space<vmem>>, vector<1x128xf32>
    %446 = vector.broadcast %445 : vector<1x128xf32> to vector<2x128xf32>
    %447 = arith.mulf %6, %446 : vector<2x128xf32>
    %448 = arith.addf %444, %447 : vector<2x128xf32>
    %c0_222 = arith.constant 0 : index
    %c9984_223 = arith.constant 9984 : index
    %449 = vector.load %arg3[%c0_222, %c9984_223] : memref<1x14336xf32, #tpu.memory_space<vmem>>, vector<1x128xf32>
    %450 = vector.broadcast %449 : vector<1x128xf32> to vector<2x128xf32>
    %451 = arith.addf %448, %450 : vector<2x128xf32>
    %cst_224 = arith.constant 0.000000e+00 : f32
    %452 = vector.broadcast %cst_224 : f32 to vector<2x128xf32>
    %453 = arith.maximumf %451, %452 : vector<2x128xf32>
    %c0_225 = arith.constant 0 : index
    %c9984_226 = arith.constant 9984 : index
    %454 = vector.load %arg4[%c0_225, %c9984_226] : memref<1x14336xf32, #tpu.memory_space<vmem>>, vector<1x128xf32>
    %455 = vector.broadcast %454 : vector<1x128xf32> to vector<2x128xf32>
    %456 = arith.mulf %453, %455 : vector<2x128xf32>
    %457 = arith.addf %441, %456 : vector<2x128xf32>
    %c0_227 = arith.constant 0 : index
    %c10880 = arith.constant 10880 : index
    %458 = vector.load %arg2[%c0_227, %c10880] : memref<2x14336xf32, #tpu.memory_space<vmem>>, vector<1x128xf32>
    %459 = vector.broadcast %458 : vector<1x128xf32> to vector<2x128xf32>
    %460 = arith.mulf %3, %459 : vector<2x128xf32>
    %c1_228 = arith.constant 1 : index
    %c10880_229 = arith.constant 10880 : index
    %461 = vector.load %arg2[%c1_228, %c10880_229] : memref<2x14336xf32, #tpu.memory_space<vmem>>, vector<1x128xf32>
    %462 = vector.broadcast %461 : vector<1x128xf32> to vector<2x128xf32>
    %463 = arith.mulf %6, %462 : vector<2x128xf32>
    %464 = arith.addf %460, %463 : vector<2x128xf32>
    %c0_230 = arith.constant 0 : index
    %c10880_231 = arith.constant 10880 : index
    %465 = vector.load %arg3[%c0_230, %c10880_231] : memref<1x14336xf32, #tpu.memory_space<vmem>>, vector<1x128xf32>
    %466 = vector.broadcast %465 : vector<1x128xf32> to vector<2x128xf32>
    %467 = arith.addf %464, %466 : vector<2x128xf32>
    %cst_232 = arith.constant 0.000000e+00 : f32
    %468 = vector.broadcast %cst_232 : f32 to vector<2x128xf32>
    %469 = arith.maximumf %467, %468 : vector<2x128xf32>
    %c0_233 = arith.constant 0 : index
    %c10880_234 = arith.constant 10880 : index
    %470 = vector.load %arg4[%c0_233, %c10880_234] : memref<1x14336xf32, #tpu.memory_space<vmem>>, vector<1x128xf32>
    %471 = vector.broadcast %470 : vector<1x128xf32> to vector<2x128xf32>
    %472 = arith.mulf %469, %471 : vector<2x128xf32>
    %473 = arith.addf %457, %472 : vector<2x128xf32>
    %c0_235 = arith.constant 0 : index
    %c11776 = arith.constant 11776 : index
    %474 = vector.load %arg2[%c0_235, %c11776] : memref<2x14336xf32, #tpu.memory_space<vmem>>, vector<1x128xf32>
    %475 = vector.broadcast %474 : vector<1x128xf32> to vector<2x128xf32>
    %476 = arith.mulf %3, %475 : vector<2x128xf32>
    %c1_236 = arith.constant 1 : index
    %c11776_237 = arith.constant 11776 : index
    %477 = vector.load %arg2[%c1_236, %c11776_237] : memref<2x14336xf32, #tpu.memory_space<vmem>>, vector<1x128xf32>
    %478 = vector.broadcast %477 : vector<1x128xf32> to vector<2x128xf32>
    %479 = arith.mulf %6, %478 : vector<2x128xf32>
    %480 = arith.addf %476, %479 : vector<2x128xf32>
    %c0_238 = arith.constant 0 : index
    %c11776_239 = arith.constant 11776 : index
    %481 = vector.load %arg3[%c0_238, %c11776_239] : memref<1x14336xf32, #tpu.memory_space<vmem>>, vector<1x128xf32>
    %482 = vector.broadcast %481 : vector<1x128xf32> to vector<2x128xf32>
    %483 = arith.addf %480, %482 : vector<2x128xf32>
    %cst_240 = arith.constant 0.000000e+00 : f32
    %484 = vector.broadcast %cst_240 : f32 to vector<2x128xf32>
    %485 = arith.maximumf %483, %484 : vector<2x128xf32>
    %c0_241 = arith.constant 0 : index
    %c11776_242 = arith.constant 11776 : index
    %486 = vector.load %arg4[%c0_241, %c11776_242] : memref<1x14336xf32, #tpu.memory_space<vmem>>, vector<1x128xf32>
    %487 = vector.broadcast %486 : vector<1x128xf32> to vector<2x128xf32>
    %488 = arith.mulf %485, %487 : vector<2x128xf32>
    %489 = arith.addf %473, %488 : vector<2x128xf32>
    %c0_243 = arith.constant 0 : index
    %c12672 = arith.constant 12672 : index
    %490 = vector.load %arg2[%c0_243, %c12672] : memref<2x14336xf32, #tpu.memory_space<vmem>>, vector<1x128xf32>
    %491 = vector.broadcast %490 : vector<1x128xf32> to vector<2x128xf32>
    %492 = arith.mulf %3, %491 : vector<2x128xf32>
    %c1_244 = arith.constant 1 : index
    %c12672_245 = arith.constant 12672 : index
    %493 = vector.load %arg2[%c1_244, %c12672_245] : memref<2x14336xf32, #tpu.memory_space<vmem>>, vector<1x128xf32>
    %494 = vector.broadcast %493 : vector<1x128xf32> to vector<2x128xf32>
    %495 = arith.mulf %6, %494 : vector<2x128xf32>
    %496 = arith.addf %492, %495 : vector<2x128xf32>
    %c0_246 = arith.constant 0 : index
    %c12672_247 = arith.constant 12672 : index
    %497 = vector.load %arg3[%c0_246, %c12672_247] : memref<1x14336xf32, #tpu.memory_space<vmem>>, vector<1x128xf32>
    %498 = vector.broadcast %497 : vector<1x128xf32> to vector<2x128xf32>
    %499 = arith.addf %496, %498 : vector<2x128xf32>
    %cst_248 = arith.constant 0.000000e+00 : f32
    %500 = vector.broadcast %cst_248 : f32 to vector<2x128xf32>
    %501 = arith.maximumf %499, %500 : vector<2x128xf32>
    %c0_249 = arith.constant 0 : index
    %c12672_250 = arith.constant 12672 : index
    %502 = vector.load %arg4[%c0_249, %c12672_250] : memref<1x14336xf32, #tpu.memory_space<vmem>>, vector<1x128xf32>
    %503 = vector.broadcast %502 : vector<1x128xf32> to vector<2x128xf32>
    %504 = arith.mulf %501, %503 : vector<2x128xf32>
    %505 = arith.addf %489, %504 : vector<2x128xf32>
    %c0_251 = arith.constant 0 : index
    %c13568 = arith.constant 13568 : index
    %506 = vector.load %arg2[%c0_251, %c13568] : memref<2x14336xf32, #tpu.memory_space<vmem>>, vector<1x128xf32>
    %507 = vector.broadcast %506 : vector<1x128xf32> to vector<2x128xf32>
    %508 = arith.mulf %3, %507 : vector<2x128xf32>
    %c1_252 = arith.constant 1 : index
    %c13568_253 = arith.constant 13568 : index
    %509 = vector.load %arg2[%c1_252, %c13568_253] : memref<2x14336xf32, #tpu.memory_space<vmem>>, vector<1x128xf32>
    %510 = vector.broadcast %509 : vector<1x128xf32> to vector<2x128xf32>
    %511 = arith.mulf %6, %510 : vector<2x128xf32>
    %512 = arith.addf %508, %511 : vector<2x128xf32>
    %c0_254 = arith.constant 0 : index
    %c13568_255 = arith.constant 13568 : index
    %513 = vector.load %arg3[%c0_254, %c13568_255] : memref<1x14336xf32, #tpu.memory_space<vmem>>, vector<1x128xf32>
    %514 = vector.broadcast %513 : vector<1x128xf32> to vector<2x128xf32>
    %515 = arith.addf %512, %514 : vector<2x128xf32>
    %cst_256 = arith.constant 0.000000e+00 : f32
    %516 = vector.broadcast %cst_256 : f32 to vector<2x128xf32>
    %517 = arith.maximumf %515, %516 : vector<2x128xf32>
    %c0_257 = arith.constant 0 : index
    %c13568_258 = arith.constant 13568 : index
    %518 = vector.load %arg4[%c0_257, %c13568_258] : memref<1x14336xf32, #tpu.memory_space<vmem>>, vector<1x128xf32>
    %519 = vector.broadcast %518 : vector<1x128xf32> to vector<2x128xf32>
    %520 = arith.mulf %517, %519 : vector<2x128xf32>
    %521 = arith.addf %505, %520 : vector<2x128xf32>
    %522 = vector.broadcast %7 : f32 to vector<2x128xf32>
    %523 = arith.addf %521, %522 : vector<2x128xf32>
    %524 = math.tanh %523 : vector<2x128xf32>
    %c0_259 = arith.constant 0 : index
    %c128_260 = arith.constant 128 : index
    %525 = vector.load %arg6[%c0_259, %c128_260] : memref<2x784xf32, #tpu.memory_space<vmem>>, vector<2x128xf32>
    tpu.vector_store %arg6[%c0_259, %c128_260], %524 {strides = array<i32>} : memref<2x784xf32, #tpu.memory_space<vmem>>, vector<2x128xf32>,
    %c0_261 = arith.constant 0 : index
    %c256 = arith.constant 256 : index
    %526 = vector.load %arg2[%c0_261, %c256] : memref<2x14336xf32, #tpu.memory_space<vmem>>, vector<1x128xf32>
    %527 = vector.broadcast %526 : vector<1x128xf32> to vector<2x128xf32>
    %528 = arith.mulf %3, %527 : vector<2x128xf32>
    %c1_262 = arith.constant 1 : index
    %c256_263 = arith.constant 256 : index
    %529 = vector.load %arg2[%c1_262, %c256_263] : memref<2x14336xf32, #tpu.memory_space<vmem>>, vector<1x128xf32>
    %530 = vector.broadcast %529 : vector<1x128xf32> to vector<2x128xf32>
    %531 = arith.mulf %6, %530 : vector<2x128xf32>
    %532 = arith.addf %528, %531 : vector<2x128xf32>
    %c0_264 = arith.constant 0 : index
    %c256_265 = arith.constant 256 : index
    %533 = vector.load %arg3[%c0_264, %c256_265] : memref<1x14336xf32, #tpu.memory_space<vmem>>, vector<1x128xf32>
    %534 = vector.broadcast %533 : vector<1x128xf32> to vector<2x128xf32>
    %535 = arith.addf %532, %534 : vector<2x128xf32>
    %cst_266 = arith.constant 0.000000e+00 : f32
    %536 = vector.broadcast %cst_266 : f32 to vector<2x128xf32>
    %537 = arith.maximumf %535, %536 : vector<2x128xf32>
    %c0_267 = arith.constant 0 : index
    %c256_268 = arith.constant 256 : index
    %538 = vector.load %arg4[%c0_267, %c256_268] : memref<1x14336xf32, #tpu.memory_space<vmem>>, vector<1x128xf32>
    %539 = vector.broadcast %538 : vector<1x128xf32> to vector<2x128xf32>
    %540 = arith.mulf %537, %539 : vector<2x128xf32>
    %c0_269 = arith.constant 0 : index
    %c1152 = arith.constant 1152 : index
    %541 = vector.load %arg2[%c0_269, %c1152] : memref<2x14336xf32, #tpu.memory_space<vmem>>, vector<1x128xf32>
    %542 = vector.broadcast %541 : vector<1x128xf32> to vector<2x128xf32>
    %543 = arith.mulf %3, %542 : vector<2x128xf32>
    %c1_270 = arith.constant 1 : index
    %c1152_271 = arith.constant 1152 : index
    %544 = vector.load %arg2[%c1_270, %c1152_271] : memref<2x14336xf32, #tpu.memory_space<vmem>>, vector<1x128xf32>
    %545 = vector.broadcast %544 : vector<1x128xf32> to vector<2x128xf32>
    %546 = arith.mulf %6, %545 : vector<2x128xf32>
    %547 = arith.addf %543, %546 : vector<2x128xf32>
    %c0_272 = arith.constant 0 : index
    %c1152_273 = arith.constant 1152 : index
    %548 = vector.load %arg3[%c0_272, %c1152_273] : memref<1x14336xf32, #tpu.memory_space<vmem>>, vector<1x128xf32>
    %549 = vector.broadcast %548 : vector<1x128xf32> to vector<2x128xf32>
    %550 = arith.addf %547, %549 : vector<2x128xf32>
    %cst_274 = arith.constant 0.000000e+00 : f32
    %551 = vector.broadcast %cst_274 : f32 to vector<2x128xf32>
    %552 = arith.maximumf %550, %551 : vector<2x128xf32>
    %c0_275 = arith.constant 0 : index
    %c1152_276 = arith.constant 1152 : index
    %553 = vector.load %arg4[%c0_275, %c1152_276] : memref<1x14336xf32, #tpu.memory_space<vmem>>, vector<1x128xf32>
    %554 = vector.broadcast %553 : vector<1x128xf32> to vector<2x128xf32>
    %555 = arith.mulf %552, %554 : vector<2x128xf32>
    %556 = arith.addf %540, %555 : vector<2x128xf32>
    %c0_277 = arith.constant 0 : index
    %c2048 = arith.constant 2048 : index
    %557 = vector.load %arg2[%c0_277, %c2048] : memref<2x14336xf32, #tpu.memory_space<vmem>>, vector<1x128xf32>
    %558 = vector.broadcast %557 : vector<1x128xf32> to vector<2x128xf32>
    %559 = arith.mulf %3, %558 : vector<2x128xf32>
    %c1_278 = arith.constant 1 : index
    %c2048_279 = arith.constant 2048 : index
    %560 = vector.load %arg2[%c1_278, %c2048_279] : memref<2x14336xf32, #tpu.memory_space<vmem>>, vector<1x128xf32>
    %561 = vector.broadcast %560 : vector<1x128xf32> to vector<2x128xf32>
    %562 = arith.mulf %6, %561 : vector<2x128xf32>
    %563 = arith.addf %559, %562 : vector<2x128xf32>
    %c0_280 = arith.constant 0 : index
    %c2048_281 = arith.constant 2048 : index
    %564 = vector.load %arg3[%c0_280, %c2048_281] : memref<1x14336xf32, #tpu.memory_space<vmem>>, vector<1x128xf32>
    %565 = vector.broadcast %564 : vector<1x128xf32> to vector<2x128xf32>
    %566 = arith.addf %563, %565 : vector<2x128xf32>
    %cst_282 = arith.constant 0.000000e+00 : f32
    %567 = vector.broadcast %cst_282 : f32 to vector<2x128xf32>
    %568 = arith.maximumf %566, %567 : vector<2x128xf32>
    %c0_283 = arith.constant 0 : index
    %c2048_284 = arith.constant 2048 : index
    %569 = vector.load %arg4[%c0_283, %c2048_284] : memref<1x14336xf32, #tpu.memory_space<vmem>>, vector<1x128xf32>
    %570 = vector.broadcast %569 : vector<1x128xf32> to vector<2x128xf32>
    %571 = arith.mulf %568, %570 : vector<2x128xf32>
    %572 = arith.addf %556, %571 : vector<2x128xf32>
    %c0_285 = arith.constant 0 : index
    %c2944 = arith.constant 2944 : index
    %573 = vector.load %arg2[%c0_285, %c2944] : memref<2x14336xf32, #tpu.memory_space<vmem>>, vector<1x128xf32>
    %574 = vector.broadcast %573 : vector<1x128xf32> to vector<2x128xf32>
    %575 = arith.mulf %3, %574 : vector<2x128xf32>
    %c1_286 = arith.constant 1 : index
    %c2944_287 = arith.constant 2944 : index
    %576 = vector.load %arg2[%c1_286, %c2944_287] : memref<2x14336xf32, #tpu.memory_space<vmem>>, vector<1x128xf32>
    %577 = vector.broadcast %576 : vector<1x128xf32> to vector<2x128xf32>
    %578 = arith.mulf %6, %577 : vector<2x128xf32>
    %579 = arith.addf %575, %578 : vector<2x128xf32>
    %c0_288 = arith.constant 0 : index
    %c2944_289 = arith.constant 2944 : index
    %580 = vector.load %arg3[%c0_288, %c2944_289] : memref<1x14336xf32, #tpu.memory_space<vmem>>, vector<1x128xf32>
    %581 = vector.broadcast %580 : vector<1x128xf32> to vector<2x128xf32>
    %582 = arith.addf %579, %581 : vector<2x128xf32>
    %cst_290 = arith.constant 0.000000e+00 : f32
    %583 = vector.broadcast %cst_290 : f32 to vector<2x128xf32>
    %584 = arith.maximumf %582, %583 : vector<2x128xf32>
    %c0_291 = arith.constant 0 : index
    %c2944_292 = arith.constant 2944 : index
    %585 = vector.load %arg4[%c0_291, %c2944_292] : memref<1x14336xf32, #tpu.memory_space<vmem>>, vector<1x128xf32>
    %586 = vector.broadcast %585 : vector<1x128xf32> to vector<2x128xf32>
    %587 = arith.mulf %584, %586 : vector<2x128xf32>
    %588 = arith.addf %572, %587 : vector<2x128xf32>
    %c0_293 = arith.constant 0 : index
    %c3840 = arith.constant 3840 : index
    %589 = vector.load %arg2[%c0_293, %c3840] : memref<2x14336xf32, #tpu.memory_space<vmem>>, vector<1x128xf32>
    %590 = vector.broadcast %589 : vector<1x128xf32> to vector<2x128xf32>
    %591 = arith.mulf %3, %590 : vector<2x128xf32>
    %c1_294 = arith.constant 1 : index
    %c3840_295 = arith.constant 3840 : index
    %592 = vector.load %arg2[%c1_294, %c3840_295] : memref<2x14336xf32, #tpu.memory_space<vmem>>, vector<1x128xf32>
    %593 = vector.broadcast %592 : vector<1x128xf32> to vector<2x128xf32>
    %594 = arith.mulf %6, %593 : vector<2x128xf32>
    %595 = arith.addf %591, %594 : vector<2x128xf32>
    %c0_296 = arith.constant 0 : index
    %c3840_297 = arith.constant 3840 : index
    %596 = vector.load %arg3[%c0_296, %c3840_297] : memref<1x14336xf32, #tpu.memory_space<vmem>>, vector<1x128xf32>
    %597 = vector.broadcast %596 : vector<1x128xf32> to vector<2x128xf32>
    %598 = arith.addf %595, %597 : vector<2x128xf32>
    %cst_298 = arith.constant 0.000000e+00 : f32
    %599 = vector.broadcast %cst_298 : f32 to vector<2x128xf32>
    %600 = arith.maximumf %598, %599 : vector<2x128xf32>
    %c0_299 = arith.constant 0 : index
    %c3840_300 = arith.constant 3840 : index
    %601 = vector.load %arg4[%c0_299, %c3840_300] : memref<1x14336xf32, #tpu.memory_space<vmem>>, vector<1x128xf32>
    %602 = vector.broadcast %601 : vector<1x128xf32> to vector<2x128xf32>
    %603 = arith.mulf %600, %602 : vector<2x128xf32>
    %604 = arith.addf %588, %603 : vector<2x128xf32>
    %c0_301 = arith.constant 0 : index
    %c4736 = arith.constant 4736 : index
    %605 = vector.load %arg2[%c0_301, %c4736] : memref<2x14336xf32, #tpu.memory_space<vmem>>, vector<1x128xf32>
    %606 = vector.broadcast %605 : vector<1x128xf32> to vector<2x128xf32>
    %607 = arith.mulf %3, %606 : vector<2x128xf32>
    %c1_302 = arith.constant 1 : index
    %c4736_303 = arith.constant 4736 : index
    %608 = vector.load %arg2[%c1_302, %c4736_303] : memref<2x14336xf32, #tpu.memory_space<vmem>>, vector<1x128xf32>
    %609 = vector.broadcast %608 : vector<1x128xf32> to vector<2x128xf32>
    %610 = arith.mulf %6, %609 : vector<2x128xf32>
    %611 = arith.addf %607, %610 : vector<2x128xf32>
    %c0_304 = arith.constant 0 : index
    %c4736_305 = arith.constant 4736 : index
    %612 = vector.load %arg3[%c0_304, %c4736_305] : memref<1x14336xf32, #tpu.memory_space<vmem>>, vector<1x128xf32>
    %613 = vector.broadcast %612 : vector<1x128xf32> to vector<2x128xf32>
    %614 = arith.addf %611, %613 : vector<2x128xf32>
    %cst_306 = arith.constant 0.000000e+00 : f32
    %615 = vector.broadcast %cst_306 : f32 to vector<2x128xf32>
    %616 = arith.maximumf %614, %615 : vector<2x128xf32>
    %c0_307 = arith.constant 0 : index
    %c4736_308 = arith.constant 4736 : index
    %617 = vector.load %arg4[%c0_307, %c4736_308] : memref<1x14336xf32, #tpu.memory_space<vmem>>, vector<1x128xf32>
    %618 = vector.broadcast %617 : vector<1x128xf32> to vector<2x128xf32>
    %619 = arith.mulf %616, %618 : vector<2x128xf32>
    %620 = arith.addf %604, %619 : vector<2x128xf32>
    %c0_309 = arith.constant 0 : index
    %c5632 = arith.constant 5632 : index
    %621 = vector.load %arg2[%c0_309, %c5632] : memref<2x14336xf32, #tpu.memory_space<vmem>>, vector<1x128xf32>
    %622 = vector.broadcast %621 : vector<1x128xf32> to vector<2x128xf32>
    %623 = arith.mulf %3, %622 : vector<2x128xf32>
    %c1_310 = arith.constant 1 : index
    %c5632_311 = arith.constant 5632 : index
    %624 = vector.load %arg2[%c1_310, %c5632_311] : memref<2x14336xf32, #tpu.memory_space<vmem>>, vector<1x128xf32>
    %625 = vector.broadcast %624 : vector<1x128xf32> to vector<2x128xf32>
    %626 = arith.mulf %6, %625 : vector<2x128xf32>
    %627 = arith.addf %623, %626 : vector<2x128xf32>
    %c0_312 = arith.constant 0 : index
    %c5632_313 = arith.constant 5632 : index
    %628 = vector.load %arg3[%c0_312, %c5632_313] : memref<1x14336xf32, #tpu.memory_space<vmem>>, vector<1x128xf32>
    %629 = vector.broadcast %628 : vector<1x128xf32> to vector<2x128xf32>
    %630 = arith.addf %627, %629 : vector<2x128xf32>
    %cst_314 = arith.constant 0.000000e+00 : f32
    %631 = vector.broadcast %cst_314 : f32 to vector<2x128xf32>
    %632 = arith.maximumf %630, %631 : vector<2x128xf32>
    %c0_315 = arith.constant 0 : index
    %c5632_316 = arith.constant 5632 : index
    %633 = vector.load %arg4[%c0_315, %c5632_316] : memref<1x14336xf32, #tpu.memory_space<vmem>>, vector<1x128xf32>
    %634 = vector.broadcast %633 : vector<1x128xf32> to vector<2x128xf32>
    %635 = arith.mulf %632, %634 : vector<2x128xf32>
    %636 = arith.addf %620, %635 : vector<2x128xf32>
    %c0_317 = arith.constant 0 : index
    %c6528 = arith.constant 6528 : index
    %637 = vector.load %arg2[%c0_317, %c6528] : memref<2x14336xf32, #tpu.memory_space<vmem>>, vector<1x128xf32>
    %638 = vector.broadcast %637 : vector<1x128xf32> to vector<2x128xf32>
    %639 = arith.mulf %3, %638 : vector<2x128xf32>
    %c1_318 = arith.constant 1 : index
    %c6528_319 = arith.constant 6528 : index
    %640 = vector.load %arg2[%c1_318, %c6528_319] : memref<2x14336xf32, #tpu.memory_space<vmem>>, vector<1x128xf32>
    %641 = vector.broadcast %640 : vector<1x128xf32> to vector<2x128xf32>
    %642 = arith.mulf %6, %641 : vector<2x128xf32>
    %643 = arith.addf %639, %642 : vector<2x128xf32>
    %c0_320 = arith.constant 0 : index
    %c6528_321 = arith.constant 6528 : index
    %644 = vector.load %arg3[%c0_320, %c6528_321] : memref<1x14336xf32, #tpu.memory_space<vmem>>, vector<1x128xf32>
    %645 = vector.broadcast %644 : vector<1x128xf32> to vector<2x128xf32>
    %646 = arith.addf %643, %645 : vector<2x128xf32>
    %cst_322 = arith.constant 0.000000e+00 : f32
    %647 = vector.broadcast %cst_322 : f32 to vector<2x128xf32>
    %648 = arith.maximumf %646, %647 : vector<2x128xf32>
    %c0_323 = arith.constant 0 : index
    %c6528_324 = arith.constant 6528 : index
    %649 = vector.load %arg4[%c0_323, %c6528_324] : memref<1x14336xf32, #tpu.memory_space<vmem>>, vector<1x128xf32>
    %650 = vector.broadcast %649 : vector<1x128xf32> to vector<2x128xf32>
    %651 = arith.mulf %648, %650 : vector<2x128xf32>
    %652 = arith.addf %636, %651 : vector<2x128xf32>
    %c0_325 = arith.constant 0 : index
    %c7424 = arith.constant 7424 : index
    %653 = vector.load %arg2[%c0_325, %c7424] : memref<2x14336xf32, #tpu.memory_space<vmem>>, vector<1x128xf32>
    %654 = vector.broadcast %653 : vector<1x128xf32> to vector<2x128xf32>
    %655 = arith.mulf %3, %654 : vector<2x128xf32>
    %c1_326 = arith.constant 1 : index
    %c7424_327 = arith.constant 7424 : index
    %656 = vector.load %arg2[%c1_326, %c7424_327] : memref<2x14336xf32, #tpu.memory_space<vmem>>, vector<1x128xf32>
    %657 = vector.broadcast %656 : vector<1x128xf32> to vector<2x128xf32>
    %658 = arith.mulf %6, %657 : vector<2x128xf32>
    %659 = arith.addf %655, %658 : vector<2x128xf32>
    %c0_328 = arith.constant 0 : index
    %c7424_329 = arith.constant 7424 : index
    %660 = vector.load %arg3[%c0_328, %c7424_329] : memref<1x14336xf32, #tpu.memory_space<vmem>>, vector<1x128xf32>
    %661 = vector.broadcast %660 : vector<1x128xf32> to vector<2x128xf32>
    %662 = arith.addf %659, %661 : vector<2x128xf32>
    %cst_330 = arith.constant 0.000000e+00 : f32
    %663 = vector.broadcast %cst_330 : f32 to vector<2x128xf32>
    %664 = arith.maximumf %662, %663 : vector<2x128xf32>
    %c0_331 = arith.constant 0 : index
    %c7424_332 = arith.constant 7424 : index
    %665 = vector.load %arg4[%c0_331, %c7424_332] : memref<1x14336xf32, #tpu.memory_space<vmem>>, vector<1x128xf32>
    %666 = vector.broadcast %665 : vector<1x128xf32> to vector<2x128xf32>
    %667 = arith.mulf %664, %666 : vector<2x128xf32>
    %668 = arith.addf %652, %667 : vector<2x128xf32>
    %c0_333 = arith.constant 0 : index
    %c8320 = arith.constant 8320 : index
    %669 = vector.load %arg2[%c0_333, %c8320] : memref<2x14336xf32, #tpu.memory_space<vmem>>, vector<1x128xf32>
    %670 = vector.broadcast %669 : vector<1x128xf32> to vector<2x128xf32>
    %671 = arith.mulf %3, %670 : vector<2x128xf32>
    %c1_334 = arith.constant 1 : index
    %c8320_335 = arith.constant 8320 : index
    %672 = vector.load %arg2[%c1_334, %c8320_335] : memref<2x14336xf32, #tpu.memory_space<vmem>>, vector<1x128xf32>
    %673 = vector.broadcast %672 : vector<1x128xf32> to vector<2x128xf32>
    %674 = arith.mulf %6, %673 : vector<2x128xf32>
    %675 = arith.addf %671, %674 : vector<2x128xf32>
    %c0_336 = arith.constant 0 : index
    %c8320_337 = arith.constant 8320 : index
    %676 = vector.load %arg3[%c0_336, %c8320_337] : memref<1x14336xf32, #tpu.memory_space<vmem>>, vector<1x128xf32>
    %677 = vector.broadcast %676 : vector<1x128xf32> to vector<2x128xf32>
    %678 = arith.addf %675, %677 : vector<2x128xf32>
    %cst_338 = arith.constant 0.000000e+00 : f32
    %679 = vector.broadcast %cst_338 : f32 to vector<2x128xf32>
    %680 = arith.maximumf %678, %679 : vector<2x128xf32>
    %c0_339 = arith.constant 0 : index
    %c8320_340 = arith.constant 8320 : index
    %681 = vector.load %arg4[%c0_339, %c8320_340] : memref<1x14336xf32, #tpu.memory_space<vmem>>, vector<1x128xf32>
    %682 = vector.broadcast %681 : vector<1x128xf32> to vector<2x128xf32>
    %683 = arith.mulf %680, %682 : vector<2x128xf32>
    %684 = arith.addf %668, %683 : vector<2x128xf32>
    %c0_341 = arith.constant 0 : index
    %c9216 = arith.constant 9216 : index
    %685 = vector.load %arg2[%c0_341, %c9216] : memref<2x14336xf32, #tpu.memory_space<vmem>>, vector<1x128xf32>
    %686 = vector.broadcast %685 : vector<1x128xf32> to vector<2x128xf32>
    %687 = arith.mulf %3, %686 : vector<2x128xf32>
    %c1_342 = arith.constant 1 : index
    %c9216_343 = arith.constant 9216 : index
    %688 = vector.load %arg2[%c1_342, %c9216_343] : memref<2x14336xf32, #tpu.memory_space<vmem>>, vector<1x128xf32>
    %689 = vector.broadcast %688 : vector<1x128xf32> to vector<2x128xf32>
    %690 = arith.mulf %6, %689 : vector<2x128xf32>
    %691 = arith.addf %687, %690 : vector<2x128xf32>
    %c0_344 = arith.constant 0 : index
    %c9216_345 = arith.constant 9216 : index
    %692 = vector.load %arg3[%c0_344, %c9216_345] : memref<1x14336xf32, #tpu.memory_space<vmem>>, vector<1x128xf32>
    %693 = vector.broadcast %692 : vector<1x128xf32> to vector<2x128xf32>
    %694 = arith.addf %691, %693 : vector<2x128xf32>
    %cst_346 = arith.constant 0.000000e+00 : f32
    %695 = vector.broadcast %cst_346 : f32 to vector<2x128xf32>
    %696 = arith.maximumf %694, %695 : vector<2x128xf32>
    %c0_347 = arith.constant 0 : index
    %c9216_348 = arith.constant 9216 : index
    %697 = vector.load %arg4[%c0_347, %c9216_348] : memref<1x14336xf32, #tpu.memory_space<vmem>>, vector<1x128xf32>
    %698 = vector.broadcast %697 : vector<1x128xf32> to vector<2x128xf32>
    %699 = arith.mulf %696, %698 : vector<2x128xf32>
    %700 = arith.addf %684, %699 : vector<2x128xf32>
    %c0_349 = arith.constant 0 : index
    %c10112 = arith.constant 10112 : index
    %701 = vector.load %arg2[%c0_349, %c10112] : memref<2x14336xf32, #tpu.memory_space<vmem>>, vector<1x128xf32>
    %702 = vector.broadcast %701 : vector<1x128xf32> to vector<2x128xf32>
    %703 = arith.mulf %3, %702 : vector<2x128xf32>
    %c1_350 = arith.constant 1 : index
    %c10112_351 = arith.constant 10112 : index
    %704 = vector.load %arg2[%c1_350, %c10112_351] : memref<2x14336xf32, #tpu.memory_space<vmem>>, vector<1x128xf32>
    %705 = vector.broadcast %704 : vector<1x128xf32> to vector<2x128xf32>
    %706 = arith.mulf %6, %705 : vector<2x128xf32>
    %707 = arith.addf %703, %706 : vector<2x128xf32>
    %c0_352 = arith.constant 0 : index
    %c10112_353 = arith.constant 10112 : index
    %708 = vector.load %arg3[%c0_352, %c10112_353] : memref<1x14336xf32, #tpu.memory_space<vmem>>, vector<1x128xf32>
    %709 = vector.broadcast %708 : vector<1x128xf32> to vector<2x128xf32>
    %710 = arith.addf %707, %709 : vector<2x128xf32>
    %cst_354 = arith.constant 0.000000e+00 : f32
    %711 = vector.broadcast %cst_354 : f32 to vector<2x128xf32>
    %712 = arith.maximumf %710, %711 : vector<2x128xf32>
    %c0_355 = arith.constant 0 : index
    %c10112_356 = arith.constant 10112 : index
    %713 = vector.load %arg4[%c0_355, %c10112_356] : memref<1x14336xf32, #tpu.memory_space<vmem>>, vector<1x128xf32>
    %714 = vector.broadcast %713 : vector<1x128xf32> to vector<2x128xf32>
    %715 = arith.mulf %712, %714 : vector<2x128xf32>
    %716 = arith.addf %700, %715 : vector<2x128xf32>
    %c0_357 = arith.constant 0 : index
    %c11008 = arith.constant 11008 : index
    %717 = vector.load %arg2[%c0_357, %c11008] : memref<2x14336xf32, #tpu.memory_space<vmem>>, vector<1x128xf32>
    %718 = vector.broadcast %717 : vector<1x128xf32> to vector<2x128xf32>
    %719 = arith.mulf %3, %718 : vector<2x128xf32>
    %c1_358 = arith.constant 1 : index
    %c11008_359 = arith.constant 11008 : index
    %720 = vector.load %arg2[%c1_358, %c11008_359] : memref<2x14336xf32, #tpu.memory_space<vmem>>, vector<1x128xf32>
    %721 = vector.broadcast %720 : vector<1x128xf32> to vector<2x128xf32>
    %722 = arith.mulf %6, %721 : vector<2x128xf32>
    %723 = arith.addf %719, %722 : vector<2x128xf32>
    %c0_360 = arith.constant 0 : index
    %c11008_361 = arith.constant 11008 : index
    %724 = vector.load %arg3[%c0_360, %c11008_361] : memref<1x14336xf32, #tpu.memory_space<vmem>>, vector<1x128xf32>
    %725 = vector.broadcast %724 : vector<1x128xf32> to vector<2x128xf32>
    %726 = arith.addf %723, %725 : vector<2x128xf32>
    %cst_362 = arith.constant 0.000000e+00 : f32
    %727 = vector.broadcast %cst_362 : f32 to vector<2x128xf32>
    %728 = arith.maximumf %726, %727 : vector<2x128xf32>
    %c0_363 = arith.constant 0 : index
    %c11008_364 = arith.constant 11008 : index
    %729 = vector.load %arg4[%c0_363, %c11008_364] : memref<1x14336xf32, #tpu.memory_space<vmem>>, vector<1x128xf32>
    %730 = vector.broadcast %729 : vector<1x128xf32> to vector<2x128xf32>
    %731 = arith.mulf %728, %730 : vector<2x128xf32>
    %732 = arith.addf %716, %731 : vector<2x128xf32>
    %c0_365 = arith.constant 0 : index
    %c11904 = arith.constant 11904 : index
    %733 = vector.load %arg2[%c0_365, %c11904] : memref<2x14336xf32, #tpu.memory_space<vmem>>, vector<1x128xf32>
    %734 = vector.broadcast %733 : vector<1x128xf32> to vector<2x128xf32>
    %735 = arith.mulf %3, %734 : vector<2x128xf32>
    %c1_366 = arith.constant 1 : index
    %c11904_367 = arith.constant 11904 : index
    %736 = vector.load %arg2[%c1_366, %c11904_367] : memref<2x14336xf32, #tpu.memory_space<vmem>>, vector<1x128xf32>
    %737 = vector.broadcast %736 : vector<1x128xf32> to vector<2x128xf32>
    %738 = arith.mulf %6, %737 : vector<2x128xf32>
    %739 = arith.addf %735, %738 : vector<2x128xf32>
    %c0_368 = arith.constant 0 : index
    %c11904_369 = arith.constant 11904 : index
    %740 = vector.load %arg3[%c0_368, %c11904_369] : memref<1x14336xf32, #tpu.memory_space<vmem>>, vector<1x128xf32>
    %741 = vector.broadcast %740 : vector<1x128xf32> to vector<2x128xf32>
    %742 = arith.addf %739, %741 : vector<2x128xf32>
    %cst_370 = arith.constant 0.000000e+00 : f32
    %743 = vector.broadcast %cst_370 : f32 to vector<2x128xf32>
    %744 = arith.maximumf %742, %743 : vector<2x128xf32>
    %c0_371 = arith.constant 0 : index
    %c11904_372 = arith.constant 11904 : index
    %745 = vector.load %arg4[%c0_371, %c11904_372] : memref<1x14336xf32, #tpu.memory_space<vmem>>, vector<1x128xf32>
    %746 = vector.broadcast %745 : vector<1x128xf32> to vector<2x128xf32>
    %747 = arith.mulf %744, %746 : vector<2x128xf32>
    %748 = arith.addf %732, %747 : vector<2x128xf32>
    %c0_373 = arith.constant 0 : index
    %c12800 = arith.constant 12800 : index
    %749 = vector.load %arg2[%c0_373, %c12800] : memref<2x14336xf32, #tpu.memory_space<vmem>>, vector<1x128xf32>
    %750 = vector.broadcast %749 : vector<1x128xf32> to vector<2x128xf32>
    %751 = arith.mulf %3, %750 : vector<2x128xf32>
    %c1_374 = arith.constant 1 : index
    %c12800_375 = arith.constant 12800 : index
    %752 = vector.load %arg2[%c1_374, %c12800_375] : memref<2x14336xf32, #tpu.memory_space<vmem>>, vector<1x128xf32>
    %753 = vector.broadcast %752 : vector<1x128xf32> to vector<2x128xf32>
    %754 = arith.mulf %6, %753 : vector<2x128xf32>
    %755 = arith.addf %751, %754 : vector<2x128xf32>
    %c0_376 = arith.constant 0 : index
    %c12800_377 = arith.constant 12800 : index
    %756 = vector.load %arg3[%c0_376, %c12800_377] : memref<1x14336xf32, #tpu.memory_space<vmem>>, vector<1x128xf32>
    %757 = vector.broadcast %756 : vector<1x128xf32> to vector<2x128xf32>
    %758 = arith.addf %755, %757 : vector<2x128xf32>
    %cst_378 = arith.constant 0.000000e+00 : f32
    %759 = vector.broadcast %cst_378 : f32 to vector<2x128xf32>
    %760 = arith.maximumf %758, %759 : vector<2x128xf32>
    %c0_379 = arith.constant 0 : index
    %c12800_380 = arith.constant 12800 : index
    %761 = vector.load %arg4[%c0_379, %c12800_380] : memref<1x14336xf32, #tpu.memory_space<vmem>>, vector<1x128xf32>
    %762 = vector.broadcast %761 : vector<1x128xf32> to vector<2x128xf32>
    %763 = arith.mulf %760, %762 : vector<2x128xf32>
    %764 = arith.addf %748, %763 : vector<2x128xf32>
    %c0_381 = arith.constant 0 : index
    %c13696 = arith.constant 13696 : index
    %765 = vector.load %arg2[%c0_381, %c13696] : memref<2x14336xf32, #tpu.memory_space<vmem>>, vector<1x128xf32>
    %766 = vector.broadcast %765 : vector<1x128xf32> to vector<2x128xf32>
    %767 = arith.mulf %3, %766 : vector<2x128xf32>
    %c1_382 = arith.constant 1 : index
    %c13696_383 = arith.constant 13696 : index
    %768 = vector.load %arg2[%c1_382, %c13696_383] : memref<2x14336xf32, #tpu.memory_space<vmem>>, vector<1x128xf32>
    %769 = vector.broadcast %768 : vector<1x128xf32> to vector<2x128xf32>
    %770 = arith.mulf %6, %769 : vector<2x128xf32>
    %771 = arith.addf %767, %770 : vector<2x128xf32>
    %c0_384 = arith.constant 0 : index
    %c13696_385 = arith.constant 13696 : index
    %772 = vector.load %arg3[%c0_384, %c13696_385] : memref<1x14336xf32, #tpu.memory_space<vmem>>, vector<1x128xf32>
    %773 = vector.broadcast %772 : vector<1x128xf32> to vector<2x128xf32>
    %774 = arith.addf %771, %773 : vector<2x128xf32>
    %cst_386 = arith.constant 0.000000e+00 : f32
    %775 = vector.broadcast %cst_386 : f32 to vector<2x128xf32>
    %776 = arith.maximumf %774, %775 : vector<2x128xf32>
    %c0_387 = arith.constant 0 : index
    %c13696_388 = arith.constant 13696 : index
    %777 = vector.load %arg4[%c0_387, %c13696_388] : memref<1x14336xf32, #tpu.memory_space<vmem>>, vector<1x128xf32>
    %778 = vector.broadcast %777 : vector<1x128xf32> to vector<2x128xf32>
    %779 = arith.mulf %776, %778 : vector<2x128xf32>
    %780 = arith.addf %764, %779 : vector<2x128xf32>
    %781 = vector.broadcast %7 : f32 to vector<2x128xf32>
    %782 = arith.addf %780, %781 : vector<2x128xf32>
    %783 = math.tanh %782 : vector<2x128xf32>
    %c0_389 = arith.constant 0 : index
    %c256_390 = arith.constant 256 : index
    %784 = vector.load %arg6[%c0_389, %c256_390] : memref<2x784xf32, #tpu.memory_space<vmem>>, vector<2x128xf32>
    tpu.vector_store %arg6[%c0_389, %c256_390], %783 {strides = array<i32>} : memref<2x784xf32, #tpu.memory_space<vmem>>, vector<2x128xf32>,
    %c0_391 = arith.constant 0 : index
    %c384 = arith.constant 384 : index
    %785 = vector.load %arg2[%c0_391, %c384] : memref<2x14336xf32, #tpu.memory_space<vmem>>, vector<1x128xf32>
    %786 = vector.broadcast %785 : vector<1x128xf32> to vector<2x128xf32>
    %787 = arith.mulf %3, %786 : vector<2x128xf32>
    %c1_392 = arith.constant 1 : index
    %c384_393 = arith.constant 384 : index
    %788 = vector.load %arg2[%c1_392, %c384_393] : memref<2x14336xf32, #tpu.memory_space<vmem>>, vector<1x128xf32>
    %789 = vector.broadcast %788 : vector<1x128xf32> to vector<2x128xf32>
    %790 = arith.mulf %6, %789 : vector<2x128xf32>
    %791 = arith.addf %787, %790 : vector<2x128xf32>
    %c0_394 = arith.constant 0 : index
    %c384_395 = arith.constant 384 : index
    %792 = vector.load %arg3[%c0_394, %c384_395] : memref<1x14336xf32, #tpu.memory_space<vmem>>, vector<1x128xf32>
    %793 = vector.broadcast %792 : vector<1x128xf32> to vector<2x128xf32>
    %794 = arith.addf %791, %793 : vector<2x128xf32>
    %cst_396 = arith.constant 0.000000e+00 : f32
    %795 = vector.broadcast %cst_396 : f32 to vector<2x128xf32>
    %796 = arith.maximumf %794, %795 : vector<2x128xf32>
    %c0_397 = arith.constant 0 : index
    %c384_398 = arith.constant 384 : index
    %797 = vector.load %arg4[%c0_397, %c384_398] : memref<1x14336xf32, #tpu.memory_space<vmem>>, vector<1x128xf32>
    %798 = vector.broadcast %797 : vector<1x128xf32> to vector<2x128xf32>
    %799 = arith.mulf %796, %798 : vector<2x128xf32>
    %c0_399 = arith.constant 0 : index
    %c1280 = arith.constant 1280 : index
    %800 = vector.load %arg2[%c0_399, %c1280] : memref<2x14336xf32, #tpu.memory_space<vmem>>, vector<1x128xf32>
    %801 = vector.broadcast %800 : vector<1x128xf32> to vector<2x128xf32>
    %802 = arith.mulf %3, %801 : vector<2x128xf32>
    %c1_400 = arith.constant 1 : index
    %c1280_401 = arith.constant 1280 : index
    %803 = vector.load %arg2[%c1_400, %c1280_401] : memref<2x14336xf32, #tpu.memory_space<vmem>>, vector<1x128xf32>
    %804 = vector.broadcast %803 : vector<1x128xf32> to vector<2x128xf32>
    %805 = arith.mulf %6, %804 : vector<2x128xf32>
    %806 = arith.addf %802, %805 : vector<2x128xf32>
    %c0_402 = arith.constant 0 : index
    %c1280_403 = arith.constant 1280 : index
    %807 = vector.load %arg3[%c0_402, %c1280_403] : memref<1x14336xf32, #tpu.memory_space<vmem>>, vector<1x128xf32>
    %808 = vector.broadcast %807 : vector<1x128xf32> to vector<2x128xf32>
    %809 = arith.addf %806, %808 : vector<2x128xf32>
    %cst_404 = arith.constant 0.000000e+00 : f32
    %810 = vector.broadcast %cst_404 : f32 to vector<2x128xf32>
    %811 = arith.maximumf %809, %810 : vector<2x128xf32>
    %c0_405 = arith.constant 0 : index
    %c1280_406 = arith.constant 1280 : index
    %812 = vector.load %arg4[%c0_405, %c1280_406] : memref<1x14336xf32, #tpu.memory_space<vmem>>, vector<1x128xf32>
    %813 = vector.broadcast %812 : vector<1x128xf32> to vector<2x128xf32>
    %814 = arith.mulf %811, %813 : vector<2x128xf32>
    %815 = arith.addf %799, %814 : vector<2x128xf32>
    %c0_407 = arith.constant 0 : index
    %c2176 = arith.constant 2176 : index
    %816 = vector.load %arg2[%c0_407, %c2176] : memref<2x14336xf32, #tpu.memory_space<vmem>>, vector<1x128xf32>
    %817 = vector.broadcast %816 : vector<1x128xf32> to vector<2x128xf32>
    %818 = arith.mulf %3, %817 : vector<2x128xf32>
    %c1_408 = arith.constant 1 : index
    %c2176_409 = arith.constant 2176 : index
    %819 = vector.load %arg2[%c1_408, %c2176_409] : memref<2x14336xf32, #tpu.memory_space<vmem>>, vector<1x128xf32>
    %820 = vector.broadcast %819 : vector<1x128xf32> to vector<2x128xf32>
    %821 = arith.mulf %6, %820 : vector<2x128xf32>
    %822 = arith.addf %818, %821 : vector<2x128xf32>
    %c0_410 = arith.constant 0 : index
    %c2176_411 = arith.constant 2176 : index
    %823 = vector.load %arg3[%c0_410, %c2176_411] : memref<1x14336xf32, #tpu.memory_space<vmem>>, vector<1x128xf32>
    %824 = vector.broadcast %823 : vector<1x128xf32> to vector<2x128xf32>
    %825 = arith.addf %822, %824 : vector<2x128xf32>
    %cst_412 = arith.constant 0.000000e+00 : f32
    %826 = vector.broadcast %cst_412 : f32 to vector<2x128xf32>
    %827 = arith.maximumf %825, %826 : vector<2x128xf32>
    %c0_413 = arith.constant 0 : index
    %c2176_414 = arith.constant 2176 : index
    %828 = vector.load %arg4[%c0_413, %c2176_414] : memref<1x14336xf32, #tpu.memory_space<vmem>>, vector<1x128xf32>
    %829 = vector.broadcast %828 : vector<1x128xf32> to vector<2x128xf32>
    %830 = arith.mulf %827, %829 : vector<2x128xf32>
    %831 = arith.addf %815, %830 : vector<2x128xf32>
    %c0_415 = arith.constant 0 : index
    %c3072 = arith.constant 3072 : index
    %832 = vector.load %arg2[%c0_415, %c3072] : memref<2x14336xf32, #tpu.memory_space<vmem>>, vector<1x128xf32>
    %833 = vector.broadcast %832 : vector<1x128xf32> to vector<2x128xf32>
    %834 = arith.mulf %3, %833 : vector<2x128xf32>
    %c1_416 = arith.constant 1 : index
    %c3072_417 = arith.constant 3072 : index
    %835 = vector.load %arg2[%c1_416, %c3072_417] : memref<2x14336xf32, #tpu.memory_space<vmem>>, vector<1x128xf32>
    %836 = vector.broadcast %835 : vector<1x128xf32> to vector<2x128xf32>
    %837 = arith.mulf %6, %836 : vector<2x128xf32>
    %838 = arith.addf %834, %837 : vector<2x128xf32>
    %c0_418 = arith.constant 0 : index
    %c3072_419 = arith.constant 3072 : index
    %839 = vector.load %arg3[%c0_418, %c3072_419] : memref<1x14336xf32, #tpu.memory_space<vmem>>, vector<1x128xf32>
    %840 = vector.broadcast %839 : vector<1x128xf32> to vector<2x128xf32>
    %841 = arith.addf %838, %840 : vector<2x128xf32>
    %cst_420 = arith.constant 0.000000e+00 : f32
    %842 = vector.broadcast %cst_420 : f32 to vector<2x128xf32>
    %843 = arith.maximumf %841, %842 : vector<2x128xf32>
    %c0_421 = arith.constant 0 : index
    %c3072_422 = arith.constant 3072 : index
    %844 = vector.load %arg4[%c0_421, %c3072_422] : memref<1x14336xf32, #tpu.memory_space<vmem>>, vector<1x128xf32>
    %845 = vector.broadcast %844 : vector<1x128xf32> to vector<2x128xf32>
    %846 = arith.mulf %843, %845 : vector<2x128xf32>
    %847 = arith.addf %831, %846 : vector<2x128xf32>
    %c0_423 = arith.constant 0 : index
    %c3968 = arith.constant 3968 : index
    %848 = vector.load %arg2[%c0_423, %c3968] : memref<2x14336xf32, #tpu.memory_space<vmem>>, vector<1x128xf32>
    %849 = vector.broadcast %848 : vector<1x128xf32> to vector<2x128xf32>
    %850 = arith.mulf %3, %849 : vector<2x128xf32>
    %c1_424 = arith.constant 1 : index
    %c3968_425 = arith.constant 3968 : index
    %851 = vector.load %arg2[%c1_424, %c3968_425] : memref<2x14336xf32, #tpu.memory_space<vmem>>, vector<1x128xf32>
    %852 = vector.broadcast %851 : vector<1x128xf32> to vector<2x128xf32>
    %853 = arith.mulf %6, %852 : vector<2x128xf32>
    %854 = arith.addf %850, %853 : vector<2x128xf32>
    %c0_426 = arith.constant 0 : index
    %c3968_427 = arith.constant 3968 : index
    %855 = vector.load %arg3[%c0_426, %c3968_427] : memref<1x14336xf32, #tpu.memory_space<vmem>>, vector<1x128xf32>
    %856 = vector.broadcast %855 : vector<1x128xf32> to vector<2x128xf32>
    %857 = arith.addf %854, %856 : vector<2x128xf32>
    %cst_428 = arith.constant 0.000000e+00 : f32
    %858 = vector.broadcast %cst_428 : f32 to vector<2x128xf32>
    %859 = arith.maximumf %857, %858 : vector<2x128xf32>
    %c0_429 = arith.constant 0 : index
    %c3968_430 = arith.constant 3968 : index
    %860 = vector.load %arg4[%c0_429, %c3968_430] : memref<1x14336xf32, #tpu.memory_space<vmem>>, vector<1x128xf32>
    %861 = vector.broadcast %860 : vector<1x128xf32> to vector<2x128xf32>
    %862 = arith.mulf %859, %861 : vector<2x128xf32>
    %863 = arith.addf %847, %862 : vector<2x128xf32>
    %c0_431 = arith.constant 0 : index
    %c4864 = arith.constant 4864 : index
    %864 = vector.load %arg2[%c0_431, %c4864] : memref<2x14336xf32, #tpu.memory_space<vmem>>, vector<1x128xf32>
    %865 = vector.broadcast %864 : vector<1x128xf32> to vector<2x128xf32>
    %866 = arith.mulf %3, %865 : vector<2x128xf32>
    %c1_432 = arith.constant 1 : index
    %c4864_433 = arith.constant 4864 : index
    %867 = vector.load %arg2[%c1_432, %c4864_433] : memref<2x14336xf32, #tpu.memory_space<vmem>>, vector<1x128xf32>
    %868 = vector.broadcast %867 : vector<1x128xf32> to vector<2x128xf32>
    %869 = arith.mulf %6, %868 : vector<2x128xf32>
    %870 = arith.addf %866, %869 : vector<2x128xf32>
    %c0_434 = arith.constant 0 : index
    %c4864_435 = arith.constant 4864 : index
    %871 = vector.load %arg3[%c0_434, %c4864_435] : memref<1x14336xf32, #tpu.memory_space<vmem>>, vector<1x128xf32>
    %872 = vector.broadcast %871 : vector<1x128xf32> to vector<2x128xf32>
    %873 = arith.addf %870, %872 : vector<2x128xf32>
    %cst_436 = arith.constant 0.000000e+00 : f32
    %874 = vector.broadcast %cst_436 : f32 to vector<2x128xf32>
    %875 = arith.maximumf %873, %874 : vector<2x128xf32>
    %c0_437 = arith.constant 0 : index
    %c4864_438 = arith.constant 4864 : index
    %876 = vector.load %arg4[%c0_437, %c4864_438] : memref<1x14336xf32, #tpu.memory_space<vmem>>, vector<1x128xf32>
    %877 = vector.broadcast %876 : vector<1x128xf32> to vector<2x128xf32>
    %878 = arith.mulf %875, %877 : vector<2x128xf32>
    %879 = arith.addf %863, %878 : vector<2x128xf32>
    %c0_439 = arith.constant 0 : index
    %c5760 = arith.constant 5760 : index
    %880 = vector.load %arg2[%c0_439, %c5760] : memref<2x14336xf32, #tpu.memory_space<vmem>>, vector<1x128xf32>
    %881 = vector.broadcast %880 : vector<1x128xf32> to vector<2x128xf32>
    %882 = arith.mulf %3, %881 : vector<2x128xf32>
    %c1_440 = arith.constant 1 : index
    %c5760_441 = arith.constant 5760 : index
    %883 = vector.load %arg2[%c1_440, %c5760_441] : memref<2x14336xf32, #tpu.memory_space<vmem>>, vector<1x128xf32>
    %884 = vector.broadcast %883 : vector<1x128xf32> to vector<2x128xf32>
    %885 = arith.mulf %6, %884 : vector<2x128xf32>
    %886 = arith.addf %882, %885 : vector<2x128xf32>
    %c0_442 = arith.constant 0 : index
    %c5760_443 = arith.constant 5760 : index
    %887 = vector.load %arg3[%c0_442, %c5760_443] : memref<1x14336xf32, #tpu.memory_space<vmem>>, vector<1x128xf32>
    %888 = vector.broadcast %887 : vector<1x128xf32> to vector<2x128xf32>
    %889 = arith.addf %886, %888 : vector<2x128xf32>
    %cst_444 = arith.constant 0.000000e+00 : f32
    %890 = vector.broadcast %cst_444 : f32 to vector<2x128xf32>
    %891 = arith.maximumf %889, %890 : vector<2x128xf32>
    %c0_445 = arith.constant 0 : index
    %c5760_446 = arith.constant 5760 : index
    %892 = vector.load %arg4[%c0_445, %c5760_446] : memref<1x14336xf32, #tpu.memory_space<vmem>>, vector<1x128xf32>
    %893 = vector.broadcast %892 : vector<1x128xf32> to vector<2x128xf32>
    %894 = arith.mulf %891, %893 : vector<2x128xf32>
    %895 = arith.addf %879, %894 : vector<2x128xf32>
    %c0_447 = arith.constant 0 : index
    %c6656 = arith.constant 6656 : index
    %896 = vector.load %arg2[%c0_447, %c6656] : memref<2x14336xf32, #tpu.memory_space<vmem>>, vector<1x128xf32>
    %897 = vector.broadcast %896 : vector<1x128xf32> to vector<2x128xf32>
    %898 = arith.mulf %3, %897 : vector<2x128xf32>
    %c1_448 = arith.constant 1 : index
    %c6656_449 = arith.constant 6656 : index
    %899 = vector.load %arg2[%c1_448, %c6656_449] : memref<2x14336xf32, #tpu.memory_space<vmem>>, vector<1x128xf32>
    %900 = vector.broadcast %899 : vector<1x128xf32> to vector<2x128xf32>
    %901 = arith.mulf %6, %900 : vector<2x128xf32>
    %902 = arith.addf %898, %901 : vector<2x128xf32>
    %c0_450 = arith.constant 0 : index
    %c6656_451 = arith.constant 6656 : index
    %903 = vector.load %arg3[%c0_450, %c6656_451] : memref<1x14336xf32, #tpu.memory_space<vmem>>, vector<1x128xf32>
    %904 = vector.broadcast %903 : vector<1x128xf32> to vector<2x128xf32>
    %905 = arith.addf %902, %904 : vector<2x128xf32>
    %cst_452 = arith.constant 0.000000e+00 : f32
    %906 = vector.broadcast %cst_452 : f32 to vector<2x128xf32>
    %907 = arith.maximumf %905, %906 : vector<2x128xf32>
    %c0_453 = arith.constant 0 : index
    %c6656_454 = arith.constant 6656 : index
    %908 = vector.load %arg4[%c0_453, %c6656_454] : memref<1x14336xf32, #tpu.memory_space<vmem>>, vector<1x128xf32>
    %909 = vector.broadcast %908 : vector<1x128xf32> to vector<2x128xf32>
    %910 = arith.mulf %907, %909 : vector<2x128xf32>
    %911 = arith.addf %895, %910 : vector<2x128xf32>
    %c0_455 = arith.constant 0 : index
    %c7552 = arith.constant 7552 : index
    %912 = vector.load %arg2[%c0_455, %c7552] : memref<2x14336xf32, #tpu.memory_space<vmem>>, vector<1x128xf32>
    %913 = vector.broadcast %912 : vector<1x128xf32> to vector<2x128xf32>
    %914 = arith.mulf %3, %913 : vector<2x128xf32>
    %c1_456 = arith.constant 1 : index
    %c7552_457 = arith.constant 7552 : index
    %915 = vector.load %arg2[%c1_456, %c7552_457] : memref<2x14336xf32, #tpu.memory_space<vmem>>, vector<1x128xf32>
    %916 = vector.broadcast %915 : vector<1x128xf32> to vector<2x128xf32>
    %917 = arith.mulf %6, %916 : vector<2x128xf32>
    %918 = arith.addf %914, %917 : vector<2x128xf32>
    %c0_458 = arith.constant 0 : index
    %c7552_459 = arith.constant 7552 : index
    %919 = vector.load %arg3[%c0_458, %c7552_459] : memref<1x14336xf32, #tpu.memory_space<vmem>>, vector<1x128xf32>
    %920 = vector.broadcast %919 : vector<1x128xf32> to vector<2x128xf32>
    %921 = arith.addf %918, %920 : vector<2x128xf32>
    %cst_460 = arith.constant 0.000000e+00 : f32
    %922 = vector.broadcast %cst_460 : f32 to vector<2x128xf32>
    %923 = arith.maximumf %921, %922 : vector<2x128xf32>
    %c0_461 = arith.constant 0 : index
    %c7552_462 = arith.constant 7552 : index
    %924 = vector.load %arg4[%c0_461, %c7552_462] : memref<1x14336xf32, #tpu.memory_space<vmem>>, vector<1x128xf32>
    %925 = vector.broadcast %924 : vector<1x128xf32> to vector<2x128xf32>
    %926 = arith.mulf %923, %925 : vector<2x128xf32>
    %927 = arith.addf %911, %926 : vector<2x128xf32>
    %c0_463 = arith.constant 0 : index
    %c8448 = arith.constant 8448 : index
    %928 = vector.load %arg2[%c0_463, %c8448] : memref<2x14336xf32, #tpu.memory_space<vmem>>, vector<1x128xf32>
    %929 = vector.broadcast %928 : vector<1x128xf32> to vector<2x128xf32>
    %930 = arith.mulf %3, %929 : vector<2x128xf32>
    %c1_464 = arith.constant 1 : index
    %c8448_465 = arith.constant 8448 : index
    %931 = vector.load %arg2[%c1_464, %c8448_465] : memref<2x14336xf32, #tpu.memory_space<vmem>>, vector<1x128xf32>
    %932 = vector.broadcast %931 : vector<1x128xf32> to vector<2x128xf32>
    %933 = arith.mulf %6, %932 : vector<2x128xf32>
    %934 = arith.addf %930, %933 : vector<2x128xf32>
    %c0_466 = arith.constant 0 : index
    %c8448_467 = arith.constant 8448 : index
    %935 = vector.load %arg3[%c0_466, %c8448_467] : memref<1x14336xf32, #tpu.memory_space<vmem>>, vector<1x128xf32>
    %936 = vector.broadcast %935 : vector<1x128xf32> to vector<2x128xf32>
    %937 = arith.addf %934, %936 : vector<2x128xf32>
    %cst_468 = arith.constant 0.000000e+00 : f32
    %938 = vector.broadcast %cst_468 : f32 to vector<2x128xf32>
    %939 = arith.maximumf %937, %938 : vector<2x128xf32>
    %c0_469 = arith.constant 0 : index
    %c8448_470 = arith.constant 8448 : index
    %940 = vector.load %arg4[%c0_469, %c8448_470] : memref<1x14336xf32, #tpu.memory_space<vmem>>, vector<1x128xf32>
    %941 = vector.broadcast %940 : vector<1x128xf32> to vector<2x128xf32>
    %942 = arith.mulf %939, %941 : vector<2x128xf32>
    %943 = arith.addf %927, %942 : vector<2x128xf32>
    %c0_471 = arith.constant 0 : index
    %c9344 = arith.constant 9344 : index
    %944 = vector.load %arg2[%c0_471, %c9344] : memref<2x14336xf32, #tpu.memory_space<vmem>>, vector<1x128xf32>
    %945 = vector.broadcast %944 : vector<1x128xf32> to vector<2x128xf32>
    %946 = arith.mulf %3, %945 : vector<2x128xf32>
    %c1_472 = arith.constant 1 : index
    %c9344_473 = arith.constant 9344 : index
    %947 = vector.load %arg2[%c1_472, %c9344_473] : memref<2x14336xf32, #tpu.memory_space<vmem>>, vector<1x128xf32>
    %948 = vector.broadcast %947 : vector<1x128xf32> to vector<2x128xf32>
    %949 = arith.mulf %6, %948 : vector<2x128xf32>
    %950 = arith.addf %946, %949 : vector<2x128xf32>
    %c0_474 = arith.constant 0 : index
    %c9344_475 = arith.constant 9344 : index
    %951 = vector.load %arg3[%c0_474, %c9344_475] : memref<1x14336xf32, #tpu.memory_space<vmem>>, vector<1x128xf32>
    %952 = vector.broadcast %951 : vector<1x128xf32> to vector<2x128xf32>
    %953 = arith.addf %950, %952 : vector<2x128xf32>
    %cst_476 = arith.constant 0.000000e+00 : f32
    %954 = vector.broadcast %cst_476 : f32 to vector<2x128xf32>
    %955 = arith.maximumf %953, %954 : vector<2x128xf32>
    %c0_477 = arith.constant 0 : index
    %c9344_478 = arith.constant 9344 : index
    %956 = vector.load %arg4[%c0_477, %c9344_478] : memref<1x14336xf32, #tpu.memory_space<vmem>>, vector<1x128xf32>
    %957 = vector.broadcast %956 : vector<1x128xf32> to vector<2x128xf32>
    %958 = arith.mulf %955, %957 : vector<2x128xf32>
    %959 = arith.addf %943, %958 : vector<2x128xf32>
    %c0_479 = arith.constant 0 : index
    %c10240 = arith.constant 10240 : index
    %960 = vector.load %arg2[%c0_479, %c10240] : memref<2x14336xf32, #tpu.memory_space<vmem>>, vector<1x128xf32>
    %961 = vector.broadcast %960 : vector<1x128xf32> to vector<2x128xf32>
    %962 = arith.mulf %3, %961 : vector<2x128xf32>
    %c1_480 = arith.constant 1 : index
    %c10240_481 = arith.constant 10240 : index
    %963 = vector.load %arg2[%c1_480, %c10240_481] : memref<2x14336xf32, #tpu.memory_space<vmem>>, vector<1x128xf32>
    %964 = vector.broadcast %963 : vector<1x128xf32> to vector<2x128xf32>
    %965 = arith.mulf %6, %964 : vector<2x128xf32>
    %966 = arith.addf %962, %965 : vector<2x128xf32>
    %c0_482 = arith.constant 0 : index
    %c10240_483 = arith.constant 10240 : index
    %967 = vector.load %arg3[%c0_482, %c10240_483] : memref<1x14336xf32, #tpu.memory_space<vmem>>, vector<1x128xf32>
    %968 = vector.broadcast %967 : vector<1x128xf32> to vector<2x128xf32>
    %969 = arith.addf %966, %968 : vector<2x128xf32>
    %cst_484 = arith.constant 0.000000e+00 : f32
    %970 = vector.broadcast %cst_484 : f32 to vector<2x128xf32>
    %971 = arith.maximumf %969, %970 : vector<2x128xf32>
    %c0_485 = arith.constant 0 : index
    %c10240_486 = arith.constant 10240 : index
    %972 = vector.load %arg4[%c0_485, %c10240_486] : memref<1x14336xf32, #tpu.memory_space<vmem>>, vector<1x128xf32>
    %973 = vector.broadcast %972 : vector<1x128xf32> to vector<2x128xf32>
    %974 = arith.mulf %971, %973 : vector<2x128xf32>
    %975 = arith.addf %959, %974 : vector<2x128xf32>
    %c0_487 = arith.constant 0 : index
    %c11136 = arith.constant 11136 : index
    %976 = vector.load %arg2[%c0_487, %c11136] : memref<2x14336xf32, #tpu.memory_space<vmem>>, vector<1x128xf32>
    %977 = vector.broadcast %976 : vector<1x128xf32> to vector<2x128xf32>
    %978 = arith.mulf %3, %977 : vector<2x128xf32>
    %c1_488 = arith.constant 1 : index
    %c11136_489 = arith.constant 11136 : index
    %979 = vector.load %arg2[%c1_488, %c11136_489] : memref<2x14336xf32, #tpu.memory_space<vmem>>, vector<1x128xf32>
    %980 = vector.broadcast %979 : vector<1x128xf32> to vector<2x128xf32>
    %981 = arith.mulf %6, %980 : vector<2x128xf32>
    %982 = arith.addf %978, %981 : vector<2x128xf32>
    %c0_490 = arith.constant 0 : index
    %c11136_491 = arith.constant 11136 : index
    %983 = vector.load %arg3[%c0_490, %c11136_491] : memref<1x14336xf32, #tpu.memory_space<vmem>>, vector<1x128xf32>
    %984 = vector.broadcast %983 : vector<1x128xf32> to vector<2x128xf32>
    %985 = arith.addf %982, %984 : vector<2x128xf32>
    %cst_492 = arith.constant 0.000000e+00 : f32
    %986 = vector.broadcast %cst_492 : f32 to vector<2x128xf32>
    %987 = arith.maximumf %985, %986 : vector<2x128xf32>
    %c0_493 = arith.constant 0 : index
    %c11136_494 = arith.constant 11136 : index
    %988 = vector.load %arg4[%c0_493, %c11136_494] : memref<1x14336xf32, #tpu.memory_space<vmem>>, vector<1x128xf32>
    %989 = vector.broadcast %988 : vector<1x128xf32> to vector<2x128xf32>
    %990 = arith.mulf %987, %989 : vector<2x128xf32>
    %991 = arith.addf %975, %990 : vector<2x128xf32>
    %c0_495 = arith.constant 0 : index
    %c12032 = arith.constant 12032 : index
    %992 = vector.load %arg2[%c0_495, %c12032] : memref<2x14336xf32, #tpu.memory_space<vmem>>, vector<1x128xf32>
    %993 = vector.broadcast %992 : vector<1x128xf32> to vector<2x128xf32>
    %994 = arith.mulf %3, %993 : vector<2x128xf32>
    %c1_496 = arith.constant 1 : index
    %c12032_497 = arith.constant 12032 : index
    %995 = vector.load %arg2[%c1_496, %c12032_497] : memref<2x14336xf32, #tpu.memory_space<vmem>>, vector<1x128xf32>
    %996 = vector.broadcast %995 : vector<1x128xf32> to vector<2x128xf32>
    %997 = arith.mulf %6, %996 : vector<2x128xf32>
    %998 = arith.addf %994, %997 : vector<2x128xf32>
    %c0_498 = arith.constant 0 : index
    %c12032_499 = arith.constant 12032 : index
    %999 = vector.load %arg3[%c0_498, %c12032_499] : memref<1x14336xf32, #tpu.memory_space<vmem>>, vector<1x128xf32>
    %1000 = vector.broadcast %999 : vector<1x128xf32> to vector<2x128xf32>
    %1001 = arith.addf %998, %1000 : vector<2x128xf32>
    %cst_500 = arith.constant 0.000000e+00 : f32
    %1002 = vector.broadcast %cst_500 : f32 to vector<2x128xf32>
    %1003 = arith.maximumf %1001, %1002 : vector<2x128xf32>
    %c0_501 = arith.constant 0 : index
    %c12032_502 = arith.constant 12032 : index
    %1004 = vector.load %arg4[%c0_501, %c12032_502] : memref<1x14336xf32, #tpu.memory_space<vmem>>, vector<1x128xf32>
    %1005 = vector.broadcast %1004 : vector<1x128xf32> to vector<2x128xf32>
    %1006 = arith.mulf %1003, %1005 : vector<2x128xf32>
    %1007 = arith.addf %991, %1006 : vector<2x128xf32>
    %c0_503 = arith.constant 0 : index
    %c12928 = arith.constant 12928 : index
    %1008 = vector.load %arg2[%c0_503, %c12928] : memref<2x14336xf32, #tpu.memory_space<vmem>>, vector<1x128xf32>
    %1009 = vector.broadcast %1008 : vector<1x128xf32> to vector<2x128xf32>
    %1010 = arith.mulf %3, %1009 : vector<2x128xf32>
    %c1_504 = arith.constant 1 : index
    %c12928_505 = arith.constant 12928 : index
    %1011 = vector.load %arg2[%c1_504, %c12928_505] : memref<2x14336xf32, #tpu.memory_space<vmem>>, vector<1x128xf32>
    %1012 = vector.broadcast %1011 : vector<1x128xf32> to vector<2x128xf32>
    %1013 = arith.mulf %6, %1012 : vector<2x128xf32>
    %1014 = arith.addf %1010, %1013 : vector<2x128xf32>
    %c0_506 = arith.constant 0 : index
    %c12928_507 = arith.constant 12928 : index
    %1015 = vector.load %arg3[%c0_506, %c12928_507] : memref<1x14336xf32, #tpu.memory_space<vmem>>, vector<1x128xf32>
    %1016 = vector.broadcast %1015 : vector<1x128xf32> to vector<2x128xf32>
    %1017 = arith.addf %1014, %1016 : vector<2x128xf32>
    %cst_508 = arith.constant 0.000000e+00 : f32
    %1018 = vector.broadcast %cst_508 : f32 to vector<2x128xf32>
    %1019 = arith.maximumf %1017, %1018 : vector<2x128xf32>
    %c0_509 = arith.constant 0 : index
    %c12928_510 = arith.constant 12928 : index
    %1020 = vector.load %arg4[%c0_509, %c12928_510] : memref<1x14336xf32, #tpu.memory_space<vmem>>, vector<1x128xf32>
    %1021 = vector.broadcast %1020 : vector<1x128xf32> to vector<2x128xf32>
    %1022 = arith.mulf %1019, %1021 : vector<2x128xf32>
    %1023 = arith.addf %1007, %1022 : vector<2x128xf32>
    %c0_511 = arith.constant 0 : index
    %c13824 = arith.constant 13824 : index
    %1024 = vector.load %arg2[%c0_511, %c13824] : memref<2x14336xf32, #tpu.memory_space<vmem>>, vector<1x128xf32>
    %1025 = vector.broadcast %1024 : vector<1x128xf32> to vector<2x128xf32>
    %1026 = arith.mulf %3, %1025 : vector<2x128xf32>
    %c1_512 = arith.constant 1 : index
    %c13824_513 = arith.constant 13824 : index
    %1027 = vector.load %arg2[%c1_512, %c13824_513] : memref<2x14336xf32, #tpu.memory_space<vmem>>, vector<1x128xf32>
    %1028 = vector.broadcast %1027 : vector<1x128xf32> to vector<2x128xf32>
    %1029 = arith.mulf %6, %1028 : vector<2x128xf32>
    %1030 = arith.addf %1026, %1029 : vector<2x128xf32>
    %c0_514 = arith.constant 0 : index
    %c13824_515 = arith.constant 13824 : index
    %1031 = vector.load %arg3[%c0_514, %c13824_515] : memref<1x14336xf32, #tpu.memory_space<vmem>>, vector<1x128xf32>
    %1032 = vector.broadcast %1031 : vector<1x128xf32> to vector<2x128xf32>
    %1033 = arith.addf %1030, %1032 : vector<2x128xf32>
    %cst_516 = arith.constant 0.000000e+00 : f32
    %1034 = vector.broadcast %cst_516 : f32 to vector<2x128xf32>
    %1035 = arith.maximumf %1033, %1034 : vector<2x128xf32>
    %c0_517 = arith.constant 0 : index
    %c13824_518 = arith.constant 13824 : index
    %1036 = vector.load %arg4[%c0_517, %c13824_518] : memref<1x14336xf32, #tpu.memory_space<vmem>>, vector<1x128xf32>
    %1037 = vector.broadcast %1036 : vector<1x128xf32> to vector<2x128xf32>
    %1038 = arith.mulf %1035, %1037 : vector<2x128xf32>
    %1039 = arith.addf %1023, %1038 : vector<2x128xf32>
    %1040 = vector.broadcast %7 : f32 to vector<2x128xf32>
    %1041 = arith.addf %1039, %1040 : vector<2x128xf32>
    %1042 = math.tanh %1041 : vector<2x128xf32>
    %c0_519 = arith.constant 0 : index
    %c384_520 = arith.constant 384 : index
    %1043 = vector.load %arg6[%c0_519, %c384_520] : memref<2x784xf32, #tpu.memory_space<vmem>>, vector<2x128xf32>
    tpu.vector_store %arg6[%c0_519, %c384_520], %1042 {strides = array<i32>} : memref<2x784xf32, #tpu.memory_space<vmem>>, vector<2x128xf32>,
    %c0_521 = arith.constant 0 : index
    %c512 = arith.constant 512 : index
    %1044 = vector.load %arg2[%c0_521, %c512] : memref<2x14336xf32, #tpu.memory_space<vmem>>, vector<1x128xf32>
    %1045 = vector.broadcast %1044 : vector<1x128xf32> to vector<2x128xf32>
    %1046 = arith.mulf %3, %1045 : vector<2x128xf32>
    %c1_522 = arith.constant 1 : index
    %c512_523 = arith.constant 512 : index
    %1047 = vector.load %arg2[%c1_522, %c512_523] : memref<2x14336xf32, #tpu.memory_space<vmem>>, vector<1x128xf32>
    %1048 = vector.broadcast %1047 : vector<1x128xf32> to vector<2x128xf32>
    %1049 = arith.mulf %6, %1048 : vector<2x128xf32>
    %1050 = arith.addf %1046, %1049 : vector<2x128xf32>
    %c0_524 = arith.constant 0 : index
    %c512_525 = arith.constant 512 : index
    %1051 = vector.load %arg3[%c0_524, %c512_525] : memref<1x14336xf32, #tpu.memory_space<vmem>>, vector<1x128xf32>
    %1052 = vector.broadcast %1051 : vector<1x128xf32> to vector<2x128xf32>
    %1053 = arith.addf %1050, %1052 : vector<2x128xf32>
    %cst_526 = arith.constant 0.000000e+00 : f32
    %1054 = vector.broadcast %cst_526 : f32 to vector<2x128xf32>
    %1055 = arith.maximumf %1053, %1054 : vector<2x128xf32>
    %c0_527 = arith.constant 0 : index
    %c512_528 = arith.constant 512 : index
    %1056 = vector.load %arg4[%c0_527, %c512_528] : memref<1x14336xf32, #tpu.memory_space<vmem>>, vector<1x128xf32>
    %1057 = vector.broadcast %1056 : vector<1x128xf32> to vector<2x128xf32>
    %1058 = arith.mulf %1055, %1057 : vector<2x128xf32>
    %c0_529 = arith.constant 0 : index
    %c1408 = arith.constant 1408 : index
    %1059 = vector.load %arg2[%c0_529, %c1408] : memref<2x14336xf32, #tpu.memory_space<vmem>>, vector<1x128xf32>
    %1060 = vector.broadcast %1059 : vector<1x128xf32> to vector<2x128xf32>
    %1061 = arith.mulf %3, %1060 : vector<2x128xf32>
    %c1_530 = arith.constant 1 : index
    %c1408_531 = arith.constant 1408 : index
    %1062 = vector.load %arg2[%c1_530, %c1408_531] : memref<2x14336xf32, #tpu.memory_space<vmem>>, vector<1x128xf32>
    %1063 = vector.broadcast %1062 : vector<1x128xf32> to vector<2x128xf32>
    %1064 = arith.mulf %6, %1063 : vector<2x128xf32>
    %1065 = arith.addf %1061, %1064 : vector<2x128xf32>
    %c0_532 = arith.constant 0 : index
    %c1408_533 = arith.constant 1408 : index
    %1066 = vector.load %arg3[%c0_532, %c1408_533] : memref<1x14336xf32, #tpu.memory_space<vmem>>, vector<1x128xf32>
    %1067 = vector.broadcast %1066 : vector<1x128xf32> to vector<2x128xf32>
    %1068 = arith.addf %1065, %1067 : vector<2x128xf32>
    %cst_534 = arith.constant 0.000000e+00 : f32
    %1069 = vector.broadcast %cst_534 : f32 to vector<2x128xf32>
    %1070 = arith.maximumf %1068, %1069 : vector<2x128xf32>
    %c0_535 = arith.constant 0 : index
    %c1408_536 = arith.constant 1408 : index
    %1071 = vector.load %arg4[%c0_535, %c1408_536] : memref<1x14336xf32, #tpu.memory_space<vmem>>, vector<1x128xf32>
    %1072 = vector.broadcast %1071 : vector<1x128xf32> to vector<2x128xf32>
    %1073 = arith.mulf %1070, %1072 : vector<2x128xf32>
    %1074 = arith.addf %1058, %1073 : vector<2x128xf32>
    %c0_537 = arith.constant 0 : index
    %c2304 = arith.constant 2304 : index
    %1075 = vector.load %arg2[%c0_537, %c2304] : memref<2x14336xf32, #tpu.memory_space<vmem>>, vector<1x128xf32>
    %1076 = vector.broadcast %1075 : vector<1x128xf32> to vector<2x128xf32>
    %1077 = arith.mulf %3, %1076 : vector<2x128xf32>
    %c1_538 = arith.constant 1 : index
    %c2304_539 = arith.constant 2304 : index
    %1078 = vector.load %arg2[%c1_538, %c2304_539] : memref<2x14336xf32, #tpu.memory_space<vmem>>, vector<1x128xf32>
    %1079 = vector.broadcast %1078 : vector<1x128xf32> to vector<2x128xf32>
    %1080 = arith.mulf %6, %1079 : vector<2x128xf32>
    %1081 = arith.addf %1077, %1080 : vector<2x128xf32>
    %c0_540 = arith.constant 0 : index
    %c2304_541 = arith.constant 2304 : index
    %1082 = vector.load %arg3[%c0_540, %c2304_541] : memref<1x14336xf32, #tpu.memory_space<vmem>>, vector<1x128xf32>
    %1083 = vector.broadcast %1082 : vector<1x128xf32> to vector<2x128xf32>
    %1084 = arith.addf %1081, %1083 : vector<2x128xf32>
    %cst_542 = arith.constant 0.000000e+00 : f32
    %1085 = vector.broadcast %cst_542 : f32 to vector<2x128xf32>
    %1086 = arith.maximumf %1084, %1085 : vector<2x128xf32>
    %c0_543 = arith.constant 0 : index
    %c2304_544 = arith.constant 2304 : index
    %1087 = vector.load %arg4[%c0_543, %c2304_544] : memref<1x14336xf32, #tpu.memory_space<vmem>>, vector<1x128xf32>
    %1088 = vector.broadcast %1087 : vector<1x128xf32> to vector<2x128xf32>
    %1089 = arith.mulf %1086, %1088 : vector<2x128xf32>
    %1090 = arith.addf %1074, %1089 : vector<2x128xf32>
    %c0_545 = arith.constant 0 : index
    %c3200 = arith.constant 3200 : index
    %1091 = vector.load %arg2[%c0_545, %c3200] : memref<2x14336xf32, #tpu.memory_space<vmem>>, vector<1x128xf32>
    %1092 = vector.broadcast %1091 : vector<1x128xf32> to vector<2x128xf32>
    %1093 = arith.mulf %3, %1092 : vector<2x128xf32>
    %c1_546 = arith.constant 1 : index
    %c3200_547 = arith.constant 3200 : index
    %1094 = vector.load %arg2[%c1_546, %c3200_547] : memref<2x14336xf32, #tpu.memory_space<vmem>>, vector<1x128xf32>
    %1095 = vector.broadcast %1094 : vector<1x128xf32> to vector<2x128xf32>
    %1096 = arith.mulf %6, %1095 : vector<2x128xf32>
    %1097 = arith.addf %1093, %1096 : vector<2x128xf32>
    %c0_548 = arith.constant 0 : index
    %c3200_549 = arith.constant 3200 : index
    %1098 = vector.load %arg3[%c0_548, %c3200_549] : memref<1x14336xf32, #tpu.memory_space<vmem>>, vector<1x128xf32>
    %1099 = vector.broadcast %1098 : vector<1x128xf32> to vector<2x128xf32>
    %1100 = arith.addf %1097, %1099 : vector<2x128xf32>
    %cst_550 = arith.constant 0.000000e+00 : f32
    %1101 = vector.broadcast %cst_550 : f32 to vector<2x128xf32>
    %1102 = arith.maximumf %1100, %1101 : vector<2x128xf32>
    %c0_551 = arith.constant 0 : index
    %c3200_552 = arith.constant 3200 : index
    %1103 = vector.load %arg4[%c0_551, %c3200_552] : memref<1x14336xf32, #tpu.memory_space<vmem>>, vector<1x128xf32>
    %1104 = vector.broadcast %1103 : vector<1x128xf32> to vector<2x128xf32>
    %1105 = arith.mulf %1102, %1104 : vector<2x128xf32>
    %1106 = arith.addf %1090, %1105 : vector<2x128xf32>
    %c0_553 = arith.constant 0 : index
    %c4096 = arith.constant 4096 : index
    %1107 = vector.load %arg2[%c0_553, %c4096] : memref<2x14336xf32, #tpu.memory_space<vmem>>, vector<1x128xf32>
    %1108 = vector.broadcast %1107 : vector<1x128xf32> to vector<2x128xf32>
    %1109 = arith.mulf %3, %1108 : vector<2x128xf32>
    %c1_554 = arith.constant 1 : index
    %c4096_555 = arith.constant 4096 : index
    %1110 = vector.load %arg2[%c1_554, %c4096_555] : memref<2x14336xf32, #tpu.memory_space<vmem>>, vector<1x128xf32>
    %1111 = vector.broadcast %1110 : vector<1x128xf32> to vector<2x128xf32>
    %1112 = arith.mulf %6, %1111 : vector<2x128xf32>
    %1113 = arith.addf %1109, %1112 : vector<2x128xf32>
    %c0_556 = arith.constant 0 : index
    %c4096_557 = arith.constant 4096 : index
    %1114 = vector.load %arg3[%c0_556, %c4096_557] : memref<1x14336xf32, #tpu.memory_space<vmem>>, vector<1x128xf32>
    %1115 = vector.broadcast %1114 : vector<1x128xf32> to vector<2x128xf32>
    %1116 = arith.addf %1113, %1115 : vector<2x128xf32>
    %cst_558 = arith.constant 0.000000e+00 : f32
    %1117 = vector.broadcast %cst_558 : f32 to vector<2x128xf32>
    %1118 = arith.maximumf %1116, %1117 : vector<2x128xf32>
    %c0_559 = arith.constant 0 : index
    %c4096_560 = arith.constant 4096 : index
    %1119 = vector.load %arg4[%c0_559, %c4096_560] : memref<1x14336xf32, #tpu.memory_space<vmem>>, vector<1x128xf32>
    %1120 = vector.broadcast %1119 : vector<1x128xf32> to vector<2x128xf32>
    %1121 = arith.mulf %1118, %1120 : vector<2x128xf32>
    %1122 = arith.addf %1106, %1121 : vector<2x128xf32>
    %c0_561 = arith.constant 0 : index
    %c4992 = arith.constant 4992 : index
    %1123 = vector.load %arg2[%c0_561, %c4992] : memref<2x14336xf32, #tpu.memory_space<vmem>>, vector<1x128xf32>
    %1124 = vector.broadcast %1123 : vector<1x128xf32> to vector<2x128xf32>
    %1125 = arith.mulf %3, %1124 : vector<2x128xf32>
    %c1_562 = arith.constant 1 : index
    %c4992_563 = arith.constant 4992 : index
    %1126 = vector.load %arg2[%c1_562, %c4992_563] : memref<2x14336xf32, #tpu.memory_space<vmem>>, vector<1x128xf32>
    %1127 = vector.broadcast %1126 : vector<1x128xf32> to vector<2x128xf32>
    %1128 = arith.mulf %6, %1127 : vector<2x128xf32>
    %1129 = arith.addf %1125, %1128 : vector<2x128xf32>
    %c0_564 = arith.constant 0 : index
    %c4992_565 = arith.constant 4992 : index
    %1130 = vector.load %arg3[%c0_564, %c4992_565] : memref<1x14336xf32, #tpu.memory_space<vmem>>, vector<1x128xf32>
    %1131 = vector.broadcast %1130 : vector<1x128xf32> to vector<2x128xf32>
    %1132 = arith.addf %1129, %1131 : vector<2x128xf32>
    %cst_566 = arith.constant 0.000000e+00 : f32
    %1133 = vector.broadcast %cst_566 : f32 to vector<2x128xf32>
    %1134 = arith.maximumf %1132, %1133 : vector<2x128xf32>
    %c0_567 = arith.constant 0 : index
    %c4992_568 = arith.constant 4992 : index
    %1135 = vector.load %arg4[%c0_567, %c4992_568] : memref<1x14336xf32, #tpu.memory_space<vmem>>, vector<1x128xf32>
    %1136 = vector.broadcast %1135 : vector<1x128xf32> to vector<2x128xf32>
    %1137 = arith.mulf %1134, %1136 : vector<2x128xf32>
    %1138 = arith.addf %1122, %1137 : vector<2x128xf32>
    %c0_569 = arith.constant 0 : index
    %c5888 = arith.constant 5888 : index
    %1139 = vector.load %arg2[%c0_569, %c5888] : memref<2x14336xf32, #tpu.memory_space<vmem>>, vector<1x128xf32>
    %1140 = vector.broadcast %1139 : vector<1x128xf32> to vector<2x128xf32>
    %1141 = arith.mulf %3, %1140 : vector<2x128xf32>
    %c1_570 = arith.constant 1 : index
    %c5888_571 = arith.constant 5888 : index
    %1142 = vector.load %arg2[%c1_570, %c5888_571] : memref<2x14336xf32, #tpu.memory_space<vmem>>, vector<1x128xf32>
    %1143 = vector.broadcast %1142 : vector<1x128xf32> to vector<2x128xf32>
    %1144 = arith.mulf %6, %1143 : vector<2x128xf32>
    %1145 = arith.addf %1141, %1144 : vector<2x128xf32>
    %c0_572 = arith.constant 0 : index
    %c5888_573 = arith.constant 5888 : index
    %1146 = vector.load %arg3[%c0_572, %c5888_573] : memref<1x14336xf32, #tpu.memory_space<vmem>>, vector<1x128xf32>
    %1147 = vector.broadcast %1146 : vector<1x128xf32> to vector<2x128xf32>
    %1148 = arith.addf %1145, %1147 : vector<2x128xf32>
    %cst_574 = arith.constant 0.000000e+00 : f32
    %1149 = vector.broadcast %cst_574 : f32 to vector<2x128xf32>
    %1150 = arith.maximumf %1148, %1149 : vector<2x128xf32>
    %c0_575 = arith.constant 0 : index
    %c5888_576 = arith.constant 5888 : index
    %1151 = vector.load %arg4[%c0_575, %c5888_576] : memref<1x14336xf32, #tpu.memory_space<vmem>>, vector<1x128xf32>
    %1152 = vector.broadcast %1151 : vector<1x128xf32> to vector<2x128xf32>
    %1153 = arith.mulf %1150, %1152 : vector<2x128xf32>
    %1154 = arith.addf %1138, %1153 : vector<2x128xf32>
    %c0_577 = arith.constant 0 : index
    %c6784 = arith.constant 6784 : index
    %1155 = vector.load %arg2[%c0_577, %c6784] : memref<2x14336xf32, #tpu.memory_space<vmem>>, vector<1x128xf32>
    %1156 = vector.broadcast %1155 : vector<1x128xf32> to vector<2x128xf32>
    %1157 = arith.mulf %3, %1156 : vector<2x128xf32>
    %c1_578 = arith.constant 1 : index
    %c6784_579 = arith.constant 6784 : index
    %1158 = vector.load %arg2[%c1_578, %c6784_579] : memref<2x14336xf32, #tpu.memory_space<vmem>>, vector<1x128xf32>
    %1159 = vector.broadcast %1158 : vector<1x128xf32> to vector<2x128xf32>
    %1160 = arith.mulf %6, %1159 : vector<2x128xf32>
    %1161 = arith.addf %1157, %1160 : vector<2x128xf32>
    %c0_580 = arith.constant 0 : index
    %c6784_581 = arith.constant 6784 : index
    %1162 = vector.load %arg3[%c0_580, %c6784_581] : memref<1x14336xf32, #tpu.memory_space<vmem>>, vector<1x128xf32>
    %1163 = vector.broadcast %1162 : vector<1x128xf32> to vector<2x128xf32>
    %1164 = arith.addf %1161, %1163 : vector<2x128xf32>
    %cst_582 = arith.constant 0.000000e+00 : f32
    %1165 = vector.broadcast %cst_582 : f32 to vector<2x128xf32>
    %1166 = arith.maximumf %1164, %1165 : vector<2x128xf32>
    %c0_583 = arith.constant 0 : index
    %c6784_584 = arith.constant 6784 : index
    %1167 = vector.load %arg4[%c0_583, %c6784_584] : memref<1x14336xf32, #tpu.memory_space<vmem>>, vector<1x128xf32>
    %1168 = vector.broadcast %1167 : vector<1x128xf32> to vector<2x128xf32>
    %1169 = arith.mulf %1166, %1168 : vector<2x128xf32>
    %1170 = arith.addf %1154, %1169 : vector<2x128xf32>
    %c0_585 = arith.constant 0 : index
    %c7680 = arith.constant 7680 : index
    %1171 = vector.load %arg2[%c0_585, %c7680] : memref<2x14336xf32, #tpu.memory_space<vmem>>, vector<1x128xf32>
    %1172 = vector.broadcast %1171 : vector<1x128xf32> to vector<2x128xf32>
    %1173 = arith.mulf %3, %1172 : vector<2x128xf32>
    %c1_586 = arith.constant 1 : index
    %c7680_587 = arith.constant 7680 : index
    %1174 = vector.load %arg2[%c1_586, %c7680_587] : memref<2x14336xf32, #tpu.memory_space<vmem>>, vector<1x128xf32>
    %1175 = vector.broadcast %1174 : vector<1x128xf32> to vector<2x128xf32>
    %1176 = arith.mulf %6, %1175 : vector<2x128xf32>
    %1177 = arith.addf %1173, %1176 : vector<2x128xf32>
    %c0_588 = arith.constant 0 : index
    %c7680_589 = arith.constant 7680 : index
    %1178 = vector.load %arg3[%c0_588, %c7680_589] : memref<1x14336xf32, #tpu.memory_space<vmem>>, vector<1x128xf32>
    %1179 = vector.broadcast %1178 : vector<1x128xf32> to vector<2x128xf32>
    %1180 = arith.addf %1177, %1179 : vector<2x128xf32>
    %cst_590 = arith.constant 0.000000e+00 : f32
    %1181 = vector.broadcast %cst_590 : f32 to vector<2x128xf32>
    %1182 = arith.maximumf %1180, %1181 : vector<2x128xf32>
    %c0_591 = arith.constant 0 : index
    %c7680_592 = arith.constant 7680 : index
    %1183 = vector.load %arg4[%c0_591, %c7680_592] : memref<1x14336xf32, #tpu.memory_space<vmem>>, vector<1x128xf32>
    %1184 = vector.broadcast %1183 : vector<1x128xf32> to vector<2x128xf32>
    %1185 = arith.mulf %1182, %1184 : vector<2x128xf32>
    %1186 = arith.addf %1170, %1185 : vector<2x128xf32>
    %c0_593 = arith.constant 0 : index
    %c8576 = arith.constant 8576 : index
    %1187 = vector.load %arg2[%c0_593, %c8576] : memref<2x14336xf32, #tpu.memory_space<vmem>>, vector<1x128xf32>
    %1188 = vector.broadcast %1187 : vector<1x128xf32> to vector<2x128xf32>
    %1189 = arith.mulf %3, %1188 : vector<2x128xf32>
    %c1_594 = arith.constant 1 : index
    %c8576_595 = arith.constant 8576 : index
    %1190 = vector.load %arg2[%c1_594, %c8576_595] : memref<2x14336xf32, #tpu.memory_space<vmem>>, vector<1x128xf32>
    %1191 = vector.broadcast %1190 : vector<1x128xf32> to vector<2x128xf32>
    %1192 = arith.mulf %6, %1191 : vector<2x128xf32>
    %1193 = arith.addf %1189, %1192 : vector<2x128xf32>
    %c0_596 = arith.constant 0 : index
    %c8576_597 = arith.constant 8576 : index
    %1194 = vector.load %arg3[%c0_596, %c8576_597] : memref<1x14336xf32, #tpu.memory_space<vmem>>, vector<1x128xf32>
    %1195 = vector.broadcast %1194 : vector<1x128xf32> to vector<2x128xf32>
    %1196 = arith.addf %1193, %1195 : vector<2x128xf32>
    %cst_598 = arith.constant 0.000000e+00 : f32
    %1197 = vector.broadcast %cst_598 : f32 to vector<2x128xf32>
    %1198 = arith.maximumf %1196, %1197 : vector<2x128xf32>
    %c0_599 = arith.constant 0 : index
    %c8576_600 = arith.constant 8576 : index
    %1199 = vector.load %arg4[%c0_599, %c8576_600] : memref<1x14336xf32, #tpu.memory_space<vmem>>, vector<1x128xf32>
    %1200 = vector.broadcast %1199 : vector<1x128xf32> to vector<2x128xf32>
    %1201 = arith.mulf %1198, %1200 : vector<2x128xf32>
    %1202 = arith.addf %1186, %1201 : vector<2x128xf32>
    %c0_601 = arith.constant 0 : index
    %c9472 = arith.constant 9472 : index
    %1203 = vector.load %arg2[%c0_601, %c9472] : memref<2x14336xf32, #tpu.memory_space<vmem>>, vector<1x128xf32>
    %1204 = vector.broadcast %1203 : vector<1x128xf32> to vector<2x128xf32>
    %1205 = arith.mulf %3, %1204 : vector<2x128xf32>
    %c1_602 = arith.constant 1 : index
    %c9472_603 = arith.constant 9472 : index
    %1206 = vector.load %arg2[%c1_602, %c9472_603] : memref<2x14336xf32, #tpu.memory_space<vmem>>, vector<1x128xf32>
    %1207 = vector.broadcast %1206 : vector<1x128xf32> to vector<2x128xf32>
    %1208 = arith.mulf %6, %1207 : vector<2x128xf32>
    %1209 = arith.addf %1205, %1208 : vector<2x128xf32>
    %c0_604 = arith.constant 0 : index
    %c9472_605 = arith.constant 9472 : index
    %1210 = vector.load %arg3[%c0_604, %c9472_605] : memref<1x14336xf32, #tpu.memory_space<vmem>>, vector<1x128xf32>
    %1211 = vector.broadcast %1210 : vector<1x128xf32> to vector<2x128xf32>
    %1212 = arith.addf %1209, %1211 : vector<2x128xf32>
    %cst_606 = arith.constant 0.000000e+00 : f32
    %1213 = vector.broadcast %cst_606 : f32 to vector<2x128xf32>
    %1214 = arith.maximumf %1212, %1213 : vector<2x128xf32>
    %c0_607 = arith.constant 0 : index
    %c9472_608 = arith.constant 9472 : index
    %1215 = vector.load %arg4[%c0_607, %c9472_608] : memref<1x14336xf32, #tpu.memory_space<vmem>>, vector<1x128xf32>
    %1216 = vector.broadcast %1215 : vector<1x128xf32> to vector<2x128xf32>
    %1217 = arith.mulf %1214, %1216 : vector<2x128xf32>
    %1218 = arith.addf %1202, %1217 : vector<2x128xf32>
    %c0_609 = arith.constant 0 : index
    %c10368 = arith.constant 10368 : index
    %1219 = vector.load %arg2[%c0_609, %c10368] : memref<2x14336xf32, #tpu.memory_space<vmem>>, vector<1x128xf32>
    %1220 = vector.broadcast %1219 : vector<1x128xf32> to vector<2x128xf32>
    %1221 = arith.mulf %3, %1220 : vector<2x128xf32>
    %c1_610 = arith.constant 1 : index
    %c10368_611 = arith.constant 10368 : index
    %1222 = vector.load %arg2[%c1_610, %c10368_611] : memref<2x14336xf32, #tpu.memory_space<vmem>>, vector<1x128xf32>
    %1223 = vector.broadcast %1222 : vector<1x128xf32> to vector<2x128xf32>
    %1224 = arith.mulf %6, %1223 : vector<2x128xf32>
    %1225 = arith.addf %1221, %1224 : vector<2x128xf32>
    %c0_612 = arith.constant 0 : index
    %c10368_613 = arith.constant 10368 : index
    %1226 = vector.load %arg3[%c0_612, %c10368_613] : memref<1x14336xf32, #tpu.memory_space<vmem>>, vector<1x128xf32>
    %1227 = vector.broadcast %1226 : vector<1x128xf32> to vector<2x128xf32>
    %1228 = arith.addf %1225, %1227 : vector<2x128xf32>
    %cst_614 = arith.constant 0.000000e+00 : f32
    %1229 = vector.broadcast %cst_614 : f32 to vector<2x128xf32>
    %1230 = arith.maximumf %1228, %1229 : vector<2x128xf32>
    %c0_615 = arith.constant 0 : index
    %c10368_616 = arith.constant 10368 : index
    %1231 = vector.load %arg4[%c0_615, %c10368_616] : memref<1x14336xf32, #tpu.memory_space<vmem>>, vector<1x128xf32>
    %1232 = vector.broadcast %1231 : vector<1x128xf32> to vector<2x128xf32>
    %1233 = arith.mulf %1230, %1232 : vector<2x128xf32>
    %1234 = arith.addf %1218, %1233 : vector<2x128xf32>
    %c0_617 = arith.constant 0 : index
    %c11264 = arith.constant 11264 : index
    %1235 = vector.load %arg2[%c0_617, %c11264] : memref<2x14336xf32, #tpu.memory_space<vmem>>, vector<1x128xf32>
    %1236 = vector.broadcast %1235 : vector<1x128xf32> to vector<2x128xf32>
    %1237 = arith.mulf %3, %1236 : vector<2x128xf32>
    %c1_618 = arith.constant 1 : index
    %c11264_619 = arith.constant 11264 : index
    %1238 = vector.load %arg2[%c1_618, %c11264_619] : memref<2x14336xf32, #tpu.memory_space<vmem>>, vector<1x128xf32>
    %1239 = vector.broadcast %1238 : vector<1x128xf32> to vector<2x128xf32>
    %1240 = arith.mulf %6, %1239 : vector<2x128xf32>
    %1241 = arith.addf %1237, %1240 : vector<2x128xf32>
    %c0_620 = arith.constant 0 : index
    %c11264_621 = arith.constant 11264 : index
    %1242 = vector.load %arg3[%c0_620, %c11264_621] : memref<1x14336xf32, #tpu.memory_space<vmem>>, vector<1x128xf32>
    %1243 = vector.broadcast %1242 : vector<1x128xf32> to vector<2x128xf32>
    %1244 = arith.addf %1241, %1243 : vector<2x128xf32>
    %cst_622 = arith.constant 0.000000e+00 : f32
    %1245 = vector.broadcast %cst_622 : f32 to vector<2x128xf32>
    %1246 = arith.maximumf %1244, %1245 : vector<2x128xf32>
    %c0_623 = arith.constant 0 : index
    %c11264_624 = arith.constant 11264 : index
    %1247 = vector.load %arg4[%c0_623, %c11264_624] : memref<1x14336xf32, #tpu.memory_space<vmem>>, vector<1x128xf32>
    %1248 = vector.broadcast %1247 : vector<1x128xf32> to vector<2x128xf32>
    %1249 = arith.mulf %1246, %1248 : vector<2x128xf32>
    %1250 = arith.addf %1234, %1249 : vector<2x128xf32>
    %c0_625 = arith.constant 0 : index
    %c12160 = arith.constant 12160 : index
    %1251 = vector.load %arg2[%c0_625, %c12160] : memref<2x14336xf32, #tpu.memory_space<vmem>>, vector<1x128xf32>
    %1252 = vector.broadcast %1251 : vector<1x128xf32> to vector<2x128xf32>
    %1253 = arith.mulf %3, %1252 : vector<2x128xf32>
    %c1_626 = arith.constant 1 : index
    %c12160_627 = arith.constant 12160 : index
    %1254 = vector.load %arg2[%c1_626, %c12160_627] : memref<2x14336xf32, #tpu.memory_space<vmem>>, vector<1x128xf32>
    %1255 = vector.broadcast %1254 : vector<1x128xf32> to vector<2x128xf32>
    %1256 = arith.mulf %6, %1255 : vector<2x128xf32>
    %1257 = arith.addf %1253, %1256 : vector<2x128xf32>
    %c0_628 = arith.constant 0 : index
    %c12160_629 = arith.constant 12160 : index
    %1258 = vector.load %arg3[%c0_628, %c12160_629] : memref<1x14336xf32, #tpu.memory_space<vmem>>, vector<1x128xf32>
    %1259 = vector.broadcast %1258 : vector<1x128xf32> to vector<2x128xf32>
    %1260 = arith.addf %1257, %1259 : vector<2x128xf32>
    %cst_630 = arith.constant 0.000000e+00 : f32
    %1261 = vector.broadcast %cst_630 : f32 to vector<2x128xf32>
    %1262 = arith.maximumf %1260, %1261 : vector<2x128xf32>
    %c0_631 = arith.constant 0 : index
    %c12160_632 = arith.constant 12160 : index
    %1263 = vector.load %arg4[%c0_631, %c12160_632] : memref<1x14336xf32, #tpu.memory_space<vmem>>, vector<1x128xf32>
    %1264 = vector.broadcast %1263 : vector<1x128xf32> to vector<2x128xf32>
    %1265 = arith.mulf %1262, %1264 : vector<2x128xf32>
    %1266 = arith.addf %1250, %1265 : vector<2x128xf32>
    %c0_633 = arith.constant 0 : index
    %c13056 = arith.constant 13056 : index
    %1267 = vector.load %arg2[%c0_633, %c13056] : memref<2x14336xf32, #tpu.memory_space<vmem>>, vector<1x128xf32>
    %1268 = vector.broadcast %1267 : vector<1x128xf32> to vector<2x128xf32>
    %1269 = arith.mulf %3, %1268 : vector<2x128xf32>
    %c1_634 = arith.constant 1 : index
    %c13056_635 = arith.constant 13056 : index
    %1270 = vector.load %arg2[%c1_634, %c13056_635] : memref<2x14336xf32, #tpu.memory_space<vmem>>, vector<1x128xf32>
    %1271 = vector.broadcast %1270 : vector<1x128xf32> to vector<2x128xf32>
    %1272 = arith.mulf %6, %1271 : vector<2x128xf32>
    %1273 = arith.addf %1269, %1272 : vector<2x128xf32>
    %c0_636 = arith.constant 0 : index
    %c13056_637 = arith.constant 13056 : index
    %1274 = vector.load %arg3[%c0_636, %c13056_637] : memref<1x14336xf32, #tpu.memory_space<vmem>>, vector<1x128xf32>
    %1275 = vector.broadcast %1274 : vector<1x128xf32> to vector<2x128xf32>
    %1276 = arith.addf %1273, %1275 : vector<2x128xf32>
    %cst_638 = arith.constant 0.000000e+00 : f32
    %1277 = vector.broadcast %cst_638 : f32 to vector<2x128xf32>
    %1278 = arith.maximumf %1276, %1277 : vector<2x128xf32>
    %c0_639 = arith.constant 0 : index
    %c13056_640 = arith.constant 13056 : index
    %1279 = vector.load %arg4[%c0_639, %c13056_640] : memref<1x14336xf32, #tpu.memory_space<vmem>>, vector<1x128xf32>
    %1280 = vector.broadcast %1279 : vector<1x128xf32> to vector<2x128xf32>
    %1281 = arith.mulf %1278, %1280 : vector<2x128xf32>
    %1282 = arith.addf %1266, %1281 : vector<2x128xf32>
    %c0_641 = arith.constant 0 : index
    %c13952 = arith.constant 13952 : index
    %1283 = vector.load %arg2[%c0_641, %c13952] : memref<2x14336xf32, #tpu.memory_space<vmem>>, vector<1x128xf32>
    %1284 = vector.broadcast %1283 : vector<1x128xf32> to vector<2x128xf32>
    %1285 = arith.mulf %3, %1284 : vector<2x128xf32>
    %c1_642 = arith.constant 1 : index
    %c13952_643 = arith.constant 13952 : index
    %1286 = vector.load %arg2[%c1_642, %c13952_643] : memref<2x14336xf32, #tpu.memory_space<vmem>>, vector<1x128xf32>
    %1287 = vector.broadcast %1286 : vector<1x128xf32> to vector<2x128xf32>
    %1288 = arith.mulf %6, %1287 : vector<2x128xf32>
    %1289 = arith.addf %1285, %1288 : vector<2x128xf32>
    %c0_644 = arith.constant 0 : index
    %c13952_645 = arith.constant 13952 : index
    %1290 = vector.load %arg3[%c0_644, %c13952_645] : memref<1x14336xf32, #tpu.memory_space<vmem>>, vector<1x128xf32>
    %1291 = vector.broadcast %1290 : vector<1x128xf32> to vector<2x128xf32>
    %1292 = arith.addf %1289, %1291 : vector<2x128xf32>
    %cst_646 = arith.constant 0.000000e+00 : f32
    %1293 = vector.broadcast %cst_646 : f32 to vector<2x128xf32>
    %1294 = arith.maximumf %1292, %1293 : vector<2x128xf32>
    %c0_647 = arith.constant 0 : index
    %c13952_648 = arith.constant 13952 : index
    %1295 = vector.load %arg4[%c0_647, %c13952_648] : memref<1x14336xf32, #tpu.memory_space<vmem>>, vector<1x128xf32>
    %1296 = vector.broadcast %1295 : vector<1x128xf32> to vector<2x128xf32>
    %1297 = arith.mulf %1294, %1296 : vector<2x128xf32>
    %1298 = arith.addf %1282, %1297 : vector<2x128xf32>
    %1299 = vector.broadcast %7 : f32 to vector<2x128xf32>
    %1300 = arith.addf %1298, %1299 : vector<2x128xf32>
    %1301 = math.tanh %1300 : vector<2x128xf32>
    %c0_649 = arith.constant 0 : index
    %c512_650 = arith.constant 512 : index
    %1302 = vector.load %arg6[%c0_649, %c512_650] : memref<2x784xf32, #tpu.memory_space<vmem>>, vector<2x128xf32>
    tpu.vector_store %arg6[%c0_649, %c512_650], %1301 {strides = array<i32>} : memref<2x784xf32, #tpu.memory_space<vmem>>, vector<2x128xf32>,
    %c0_651 = arith.constant 0 : index
    %c640 = arith.constant 640 : index
    %1303 = vector.load %arg2[%c0_651, %c640] : memref<2x14336xf32, #tpu.memory_space<vmem>>, vector<1x128xf32>
    %1304 = vector.broadcast %1303 : vector<1x128xf32> to vector<2x128xf32>
    %1305 = arith.mulf %3, %1304 : vector<2x128xf32>
    %c1_652 = arith.constant 1 : index
    %c640_653 = arith.constant 640 : index
    %1306 = vector.load %arg2[%c1_652, %c640_653] : memref<2x14336xf32, #tpu.memory_space<vmem>>, vector<1x128xf32>
    %1307 = vector.broadcast %1306 : vector<1x128xf32> to vector<2x128xf32>
    %1308 = arith.mulf %6, %1307 : vector<2x128xf32>
    %1309 = arith.addf %1305, %1308 : vector<2x128xf32>
    %c0_654 = arith.constant 0 : index
    %c640_655 = arith.constant 640 : index
    %1310 = vector.load %arg3[%c0_654, %c640_655] : memref<1x14336xf32, #tpu.memory_space<vmem>>, vector<1x128xf32>
    %1311 = vector.broadcast %1310 : vector<1x128xf32> to vector<2x128xf32>
    %1312 = arith.addf %1309, %1311 : vector<2x128xf32>
    %cst_656 = arith.constant 0.000000e+00 : f32
    %1313 = vector.broadcast %cst_656 : f32 to vector<2x128xf32>
    %1314 = arith.maximumf %1312, %1313 : vector<2x128xf32>
    %c0_657 = arith.constant 0 : index
    %c640_658 = arith.constant 640 : index
    %1315 = vector.load %arg4[%c0_657, %c640_658] : memref<1x14336xf32, #tpu.memory_space<vmem>>, vector<1x128xf32>
    %1316 = vector.broadcast %1315 : vector<1x128xf32> to vector<2x128xf32>
    %1317 = arith.mulf %1314, %1316 : vector<2x128xf32>
    %c0_659 = arith.constant 0 : index
    %c1536 = arith.constant 1536 : index
    %1318 = vector.load %arg2[%c0_659, %c1536] : memref<2x14336xf32, #tpu.memory_space<vmem>>, vector<1x128xf32>
    %1319 = vector.broadcast %1318 : vector<1x128xf32> to vector<2x128xf32>
    %1320 = arith.mulf %3, %1319 : vector<2x128xf32>
    %c1_660 = arith.constant 1 : index
    %c1536_661 = arith.constant 1536 : index
    %1321 = vector.load %arg2[%c1_660, %c1536_661] : memref<2x14336xf32, #tpu.memory_space<vmem>>, vector<1x128xf32>
    %1322 = vector.broadcast %1321 : vector<1x128xf32> to vector<2x128xf32>
    %1323 = arith.mulf %6, %1322 : vector<2x128xf32>
    %1324 = arith.addf %1320, %1323 : vector<2x128xf32>
    %c0_662 = arith.constant 0 : index
    %c1536_663 = arith.constant 1536 : index
    %1325 = vector.load %arg3[%c0_662, %c1536_663] : memref<1x14336xf32, #tpu.memory_space<vmem>>, vector<1x128xf32>
    %1326 = vector.broadcast %1325 : vector<1x128xf32> to vector<2x128xf32>
    %1327 = arith.addf %1324, %1326 : vector<2x128xf32>
    %cst_664 = arith.constant 0.000000e+00 : f32
    %1328 = vector.broadcast %cst_664 : f32 to vector<2x128xf32>
    %1329 = arith.maximumf %1327, %1328 : vector<2x128xf32>
    %c0_665 = arith.constant 0 : index
    %c1536_666 = arith.constant 1536 : index
    %1330 = vector.load %arg4[%c0_665, %c1536_666] : memref<1x14336xf32, #tpu.memory_space<vmem>>, vector<1x128xf32>
    %1331 = vector.broadcast %1330 : vector<1x128xf32> to vector<2x128xf32>
    %1332 = arith.mulf %1329, %1331 : vector<2x128xf32>
    %1333 = arith.addf %1317, %1332 : vector<2x128xf32>
    %c0_667 = arith.constant 0 : index
    %c2432 = arith.constant 2432 : index
    %1334 = vector.load %arg2[%c0_667, %c2432] : memref<2x14336xf32, #tpu.memory_space<vmem>>, vector<1x128xf32>
    %1335 = vector.broadcast %1334 : vector<1x128xf32> to vector<2x128xf32>
    %1336 = arith.mulf %3, %1335 : vector<2x128xf32>
    %c1_668 = arith.constant 1 : index
    %c2432_669 = arith.constant 2432 : index
    %1337 = vector.load %arg2[%c1_668, %c2432_669] : memref<2x14336xf32, #tpu.memory_space<vmem>>, vector<1x128xf32>
    %1338 = vector.broadcast %1337 : vector<1x128xf32> to vector<2x128xf32>
    %1339 = arith.mulf %6, %1338 : vector<2x128xf32>
    %1340 = arith.addf %1336, %1339 : vector<2x128xf32>
    %c0_670 = arith.constant 0 : index
    %c2432_671 = arith.constant 2432 : index
    %1341 = vector.load %arg3[%c0_670, %c2432_671] : memref<1x14336xf32, #tpu.memory_space<vmem>>, vector<1x128xf32>
    %1342 = vector.broadcast %1341 : vector<1x128xf32> to vector<2x128xf32>
    %1343 = arith.addf %1340, %1342 : vector<2x128xf32>
    %cst_672 = arith.constant 0.000000e+00 : f32
    %1344 = vector.broadcast %cst_672 : f32 to vector<2x128xf32>
    %1345 = arith.maximumf %1343, %1344 : vector<2x128xf32>
    %c0_673 = arith.constant 0 : index
    %c2432_674 = arith.constant 2432 : index
    %1346 = vector.load %arg4[%c0_673, %c2432_674] : memref<1x14336xf32, #tpu.memory_space<vmem>>, vector<1x128xf32>
    %1347 = vector.broadcast %1346 : vector<1x128xf32> to vector<2x128xf32>
    %1348 = arith.mulf %1345, %1347 : vector<2x128xf32>
    %1349 = arith.addf %1333, %1348 : vector<2x128xf32>
    %c0_675 = arith.constant 0 : index
    %c3328 = arith.constant 3328 : index
    %1350 = vector.load %arg2[%c0_675, %c3328] : memref<2x14336xf32, #tpu.memory_space<vmem>>, vector<1x128xf32>
    %1351 = vector.broadcast %1350 : vector<1x128xf32> to vector<2x128xf32>
    %1352 = arith.mulf %3, %1351 : vector<2x128xf32>
    %c1_676 = arith.constant 1 : index
    %c3328_677 = arith.constant 3328 : index
    %1353 = vector.load %arg2[%c1_676, %c3328_677] : memref<2x14336xf32, #tpu.memory_space<vmem>>, vector<1x128xf32>
    %1354 = vector.broadcast %1353 : vector<1x128xf32> to vector<2x128xf32>
    %1355 = arith.mulf %6, %1354 : vector<2x128xf32>
    %1356 = arith.addf %1352, %1355 : vector<2x128xf32>
    %c0_678 = arith.constant 0 : index
    %c3328_679 = arith.constant 3328 : index
    %1357 = vector.load %arg3[%c0_678, %c3328_679] : memref<1x14336xf32, #tpu.memory_space<vmem>>, vector<1x128xf32>
    %1358 = vector.broadcast %1357 : vector<1x128xf32> to vector<2x128xf32>
    %1359 = arith.addf %1356, %1358 : vector<2x128xf32>
    %cst_680 = arith.constant 0.000000e+00 : f32
    %1360 = vector.broadcast %cst_680 : f32 to vector<2x128xf32>
    %1361 = arith.maximumf %1359, %1360 : vector<2x128xf32>
    %c0_681 = arith.constant 0 : index
    %c3328_682 = arith.constant 3328 : index
    %1362 = vector.load %arg4[%c0_681, %c3328_682] : memref<1x14336xf32, #tpu.memory_space<vmem>>, vector<1x128xf32>
    %1363 = vector.broadcast %1362 : vector<1x128xf32> to vector<2x128xf32>
    %1364 = arith.mulf %1361, %1363 : vector<2x128xf32>
    %1365 = arith.addf %1349, %1364 : vector<2x128xf32>
    %c0_683 = arith.constant 0 : index
    %c4224 = arith.constant 4224 : index
    %1366 = vector.load %arg2[%c0_683, %c4224] : memref<2x14336xf32, #tpu.memory_space<vmem>>, vector<1x128xf32>
    %1367 = vector.broadcast %1366 : vector<1x128xf32> to vector<2x128xf32>
    %1368 = arith.mulf %3, %1367 : vector<2x128xf32>
    %c1_684 = arith.constant 1 : index
    %c4224_685 = arith.constant 4224 : index
    %1369 = vector.load %arg2[%c1_684, %c4224_685] : memref<2x14336xf32, #tpu.memory_space<vmem>>, vector<1x128xf32>
    %1370 = vector.broadcast %1369 : vector<1x128xf32> to vector<2x128xf32>
    %1371 = arith.mulf %6, %1370 : vector<2x128xf32>
    %1372 = arith.addf %1368, %1371 : vector<2x128xf32>
    %c0_686 = arith.constant 0 : index
    %c4224_687 = arith.constant 4224 : index
    %1373 = vector.load %arg3[%c0_686, %c4224_687] : memref<1x14336xf32, #tpu.memory_space<vmem>>, vector<1x128xf32>
    %1374 = vector.broadcast %1373 : vector<1x128xf32> to vector<2x128xf32>
    %1375 = arith.addf %1372, %1374 : vector<2x128xf32>
    %cst_688 = arith.constant 0.000000e+00 : f32
    %1376 = vector.broadcast %cst_688 : f32 to vector<2x128xf32>
    %1377 = arith.maximumf %1375, %1376 : vector<2x128xf32>
    %c0_689 = arith.constant 0 : index
    %c4224_690 = arith.constant 4224 : index
    %1378 = vector.load %arg4[%c0_689, %c4224_690] : memref<1x14336xf32, #tpu.memory_space<vmem>>, vector<1x128xf32>
    %1379 = vector.broadcast %1378 : vector<1x128xf32> to vector<2x128xf32>
    %1380 = arith.mulf %1377, %1379 : vector<2x128xf32>
    %1381 = arith.addf %1365, %1380 : vector<2x128xf32>
    %c0_691 = arith.constant 0 : index
    %c5120 = arith.constant 5120 : index
    %1382 = vector.load %arg2[%c0_691, %c5120] : memref<2x14336xf32, #tpu.memory_space<vmem>>, vector<1x128xf32>
    %1383 = vector.broadcast %1382 : vector<1x128xf32> to vector<2x128xf32>
    %1384 = arith.mulf %3, %1383 : vector<2x128xf32>
    %c1_692 = arith.constant 1 : index
    %c5120_693 = arith.constant 5120 : index
    %1385 = vector.load %arg2[%c1_692, %c5120_693] : memref<2x14336xf32, #tpu.memory_space<vmem>>, vector<1x128xf32>
    %1386 = vector.broadcast %1385 : vector<1x128xf32> to vector<2x128xf32>
    %1387 = arith.mulf %6, %1386 : vector<2x128xf32>
    %1388 = arith.addf %1384, %1387 : vector<2x128xf32>
    %c0_694 = arith.constant 0 : index
    %c5120_695 = arith.constant 5120 : index
    %1389 = vector.load %arg3[%c0_694, %c5120_695] : memref<1x14336xf32, #tpu.memory_space<vmem>>, vector<1x128xf32>
    %1390 = vector.broadcast %1389 : vector<1x128xf32> to vector<2x128xf32>
    %1391 = arith.addf %1388, %1390 : vector<2x128xf32>
    %cst_696 = arith.constant 0.000000e+00 : f32
    %1392 = vector.broadcast %cst_696 : f32 to vector<2x128xf32>
    %1393 = arith.maximumf %1391, %1392 : vector<2x128xf32>
    %c0_697 = arith.constant 0 : index
    %c5120_698 = arith.constant 5120 : index
    %1394 = vector.load %arg4[%c0_697, %c5120_698] : memref<1x14336xf32, #tpu.memory_space<vmem>>, vector<1x128xf32>
    %1395 = vector.broadcast %1394 : vector<1x128xf32> to vector<2x128xf32>
    %1396 = arith.mulf %1393, %1395 : vector<2x128xf32>
    %1397 = arith.addf %1381, %1396 : vector<2x128xf32>
    %c0_699 = arith.constant 0 : index
    %c6016 = arith.constant 6016 : index
    %1398 = vector.load %arg2[%c0_699, %c6016] : memref<2x14336xf32, #tpu.memory_space<vmem>>, vector<1x128xf32>
    %1399 = vector.broadcast %1398 : vector<1x128xf32> to vector<2x128xf32>
    %1400 = arith.mulf %3, %1399 : vector<2x128xf32>
    %c1_700 = arith.constant 1 : index
    %c6016_701 = arith.constant 6016 : index
    %1401 = vector.load %arg2[%c1_700, %c6016_701] : memref<2x14336xf32, #tpu.memory_space<vmem>>, vector<1x128xf32>
    %1402 = vector.broadcast %1401 : vector<1x128xf32> to vector<2x128xf32>
    %1403 = arith.mulf %6, %1402 : vector<2x128xf32>
    %1404 = arith.addf %1400, %1403 : vector<2x128xf32>
    %c0_702 = arith.constant 0 : index
    %c6016_703 = arith.constant 6016 : index
    %1405 = vector.load %arg3[%c0_702, %c6016_703] : memref<1x14336xf32, #tpu.memory_space<vmem>>, vector<1x128xf32>
    %1406 = vector.broadcast %1405 : vector<1x128xf32> to vector<2x128xf32>
    %1407 = arith.addf %1404, %1406 : vector<2x128xf32>
    %cst_704 = arith.constant 0.000000e+00 : f32
    %1408 = vector.broadcast %cst_704 : f32 to vector<2x128xf32>
    %1409 = arith.maximumf %1407, %1408 : vector<2x128xf32>
    %c0_705 = arith.constant 0 : index
    %c6016_706 = arith.constant 6016 : index
    %1410 = vector.load %arg4[%c0_705, %c6016_706] : memref<1x14336xf32, #tpu.memory_space<vmem>>, vector<1x128xf32>
    %1411 = vector.broadcast %1410 : vector<1x128xf32> to vector<2x128xf32>
    %1412 = arith.mulf %1409, %1411 : vector<2x128xf32>
    %1413 = arith.addf %1397, %1412 : vector<2x128xf32>
    %c0_707 = arith.constant 0 : index
    %c6912 = arith.constant 6912 : index
    %1414 = vector.load %arg2[%c0_707, %c6912] : memref<2x14336xf32, #tpu.memory_space<vmem>>, vector<1x128xf32>
    %1415 = vector.broadcast %1414 : vector<1x128xf32> to vector<2x128xf32>
    %1416 = arith.mulf %3, %1415 : vector<2x128xf32>
    %c1_708 = arith.constant 1 : index
    %c6912_709 = arith.constant 6912 : index
    %1417 = vector.load %arg2[%c1_708, %c6912_709] : memref<2x14336xf32, #tpu.memory_space<vmem>>, vector<1x128xf32>
    %1418 = vector.broadcast %1417 : vector<1x128xf32> to vector<2x128xf32>
    %1419 = arith.mulf %6, %1418 : vector<2x128xf32>
    %1420 = arith.addf %1416, %1419 : vector<2x128xf32>
    %c0_710 = arith.constant 0 : index
    %c6912_711 = arith.constant 6912 : index
    %1421 = vector.load %arg3[%c0_710, %c6912_711] : memref<1x14336xf32, #tpu.memory_space<vmem>>, vector<1x128xf32>
    %1422 = vector.broadcast %1421 : vector<1x128xf32> to vector<2x128xf32>
    %1423 = arith.addf %1420, %1422 : vector<2x128xf32>
    %cst_712 = arith.constant 0.000000e+00 : f32
    %1424 = vector.broadcast %cst_712 : f32 to vector<2x128xf32>
    %1425 = arith.maximumf %1423, %1424 : vector<2x128xf32>
    %c0_713 = arith.constant 0 : index
    %c6912_714 = arith.constant 6912 : index
    %1426 = vector.load %arg4[%c0_713, %c6912_714] : memref<1x14336xf32, #tpu.memory_space<vmem>>, vector<1x128xf32>
    %1427 = vector.broadcast %1426 : vector<1x128xf32> to vector<2x128xf32>
    %1428 = arith.mulf %1425, %1427 : vector<2x128xf32>
    %1429 = arith.addf %1413, %1428 : vector<2x128xf32>
    %c0_715 = arith.constant 0 : index
    %c7808 = arith.constant 7808 : index
    %1430 = vector.load %arg2[%c0_715, %c7808] : memref<2x14336xf32, #tpu.memory_space<vmem>>, vector<1x128xf32>
    %1431 = vector.broadcast %1430 : vector<1x128xf32> to vector<2x128xf32>
    %1432 = arith.mulf %3, %1431 : vector<2x128xf32>
    %c1_716 = arith.constant 1 : index
    %c7808_717 = arith.constant 7808 : index
    %1433 = vector.load %arg2[%c1_716, %c7808_717] : memref<2x14336xf32, #tpu.memory_space<vmem>>, vector<1x128xf32>
    %1434 = vector.broadcast %1433 : vector<1x128xf32> to vector<2x128xf32>
    %1435 = arith.mulf %6, %1434 : vector<2x128xf32>
    %1436 = arith.addf %1432, %1435 : vector<2x128xf32>
    %c0_718 = arith.constant 0 : index
    %c7808_719 = arith.constant 7808 : index
    %1437 = vector.load %arg3[%c0_718, %c7808_719] : memref<1x14336xf32, #tpu.memory_space<vmem>>, vector<1x128xf32>
    %1438 = vector.broadcast %1437 : vector<1x128xf32> to vector<2x128xf32>
    %1439 = arith.addf %1436, %1438 : vector<2x128xf32>
    %cst_720 = arith.constant 0.000000e+00 : f32
    %1440 = vector.broadcast %cst_720 : f32 to vector<2x128xf32>
    %1441 = arith.maximumf %1439, %1440 : vector<2x128xf32>
    %c0_721 = arith.constant 0 : index
    %c7808_722 = arith.constant 7808 : index
    %1442 = vector.load %arg4[%c0_721, %c7808_722] : memref<1x14336xf32, #tpu.memory_space<vmem>>, vector<1x128xf32>
    %1443 = vector.broadcast %1442 : vector<1x128xf32> to vector<2x128xf32>
    %1444 = arith.mulf %1441, %1443 : vector<2x128xf32>
    %1445 = arith.addf %1429, %1444 : vector<2x128xf32>
    %c0_723 = arith.constant 0 : index
    %c8704 = arith.constant 8704 : index
    %1446 = vector.load %arg2[%c0_723, %c8704] : memref<2x14336xf32, #tpu.memory_space<vmem>>, vector<1x128xf32>
    %1447 = vector.broadcast %1446 : vector<1x128xf32> to vector<2x128xf32>
    %1448 = arith.mulf %3, %1447 : vector<2x128xf32>
    %c1_724 = arith.constant 1 : index
    %c8704_725 = arith.constant 8704 : index
    %1449 = vector.load %arg2[%c1_724, %c8704_725] : memref<2x14336xf32, #tpu.memory_space<vmem>>, vector<1x128xf32>
    %1450 = vector.broadcast %1449 : vector<1x128xf32> to vector<2x128xf32>
    %1451 = arith.mulf %6, %1450 : vector<2x128xf32>
    %1452 = arith.addf %1448, %1451 : vector<2x128xf32>
    %c0_726 = arith.constant 0 : index
    %c8704_727 = arith.constant 8704 : index
    %1453 = vector.load %arg3[%c0_726, %c8704_727] : memref<1x14336xf32, #tpu.memory_space<vmem>>, vector<1x128xf32>
    %1454 = vector.broadcast %1453 : vector<1x128xf32> to vector<2x128xf32>
    %1455 = arith.addf %1452, %1454 : vector<2x128xf32>
    %cst_728 = arith.constant 0.000000e+00 : f32
    %1456 = vector.broadcast %cst_728 : f32 to vector<2x128xf32>
    %1457 = arith.maximumf %1455, %1456 : vector<2x128xf32>
    %c0_729 = arith.constant 0 : index
    %c8704_730 = arith.constant 8704 : index
    %1458 = vector.load %arg4[%c0_729, %c8704_730] : memref<1x14336xf32, #tpu.memory_space<vmem>>, vector<1x128xf32>
    %1459 = vector.broadcast %1458 : vector<1x128xf32> to vector<2x128xf32>
    %1460 = arith.mulf %1457, %1459 : vector<2x128xf32>
    %1461 = arith.addf %1445, %1460 : vector<2x128xf32>
    %c0_731 = arith.constant 0 : index
    %c9600 = arith.constant 9600 : index
    %1462 = vector.load %arg2[%c0_731, %c9600] : memref<2x14336xf32, #tpu.memory_space<vmem>>, vector<1x128xf32>
    %1463 = vector.broadcast %1462 : vector<1x128xf32> to vector<2x128xf32>
    %1464 = arith.mulf %3, %1463 : vector<2x128xf32>
    %c1_732 = arith.constant 1 : index
    %c9600_733 = arith.constant 9600 : index
    %1465 = vector.load %arg2[%c1_732, %c9600_733] : memref<2x14336xf32, #tpu.memory_space<vmem>>, vector<1x128xf32>
    %1466 = vector.broadcast %1465 : vector<1x128xf32> to vector<2x128xf32>
    %1467 = arith.mulf %6, %1466 : vector<2x128xf32>
    %1468 = arith.addf %1464, %1467 : vector<2x128xf32>
    %c0_734 = arith.constant 0 : index
    %c9600_735 = arith.constant 9600 : index
    %1469 = vector.load %arg3[%c0_734, %c9600_735] : memref<1x14336xf32, #tpu.memory_space<vmem>>, vector<1x128xf32>
    %1470 = vector.broadcast %1469 : vector<1x128xf32> to vector<2x128xf32>
    %1471 = arith.addf %1468, %1470 : vector<2x128xf32>
    %cst_736 = arith.constant 0.000000e+00 : f32
    %1472 = vector.broadcast %cst_736 : f32 to vector<2x128xf32>
    %1473 = arith.maximumf %1471, %1472 : vector<2x128xf32>
    %c0_737 = arith.constant 0 : index
    %c9600_738 = arith.constant 9600 : index
    %1474 = vector.load %arg4[%c0_737, %c9600_738] : memref<1x14336xf32, #tpu.memory_space<vmem>>, vector<1x128xf32>
    %1475 = vector.broadcast %1474 : vector<1x128xf32> to vector<2x128xf32>
    %1476 = arith.mulf %1473, %1475 : vector<2x128xf32>
    %1477 = arith.addf %1461, %1476 : vector<2x128xf32>
    %c0_739 = arith.constant 0 : index
    %c10496 = arith.constant 10496 : index
    %1478 = vector.load %arg2[%c0_739, %c10496] : memref<2x14336xf32, #tpu.memory_space<vmem>>, vector<1x128xf32>
    %1479 = vector.broadcast %1478 : vector<1x128xf32> to vector<2x128xf32>
    %1480 = arith.mulf %3, %1479 : vector<2x128xf32>
    %c1_740 = arith.constant 1 : index
    %c10496_741 = arith.constant 10496 : index
    %1481 = vector.load %arg2[%c1_740, %c10496_741] : memref<2x14336xf32, #tpu.memory_space<vmem>>, vector<1x128xf32>
    %1482 = vector.broadcast %1481 : vector<1x128xf32> to vector<2x128xf32>
    %1483 = arith.mulf %6, %1482 : vector<2x128xf32>
    %1484 = arith.addf %1480, %1483 : vector<2x128xf32>
    %c0_742 = arith.constant 0 : index
    %c10496_743 = arith.constant 10496 : index
    %1485 = vector.load %arg3[%c0_742, %c10496_743] : memref<1x14336xf32, #tpu.memory_space<vmem>>, vector<1x128xf32>
    %1486 = vector.broadcast %1485 : vector<1x128xf32> to vector<2x128xf32>
    %1487 = arith.addf %1484, %1486 : vector<2x128xf32>
    %cst_744 = arith.constant 0.000000e+00 : f32
    %1488 = vector.broadcast %cst_744 : f32 to vector<2x128xf32>
    %1489 = arith.maximumf %1487, %1488 : vector<2x128xf32>
    %c0_745 = arith.constant 0 : index
    %c10496_746 = arith.constant 10496 : index
    %1490 = vector.load %arg4[%c0_745, %c10496_746] : memref<1x14336xf32, #tpu.memory_space<vmem>>, vector<1x128xf32>
    %1491 = vector.broadcast %1490 : vector<1x128xf32> to vector<2x128xf32>
    %1492 = arith.mulf %1489, %1491 : vector<2x128xf32>
    %1493 = arith.addf %1477, %1492 : vector<2x128xf32>
    %c0_747 = arith.constant 0 : index
    %c11392 = arith.constant 11392 : index
    %1494 = vector.load %arg2[%c0_747, %c11392] : memref<2x14336xf32, #tpu.memory_space<vmem>>, vector<1x128xf32>
    %1495 = vector.broadcast %1494 : vector<1x128xf32> to vector<2x128xf32>
    %1496 = arith.mulf %3, %1495 : vector<2x128xf32>
    %c1_748 = arith.constant 1 : index
    %c11392_749 = arith.constant 11392 : index
    %1497 = vector.load %arg2[%c1_748, %c11392_749] : memref<2x14336xf32, #tpu.memory_space<vmem>>, vector<1x128xf32>
    %1498 = vector.broadcast %1497 : vector<1x128xf32> to vector<2x128xf32>
    %1499 = arith.mulf %6, %1498 : vector<2x128xf32>
    %1500 = arith.addf %1496, %1499 : vector<2x128xf32>
    %c0_750 = arith.constant 0 : index
    %c11392_751 = arith.constant 11392 : index
    %1501 = vector.load %arg3[%c0_750, %c11392_751] : memref<1x14336xf32, #tpu.memory_space<vmem>>, vector<1x128xf32>
    %1502 = vector.broadcast %1501 : vector<1x128xf32> to vector<2x128xf32>
    %1503 = arith.addf %1500, %1502 : vector<2x128xf32>
    %cst_752 = arith.constant 0.000000e+00 : f32
    %1504 = vector.broadcast %cst_752 : f32 to vector<2x128xf32>
    %1505 = arith.maximumf %1503, %1504 : vector<2x128xf32>
    %c0_753 = arith.constant 0 : index
    %c11392_754 = arith.constant 11392 : index
    %1506 = vector.load %arg4[%c0_753, %c11392_754] : memref<1x14336xf32, #tpu.memory_space<vmem>>, vector<1x128xf32>
    %1507 = vector.broadcast %1506 : vector<1x128xf32> to vector<2x128xf32>
    %1508 = arith.mulf %1505, %1507 : vector<2x128xf32>
    %1509 = arith.addf %1493, %1508 : vector<2x128xf32>
    %c0_755 = arith.constant 0 : index
    %c12288 = arith.constant 12288 : index
    %1510 = vector.load %arg2[%c0_755, %c12288] : memref<2x14336xf32, #tpu.memory_space<vmem>>, vector<1x128xf32>
    %1511 = vector.broadcast %1510 : vector<1x128xf32> to vector<2x128xf32>
    %1512 = arith.mulf %3, %1511 : vector<2x128xf32>
    %c1_756 = arith.constant 1 : index
    %c12288_757 = arith.constant 12288 : index
    %1513 = vector.load %arg2[%c1_756, %c12288_757] : memref<2x14336xf32, #tpu.memory_space<vmem>>, vector<1x128xf32>
    %1514 = vector.broadcast %1513 : vector<1x128xf32> to vector<2x128xf32>
    %1515 = arith.mulf %6, %1514 : vector<2x128xf32>
    %1516 = arith.addf %1512, %1515 : vector<2x128xf32>
    %c0_758 = arith.constant 0 : index
    %c12288_759 = arith.constant 12288 : index
    %1517 = vector.load %arg3[%c0_758, %c12288_759] : memref<1x14336xf32, #tpu.memory_space<vmem>>, vector<1x128xf32>
    %1518 = vector.broadcast %1517 : vector<1x128xf32> to vector<2x128xf32>
    %1519 = arith.addf %1516, %1518 : vector<2x128xf32>
    %cst_760 = arith.constant 0.000000e+00 : f32
    %1520 = vector.broadcast %cst_760 : f32 to vector<2x128xf32>
    %1521 = arith.maximumf %1519, %1520 : vector<2x128xf32>
    %c0_761 = arith.constant 0 : index
    %c12288_762 = arith.constant 12288 : index
    %1522 = vector.load %arg4[%c0_761, %c12288_762] : memref<1x14336xf32, #tpu.memory_space<vmem>>, vector<1x128xf32>
    %1523 = vector.broadcast %1522 : vector<1x128xf32> to vector<2x128xf32>
    %1524 = arith.mulf %1521, %1523 : vector<2x128xf32>
    %1525 = arith.addf %1509, %1524 : vector<2x128xf32>
    %c0_763 = arith.constant 0 : index
    %c13184 = arith.constant 13184 : index
    %1526 = vector.load %arg2[%c0_763, %c13184] : memref<2x14336xf32, #tpu.memory_space<vmem>>, vector<1x128xf32>
    %1527 = vector.broadcast %1526 : vector<1x128xf32> to vector<2x128xf32>
    %1528 = arith.mulf %3, %1527 : vector<2x128xf32>
    %c1_764 = arith.constant 1 : index
    %c13184_765 = arith.constant 13184 : index
    %1529 = vector.load %arg2[%c1_764, %c13184_765] : memref<2x14336xf32, #tpu.memory_space<vmem>>, vector<1x128xf32>
    %1530 = vector.broadcast %1529 : vector<1x128xf32> to vector<2x128xf32>
    %1531 = arith.mulf %6, %1530 : vector<2x128xf32>
    %1532 = arith.addf %1528, %1531 : vector<2x128xf32>
    %c0_766 = arith.constant 0 : index
    %c13184_767 = arith.constant 13184 : index
    %1533 = vector.load %arg3[%c0_766, %c13184_767] : memref<1x14336xf32, #tpu.memory_space<vmem>>, vector<1x128xf32>
    %1534 = vector.broadcast %1533 : vector<1x128xf32> to vector<2x128xf32>
    %1535 = arith.addf %1532, %1534 : vector<2x128xf32>
    %cst_768 = arith.constant 0.000000e+00 : f32
    %1536 = vector.broadcast %cst_768 : f32 to vector<2x128xf32>
    %1537 = arith.maximumf %1535, %1536 : vector<2x128xf32>
    %c0_769 = arith.constant 0 : index
    %c13184_770 = arith.constant 13184 : index
    %1538 = vector.load %arg4[%c0_769, %c13184_770] : memref<1x14336xf32, #tpu.memory_space<vmem>>, vector<1x128xf32>
    %1539 = vector.broadcast %1538 : vector<1x128xf32> to vector<2x128xf32>
    %1540 = arith.mulf %1537, %1539 : vector<2x128xf32>
    %1541 = arith.addf %1525, %1540 : vector<2x128xf32>
    %c0_771 = arith.constant 0 : index
    %c14080 = arith.constant 14080 : index
    %1542 = vector.load %arg2[%c0_771, %c14080] : memref<2x14336xf32, #tpu.memory_space<vmem>>, vector<1x128xf32>
    %1543 = vector.broadcast %1542 : vector<1x128xf32> to vector<2x128xf32>
    %1544 = arith.mulf %3, %1543 : vector<2x128xf32>
    %c1_772 = arith.constant 1 : index
    %c14080_773 = arith.constant 14080 : index
    %1545 = vector.load %arg2[%c1_772, %c14080_773] : memref<2x14336xf32, #tpu.memory_space<vmem>>, vector<1x128xf32>
    %1546 = vector.broadcast %1545 : vector<1x128xf32> to vector<2x128xf32>
    %1547 = arith.mulf %6, %1546 : vector<2x128xf32>
    %1548 = arith.addf %1544, %1547 : vector<2x128xf32>
    %c0_774 = arith.constant 0 : index
    %c14080_775 = arith.constant 14080 : index
    %1549 = vector.load %arg3[%c0_774, %c14080_775] : memref<1x14336xf32, #tpu.memory_space<vmem>>, vector<1x128xf32>
    %1550 = vector.broadcast %1549 : vector<1x128xf32> to vector<2x128xf32>
    %1551 = arith.addf %1548, %1550 : vector<2x128xf32>
    %cst_776 = arith.constant 0.000000e+00 : f32
    %1552 = vector.broadcast %cst_776 : f32 to vector<2x128xf32>
    %1553 = arith.maximumf %1551, %1552 : vector<2x128xf32>
    %c0_777 = arith.constant 0 : index
    %c14080_778 = arith.constant 14080 : index
    %1554 = vector.load %arg4[%c0_777, %c14080_778] : memref<1x14336xf32, #tpu.memory_space<vmem>>, vector<1x128xf32>
    %1555 = vector.broadcast %1554 : vector<1x128xf32> to vector<2x128xf32>
    %1556 = arith.mulf %1553, %1555 : vector<2x128xf32>
    %1557 = arith.addf %1541, %1556 : vector<2x128xf32>
    %1558 = vector.broadcast %7 : f32 to vector<2x128xf32>
    %1559 = arith.addf %1557, %1558 : vector<2x128xf32>
    %1560 = math.tanh %1559 : vector<2x128xf32>
    %c0_779 = arith.constant 0 : index
    %c640_780 = arith.constant 640 : index
    %1561 = vector.load %arg6[%c0_779, %c640_780] : memref<2x784xf32, #tpu.memory_space<vmem>>, vector<2x128xf32>
    tpu.vector_store %arg6[%c0_779, %c640_780], %1560 {strides = array<i32>} : memref<2x784xf32, #tpu.memory_space<vmem>>, vector<2x128xf32>,
    %c0_781 = arith.constant 0 : index
    %c768 = arith.constant 768 : index
    %1562 = vector.load %arg2[%c0_781, %c768] : memref<2x14336xf32, #tpu.memory_space<vmem>>, vector<1x128xf32>
    %1563 = vector.broadcast %1562 : vector<1x128xf32> to vector<2x128xf32>
    %1564 = arith.mulf %3, %1563 : vector<2x128xf32>
    %c1_782 = arith.constant 1 : index
    %c768_783 = arith.constant 768 : index
    %1565 = vector.load %arg2[%c1_782, %c768_783] : memref<2x14336xf32, #tpu.memory_space<vmem>>, vector<1x128xf32>
    %1566 = vector.broadcast %1565 : vector<1x128xf32> to vector<2x128xf32>
    %1567 = arith.mulf %6, %1566 : vector<2x128xf32>
    %1568 = arith.addf %1564, %1567 : vector<2x128xf32>
    %c0_784 = arith.constant 0 : index
    %c768_785 = arith.constant 768 : index
    %1569 = vector.load %arg3[%c0_784, %c768_785] : memref<1x14336xf32, #tpu.memory_space<vmem>>, vector<1x128xf32>
    %1570 = vector.broadcast %1569 : vector<1x128xf32> to vector<2x128xf32>
    %1571 = arith.addf %1568, %1570 : vector<2x128xf32>
    %cst_786 = arith.constant 0.000000e+00 : f32
    %1572 = vector.broadcast %cst_786 : f32 to vector<2x128xf32>
    %1573 = arith.maximumf %1571, %1572 : vector<2x128xf32>
    %c0_787 = arith.constant 0 : index
    %c768_788 = arith.constant 768 : index
    %1574 = vector.load %arg4[%c0_787, %c768_788] : memref<1x14336xf32, #tpu.memory_space<vmem>>, vector<1x128xf32>
    %1575 = vector.broadcast %1574 : vector<1x128xf32> to vector<2x128xf32>
    %1576 = arith.mulf %1573, %1575 : vector<2x128xf32>
    %c0_789 = arith.constant 0 : index
    %c1664 = arith.constant 1664 : index
    %1577 = vector.load %arg2[%c0_789, %c1664] : memref<2x14336xf32, #tpu.memory_space<vmem>>, vector<1x128xf32>
    %1578 = vector.broadcast %1577 : vector<1x128xf32> to vector<2x128xf32>
    %1579 = arith.mulf %3, %1578 : vector<2x128xf32>
    %c1_790 = arith.constant 1 : index
    %c1664_791 = arith.constant 1664 : index
    %1580 = vector.load %arg2[%c1_790, %c1664_791] : memref<2x14336xf32, #tpu.memory_space<vmem>>, vector<1x128xf32>
    %1581 = vector.broadcast %1580 : vector<1x128xf32> to vector<2x128xf32>
    %1582 = arith.mulf %6, %1581 : vector<2x128xf32>
    %1583 = arith.addf %1579, %1582 : vector<2x128xf32>
    %c0_792 = arith.constant 0 : index
    %c1664_793 = arith.constant 1664 : index
    %1584 = vector.load %arg3[%c0_792, %c1664_793] : memref<1x14336xf32, #tpu.memory_space<vmem>>, vector<1x128xf32>
    %1585 = vector.broadcast %1584 : vector<1x128xf32> to vector<2x128xf32>
    %1586 = arith.addf %1583, %1585 : vector<2x128xf32>
    %cst_794 = arith.constant 0.000000e+00 : f32
    %1587 = vector.broadcast %cst_794 : f32 to vector<2x128xf32>
    %1588 = arith.maximumf %1586, %1587 : vector<2x128xf32>
    %c0_795 = arith.constant 0 : index
    %c1664_796 = arith.constant 1664 : index
    %1589 = vector.load %arg4[%c0_795, %c1664_796] : memref<1x14336xf32, #tpu.memory_space<vmem>>, vector<1x128xf32>
    %1590 = vector.broadcast %1589 : vector<1x128xf32> to vector<2x128xf32>
    %1591 = arith.mulf %1588, %1590 : vector<2x128xf32>
    %1592 = arith.addf %1576, %1591 : vector<2x128xf32>
    %c0_797 = arith.constant 0 : index
    %c2560 = arith.constant 2560 : index
    %1593 = vector.load %arg2[%c0_797, %c2560] : memref<2x14336xf32, #tpu.memory_space<vmem>>, vector<1x128xf32>
    %1594 = vector.broadcast %1593 : vector<1x128xf32> to vector<2x128xf32>
    %1595 = arith.mulf %3, %1594 : vector<2x128xf32>
    %c1_798 = arith.constant 1 : index
    %c2560_799 = arith.constant 2560 : index
    %1596 = vector.load %arg2[%c1_798, %c2560_799] : memref<2x14336xf32, #tpu.memory_space<vmem>>, vector<1x128xf32>
    %1597 = vector.broadcast %1596 : vector<1x128xf32> to vector<2x128xf32>
    %1598 = arith.mulf %6, %1597 : vector<2x128xf32>
    %1599 = arith.addf %1595, %1598 : vector<2x128xf32>
    %c0_800 = arith.constant 0 : index
    %c2560_801 = arith.constant 2560 : index
    %1600 = vector.load %arg3[%c0_800, %c2560_801] : memref<1x14336xf32, #tpu.memory_space<vmem>>, vector<1x128xf32>
    %1601 = vector.broadcast %1600 : vector<1x128xf32> to vector<2x128xf32>
    %1602 = arith.addf %1599, %1601 : vector<2x128xf32>
    %cst_802 = arith.constant 0.000000e+00 : f32
    %1603 = vector.broadcast %cst_802 : f32 to vector<2x128xf32>
    %1604 = arith.maximumf %1602, %1603 : vector<2x128xf32>
    %c0_803 = arith.constant 0 : index
    %c2560_804 = arith.constant 2560 : index
    %1605 = vector.load %arg4[%c0_803, %c2560_804] : memref<1x14336xf32, #tpu.memory_space<vmem>>, vector<1x128xf32>
    %1606 = vector.broadcast %1605 : vector<1x128xf32> to vector<2x128xf32>
    %1607 = arith.mulf %1604, %1606 : vector<2x128xf32>
    %1608 = arith.addf %1592, %1607 : vector<2x128xf32>
    %c0_805 = arith.constant 0 : index
    %c3456 = arith.constant 3456 : index
    %1609 = vector.load %arg2[%c0_805, %c3456] : memref<2x14336xf32, #tpu.memory_space<vmem>>, vector<1x128xf32>
    %1610 = vector.broadcast %1609 : vector<1x128xf32> to vector<2x128xf32>
    %1611 = arith.mulf %3, %1610 : vector<2x128xf32>
    %c1_806 = arith.constant 1 : index
    %c3456_807 = arith.constant 3456 : index
    %1612 = vector.load %arg2[%c1_806, %c3456_807] : memref<2x14336xf32, #tpu.memory_space<vmem>>, vector<1x128xf32>
    %1613 = vector.broadcast %1612 : vector<1x128xf32> to vector<2x128xf32>
    %1614 = arith.mulf %6, %1613 : vector<2x128xf32>
    %1615 = arith.addf %1611, %1614 : vector<2x128xf32>
    %c0_808 = arith.constant 0 : index
    %c3456_809 = arith.constant 3456 : index
    %1616 = vector.load %arg3[%c0_808, %c3456_809] : memref<1x14336xf32, #tpu.memory_space<vmem>>, vector<1x128xf32>
    %1617 = vector.broadcast %1616 : vector<1x128xf32> to vector<2x128xf32>
    %1618 = arith.addf %1615, %1617 : vector<2x128xf32>
    %cst_810 = arith.constant 0.000000e+00 : f32
    %1619 = vector.broadcast %cst_810 : f32 to vector<2x128xf32>
    %1620 = arith.maximumf %1618, %1619 : vector<2x128xf32>
    %c0_811 = arith.constant 0 : index
    %c3456_812 = arith.constant 3456 : index
    %1621 = vector.load %arg4[%c0_811, %c3456_812] : memref<1x14336xf32, #tpu.memory_space<vmem>>, vector<1x128xf32>
    %1622 = vector.broadcast %1621 : vector<1x128xf32> to vector<2x128xf32>
    %1623 = arith.mulf %1620, %1622 : vector<2x128xf32>
    %1624 = arith.addf %1608, %1623 : vector<2x128xf32>
    %c0_813 = arith.constant 0 : index
    %c4352 = arith.constant 4352 : index
    %1625 = vector.load %arg2[%c0_813, %c4352] : memref<2x14336xf32, #tpu.memory_space<vmem>>, vector<1x128xf32>
    %1626 = vector.broadcast %1625 : vector<1x128xf32> to vector<2x128xf32>
    %1627 = arith.mulf %3, %1626 : vector<2x128xf32>
    %c1_814 = arith.constant 1 : index
    %c4352_815 = arith.constant 4352 : index
    %1628 = vector.load %arg2[%c1_814, %c4352_815] : memref<2x14336xf32, #tpu.memory_space<vmem>>, vector<1x128xf32>
    %1629 = vector.broadcast %1628 : vector<1x128xf32> to vector<2x128xf32>
    %1630 = arith.mulf %6, %1629 : vector<2x128xf32>
    %1631 = arith.addf %1627, %1630 : vector<2x128xf32>
    %c0_816 = arith.constant 0 : index
    %c4352_817 = arith.constant 4352 : index
    %1632 = vector.load %arg3[%c0_816, %c4352_817] : memref<1x14336xf32, #tpu.memory_space<vmem>>, vector<1x128xf32>
    %1633 = vector.broadcast %1632 : vector<1x128xf32> to vector<2x128xf32>
    %1634 = arith.addf %1631, %1633 : vector<2x128xf32>
    %cst_818 = arith.constant 0.000000e+00 : f32
    %1635 = vector.broadcast %cst_818 : f32 to vector<2x128xf32>
    %1636 = arith.maximumf %1634, %1635 : vector<2x128xf32>
    %c0_819 = arith.constant 0 : index
    %c4352_820 = arith.constant 4352 : index
    %1637 = vector.load %arg4[%c0_819, %c4352_820] : memref<1x14336xf32, #tpu.memory_space<vmem>>, vector<1x128xf32>
    %1638 = vector.broadcast %1637 : vector<1x128xf32> to vector<2x128xf32>
    %1639 = arith.mulf %1636, %1638 : vector<2x128xf32>
    %1640 = arith.addf %1624, %1639 : vector<2x128xf32>
    %c0_821 = arith.constant 0 : index
    %c5248 = arith.constant 5248 : index
    %1641 = vector.load %arg2[%c0_821, %c5248] : memref<2x14336xf32, #tpu.memory_space<vmem>>, vector<1x128xf32>
    %1642 = vector.broadcast %1641 : vector<1x128xf32> to vector<2x128xf32>
    %1643 = arith.mulf %3, %1642 : vector<2x128xf32>
    %c1_822 = arith.constant 1 : index
    %c5248_823 = arith.constant 5248 : index
    %1644 = vector.load %arg2[%c1_822, %c5248_823] : memref<2x14336xf32, #tpu.memory_space<vmem>>, vector<1x128xf32>
    %1645 = vector.broadcast %1644 : vector<1x128xf32> to vector<2x128xf32>
    %1646 = arith.mulf %6, %1645 : vector<2x128xf32>
    %1647 = arith.addf %1643, %1646 : vector<2x128xf32>
    %c0_824 = arith.constant 0 : index
    %c5248_825 = arith.constant 5248 : index
    %1648 = vector.load %arg3[%c0_824, %c5248_825] : memref<1x14336xf32, #tpu.memory_space<vmem>>, vector<1x128xf32>
    %1649 = vector.broadcast %1648 : vector<1x128xf32> to vector<2x128xf32>
    %1650 = arith.addf %1647, %1649 : vector<2x128xf32>
    %cst_826 = arith.constant 0.000000e+00 : f32
    %1651 = vector.broadcast %cst_826 : f32 to vector<2x128xf32>
    %1652 = arith.maximumf %1650, %1651 : vector<2x128xf32>
    %c0_827 = arith.constant 0 : index
    %c5248_828 = arith.constant 5248 : index
    %1653 = vector.load %arg4[%c0_827, %c5248_828] : memref<1x14336xf32, #tpu.memory_space<vmem>>, vector<1x128xf32>
    %1654 = vector.broadcast %1653 : vector<1x128xf32> to vector<2x128xf32>
    %1655 = arith.mulf %1652, %1654 : vector<2x128xf32>
    %1656 = arith.addf %1640, %1655 : vector<2x128xf32>
    %c0_829 = arith.constant 0 : index
    %c6144 = arith.constant 6144 : index
    %1657 = vector.load %arg2[%c0_829, %c6144] : memref<2x14336xf32, #tpu.memory_space<vmem>>, vector<1x128xf32>
    %1658 = vector.broadcast %1657 : vector<1x128xf32> to vector<2x128xf32>
    %1659 = arith.mulf %3, %1658 : vector<2x128xf32>
    %c1_830 = arith.constant 1 : index
    %c6144_831 = arith.constant 6144 : index
    %1660 = vector.load %arg2[%c1_830, %c6144_831] : memref<2x14336xf32, #tpu.memory_space<vmem>>, vector<1x128xf32>
    %1661 = vector.broadcast %1660 : vector<1x128xf32> to vector<2x128xf32>
    %1662 = arith.mulf %6, %1661 : vector<2x128xf32>
    %1663 = arith.addf %1659, %1662 : vector<2x128xf32>
    %c0_832 = arith.constant 0 : index
    %c6144_833 = arith.constant 6144 : index
    %1664 = vector.load %arg3[%c0_832, %c6144_833] : memref<1x14336xf32, #tpu.memory_space<vmem>>, vector<1x128xf32>
    %1665 = vector.broadcast %1664 : vector<1x128xf32> to vector<2x128xf32>
    %1666 = arith.addf %1663, %1665 : vector<2x128xf32>
    %cst_834 = arith.constant 0.000000e+00 : f32
    %1667 = vector.broadcast %cst_834 : f32 to vector<2x128xf32>
    %1668 = arith.maximumf %1666, %1667 : vector<2x128xf32>
    %c0_835 = arith.constant 0 : index
    %c6144_836 = arith.constant 6144 : index
    %1669 = vector.load %arg4[%c0_835, %c6144_836] : memref<1x14336xf32, #tpu.memory_space<vmem>>, vector<1x128xf32>
    %1670 = vector.broadcast %1669 : vector<1x128xf32> to vector<2x128xf32>
    %1671 = arith.mulf %1668, %1670 : vector<2x128xf32>
    %1672 = arith.addf %1656, %1671 : vector<2x128xf32>
    %c0_837 = arith.constant 0 : index
    %c7040 = arith.constant 7040 : index
    %1673 = vector.load %arg2[%c0_837, %c7040] : memref<2x14336xf32, #tpu.memory_space<vmem>>, vector<1x128xf32>
    %1674 = vector.broadcast %1673 : vector<1x128xf32> to vector<2x128xf32>
    %1675 = arith.mulf %3, %1674 : vector<2x128xf32>
    %c1_838 = arith.constant 1 : index
    %c7040_839 = arith.constant 7040 : index
    %1676 = vector.load %arg2[%c1_838, %c7040_839] : memref<2x14336xf32, #tpu.memory_space<vmem>>, vector<1x128xf32>
    %1677 = vector.broadcast %1676 : vector<1x128xf32> to vector<2x128xf32>
    %1678 = arith.mulf %6, %1677 : vector<2x128xf32>
    %1679 = arith.addf %1675, %1678 : vector<2x128xf32>
    %c0_840 = arith.constant 0 : index
    %c7040_841 = arith.constant 7040 : index
    %1680 = vector.load %arg3[%c0_840, %c7040_841] : memref<1x14336xf32, #tpu.memory_space<vmem>>, vector<1x128xf32>
    %1681 = vector.broadcast %1680 : vector<1x128xf32> to vector<2x128xf32>
    %1682 = arith.addf %1679, %1681 : vector<2x128xf32>
    %cst_842 = arith.constant 0.000000e+00 : f32
    %1683 = vector.broadcast %cst_842 : f32 to vector<2x128xf32>
    %1684 = arith.maximumf %1682, %1683 : vector<2x128xf32>
    %c0_843 = arith.constant 0 : index
    %c7040_844 = arith.constant 7040 : index
    %1685 = vector.load %arg4[%c0_843, %c7040_844] : memref<1x14336xf32, #tpu.memory_space<vmem>>, vector<1x128xf32>
    %1686 = vector.broadcast %1685 : vector<1x128xf32> to vector<2x128xf32>
    %1687 = arith.mulf %1684, %1686 : vector<2x128xf32>
    %1688 = arith.addf %1672, %1687 : vector<2x128xf32>
    %c0_845 = arith.constant 0 : index
    %c7936 = arith.constant 7936 : index
    %1689 = vector.load %arg2[%c0_845, %c7936] : memref<2x14336xf32, #tpu.memory_space<vmem>>, vector<1x128xf32>
    %1690 = vector.broadcast %1689 : vector<1x128xf32> to vector<2x128xf32>
    %1691 = arith.mulf %3, %1690 : vector<2x128xf32>
    %c1_846 = arith.constant 1 : index
    %c7936_847 = arith.constant 7936 : index
    %1692 = vector.load %arg2[%c1_846, %c7936_847] : memref<2x14336xf32, #tpu.memory_space<vmem>>, vector<1x128xf32>
    %1693 = vector.broadcast %1692 : vector<1x128xf32> to vector<2x128xf32>
    %1694 = arith.mulf %6, %1693 : vector<2x128xf32>
    %1695 = arith.addf %1691, %1694 : vector<2x128xf32>
    %c0_848 = arith.constant 0 : index
    %c7936_849 = arith.constant 7936 : index
    %1696 = vector.load %arg3[%c0_848, %c7936_849] : memref<1x14336xf32, #tpu.memory_space<vmem>>, vector<1x128xf32>
    %1697 = vector.broadcast %1696 : vector<1x128xf32> to vector<2x128xf32>
    %1698 = arith.addf %1695, %1697 : vector<2x128xf32>
    %cst_850 = arith.constant 0.000000e+00 : f32
    %1699 = vector.broadcast %cst_850 : f32 to vector<2x128xf32>
    %1700 = arith.maximumf %1698, %1699 : vector<2x128xf32>
    %c0_851 = arith.constant 0 : index
    %c7936_852 = arith.constant 7936 : index
    %1701 = vector.load %arg4[%c0_851, %c7936_852] : memref<1x14336xf32, #tpu.memory_space<vmem>>, vector<1x128xf32>
    %1702 = vector.broadcast %1701 : vector<1x128xf32> to vector<2x128xf32>
    %1703 = arith.mulf %1700, %1702 : vector<2x128xf32>
    %1704 = arith.addf %1688, %1703 : vector<2x128xf32>
    %c0_853 = arith.constant 0 : index
    %c8832 = arith.constant 8832 : index
    %1705 = vector.load %arg2[%c0_853, %c8832] : memref<2x14336xf32, #tpu.memory_space<vmem>>, vector<1x128xf32>
    %1706 = vector.broadcast %1705 : vector<1x128xf32> to vector<2x128xf32>
    %1707 = arith.mulf %3, %1706 : vector<2x128xf32>
    %c1_854 = arith.constant 1 : index
    %c8832_855 = arith.constant 8832 : index
    %1708 = vector.load %arg2[%c1_854, %c8832_855] : memref<2x14336xf32, #tpu.memory_space<vmem>>, vector<1x128xf32>
    %1709 = vector.broadcast %1708 : vector<1x128xf32> to vector<2x128xf32>
    %1710 = arith.mulf %6, %1709 : vector<2x128xf32>
    %1711 = arith.addf %1707, %1710 : vector<2x128xf32>
    %c0_856 = arith.constant 0 : index
    %c8832_857 = arith.constant 8832 : index
    %1712 = vector.load %arg3[%c0_856, %c8832_857] : memref<1x14336xf32, #tpu.memory_space<vmem>>, vector<1x128xf32>
    %1713 = vector.broadcast %1712 : vector<1x128xf32> to vector<2x128xf32>
    %1714 = arith.addf %1711, %1713 : vector<2x128xf32>
    %cst_858 = arith.constant 0.000000e+00 : f32
    %1715 = vector.broadcast %cst_858 : f32 to vector<2x128xf32>
    %1716 = arith.maximumf %1714, %1715 : vector<2x128xf32>
    %c0_859 = arith.constant 0 : index
    %c8832_860 = arith.constant 8832 : index
    %1717 = vector.load %arg4[%c0_859, %c8832_860] : memref<1x14336xf32, #tpu.memory_space<vmem>>, vector<1x128xf32>
    %1718 = vector.broadcast %1717 : vector<1x128xf32> to vector<2x128xf32>
    %1719 = arith.mulf %1716, %1718 : vector<2x128xf32>
    %1720 = arith.addf %1704, %1719 : vector<2x128xf32>
    %c0_861 = arith.constant 0 : index
    %c9728 = arith.constant 9728 : index
    %1721 = vector.load %arg2[%c0_861, %c9728] : memref<2x14336xf32, #tpu.memory_space<vmem>>, vector<1x128xf32>
    %1722 = vector.broadcast %1721 : vector<1x128xf32> to vector<2x128xf32>
    %1723 = arith.mulf %3, %1722 : vector<2x128xf32>
    %c1_862 = arith.constant 1 : index
    %c9728_863 = arith.constant 9728 : index
    %1724 = vector.load %arg2[%c1_862, %c9728_863] : memref<2x14336xf32, #tpu.memory_space<vmem>>, vector<1x128xf32>
    %1725 = vector.broadcast %1724 : vector<1x128xf32> to vector<2x128xf32>
    %1726 = arith.mulf %6, %1725 : vector<2x128xf32>
    %1727 = arith.addf %1723, %1726 : vector<2x128xf32>
    %c0_864 = arith.constant 0 : index
    %c9728_865 = arith.constant 9728 : index
    %1728 = vector.load %arg3[%c0_864, %c9728_865] : memref<1x14336xf32, #tpu.memory_space<vmem>>, vector<1x128xf32>
    %1729 = vector.broadcast %1728 : vector<1x128xf32> to vector<2x128xf32>
    %1730 = arith.addf %1727, %1729 : vector<2x128xf32>
    %cst_866 = arith.constant 0.000000e+00 : f32
    %1731 = vector.broadcast %cst_866 : f32 to vector<2x128xf32>
    %1732 = arith.maximumf %1730, %1731 : vector<2x128xf32>
    %c0_867 = arith.constant 0 : index
    %c9728_868 = arith.constant 9728 : index
    %1733 = vector.load %arg4[%c0_867, %c9728_868] : memref<1x14336xf32, #tpu.memory_space<vmem>>, vector<1x128xf32>
    %1734 = vector.broadcast %1733 : vector<1x128xf32> to vector<2x128xf32>
    %1735 = arith.mulf %1732, %1734 : vector<2x128xf32>
    %1736 = arith.addf %1720, %1735 : vector<2x128xf32>
    %c0_869 = arith.constant 0 : index
    %c10624 = arith.constant 10624 : index
    %1737 = vector.load %arg2[%c0_869, %c10624] : memref<2x14336xf32, #tpu.memory_space<vmem>>, vector<1x128xf32>
    %1738 = vector.broadcast %1737 : vector<1x128xf32> to vector<2x128xf32>
    %1739 = arith.mulf %3, %1738 : vector<2x128xf32>
    %c1_870 = arith.constant 1 : index
    %c10624_871 = arith.constant 10624 : index
    %1740 = vector.load %arg2[%c1_870, %c10624_871] : memref<2x14336xf32, #tpu.memory_space<vmem>>, vector<1x128xf32>
    %1741 = vector.broadcast %1740 : vector<1x128xf32> to vector<2x128xf32>
    %1742 = arith.mulf %6, %1741 : vector<2x128xf32>
    %1743 = arith.addf %1739, %1742 : vector<2x128xf32>
    %c0_872 = arith.constant 0 : index
    %c10624_873 = arith.constant 10624 : index
    %1744 = vector.load %arg3[%c0_872, %c10624_873] : memref<1x14336xf32, #tpu.memory_space<vmem>>, vector<1x128xf32>
    %1745 = vector.broadcast %1744 : vector<1x128xf32> to vector<2x128xf32>
    %1746 = arith.addf %1743, %1745 : vector<2x128xf32>
    %cst_874 = arith.constant 0.000000e+00 : f32
    %1747 = vector.broadcast %cst_874 : f32 to vector<2x128xf32>
    %1748 = arith.maximumf %1746, %1747 : vector<2x128xf32>
    %c0_875 = arith.constant 0 : index
    %c10624_876 = arith.constant 10624 : index
    %1749 = vector.load %arg4[%c0_875, %c10624_876] : memref<1x14336xf32, #tpu.memory_space<vmem>>, vector<1x128xf32>
    %1750 = vector.broadcast %1749 : vector<1x128xf32> to vector<2x128xf32>
    %1751 = arith.mulf %1748, %1750 : vector<2x128xf32>
    %1752 = arith.addf %1736, %1751 : vector<2x128xf32>
    %c0_877 = arith.constant 0 : index
    %c11520 = arith.constant 11520 : index
    %1753 = vector.load %arg2[%c0_877, %c11520] : memref<2x14336xf32, #tpu.memory_space<vmem>>, vector<1x128xf32>
    %1754 = vector.broadcast %1753 : vector<1x128xf32> to vector<2x128xf32>
    %1755 = arith.mulf %3, %1754 : vector<2x128xf32>
    %c1_878 = arith.constant 1 : index
    %c11520_879 = arith.constant 11520 : index
    %1756 = vector.load %arg2[%c1_878, %c11520_879] : memref<2x14336xf32, #tpu.memory_space<vmem>>, vector<1x128xf32>
    %1757 = vector.broadcast %1756 : vector<1x128xf32> to vector<2x128xf32>
    %1758 = arith.mulf %6, %1757 : vector<2x128xf32>
    %1759 = arith.addf %1755, %1758 : vector<2x128xf32>
    %c0_880 = arith.constant 0 : index
    %c11520_881 = arith.constant 11520 : index
    %1760 = vector.load %arg3[%c0_880, %c11520_881] : memref<1x14336xf32, #tpu.memory_space<vmem>>, vector<1x128xf32>
    %1761 = vector.broadcast %1760 : vector<1x128xf32> to vector<2x128xf32>
    %1762 = arith.addf %1759, %1761 : vector<2x128xf32>
    %cst_882 = arith.constant 0.000000e+00 : f32
    %1763 = vector.broadcast %cst_882 : f32 to vector<2x128xf32>
    %1764 = arith.maximumf %1762, %1763 : vector<2x128xf32>
    %c0_883 = arith.constant 0 : index
    %c11520_884 = arith.constant 11520 : index
    %1765 = vector.load %arg4[%c0_883, %c11520_884] : memref<1x14336xf32, #tpu.memory_space<vmem>>, vector<1x128xf32>
    %1766 = vector.broadcast %1765 : vector<1x128xf32> to vector<2x128xf32>
    %1767 = arith.mulf %1764, %1766 : vector<2x128xf32>
    %1768 = arith.addf %1752, %1767 : vector<2x128xf32>
    %c0_885 = arith.constant 0 : index
    %c12416 = arith.constant 12416 : index
    %1769 = vector.load %arg2[%c0_885, %c12416] : memref<2x14336xf32, #tpu.memory_space<vmem>>, vector<1x128xf32>
    %1770 = vector.broadcast %1769 : vector<1x128xf32> to vector<2x128xf32>
    %1771 = arith.mulf %3, %1770 : vector<2x128xf32>
    %c1_886 = arith.constant 1 : index
    %c12416_887 = arith.constant 12416 : index
    %1772 = vector.load %arg2[%c1_886, %c12416_887] : memref<2x14336xf32, #tpu.memory_space<vmem>>, vector<1x128xf32>
    %1773 = vector.broadcast %1772 : vector<1x128xf32> to vector<2x128xf32>
    %1774 = arith.mulf %6, %1773 : vector<2x128xf32>
    %1775 = arith.addf %1771, %1774 : vector<2x128xf32>
    %c0_888 = arith.constant 0 : index
    %c12416_889 = arith.constant 12416 : index
    %1776 = vector.load %arg3[%c0_888, %c12416_889] : memref<1x14336xf32, #tpu.memory_space<vmem>>, vector<1x128xf32>
    %1777 = vector.broadcast %1776 : vector<1x128xf32> to vector<2x128xf32>
    %1778 = arith.addf %1775, %1777 : vector<2x128xf32>
    %cst_890 = arith.constant 0.000000e+00 : f32
    %1779 = vector.broadcast %cst_890 : f32 to vector<2x128xf32>
    %1780 = arith.maximumf %1778, %1779 : vector<2x128xf32>
    %c0_891 = arith.constant 0 : index
    %c12416_892 = arith.constant 12416 : index
    %1781 = vector.load %arg4[%c0_891, %c12416_892] : memref<1x14336xf32, #tpu.memory_space<vmem>>, vector<1x128xf32>
    %1782 = vector.broadcast %1781 : vector<1x128xf32> to vector<2x128xf32>
    %1783 = arith.mulf %1780, %1782 : vector<2x128xf32>
    %1784 = arith.addf %1768, %1783 : vector<2x128xf32>
    %c0_893 = arith.constant 0 : index
    %c13312 = arith.constant 13312 : index
    %1785 = vector.load %arg2[%c0_893, %c13312] : memref<2x14336xf32, #tpu.memory_space<vmem>>, vector<1x128xf32>
    %1786 = vector.broadcast %1785 : vector<1x128xf32> to vector<2x128xf32>
    %1787 = arith.mulf %3, %1786 : vector<2x128xf32>
    %c1_894 = arith.constant 1 : index
    %c13312_895 = arith.constant 13312 : index
    %1788 = vector.load %arg2[%c1_894, %c13312_895] : memref<2x14336xf32, #tpu.memory_space<vmem>>, vector<1x128xf32>
    %1789 = vector.broadcast %1788 : vector<1x128xf32> to vector<2x128xf32>
    %1790 = arith.mulf %6, %1789 : vector<2x128xf32>
    %1791 = arith.addf %1787, %1790 : vector<2x128xf32>
    %c0_896 = arith.constant 0 : index
    %c13312_897 = arith.constant 13312 : index
    %1792 = vector.load %arg3[%c0_896, %c13312_897] : memref<1x14336xf32, #tpu.memory_space<vmem>>, vector<1x128xf32>
    %1793 = vector.broadcast %1792 : vector<1x128xf32> to vector<2x128xf32>
    %1794 = arith.addf %1791, %1793 : vector<2x128xf32>
    %cst_898 = arith.constant 0.000000e+00 : f32
    %1795 = vector.broadcast %cst_898 : f32 to vector<2x128xf32>
    %1796 = arith.maximumf %1794, %1795 : vector<2x128xf32>
    %c0_899 = arith.constant 0 : index
    %c13312_900 = arith.constant 13312 : index
    %1797 = vector.load %arg4[%c0_899, %c13312_900] : memref<1x14336xf32, #tpu.memory_space<vmem>>, vector<1x128xf32>
    %1798 = vector.broadcast %1797 : vector<1x128xf32> to vector<2x128xf32>
    %1799 = arith.mulf %1796, %1798 : vector<2x128xf32>
    %1800 = arith.addf %1784, %1799 : vector<2x128xf32>
    %c0_901 = arith.constant 0 : index
    %c14208 = arith.constant 14208 : index
    %1801 = vector.load %arg2[%c0_901, %c14208] : memref<2x14336xf32, #tpu.memory_space<vmem>>, vector<1x128xf32>
    %1802 = vector.broadcast %1801 : vector<1x128xf32> to vector<2x128xf32>
    %1803 = arith.mulf %3, %1802 : vector<2x128xf32>
    %c1_902 = arith.constant 1 : index
    %c14208_903 = arith.constant 14208 : index
    %1804 = vector.load %arg2[%c1_902, %c14208_903] : memref<2x14336xf32, #tpu.memory_space<vmem>>, vector<1x128xf32>
    %1805 = vector.broadcast %1804 : vector<1x128xf32> to vector<2x128xf32>
    %1806 = arith.mulf %6, %1805 : vector<2x128xf32>
    %1807 = arith.addf %1803, %1806 : vector<2x128xf32>
    %c0_904 = arith.constant 0 : index
    %c14208_905 = arith.constant 14208 : index
    %1808 = vector.load %arg3[%c0_904, %c14208_905] : memref<1x14336xf32, #tpu.memory_space<vmem>>, vector<1x128xf32>
    %1809 = vector.broadcast %1808 : vector<1x128xf32> to vector<2x128xf32>
    %1810 = arith.addf %1807, %1809 : vector<2x128xf32>
    %cst_906 = arith.constant 0.000000e+00 : f32
    %1811 = vector.broadcast %cst_906 : f32 to vector<2x128xf32>
    %1812 = arith.maximumf %1810, %1811 : vector<2x128xf32>
    %c0_907 = arith.constant 0 : index
    %c14208_908 = arith.constant 14208 : index
    %1813 = vector.load %arg4[%c0_907, %c14208_908] : memref<1x14336xf32, #tpu.memory_space<vmem>>, vector<1x128xf32>
    %1814 = vector.broadcast %1813 : vector<1x128xf32> to vector<2x128xf32>
    %1815 = arith.mulf %1812, %1814 : vector<2x128xf32>
    %1816 = arith.addf %1800, %1815 : vector<2x128xf32>
    %1817 = vector.extract_strided_slice %1816 {offsets = [0, 0], sizes = [2, 16], strides = [1, 1]} : vector<2x128xf32> to vector<2x16xf32>
    %1818 = vector.broadcast %7 : f32 to vector<2x16xf32>
    %1819 = arith.addf %1817, %1818 : vector<2x16xf32>
    %1820 = math.tanh %1819 : vector<2x16xf32>
    %c0_909 = arith.constant 0 : index
    %c768_910 = arith.constant 768 : index
    %1821 = vector.load %arg6[%c0_909, %c768_910] : memref<2x784xf32, #tpu.memory_space<vmem>>, vector<2x16xf32>
    tpu.vector_store %arg6[%c0_909, %c768_910], %1820 {strides = array<i32>} : memref<2x784xf32, #tpu.memory_space<vmem>>, vector<2x16xf32>,
    return
  }
  func.func @transform_0(%arg0: i32) -> (i32, i32) {
    %c0_i32 = arith.constant 0 : i32
    %c0_i32_0 = arith.constant 0 : i32
    return %arg0, %c0_i32 : i32, i32
  }
  func.func @transform_1(%arg0: i32) -> (i32, i32) {
    %c0_i32 = arith.constant 0 : i32
    %c0_i32_0 = arith.constant 0 : i32
    %c0_i32_1 = arith.constant 0 : i32
    return %c0_i32, %c0_i32_0 : i32, i32
  }
  func.func @transform_2(%arg0: i32) -> (i32, i32) {
    %c0_i32 = arith.constant 0 : i32
    %c0_i32_0 = arith.constant 0 : i32
    %c0_i32_1 = arith.constant 0 : i32
    return %c0_i32, %c0_i32_0 : i32, i32
  }
  func.func @transform_3(%arg0: i32) -> (i32, i32) {
    %c0_i32 = arith.constant 0 : i32
    %c0_i32_0 = arith.constant 0 : i32
    %c0_i32_1 = arith.constant 0 : i32
    return %c0_i32, %c0_i32_0 : i32, i32
  }
  func.func @transform_4(%arg0: i32) -> i32 {
    %c0_i32 = arith.constant 0 : i32
    %c0_i32_0 = arith.constant 0 : i32
    return %c0_i32 : i32
  }
  func.func @transform_5(%arg0: i32) -> (i32, i32) {
    %c0_i32 = arith.constant 0 : i32
    %c0_i32_0 = arith.constant 0 : i32
    return %arg0, %c0_i32 : i32, i32
  }
}

</mosaic_0001>

<llo_original>
// kernel: decoder_forward.1
$region0: #{decoder_forward.1}
  #allocation0 [shape = 'u32[]', space=smem, size = 0x4, offset = 0x4, fixed_abs, tag = 'smem constant byte address 0x4 - core index']
  #allocation1 [shape = 'u32[144,128]{1,0:T(1,128)}', space=vmem, size = 0x12000, scoped, tag = 'internal scratch']
  #allocation2 [shape = 'f32[1]{0:T(128)S(6)}', space=smem, size = 0x200, scoped, tag = 'scoped memory for decoder_forward.1']
  %s0 = inlined_call_operand.vmem [shape: f32[2,2], index: 0, kind: input, shape index: {}]
  %s1 = inlined_call_operand.hbm [shape: f32[2,14336], index: 1, kind: input, shape index: {}]
  %s2 = inlined_call_operand.hbm [shape: f32[1,14336], index: 2, kind: input, shape index: {}]
  %s3 = inlined_call_operand.hbm [shape: f32[1,14336], index: 3, kind: input, shape index: {}]
  %s4 = inlined_call_operand.<no memory space> [shape: f32[1], index: 4, kind: input, shape index: {}]
  %s5 = inlined_call_operand.vmem [shape: f32[2,784], index: 5, kind: output, shape index: {}]
  %s6 = sld [smem:[#allocation0]]
  $region42: #{decoder_forward.1} parent=0
    _
  %s8 = ssub.s32 1, %s6
  %s9 = scalar_select 0, %s8, %s6
  %10 = sst [smem:[#allocation2]] %s4
  $region1: #{decoder_forward.1} parent=0
    #allocation3 [shape = 'u8[114688]{0}', space=vmem, size = 0x1c000, scoped, tag = 'input window, operand 1, single buffered']
    #allocation4 [shape = 's32[1]{0}', space=sflag, size = 0x4, scoped, tag = 'scoped memory for decoder_forward.1']
    #allocation5 [shape = 'u8[57344]{0}', space=vmem, size = 0xe000, scoped, tag = 'input window, operand 2, single buffered']
    #allocation6 [shape = 's32[1]{0}', space=sflag, size = 0x4, scoped, tag = 'scoped memory for decoder_forward.1']
    #allocation7 [shape = 'u8[57344]{0}', space=vmem, size = 0xe000, scoped, tag = 'input window, operand 3, single buffered']
    %11 = vsyncpa [#allocation4], 0
    %12 = vsyncpa [#allocation6], 0
    // Predicated region
    $region2: #{decoder_forward.1} parent=1 // pred_check
      _
    $region3: #{decoder_forward.1} parent=1 // pred_check_branch
      %14 = sbr.rel (0) target = $region5
    $region4: #{decoder_forward.1} parent=1 // pred_region
      _
    $region5: #{decoder_forward.1} parent=1 // pred_fallthru
      _
    // Predicated region
    $region6: #{decoder_forward.1} parent=1 // pred_check
      _
    $region7: #{decoder_forward.1} parent=1 // pred_check_branch
      %16 = sbr.rel (0) target = $region9
    $region8: #{decoder_forward.1} parent=1 // pred_region
      %s18 = ssub.s32 3584, 3584
      %19 = vsyncadd [#allocation4], %s18
      %s21 = sshll.u32 [#allocation3], 4
      %s22 = int_to_ptr.vmem [resolvable:$true] %s21
      %24 = dma.hbm_to_vmem [thread:$0]  %s1, 3584, %s22, [#allocation4]
    $region9: #{decoder_forward.1} parent=1 // pred_fallthru
      _
    // Predicated region
    $region10: #{decoder_forward.1} parent=1 // pred_check
      _
    $region11: #{decoder_forward.1} parent=1 // pred_check_branch
      %26 = sbr.rel (0) target = $region13
    $region12: #{decoder_forward.1} parent=1 // pred_region
      %s28 = ssub.s32 1792, 1792
      %29 = vsyncadd [#allocation6], %s28
      %s31 = sshll.u32 [#allocation5], 4
      %s32 = int_to_ptr.vmem [resolvable:$true] %s31
      %34 = dma.hbm_to_vmem [thread:$0]  %s2, 1792, %s32, [#allocation6]
    $region13: #{decoder_forward.1} parent=1 // pred_fallthru
      _
    // Predicated region
    $region14: #{decoder_forward.1} parent=1 // pred_check
      _
    $region15: #{decoder_forward.1} parent=1 // pred_check_branch
      %36 = sbr.rel (0) target = $region17
    $region16: #{decoder_forward.1} parent=1 // pred_region
      %s38 = ssub.s32 1792, 1792
      %39 = vsyncadd [#allocation6], %s38
      %s41 = sshll.u32 [#allocation7], 4
      %s42 = int_to_ptr.vmem [resolvable:$true] %s41
      %44 = dma.hbm_to_vmem [thread:$0]  %s3, 1792, %s42, [#allocation6]
    $region17: #{decoder_forward.1} parent=1 // pred_fallthru
      _
    // Predicated region
    $region18: #{decoder_forward.1} parent=1 // pred_check
      _
    $region19: #{decoder_forward.1} parent=1 // pred_check_branch
      %46 = sbr.rel (0) target = $region21
    $region20: #{decoder_forward.1} parent=1 // pred_region
      _
    $region21: #{decoder_forward.1} parent=1 // pred_fallthru
      _
    // Predicated region
    $region22: #{decoder_forward.1} parent=1 // pred_check
      _
    $region23: #{decoder_forward.1} parent=1 // pred_check_branch
      %48 = sbr.rel (0) target = $region25
    $region24: #{decoder_forward.1} parent=1 // pred_region
      %49 = dma.done [#allocation4], 3584
    $region25: #{decoder_forward.1} parent=1 // pred_fallthru
      _
    // Predicated region
    $region26: #{decoder_forward.1} parent=1 // pred_check
      _
    $region27: #{decoder_forward.1} parent=1 // pred_check_branch
      %51 = sbr.rel (0) target = $region29
    $region28: #{decoder_forward.1} parent=1 // pred_region
      %52 = dma.done [#allocation6], 1792
    $region29: #{decoder_forward.1} parent=1 // pred_fallthru
      _
    // Predicated region
    $region30: #{decoder_forward.1} parent=1 // pred_check
      _
    $region31: #{decoder_forward.1} parent=1 // pred_check_branch
      %54 = sbr.rel (0) target = $region33
    $region32: #{decoder_forward.1} parent=1 // pred_region
      %55 = dma.done [#allocation6], 1792
    $region33: #{decoder_forward.1} parent=1 // pred_fallthru
      _
    %v56 = vld [vmem:[%s0] sm:$0x3]
    %58 = vset.pattern.permute.xlu0 0
    %59 = vperm.xlu0 %58, %v56
    %v60 = vpop.permute.xlu0 %59
    %62 = vset.pattern.permute.xlu0 1
    %63 = vperm.xlu0 %62, %v56
    %v64 = vpop.permute.xlu0 %63
    %s66 = sld [smem:[#allocation2]]
    %v67 = vld [vmem:[#allocation3] sm:$0x1]
    %v68 = vlaneseq
    %v69 = vshrl.u32 %v68, 7
    %v70 = vsub.s32 0, %v69
    %v71 = vrot.slane %v67, %v70
    %v72 = vmul.f32 %v60, %v71
    %v73 = vld [vmem:[#allocation3 + $0x1] sm:$0x1]
    %v74 = vlaneseq
    %v75 = vshrl.u32 %v74, 7
    %v76 = vsub.s32 0, %v75
    %v77 = vrot.slane %v73, %v76
    %v78 = vmul.f32 %v64, %v77
    %v79 = vadd.f32 %v72, %v78
    %v80 = vld [vmem:[#allocation5] sm:$0x1]
    %v82 = vlaneseq
    %v83 = vshrl.u32 %v82, 7
    %v84 = vsub.s32 0, %v83
    %v85 = vrot.slane %v80, %v84
    %v87 = vadd.f32 %v79, %v85
    %v88 = vmax.f32 %v87, 0.0
    %v89 = vld [vmem:[#allocation7] sm:$0x1]
    %v91 = vlaneseq
    %v92 = vshrl.u32 %v91, 7
    %v93 = vsub.s32 0, %v92
    %v94 = vrot.slane %v89, %v93
    %v96 = vmul.f32 %v88, %v94
    %v97 = vld [vmem:[#allocation3 + $0xe] sm:$0x1]
    %v98 = vlaneseq
    %v99 = vshrl.u32 %v98, 7
    %v100 = vsub.s32 0, %v99
    %v101 = vrot.slane %v97, %v100
    %v102 = vmul.f32 %v60, %v101
    %v103 = vld [vmem:[#allocation3 + $0xf] sm:$0x1]
    %v104 = vlaneseq
    %v105 = vshrl.u32 %v104, 7
    %v106 = vsub.s32 0, %v105
    %v107 = vrot.slane %v103, %v106
    %v108 = vmul.f32 %v64, %v107
    %v109 = vadd.f32 %v102, %v108
    %v110 = vld [vmem:[#allocation5 + $0x7] sm:$0x1]
    %v112 = vlaneseq
    %v113 = vshrl.u32 %v112, 7
    %v114 = vsub.s32 0, %v113
    %v115 = vrot.slane %v110, %v114
    %v117 = vadd.f32 %v109, %v115
    %v118 = vmax.f32 %v117, 0.0
    %v119 = vld [vmem:[#allocation7 + $0x7] sm:$0x1]
    %v121 = vlaneseq
    %v122 = vshrl.u32 %v121, 7
    %v123 = vsub.s32 0, %v122
    %v124 = vrot.slane %v119, %v123
    %v126 = vmul.f32 %v118, %v124
    %v127 = vadd.f32 %v96, %v126
    %v128 = vld [vmem:[#allocation3 + $0x1c] sm:$0x1]
    %v129 = vlaneseq
    %v130 = vshrl.u32 %v129, 7
    %v131 = vsub.s32 0, %v130
    %v132 = vrot.slane %v128, %v131
    %v133 = vmul.f32 %v60, %v132
    %v134 = vld [vmem:[#allocation3 + $0x1d] sm:$0x1]
    %v135 = vlaneseq
    %v136 = vshrl.u32 %v135, 7
    %v137 = vsub.s32 0, %v136
    %v138 = vrot.slane %v134, %v137
    %v139 = vmul.f32 %v64, %v138
    %v140 = vadd.f32 %v133, %v139
    %v141 = vld [vmem:[#allocation5 + $0xe] sm:$0x1]
    %v143 = vlaneseq
    %v144 = vshrl.u32 %v143, 7
    %v145 = vsub.s32 0, %v144
    %v146 = vrot.slane %v141, %v145
    %v148 = vadd.f32 %v140, %v146
    %v149 = vmax.f32 %v148, 0.0
    %v150 = vld [vmem:[#allocation7 + $0xe] sm:$0x1]
    %v152 = vlaneseq
    %v153 = vshrl.u32 %v152, 7
    %v154 = vsub.s32 0, %v153
    %v155 = vrot.slane %v150, %v154
    %v157 = vmul.f32 %v149, %v155
    %v158 = vadd.f32 %v127, %v157
    %v159 = vld [vmem:[#allocation3 + $0x2a] sm:$0x1]
    %v160 = vlaneseq
    %v161 = vshrl.u32 %v160, 7
    %v162 = vsub.s32 0, %v161
    %v163 = vrot.slane %v159, %v162
    %v164 = vmul.f32 %v60, %v163
    %v165 = vld [vmem:[#allocation3 + $0x2b] sm:$0x1]
    %v166 = vlaneseq
    %v167 = vshrl.u32 %v166, 7
    %v168 = vsub.s32 0, %v167
    %v169 = vrot.slane %v165, %v168
    %v170 = vmul.f32 %v64, %v169
    %v171 = vadd.f32 %v164, %v170
    %v172 = vld [vmem:[#allocation5 + $0x15] sm:$0x1]
    %v174 = vlaneseq
    %v175 = vshrl.u32 %v174, 7
    %v176 = vsub.s32 0, %v175
    %v177 = vrot.slane %v172, %v176
    %v179 = vadd.f32 %v171, %v177
    %v180 = vmax.f32 %v179, 0.0
    %v181 = vld [vmem:[#allocation7 + $0x15] sm:$0x1]
    %v183 = vlaneseq
    %v184 = vshrl.u32 %v183, 7
    %v185 = vsub.s32 0, %v184
    %v186 = vrot.slane %v181, %v185
    %v188 = vmul.f32 %v180, %v186
    %v189 = vadd.f32 %v158, %v188
    %v190 = vld [vmem:[#allocation3 + $0x38] sm:$0x1]
    %v191 = vlaneseq
    %v192 = vshrl.u32 %v191, 7
    %v193 = vsub.s32 0, %v192
    %v194 = vrot.slane %v190, %v193
    %v195 = vmul.f32 %v60, %v194
    %v196 = vld [vmem:[#allocation3 + $0x39] sm:$0x1]
    %v197 = vlaneseq
    %v198 = vshrl.u32 %v197, 7
    %v199 = vsub.s32 0, %v198
    %v200 = vrot.slane %v196, %v199
    %v201 = vmul.f32 %v64, %v200
    %v202 = vadd.f32 %v195, %v201
    %v203 = vld [vmem:[#allocation5 + $0x1c] sm:$0x1]
    %v205 = vlaneseq
    %v206 = vshrl.u32 %v205, 7
    %v207 = vsub.s32 0, %v206
    %v208 = vrot.slane %v203, %v207
    %v210 = vadd.f32 %v202, %v208
    %v211 = vmax.f32 %v210, 0.0
    %v212 = vld [vmem:[#allocation7 + $0x1c] sm:$0x1]
    %v214 = vlaneseq
    %v215 = vshrl.u32 %v214, 7
    %v216 = vsub.s32 0, %v215
    %v217 = vrot.slane %v212, %v216
    %v219 = vmul.f32 %v211, %v217
    %v220 = vadd.f32 %v189, %v219
    %v221 = vld [vmem:[#allocation3 + $0x46] sm:$0x1]
    %v222 = vlaneseq
    %v223 = vshrl.u32 %v222, 7
    %v224 = vsub.s32 0, %v223
    %v225 = vrot.slane %v221, %v224
    %v226 = vmul.f32 %v60, %v225
    %v227 = vld [vmem:[#allocation3 + $0x47] sm:$0x1]
    %v228 = vlaneseq
    %v229 = vshrl.u32 %v228, 7
    %v230 = vsub.s32 0, %v229
    %v231 = vrot.slane %v227, %v230
    %v232 = vmul.f32 %v64, %v231
    %v233 = vadd.f32 %v226, %v232
    %v234 = vld [vmem:[#allocation5 + $0x23] sm:$0x1]
    %v236 = vlaneseq
    %v237 = vshrl.u32 %v236, 7
    %v238 = vsub.s32 0, %v237
    %v239 = vrot.slane %v234, %v238
    %v241 = vadd.f32 %v233, %v239
    %v242 = vmax.f32 %v241, 0.0
    %v243 = vld [vmem:[#allocation7 + $0x23] sm:$0x1]
    %v245 = vlaneseq
    %v246 = vshrl.u32 %v245, 7
    %v247 = vsub.s32 0, %v246
    %v248 = vrot.slane %v243, %v247
    %v250 = vmul.f32 %v242, %v248
    %v251 = vadd.f32 %v220, %v250
    %v252 = vld [vmem:[#allocation3 + $0x54] sm:$0x1]
    %v253 = vlaneseq
    %v254 = vshrl.u32 %v253, 7
    %v255 = vsub.s32 0, %v254
    %v256 = vrot.slane %v252, %v255
    %v257 = vmul.f32 %v60, %v256
    %v258 = vld [vmem:[#allocation3 + $0x55] sm:$0x1]
    %v259 = vlaneseq
    %v260 = vshrl.u32 %v259, 7
    %v261 = vsub.s32 0, %v260
    %v262 = vrot.slane %v258, %v261
    %v263 = vmul.f32 %v64, %v262
    %v264 = vadd.f32 %v257, %v263
    %v265 = vld [vmem:[#allocation5 + $0x2a] sm:$0x1]
    %v267 = vlaneseq
    %v268 = vshrl.u32 %v267, 7
    %v269 = vsub.s32 0, %v268
    %v270 = vrot.slane %v265, %v269
    %v272 = vadd.f32 %v264, %v270
    %v273 = vmax.f32 %v272, 0.0
    %v274 = vld [vmem:[#allocation7 + $0x2a] sm:$0x1]
    %v276 = vlaneseq
    %v277 = vshrl.u32 %v276, 7
    %v278 = vsub.s32 0, %v277
    %v279 = vrot.slane %v274, %v278
    %v281 = vmul.f32 %v273, %v279
    %v282 = vadd.f32 %v251, %v281
    %v283 = vld [vmem:[#allocation3 + $0x62] sm:$0x1]
    %v284 = vlaneseq
    %v285 = vshrl.u32 %v284, 7
    %v286 = vsub.s32 0, %v285
    %v287 = vrot.slane %v283, %v286
    %v288 = vmul.f32 %v60, %v287
    %v289 = vld [vmem:[#allocation3 + $0x63] sm:$0x1]
    %v290 = vlaneseq
    %v291 = vshrl.u32 %v290, 7
    %v292 = vsub.s32 0, %v291
    %v293 = vrot.slane %v289, %v292
    %v294 = vmul.f32 %v64, %v293
    %v295 = vadd.f32 %v288, %v294
    %v296 = vld [vmem:[#allocation5 + $0x31] sm:$0x1]
    %v298 = vlaneseq
    %v299 = vshrl.u32 %v298, 7
    %v300 = vsub.s32 0, %v299
    %v301 = vrot.slane %v296, %v300
    %v303 = vadd.f32 %v295, %v301
    %v304 = vmax.f32 %v303, 0.0
    %v305 = vld [vmem:[#allocation7 + $0x31] sm:$0x1]
    %v307 = vlaneseq
    %v308 = vshrl.u32 %v307, 7
    %v309 = vsub.s32 0, %v308
    %v310 = vrot.slane %v305, %v309
    %v312 = vmul.f32 %v304, %v310
    %v313 = vadd.f32 %v282, %v312
    %v314 = vld [vmem:[#allocation3 + $0x70] sm:$0x1]
    %v315 = vlaneseq
    %v316 = vshrl.u32 %v315, 7
    %v317 = vsub.s32 0, %v316
    %v318 = vrot.slane %v314, %v317
    %v319 = vmul.f32 %v60, %v318
    %v320 = vld [vmem:[#allocation3 + $0x71] sm:$0x1]
    %v321 = vlaneseq
    %v322 = vshrl.u32 %v321, 7
    %v323 = vsub.s32 0, %v322
    %v324 = vrot.slane %v320, %v323
    %v325 = vmul.f32 %v64, %v324
    %v326 = vadd.f32 %v319, %v325
    %v327 = vld [vmem:[#allocation5 + $0x38] sm:$0x1]
    %v329 = vlaneseq
    %v330 = vshrl.u32 %v329, 7
    %v331 = vsub.s32 0, %v330
    %v332 = vrot.slane %v327, %v331
    %v334 = vadd.f32 %v326, %v332
    %v335 = vmax.f32 %v334, 0.0
    %v336 = vld [vmem:[#allocation7 + $0x38] sm:$0x1]
    %v338 = vlaneseq
    %v339 = vshrl.u32 %v338, 7
    %v340 = vsub.s32 0, %v339
    %v341 = vrot.slane %v336, %v340
    %v343 = vmul.f32 %v335, %v341
    %v344 = vadd.f32 %v313, %v343
    %v345 = vld [vmem:[#allocation3 + $0x7e] sm:$0x1]
    %v346 = vlaneseq
    %v347 = vshrl.u32 %v346, 7
    %v348 = vsub.s32 0, %v347
    %v349 = vrot.slane %v345, %v348
    %v350 = vmul.f32 %v60, %v349
    %v351 = vld [vmem:[#allocation3 + $0x7f] sm:$0x1]
    %v352 = vlaneseq
    %v353 = vshrl.u32 %v352, 7
    %v354 = vsub.s32 0, %v353
    %v355 = vrot.slane %v351, %v354
    %v356 = vmul.f32 %v64, %v355
    %v357 = vadd.f32 %v350, %v356
    %v358 = vld [vmem:[#allocation5 + $0x3f] sm:$0x1]
    %v360 = vlaneseq
    %v361 = vshrl.u32 %v360, 7
    %v362 = vsub.s32 0, %v361
    %v363 = vrot.slane %v358, %v362
    %v365 = vadd.f32 %v357, %v363
    %v366 = vmax.f32 %v365, 0.0
    %v367 = vld [vmem:[#allocation7 + $0x3f] sm:$0x1]
    %v369 = vlaneseq
    %v370 = vshrl.u32 %v369, 7
    %v371 = vsub.s32 0, %v370
    %v372 = vrot.slane %v367, %v371
    %v374 = vmul.f32 %v366, %v372
    %v375 = vadd.f32 %v344, %v374
    %v376 = vld [vmem:[#allocation3 + $0x8c] sm:$0x1]
    %v377 = vlaneseq
    %v378 = vshrl.u32 %v377, 7
    %v379 = vsub.s32 0, %v378
    %v380 = vrot.slane %v376, %v379
    %v381 = vmul.f32 %v60, %v380
    %v382 = vld [vmem:[#allocation3 + $0x8d] sm:$0x1]
    %v383 = vlaneseq
    %v384 = vshrl.u32 %v383, 7
    %v385 = vsub.s32 0, %v384
    %v386 = vrot.slane %v382, %v385
    %v387 = vmul.f32 %v64, %v386
    %v388 = vadd.f32 %v381, %v387
    %v389 = vld [vmem:[#allocation5 + $0x46] sm:$0x1]
    %v391 = vlaneseq
    %v392 = vshrl.u32 %v391, 7
    %v393 = vsub.s32 0, %v392
    %v394 = vrot.slane %v389, %v393
    %v396 = vadd.f32 %v388, %v394
    %v397 = vmax.f32 %v396, 0.0
    %v398 = vld [vmem:[#allocation7 + $0x46] sm:$0x1]
    %v400 = vlaneseq
    %v401 = vshrl.u32 %v400, 7
    %v402 = vsub.s32 0, %v401
    %v403 = vrot.slane %v398, %v402
    %v405 = vmul.f32 %v397, %v403
    %v406 = vadd.f32 %v375, %v405
    %v407 = vld [vmem:[#allocation3 + $0x9a] sm:$0x1]
    %v408 = vlaneseq
    %v409 = vshrl.u32 %v408, 7
    %v410 = vsub.s32 0, %v409
    %v411 = vrot.slane %v407, %v410
    %v412 = vmul.f32 %v60, %v411
    %v413 = vld [vmem:[#allocation3 + $0x9b] sm:$0x1]
    %v414 = vlaneseq
    %v415 = vshrl.u32 %v414, 7
    %v416 = vsub.s32 0, %v415
    %v417 = vrot.slane %v413, %v416
    %v418 = vmul.f32 %v64, %v417
    %v419 = vadd.f32 %v412, %v418
    %v420 = vld [vmem:[#allocation5 + $0x4d] sm:$0x1]
    %v422 = vlaneseq
    %v423 = vshrl.u32 %v422, 7
    %v424 = vsub.s32 0, %v423
    %v425 = vrot.slane %v420, %v424
    %v427 = vadd.f32 %v419, %v425
    %v428 = vmax.f32 %v427, 0.0
    %v429 = vld [vmem:[#allocation7 + $0x4d] sm:$0x1]
    %v431 = vlaneseq
    %v432 = vshrl.u32 %v431, 7
    %v433 = vsub.s32 0, %v432
    %v434 = vrot.slane %v429, %v433
    %v436 = vmul.f32 %v428, %v434
    %v437 = vadd.f32 %v406, %v436
    %v438 = vld [vmem:[#allocation3 + $0xa8] sm:$0x1]
    %v439 = vlaneseq
    %v440 = vshrl.u32 %v439, 7
    %v441 = vsub.s32 0, %v440
    %v442 = vrot.slane %v438, %v441
    %v443 = vmul.f32 %v60, %v442
    %v444 = vld [vmem:[#allocation3 + $0xa9] sm:$0x1]
    %v445 = vlaneseq
    %v446 = vshrl.u32 %v445, 7
    %v447 = vsub.s32 0, %v446
    %v448 = vrot.slane %v444, %v447
    %v449 = vmul.f32 %v64, %v448
    %v450 = vadd.f32 %v443, %v449
    %v451 = vld [vmem:[#allocation5 + $0x54] sm:$0x1]
    %v453 = vlaneseq
    %v454 = vshrl.u32 %v453, 7
    %v455 = vsub.s32 0, %v454
    %v456 = vrot.slane %v451, %v455
    %v458 = vadd.f32 %v450, %v456
    %v459 = vmax.f32 %v458, 0.0
    %v460 = vld [vmem:[#allocation7 + $0x54] sm:$0x1]
    %v462 = vlaneseq
    %v463 = vshrl.u32 %v462, 7
    %v464 = vsub.s32 0, %v463
    %v465 = vrot.slane %v460, %v464
    %v467 = vmul.f32 %v459, %v465
    %v468 = vadd.f32 %v437, %v467
    %v469 = vld [vmem:[#allocation3 + $0xb6] sm:$0x1]
    %v470 = vlaneseq
    %v471 = vshrl.u32 %v470, 7
    %v472 = vsub.s32 0, %v471
    %v473 = vrot.slane %v469, %v472
    %v474 = vmul.f32 %v60, %v473
    %v475 = vld [vmem:[#allocation3 + $0xb7] sm:$0x1]
    %v476 = vlaneseq
    %v477 = vshrl.u32 %v476, 7
    %v478 = vsub.s32 0, %v477
    %v479 = vrot.slane %v475, %v478
    %v480 = vmul.f32 %v64, %v479
    %v481 = vadd.f32 %v474, %v480
    %v482 = vld [vmem:[#allocation5 + $0x5b] sm:$0x1]
    %v484 = vlaneseq
    %v485 = vshrl.u32 %v484, 7
    %v486 = vsub.s32 0, %v485
    %v487 = vrot.slane %v482, %v486
    %v489 = vadd.f32 %v481, %v487
    %v490 = vmax.f32 %v489, 0.0
    %v491 = vld [vmem:[#allocation7 + $0x5b] sm:$0x1]
    %v493 = vlaneseq
    %v494 = vshrl.u32 %v493, 7
    %v495 = vsub.s32 0, %v494
    %v496 = vrot.slane %v491, %v495
    %v498 = vmul.f32 %v490, %v496
    %v499 = vadd.f32 %v468, %v498
    %v500 = vld [vmem:[#allocation3 + $0xc4] sm:$0x1]
    %v501 = vlaneseq
    %v502 = vshrl.u32 %v501, 7
    %v503 = vsub.s32 0, %v502
    %v504 = vrot.slane %v500, %v503
    %v505 = vmul.f32 %v60, %v504
    %v506 = vld [vmem:[#allocation3 + $0xc5] sm:$0x1]
    %v507 = vlaneseq
    %v508 = vshrl.u32 %v507, 7
    %v509 = vsub.s32 0, %v508
    %v510 = vrot.slane %v506, %v509
    %v511 = vmul.f32 %v64, %v510
    %v512 = vadd.f32 %v505, %v511
    %v513 = vld [vmem:[#allocation5 + $0x62] sm:$0x1]
    %v515 = vlaneseq
    %v516 = vshrl.u32 %v515, 7
    %v517 = vsub.s32 0, %v516
    %v518 = vrot.slane %v513, %v517
    %v520 = vadd.f32 %v512, %v518
    %v521 = vmax.f32 %v520, 0.0
    %v522 = vld [vmem:[#allocation7 + $0x62] sm:$0x1]
    %v524 = vlaneseq
    %v525 = vshrl.u32 %v524, 7
    %v526 = vsub.s32 0, %v525
    %v527 = vrot.slane %v522, %v526
    %v529 = vmul.f32 %v521, %v527
    %v530 = vadd.f32 %v499, %v529
    %v531 = vld [vmem:[#allocation3 + $0xd2] sm:$0x1]
    %v532 = vlaneseq
    %v533 = vshrl.u32 %v532, 7
    %v534 = vsub.s32 0, %v533
    %v535 = vrot.slane %v531, %v534
    %v536 = vmul.f32 %v60, %v535
    %v537 = vld [vmem:[#allocation3 + $0xd3] sm:$0x1]
    %v538 = vlaneseq
    %v539 = vshrl.u32 %v538, 7
    %v540 = vsub.s32 0, %v539
    %v541 = vrot.slane %v537, %v540
    %v542 = vmul.f32 %v64, %v541
    %v543 = vadd.f32 %v536, %v542
    %v544 = vld [vmem:[#allocation5 + $0x69] sm:$0x1]
    %v546 = vlaneseq
    %v547 = vshrl.u32 %v546, 7
    %v548 = vsub.s32 0, %v547
    %v549 = vrot.slane %v544, %v548
    %v551 = vadd.f32 %v543, %v549
    %v552 = vmax.f32 %v551, 0.0
    %v553 = vld [vmem:[#allocation7 + $0x69] sm:$0x1]
    %v555 = vlaneseq
    %v556 = vshrl.u32 %v555, 7
    %v557 = vsub.s32 0, %v556
    %v558 = vrot.slane %v553, %v557
    %v560 = vmul.f32 %v552, %v558
    %v561 = vadd.f32 %v530, %v560
    %v562 = vstv %s66
    %v563 = vadd.f32 %v561, %v562
    %v564 = vtanh.pop %v563
    %565 = vst [vmem:[%s5] sm:$0x3] %v564
    %v566 = vld [vmem:[#allocation3 + $0x2] sm:$0x1]
    %v567 = vlaneseq
    %v568 = vshrl.u32 %v567, 7
    %v569 = vsub.s32 0, %v568
    %v570 = vrot.slane %v566, %v569
    %v571 = vmul.f32 %v60, %v570
    %v572 = vld [vmem:[#allocation3 + $0x3] sm:$0x1]
    %v573 = vlaneseq
    %v574 = vshrl.u32 %v573, 7
    %v575 = vsub.s32 0, %v574
    %v576 = vrot.slane %v572, %v575
    %v577 = vmul.f32 %v64, %v576
    %v578 = vadd.f32 %v571, %v577
    %v579 = vld [vmem:[#allocation5 + $0x1] sm:$0x1]
    %v581 = vlaneseq
    %v582 = vshrl.u32 %v581, 7
    %v583 = vsub.s32 0, %v582
    %v584 = vrot.slane %v579, %v583
    %v586 = vadd.f32 %v578, %v584
    %v587 = vmax.f32 %v586, 0.0
    %v588 = vld [vmem:[#allocation7 + $0x1] sm:$0x1]
    %v590 = vlaneseq
    %v591 = vshrl.u32 %v590, 7
    %v592 = vsub.s32 0, %v591
    %v593 = vrot.slane %v588, %v592
    %v595 = vmul.f32 %v587, %v593
    %v596 = vld [vmem:[#allocation3 + $0x10] sm:$0x1]
    %v597 = vlaneseq
    %v598 = vshrl.u32 %v597, 7
    %v599 = vsub.s32 0, %v598
    %v600 = vrot.slane %v596, %v599
    %v601 = vmul.f32 %v60, %v600
    %v602 = vld [vmem:[#allocation3 + $0x11] sm:$0x1]
    %v603 = vlaneseq
    %v604 = vshrl.u32 %v603, 7
    %v605 = vsub.s32 0, %v604
    %v606 = vrot.slane %v602, %v605
    %v607 = vmul.f32 %v64, %v606
    %v608 = vadd.f32 %v601, %v607
    %v609 = vld [vmem:[#allocation5 + $0x8] sm:$0x1]
    %v611 = vlaneseq
    %v612 = vshrl.u32 %v611, 7
    %v613 = vsub.s32 0, %v612
    %v614 = vrot.slane %v609, %v613
    %v616 = vadd.f32 %v608, %v614
    %v617 = vmax.f32 %v616, 0.0
    %v618 = vld [vmem:[#allocation7 + $0x8] sm:$0x1]
    %v620 = vlaneseq
    %v621 = vshrl.u32 %v620, 7
    %v622 = vsub.s32 0, %v621
    %v623 = vrot.slane %v618, %v622
    %v625 = vmul.f32 %v617, %v623
    %v626 = vadd.f32 %v595, %v625
    %v627 = vld [vmem:[#allocation3 + $0x1e] sm:$0x1]
    %v628 = vlaneseq
    %v629 = vshrl.u32 %v628, 7
    %v630 = vsub.s32 0, %v629
    %v631 = vrot.slane %v627, %v630
    %v632 = vmul.f32 %v60, %v631
    %v633 = vld [vmem:[#allocation3 + $0x1f] sm:$0x1]
    %v634 = vlaneseq
    %v635 = vshrl.u32 %v634, 7
    %v636 = vsub.s32 0, %v635
    %v637 = vrot.slane %v633, %v636
    %v638 = vmul.f32 %v64, %v637
    %v639 = vadd.f32 %v632, %v638
    %v640 = vld [vmem:[#allocation5 + $0xf] sm:$0x1]
    %v642 = vlaneseq
    %v643 = vshrl.u32 %v642, 7
    %v644 = vsub.s32 0, %v643
    %v645 = vrot.slane %v640, %v644
    %v647 = vadd.f32 %v639, %v645
    %v648 = vmax.f32 %v647, 0.0
    %v649 = vld [vmem:[#allocation7 + $0xf] sm:$0x1]
    %v651 = vlaneseq
    %v652 = vshrl.u32 %v651, 7
    %v653 = vsub.s32 0, %v652
    %v654 = vrot.slane %v649, %v653
    %v656 = vmul.f32 %v648, %v654
    %v657 = vadd.f32 %v626, %v656
    %v658 = vld [vmem:[#allocation3 + $0x2c] sm:$0x1]
    %v659 = vlaneseq
    %v660 = vshrl.u32 %v659, 7
    %v661 = vsub.s32 0, %v660
    %v662 = vrot.slane %v658, %v661
    %v663 = vmul.f32 %v60, %v662
    %v664 = vld [vmem:[#allocation3 + $0x2d] sm:$0x1]
    %v665 = vlaneseq
    %v666 = vshrl.u32 %v665, 7
    %v667 = vsub.s32 0, %v666
    %v668 = vrot.slane %v664, %v667
    %v669 = vmul.f32 %v64, %v668
    %v670 = vadd.f32 %v663, %v669
    %v671 = vld [vmem:[#allocation5 + $0x16] sm:$0x1]
    %v673 = vlaneseq
    %v674 = vshrl.u32 %v673, 7
    %v675 = vsub.s32 0, %v674
    %v676 = vrot.slane %v671, %v675
    %v678 = vadd.f32 %v670, %v676
    %v679 = vmax.f32 %v678, 0.0
    %v680 = vld [vmem:[#allocation7 + $0x16] sm:$0x1]
    %v682 = vlaneseq
    %v683 = vshrl.u32 %v682, 7
    %v684 = vsub.s32 0, %v683
    %v685 = vrot.slane %v680, %v684
    %v687 = vmul.f32 %v679, %v685
    %v688 = vadd.f32 %v657, %v687
    %v689 = vld [vmem:[#allocation3 + $0x3a] sm:$0x1]
    %v690 = vlaneseq
    %v691 = vshrl.u32 %v690, 7
    %v692 = vsub.s32 0, %v691
    %v693 = vrot.slane %v689, %v692
    %v694 = vmul.f32 %v60, %v693
    %v695 = vld [vmem:[#allocation3 + $0x3b] sm:$0x1]
    %v696 = vlaneseq
    %v697 = vshrl.u32 %v696, 7
    %v698 = vsub.s32 0, %v697
    %v699 = vrot.slane %v695, %v698
    %v700 = vmul.f32 %v64, %v699
    %v701 = vadd.f32 %v694, %v700
    %v702 = vld [vmem:[#allocation5 + $0x1d] sm:$0x1]
    %v704 = vlaneseq
    %v705 = vshrl.u32 %v704, 7
    %v706 = vsub.s32 0, %v705
    %v707 = vrot.slane %v702, %v706
    %v709 = vadd.f32 %v701, %v707
    %v710 = vmax.f32 %v709, 0.0
    %v711 = vld [vmem:[#allocation7 + $0x1d] sm:$0x1]
    %v713 = vlaneseq
    %v714 = vshrl.u32 %v713, 7
    %v715 = vsub.s32 0, %v714
    %v716 = vrot.slane %v711, %v715
    %v718 = vmul.f32 %v710, %v716
    %v719 = vadd.f32 %v688, %v718
    %v720 = vld [vmem:[#allocation3 + $0x48] sm:$0x1]
    %v721 = vlaneseq
    %v722 = vshrl.u32 %v721, 7
    %v723 = vsub.s32 0, %v722
    %v724 = vrot.slane %v720, %v723
    %v725 = vmul.f32 %v60, %v724
    %v726 = vld [vmem:[#allocation3 + $0x49] sm:$0x1]
    %v727 = vlaneseq
    %v728 = vshrl.u32 %v727, 7
    %v729 = vsub.s32 0, %v728
    %v730 = vrot.slane %v726, %v729
    %v731 = vmul.f32 %v64, %v730
    %v732 = vadd.f32 %v725, %v731
    %v733 = vld [vmem:[#allocation5 + $0x24] sm:$0x1]
    %v735 = vlaneseq
    %v736 = vshrl.u32 %v735, 7
    %v737 = vsub.s32 0, %v736
    %v738 = vrot.slane %v733, %v737
    %v740 = vadd.f32 %v732, %v738
    %v741 = vmax.f32 %v740, 0.0
    %v742 = vld [vmem:[#allocation7 + $0x24] sm:$0x1]
    %v744 = vlaneseq
    %v745 = vshrl.u32 %v744, 7
    %v746 = vsub.s32 0, %v745
    %v747 = vrot.slane %v742, %v746
    %v749 = vmul.f32 %v741, %v747
    %v750 = vadd.f32 %v719, %v749
    %v751 = vld [vmem:[#allocation3 + $0x56] sm:$0x1]
    %v752 = vlaneseq
    %v753 = vshrl.u32 %v752, 7
    %v754 = vsub.s32 0, %v753
    %v755 = vrot.slane %v751, %v754
    %v756 = vmul.f32 %v60, %v755
    %v757 = vld [vmem:[#allocation3 + $0x57] sm:$0x1]
    %v758 = vlaneseq
    %v759 = vshrl.u32 %v758, 7
    %v760 = vsub.s32 0, %v759
    %v761 = vrot.slane %v757, %v760
    %v762 = vmul.f32 %v64, %v761
    %v763 = vadd.f32 %v756, %v762
    %v764 = vld [vmem:[#allocation5 + $0x2b] sm:$0x1]
    %v766 = vlaneseq
    %v767 = vshrl.u32 %v766, 7
    %v768 = vsub.s32 0, %v767
    %v769 = vrot.slane %v764, %v768
    %v771 = vadd.f32 %v763, %v769
    %v772 = vmax.f32 %v771, 0.0
    %v773 = vld [vmem:[#allocation7 + $0x2b] sm:$0x1]
    %v775 = vlaneseq
    %v776 = vshrl.u32 %v775, 7
    %v777 = vsub.s32 0, %v776
    %v778 = vrot.slane %v773, %v777
    %v780 = vmul.f32 %v772, %v778
    %v781 = vadd.f32 %v750, %v780
    %v782 = vld [vmem:[#allocation3 + $0x64] sm:$0x1]
    %v783 = vlaneseq
    %v784 = vshrl.u32 %v783, 7
    %v785 = vsub.s32 0, %v784
    %v786 = vrot.slane %v782, %v785
    %v787 = vmul.f32 %v60, %v786
    %v788 = vld [vmem:[#allocation3 + $0x65] sm:$0x1]
    %v789 = vlaneseq
    %v790 = vshrl.u32 %v789, 7
    %v791 = vsub.s32 0, %v790
    %v792 = vrot.slane %v788, %v791
    %v793 = vmul.f32 %v64, %v792
    %v794 = vadd.f32 %v787, %v793
    %v795 = vld [vmem:[#allocation5 + $0x32] sm:$0x1]
    %v797 = vlaneseq
    %v798 = vshrl.u32 %v797, 7
    %v799 = vsub.s32 0, %v798
    %v800 = vrot.slane %v795, %v799
    %v802 = vadd.f32 %v794, %v800
    %v803 = vmax.f32 %v802, 0.0
    %v804 = vld [vmem:[#allocation7 + $0x32] sm:$0x1]
    %v806 = vlaneseq
    %v807 = vshrl.u32 %v806, 7
    %v808 = vsub.s32 0, %v807
    %v809 = vrot.slane %v804, %v808
    %v811 = vmul.f32 %v803, %v809
    %v812 = vadd.f32 %v781, %v811
    %v813 = vld [vmem:[#allocation3 + $0x72] sm:$0x1]
    %v814 = vlaneseq
    %v815 = vshrl.u32 %v814, 7
    %v816 = vsub.s32 0, %v815
    %v817 = vrot.slane %v813, %v816
    %v818 = vmul.f32 %v60, %v817
    %v819 = vld [vmem:[#allocation3 + $0x73] sm:$0x1]
    %v820 = vlaneseq
    %v821 = vshrl.u32 %v820, 7
    %v822 = vsub.s32 0, %v821
    %v823 = vrot.slane %v819, %v822
    %v824 = vmul.f32 %v64, %v823
    %v825 = vadd.f32 %v818, %v824
    %v826 = vld [vmem:[#allocation5 + $0x39] sm:$0x1]
    %v828 = vlaneseq
    %v829 = vshrl.u32 %v828, 7
    %v830 = vsub.s32 0, %v829
    %v831 = vrot.slane %v826, %v830
    %v833 = vadd.f32 %v825, %v831
    %v834 = vmax.f32 %v833, 0.0
    %v835 = vld [vmem:[#allocation7 + $0x39] sm:$0x1]
    %v837 = vlaneseq
    %v838 = vshrl.u32 %v837, 7
    %v839 = vsub.s32 0, %v838
    %v840 = vrot.slane %v835, %v839
    %v842 = vmul.f32 %v834, %v840
    %v843 = vadd.f32 %v812, %v842
    %v844 = vld [vmem:[#allocation3 + $0x80] sm:$0x1]
    %v845 = vlaneseq
    %v846 = vshrl.u32 %v845, 7
    %v847 = vsub.s32 0, %v846
    %v848 = vrot.slane %v844, %v847
    %v849 = vmul.f32 %v60, %v848
    %v850 = vld [vmem:[#allocation3 + $0x81] sm:$0x1]
    %v851 = vlaneseq
    %v852 = vshrl.u32 %v851, 7
    %v853 = vsub.s32 0, %v852
    %v854 = vrot.slane %v850, %v853
    %v855 = vmul.f32 %v64, %v854
    %v856 = vadd.f32 %v849, %v855
    %v857 = vld [vmem:[#allocation5 + $0x40] sm:$0x1]
    %v859 = vlaneseq
    %v860 = vshrl.u32 %v859, 7
    %v861 = vsub.s32 0, %v860
    %v862 = vrot.slane %v857, %v861
    %v864 = vadd.f32 %v856, %v862
    %v865 = vmax.f32 %v864, 0.0
    %v866 = vld [vmem:[#allocation7 + $0x40] sm:$0x1]
    %v868 = vlaneseq
    %v869 = vshrl.u32 %v868, 7
    %v870 = vsub.s32 0, %v869
    %v871 = vrot.slane %v866, %v870
    %v873 = vmul.f32 %v865, %v871
    %v874 = vadd.f32 %v843, %v873
    %v875 = vld [vmem:[#allocation3 + $0x8e] sm:$0x1]
    %v876 = vlaneseq
    %v877 = vshrl.u32 %v876, 7
    %v878 = vsub.s32 0, %v877
    %v879 = vrot.slane %v875, %v878
    %v880 = vmul.f32 %v60, %v879
    %v881 = vld [vmem:[#allocation3 + $0x8f] sm:$0x1]
    %v882 = vlaneseq
    %v883 = vshrl.u32 %v882, 7
    %v884 = vsub.s32 0, %v883
    %v885 = vrot.slane %v881, %v884
    %v886 = vmul.f32 %v64, %v885
    %v887 = vadd.f32 %v880, %v886
    %v888 = vld [vmem:[#allocation5 + $0x47] sm:$0x1]
    %v890 = vlaneseq
    %v891 = vshrl.u32 %v890, 7
    %v892 = vsub.s32 0, %v891
    %v893 = vrot.slane %v888, %v892
    %v895 = vadd.f32 %v887, %v893
    %v896 = vmax.f32 %v895, 0.0
    %v897 = vld [vmem:[#allocation7 + $0x47] sm:$0x1]
    %v899 = vlaneseq
    %v900 = vshrl.u32 %v899, 7
    %v901 = vsub.s32 0, %v900
    %v902 = vrot.slane %v897, %v901
    %v904 = vmul.f32 %v896, %v902
    %v905 = vadd.f32 %v874, %v904
    %v906 = vld [vmem:[#allocation3 + $0x9c] sm:$0x1]
    %v907 = vlaneseq
    %v908 = vshrl.u32 %v907, 7
    %v909 = vsub.s32 0, %v908
    %v910 = vrot.slane %v906, %v909
    %v911 = vmul.f32 %v60, %v910
    %v912 = vld [vmem:[#allocation3 + $0x9d] sm:$0x1]
    %v913 = vlaneseq
    %v914 = vshrl.u32 %v913, 7
    %v915 = vsub.s32 0, %v914
    %v916 = vrot.slane %v912, %v915
    %v917 = vmul.f32 %v64, %v916
    %v918 = vadd.f32 %v911, %v917
    %v919 = vld [vmem:[#allocation5 + $0x4e] sm:$0x1]
    %v921 = vlaneseq
    %v922 = vshrl.u32 %v921, 7
    %v923 = vsub.s32 0, %v922
    %v924 = vrot.slane %v919, %v923
    %v926 = vadd.f32 %v918, %v924
    %v927 = vmax.f32 %v926, 0.0
    %v928 = vld [vmem:[#allocation7 + $0x4e] sm:$0x1]
    %v930 = vlaneseq
    %v931 = vshrl.u32 %v930, 7
    %v932 = vsub.s32 0, %v931
    %v933 = vrot.slane %v928, %v932
    %v935 = vmul.f32 %v927, %v933
    %v936 = vadd.f32 %v905, %v935
    %v937 = vld [vmem:[#allocation3 + $0xaa] sm:$0x1]
    %v938 = vlaneseq
    %v939 = vshrl.u32 %v938, 7
    %v940 = vsub.s32 0, %v939
    %v941 = vrot.slane %v937, %v940
    %v942 = vmul.f32 %v60, %v941
    %v943 = vld [vmem:[#allocation3 + $0xab] sm:$0x1]
    %v944 = vlaneseq
    %v945 = vshrl.u32 %v944, 7
    %v946 = vsub.s32 0, %v945
    %v947 = vrot.slane %v943, %v946
    %v948 = vmul.f32 %v64, %v947
    %v949 = vadd.f32 %v942, %v948
    %v950 = vld [vmem:[#allocation5 + $0x55] sm:$0x1]
    %v952 = vlaneseq
    %v953 = vshrl.u32 %v952, 7
    %v954 = vsub.s32 0, %v953
    %v955 = vrot.slane %v950, %v954
    %v957 = vadd.f32 %v949, %v955
    %v958 = vmax.f32 %v957, 0.0
    %v959 = vld [vmem:[#allocation7 + $0x55] sm:$0x1]
    %v961 = vlaneseq
    %v962 = vshrl.u32 %v961, 7
    %v963 = vsub.s32 0, %v962
    %v964 = vrot.slane %v959, %v963
    %v966 = vmul.f32 %v958, %v964
    %v967 = vadd.f32 %v936, %v966
    %v968 = vld [vmem:[#allocation3 + $0xb8] sm:$0x1]
    %v969 = vlaneseq
    %v970 = vshrl.u32 %v969, 7
    %v971 = vsub.s32 0, %v970
    %v972 = vrot.slane %v968, %v971
    %v973 = vmul.f32 %v60, %v972
    %v974 = vld [vmem:[#allocation3 + $0xb9] sm:$0x1]
    %v975 = vlaneseq
    %v976 = vshrl.u32 %v975, 7
    %v977 = vsub.s32 0, %v976
    %v978 = vrot.slane %v974, %v977
    %v979 = vmul.f32 %v64, %v978
    %v980 = vadd.f32 %v973, %v979
    %v981 = vld [vmem:[#allocation5 + $0x5c] sm:$0x1]
    %v983 = vlaneseq
    %v984 = vshrl.u32 %v983, 7
    %v985 = vsub.s32 0, %v984
    %v986 = vrot.slane %v981, %v985
    %v988 = vadd.f32 %v980, %v986
    %v989 = vmax.f32 %v988, 0.0
    %v990 = vld [vmem:[#allocation7 + $0x5c] sm:$0x1]
    %v992 = vlaneseq
    %v993 = vshrl.u32 %v992, 7
    %v994 = vsub.s32 0, %v993
    %v995 = vrot.slane %v990, %v994
    %v997 = vmul.f32 %v989, %v995
    %v998 = vadd.f32 %v967, %v997
    %v999 = vld [vmem:[#allocation3 + $0xc6] sm:$0x1]
    %v1000 = vlaneseq
    %v1001 = vshrl.u32 %v1000, 7
    %v1002 = vsub.s32 0, %v1001
    %v1003 = vrot.slane %v999, %v1002
    %v1004 = vmul.f32 %v60, %v1003
    %v1005 = vld [vmem:[#allocation3 + $0xc7] sm:$0x1]
    %v1006 = vlaneseq
    %v1007 = vshrl.u32 %v1006, 7
    %v1008 = vsub.s32 0, %v1007
    %v1009 = vrot.slane %v1005, %v1008
    %v1010 = vmul.f32 %v64, %v1009
    %v1011 = vadd.f32 %v1004, %v1010
    %v1012 = vld [vmem:[#allocation5 + $0x63] sm:$0x1]
    %v1014 = vlaneseq
    %v1015 = vshrl.u32 %v1014, 7
    %v1016 = vsub.s32 0, %v1015
    %v1017 = vrot.slane %v1012, %v1016
    %v1019 = vadd.f32 %v1011, %v1017
    %v1020 = vmax.f32 %v1019, 0.0
    %v1021 = vld [vmem:[#allocation7 + $0x63] sm:$0x1]
    %v1023 = vlaneseq
    %v1024 = vshrl.u32 %v1023, 7
    %v1025 = vsub.s32 0, %v1024
    %v1026 = vrot.slane %v1021, %v1025
    %v1028 = vmul.f32 %v1020, %v1026
    %v1029 = vadd.f32 %v998, %v1028
    %v1030 = vld [vmem:[#allocation3 + $0xd4] sm:$0x1]
    %v1031 = vlaneseq
    %v1032 = vshrl.u32 %v1031, 7
    %v1033 = vsub.s32 0, %v1032
    %v1034 = vrot.slane %v1030, %v1033
    %v1035 = vmul.f32 %v60, %v1034
    %v1036 = vld [vmem:[#allocation3 + $0xd5] sm:$0x1]
    %v1037 = vlaneseq
    %v1038 = vshrl.u32 %v1037, 7
    %v1039 = vsub.s32 0, %v1038
    %v1040 = vrot.slane %v1036, %v1039
    %v1041 = vmul.f32 %v64, %v1040
    %v1042 = vadd.f32 %v1035, %v1041
    %v1043 = vld [vmem:[#allocation5 + $0x6a] sm:$0x1]
    %v1045 = vlaneseq
    %v1046 = vshrl.u32 %v1045, 7
    %v1047 = vsub.s32 0, %v1046
    %v1048 = vrot.slane %v1043, %v1047
    %v1050 = vadd.f32 %v1042, %v1048
    %v1051 = vmax.f32 %v1050, 0.0
    %v1052 = vld [vmem:[#allocation7 + $0x6a] sm:$0x1]
    %v1054 = vlaneseq
    %v1055 = vshrl.u32 %v1054, 7
    %v1056 = vsub.s32 0, %v1055
    %v1057 = vrot.slane %v1052, %v1056
    %v1059 = vmul.f32 %v1051, %v1057
    %v1060 = vadd.f32 %v1029, %v1059
    %v1061 = vadd.f32 %v1060, %v562
    %v1062 = vtanh.pop %v1061
    %1063 = vst [vmem:[%s5 + $0x2] sm:$0x3] %v1062
    %v1064 = vld [vmem:[#allocation3 + $0x4] sm:$0x1]
    %v1065 = vlaneseq
    %v1066 = vshrl.u32 %v1065, 7
    %v1067 = vsub.s32 0, %v1066
    %v1068 = vrot.slane %v1064, %v1067
    %v1069 = vmul.f32 %v60, %v1068
    %v1070 = vld [vmem:[#allocation3 + $0x5] sm:$0x1]
    %v1071 = vlaneseq
    %v1072 = vshrl.u32 %v1071, 7
    %v1073 = vsub.s32 0, %v1072
    %v1074 = vrot.slane %v1070, %v1073
    %v1075 = vmul.f32 %v64, %v1074
    %v1076 = vadd.f32 %v1069, %v1075
    %v1077 = vld [vmem:[#allocation5 + $0x2] sm:$0x1]
    %v1079 = vlaneseq
    %v1080 = vshrl.u32 %v1079, 7
    %v1081 = vsub.s32 0, %v1080
    %v1082 = vrot.slane %v1077, %v1081
    %v1084 = vadd.f32 %v1076, %v1082
    %v1085 = vmax.f32 %v1084, 0.0
    %v1086 = vld [vmem:[#allocation7 + $0x2] sm:$0x1]
    %v1088 = vlaneseq
    %v1089 = vshrl.u32 %v1088, 7
    %v1090 = vsub.s32 0, %v1089
    %v1091 = vrot.slane %v1086, %v1090
    %v1093 = vmul.f32 %v1085, %v1091
    %v1094 = vld [vmem:[#allocation3 + $0x12] sm:$0x1]
    %v1095 = vlaneseq
    %v1096 = vshrl.u32 %v1095, 7
    %v1097 = vsub.s32 0, %v1096
    %v1098 = vrot.slane %v1094, %v1097
    %v1099 = vmul.f32 %v60, %v1098
    %v1100 = vld [vmem:[#allocation3 + $0x13] sm:$0x1]
    %v1101 = vlaneseq
    %v1102 = vshrl.u32 %v1101, 7
    %v1103 = vsub.s32 0, %v1102
    %v1104 = vrot.slane %v1100, %v1103
    %v1105 = vmul.f32 %v64, %v1104
    %v1106 = vadd.f32 %v1099, %v1105
    %v1107 = vld [vmem:[#allocation5 + $0x9] sm:$0x1]
    %v1109 = vlaneseq
    %v1110 = vshrl.u32 %v1109, 7
    %v1111 = vsub.s32 0, %v1110
    %v1112 = vrot.slane %v1107, %v1111
    %v1114 = vadd.f32 %v1106, %v1112
    %v1115 = vmax.f32 %v1114, 0.0
    %v1116 = vld [vmem:[#allocation7 + $0x9] sm:$0x1]
    %v1118 = vlaneseq
    %v1119 = vshrl.u32 %v1118, 7
    %v1120 = vsub.s32 0, %v1119
    %v1121 = vrot.slane %v1116, %v1120
    %v1123 = vmul.f32 %v1115, %v1121
    %v1124 = vadd.f32 %v1093, %v1123
    %v1125 = vld [vmem:[#allocation3 + $0x20] sm:$0x1]
    %v1126 = vlaneseq
    %v1127 = vshrl.u32 %v1126, 7
    %v1128 = vsub.s32 0, %v1127
    %v1129 = vrot.slane %v1125, %v1128
    %v1130 = vmul.f32 %v60, %v1129
    %v1131 = vld [vmem:[#allocation3 + $0x21] sm:$0x1]
    %v1132 = vlaneseq
    %v1133 = vshrl.u32 %v1132, 7
    %v1134 = vsub.s32 0, %v1133
    %v1135 = vrot.slane %v1131, %v1134
    %v1136 = vmul.f32 %v64, %v1135
    %v1137 = vadd.f32 %v1130, %v1136
    %v1138 = vld [vmem:[#allocation5 + $0x10] sm:$0x1]
    %v1140 = vlaneseq
    %v1141 = vshrl.u32 %v1140, 7
    %v1142 = vsub.s32 0, %v1141
    %v1143 = vrot.slane %v1138, %v1142
    %v1145 = vadd.f32 %v1137, %v1143
    %v1146 = vmax.f32 %v1145, 0.0
    %v1147 = vld [vmem:[#allocation7 + $0x10] sm:$0x1]
    %v1149 = vlaneseq
    %v1150 = vshrl.u32 %v1149, 7
    %v1151 = vsub.s32 0, %v1150
    %v1152 = vrot.slane %v1147, %v1151
    %v1154 = vmul.f32 %v1146, %v1152
    %v1155 = vadd.f32 %v1124, %v1154
    %v1156 = vld [vmem:[#allocation3 + $0x2e] sm:$0x1]
    %v1157 = vlaneseq
    %v1158 = vshrl.u32 %v1157, 7
    %v1159 = vsub.s32 0, %v1158
    %v1160 = vrot.slane %v1156, %v1159
    %v1161 = vmul.f32 %v60, %v1160
    %v1162 = vld [vmem:[#allocation3 + $0x2f] sm:$0x1]
    %v1163 = vlaneseq
    %v1164 = vshrl.u32 %v1163, 7
    %v1165 = vsub.s32 0, %v1164
    %v1166 = vrot.slane %v1162, %v1165
    %v1167 = vmul.f32 %v64, %v1166
    %v1168 = vadd.f32 %v1161, %v1167
    %v1169 = vld [vmem:[#allocation5 + $0x17] sm:$0x1]
    %v1171 = vlaneseq
    %v1172 = vshrl.u32 %v1171, 7
    %v1173 = vsub.s32 0, %v1172
    %v1174 = vrot.slane %v1169, %v1173
    %v1176 = vadd.f32 %v1168, %v1174
    %v1177 = vmax.f32 %v1176, 0.0
    %v1178 = vld [vmem:[#allocation7 + $0x17] sm:$0x1]
    %v1180 = vlaneseq
    %v1181 = vshrl.u32 %v1180, 7
    %v1182 = vsub.s32 0, %v1181
    %v1183 = vrot.slane %v1178, %v1182
    %v1185 = vmul.f32 %v1177, %v1183
    %v1186 = vadd.f32 %v1155, %v1185
    %v1187 = vld [vmem:[#allocation3 + $0x3c] sm:$0x1]
    %v1188 = vlaneseq
    %v1189 = vshrl.u32 %v1188, 7
    %v1190 = vsub.s32 0, %v1189
    %v1191 = vrot.slane %v1187, %v1190
    %v1192 = vmul.f32 %v60, %v1191
    %v1193 = vld [vmem:[#allocation3 + $0x3d] sm:$0x1]
    %v1194 = vlaneseq
    %v1195 = vshrl.u32 %v1194, 7
    %v1196 = vsub.s32 0, %v1195
    %v1197 = vrot.slane %v1193, %v1196
    %v1198 = vmul.f32 %v64, %v1197
    %v1199 = vadd.f32 %v1192, %v1198
    %v1200 = vld [vmem:[#allocation5 + $0x1e] sm:$0x1]
    %v1202 = vlaneseq
    %v1203 = vshrl.u32 %v1202, 7
    %v1204 = vsub.s32 0, %v1203
    %v1205 = vrot.slane %v1200, %v1204
    %v1207 = vadd.f32 %v1199, %v1205
    %v1208 = vmax.f32 %v1207, 0.0
    %v1209 = vld [vmem:[#allocation7 + $0x1e] sm:$0x1]
    %v1211 = vlaneseq
    %v1212 = vshrl.u32 %v1211, 7
    %v1213 = vsub.s32 0, %v1212
    %v1214 = vrot.slane %v1209, %v1213
    %v1216 = vmul.f32 %v1208, %v1214
    %v1217 = vadd.f32 %v1186, %v1216
    %v1218 = vld [vmem:[#allocation3 + $0x4a] sm:$0x1]
    %v1219 = vlaneseq
    %v1220 = vshrl.u32 %v1219, 7
    %v1221 = vsub.s32 0, %v1220
    %v1222 = vrot.slane %v1218, %v1221
    %v1223 = vmul.f32 %v60, %v1222
    %v1224 = vld [vmem:[#allocation3 + $0x4b] sm:$0x1]
    %v1225 = vlaneseq
    %v1226 = vshrl.u32 %v1225, 7
    %v1227 = vsub.s32 0, %v1226
    %v1228 = vrot.slane %v1224, %v1227
    %v1229 = vmul.f32 %v64, %v1228
    %v1230 = vadd.f32 %v1223, %v1229
    %v1231 = vld [vmem:[#allocation5 + $0x25] sm:$0x1]
    %v1233 = vlaneseq
    %v1234 = vshrl.u32 %v1233, 7
    %v1235 = vsub.s32 0, %v1234
    %v1236 = vrot.slane %v1231, %v1235
    %v1238 = vadd.f32 %v1230, %v1236
    %v1239 = vmax.f32 %v1238, 0.0
    %v1240 = vld [vmem:[#allocation7 + $0x25] sm:$0x1]
    %v1242 = vlaneseq
    %v1243 = vshrl.u32 %v1242, 7
    %v1244 = vsub.s32 0, %v1243
    %v1245 = vrot.slane %v1240, %v1244
    %v1247 = vmul.f32 %v1239, %v1245
    %v1248 = vadd.f32 %v1217, %v1247
    %v1249 = vld [vmem:[#allocation3 + $0x58] sm:$0x1]
    %v1250 = vlaneseq
    %v1251 = vshrl.u32 %v1250, 7
    %v1252 = vsub.s32 0, %v1251
    %v1253 = vrot.slane %v1249, %v1252
    %v1254 = vmul.f32 %v60, %v1253
    %v1255 = vld [vmem:[#allocation3 + $0x59] sm:$0x1]
    %v1256 = vlaneseq
    %v1257 = vshrl.u32 %v1256, 7
    %v1258 = vsub.s32 0, %v1257
    %v1259 = vrot.slane %v1255, %v1258
    %v1260 = vmul.f32 %v64, %v1259
    %v1261 = vadd.f32 %v1254, %v1260
    %v1262 = vld [vmem:[#allocation5 + $0x2c] sm:$0x1]
    %v1264 = vlaneseq
    %v1265 = vshrl.u32 %v1264, 7
    %v1266 = vsub.s32 0, %v1265
    %v1267 = vrot.slane %v1262, %v1266
    %v1269 = vadd.f32 %v1261, %v1267
    %v1270 = vmax.f32 %v1269, 0.0
    %v1271 = vld [vmem:[#allocation7 + $0x2c] sm:$0x1]
    %v1273 = vlaneseq
    %v1274 = vshrl.u32 %v1273, 7
    %v1275 = vsub.s32 0, %v1274
    %v1276 = vrot.slane %v1271, %v1275
    %v1278 = vmul.f32 %v1270, %v1276
    %v1279 = vadd.f32 %v1248, %v1278
    %v1280 = vld [vmem:[#allocation3 + $0x66] sm:$0x1]
    %v1281 = vlaneseq
    %v1282 = vshrl.u32 %v1281, 7
    %v1283 = vsub.s32 0, %v1282
    %v1284 = vrot.slane %v1280, %v1283
    %v1285 = vmul.f32 %v60, %v1284
    %v1286 = vld [vmem:[#allocation3 + $0x67] sm:$0x1]
    %v1287 = vlaneseq
    %v1288 = vshrl.u32 %v1287, 7
    %v1289 = vsub.s32 0, %v1288
    %v1290 = vrot.slane %v1286, %v1289
    %v1291 = vmul.f32 %v64, %v1290
    %v1292 = vadd.f32 %v1285, %v1291
    %v1293 = vld [vmem:[#allocation5 + $0x33] sm:$0x1]
    %v1295 = vlaneseq
    %v1296 = vshrl.u32 %v1295, 7
    %v1297 = vsub.s32 0, %v1296
    %v1298 = vrot.slane %v1293, %v1297
    %v1300 = vadd.f32 %v1292, %v1298
    %v1301 = vmax.f32 %v1300, 0.0
    %v1302 = vld [vmem:[#allocation7 + $0x33] sm:$0x1]
    %v1304 = vlaneseq
    %v1305 = vshrl.u32 %v1304, 7
    %v1306 = vsub.s32 0, %v1305
    %v1307 = vrot.slane %v1302, %v1306
    %v1309 = vmul.f32 %v1301, %v1307
    %v1310 = vadd.f32 %v1279, %v1309
    %v1311 = vld [vmem:[#allocation3 + $0x74] sm:$0x1]
    %v1312 = vlaneseq
    %v1313 = vshrl.u32 %v1312, 7
    %v1314 = vsub.s32 0, %v1313
    %v1315 = vrot.slane %v1311, %v1314
    %v1316 = vmul.f32 %v60, %v1315
    %v1317 = vld [vmem:[#allocation3 + $0x75] sm:$0x1]
    %v1318 = vlaneseq
    %v1319 = vshrl.u32 %v1318, 7
    %v1320 = vsub.s32 0, %v1319
    %v1321 = vrot.slane %v1317, %v1320
    %v1322 = vmul.f32 %v64, %v1321
    %v1323 = vadd.f32 %v1316, %v1322
    %v1324 = vld [vmem:[#allocation5 + $0x3a] sm:$0x1]
    %v1326 = vlaneseq
    %v1327 = vshrl.u32 %v1326, 7
    %v1328 = vsub.s32 0, %v1327
    %v1329 = vrot.slane %v1324, %v1328
    %v1331 = vadd.f32 %v1323, %v1329
    %v1332 = vmax.f32 %v1331, 0.0
    %v1333 = vld [vmem:[#allocation7 + $0x3a] sm:$0x1]
    %v1335 = vlaneseq
    %v1336 = vshrl.u32 %v1335, 7
    %v1337 = vsub.s32 0, %v1336
    %v1338 = vrot.slane %v1333, %v1337
    %v1340 = vmul.f32 %v1332, %v1338
    %v1341 = vadd.f32 %v1310, %v1340
    %v1342 = vld [vmem:[#allocation3 + $0x82] sm:$0x1]
    %v1343 = vlaneseq
    %v1344 = vshrl.u32 %v1343, 7
    %v1345 = vsub.s32 0, %v1344
    %v1346 = vrot.slane %v1342, %v1345
    %v1347 = vmul.f32 %v60, %v1346
    %v1348 = vld [vmem:[#allocation3 + $0x83] sm:$0x1]
    %v1349 = vlaneseq
    %v1350 = vshrl.u32 %v1349, 7
    %v1351 = vsub.s32 0, %v1350
    %v1352 = vrot.slane %v1348, %v1351
    %v1353 = vmul.f32 %v64, %v1352
    %v1354 = vadd.f32 %v1347, %v1353
    %v1355 = vld [vmem:[#allocation5 + $0x41] sm:$0x1]
    %v1357 = vlaneseq
    %v1358 = vshrl.u32 %v1357, 7
    %v1359 = vsub.s32 0, %v1358
    %v1360 = vrot.slane %v1355, %v1359
    %v1362 = vadd.f32 %v1354, %v1360
    %v1363 = vmax.f32 %v1362, 0.0
    %v1364 = vld [vmem:[#allocation7 + $0x41] sm:$0x1]
    %v1366 = vlaneseq
    %v1367 = vshrl.u32 %v1366, 7
    %v1368 = vsub.s32 0, %v1367
    %v1369 = vrot.slane %v1364, %v1368
    %v1371 = vmul.f32 %v1363, %v1369
    %v1372 = vadd.f32 %v1341, %v1371
    %v1373 = vld [vmem:[#allocation3 + $0x90] sm:$0x1]
    %v1374 = vlaneseq
    %v1375 = vshrl.u32 %v1374, 7
    %v1376 = vsub.s32 0, %v1375
    %v1377 = vrot.slane %v1373, %v1376
    %v1378 = vmul.f32 %v60, %v1377
    %v1379 = vld [vmem:[#allocation3 + $0x91] sm:$0x1]
    %v1380 = vlaneseq
    %v1381 = vshrl.u32 %v1380, 7
    %v1382 = vsub.s32 0, %v1381
    %v1383 = vrot.slane %v1379, %v1382
    %v1384 = vmul.f32 %v64, %v1383
    %v1385 = vadd.f32 %v1378, %v1384
    %v1386 = vld [vmem:[#allocation5 + $0x48] sm:$0x1]
    %v1388 = vlaneseq
    %v1389 = vshrl.u32 %v1388, 7
    %v1390 = vsub.s32 0, %v1389
    %v1391 = vrot.slane %v1386, %v1390
    %v1393 = vadd.f32 %v1385, %v1391
    %v1394 = vmax.f32 %v1393, 0.0
    %v1395 = vld [vmem:[#allocation7 + $0x48] sm:$0x1]
    %v1397 = vlaneseq
    %v1398 = vshrl.u32 %v1397, 7
    %v1399 = vsub.s32 0, %v1398
    %v1400 = vrot.slane %v1395, %v1399
    %v1402 = vmul.f32 %v1394, %v1400
    %v1403 = vadd.f32 %v1372, %v1402
    %v1404 = vld [vmem:[#allocation3 + $0x9e] sm:$0x1]
    %v1405 = vlaneseq
    %v1406 = vshrl.u32 %v1405, 7
    %v1407 = vsub.s32 0, %v1406
    %v1408 = vrot.slane %v1404, %v1407
    %v1409 = vmul.f32 %v60, %v1408
    %v1410 = vld [vmem:[#allocation3 + $0x9f] sm:$0x1]
    %v1411 = vlaneseq
    %v1412 = vshrl.u32 %v1411, 7
    %v1413 = vsub.s32 0, %v1412
    %v1414 = vrot.slane %v1410, %v1413
    %v1415 = vmul.f32 %v64, %v1414
    %v1416 = vadd.f32 %v1409, %v1415
    %v1417 = vld [vmem:[#allocation5 + $0x4f] sm:$0x1]
    %v1419 = vlaneseq
    %v1420 = vshrl.u32 %v1419, 7
    %v1421 = vsub.s32 0, %v1420
    %v1422 = vrot.slane %v1417, %v1421
    %v1424 = vadd.f32 %v1416, %v1422
    %v1425 = vmax.f32 %v1424, 0.0
    %v1426 = vld [vmem:[#allocation7 + $0x4f] sm:$0x1]
    %v1428 = vlaneseq
    %v1429 = vshrl.u32 %v1428, 7
    %v1430 = vsub.s32 0, %v1429
    %v1431 = vrot.slane %v1426, %v1430
    %v1433 = vmul.f32 %v1425, %v1431
    %v1434 = vadd.f32 %v1403, %v1433
    %v1435 = vld [vmem:[#allocation3 + $0xac] sm:$0x1]
    %v1436 = vlaneseq
    %v1437 = vshrl.u32 %v1436, 7
    %v1438 = vsub.s32 0, %v1437
    %v1439 = vrot.slane %v1435, %v1438
    %v1440 = vmul.f32 %v60, %v1439
    %v1441 = vld [vmem:[#allocation3 + $0xad] sm:$0x1]
    %v1442 = vlaneseq
    %v1443 = vshrl.u32 %v1442, 7
    %v1444 = vsub.s32 0, %v1443
    %v1445 = vrot.slane %v1441, %v1444
    %v1446 = vmul.f32 %v64, %v1445
    %v1447 = vadd.f32 %v1440, %v1446
    %v1448 = vld [vmem:[#allocation5 + $0x56] sm:$0x1]
    %v1450 = vlaneseq
    %v1451 = vshrl.u32 %v1450, 7
    %v1452 = vsub.s32 0, %v1451
    %v1453 = vrot.slane %v1448, %v1452
    %v1455 = vadd.f32 %v1447, %v1453
    %v1456 = vmax.f32 %v1455, 0.0
    %v1457 = vld [vmem:[#allocation7 + $0x56] sm:$0x1]
    %v1459 = vlaneseq
    %v1460 = vshrl.u32 %v1459, 7
    %v1461 = vsub.s32 0, %v1460
    %v1462 = vrot.slane %v1457, %v1461
    %v1464 = vmul.f32 %v1456, %v1462
    %v1465 = vadd.f32 %v1434, %v1464
    %v1466 = vld [vmem:[#allocation3 + $0xba] sm:$0x1]
    %v1467 = vlaneseq
    %v1468 = vshrl.u32 %v1467, 7
    %v1469 = vsub.s32 0, %v1468
    %v1470 = vrot.slane %v1466, %v1469
    %v1471 = vmul.f32 %v60, %v1470
    %v1472 = vld [vmem:[#allocation3 + $0xbb] sm:$0x1]
    %v1473 = vlaneseq
    %v1474 = vshrl.u32 %v1473, 7
    %v1475 = vsub.s32 0, %v1474
    %v1476 = vrot.slane %v1472, %v1475
    %v1477 = vmul.f32 %v64, %v1476
    %v1478 = vadd.f32 %v1471, %v1477
    %v1479 = vld [vmem:[#allocation5 + $0x5d] sm:$0x1]
    %v1481 = vlaneseq
    %v1482 = vshrl.u32 %v1481, 7
    %v1483 = vsub.s32 0, %v1482
    %v1484 = vrot.slane %v1479, %v1483
    %v1486 = vadd.f32 %v1478, %v1484
    %v1487 = vmax.f32 %v1486, 0.0
    %v1488 = vld [vmem:[#allocation7 + $0x5d] sm:$0x1]
    %v1490 = vlaneseq
    %v1491 = vshrl.u32 %v1490, 7
    %v1492 = vsub.s32 0, %v1491
    %v1493 = vrot.slane %v1488, %v1492
    %v1495 = vmul.f32 %v1487, %v1493
    %v1496 = vadd.f32 %v1465, %v1495
    %v1497 = vld [vmem:[#allocation3 + $0xc8] sm:$0x1]
    %v1498 = vlaneseq
    %v1499 = vshrl.u32 %v1498, 7
    %v1500 = vsub.s32 0, %v1499
    %v1501 = vrot.slane %v1497, %v1500
    %v1502 = vmul.f32 %v60, %v1501
    %v1503 = vld [vmem:[#allocation3 + $0xc9] sm:$0x1]
    %v1504 = vlaneseq
    %v1505 = vshrl.u32 %v1504, 7
    %v1506 = vsub.s32 0, %v1505
    %v1507 = vrot.slane %v1503, %v1506
    %v1508 = vmul.f32 %v64, %v1507
    %v1509 = vadd.f32 %v1502, %v1508
    %v1510 = vld [vmem:[#allocation5 + $0x64] sm:$0x1]
    %v1512 = vlaneseq
    %v1513 = vshrl.u32 %v1512, 7
    %v1514 = vsub.s32 0, %v1513
    %v1515 = vrot.slane %v1510, %v1514
    %v1517 = vadd.f32 %v1509, %v1515
    %v1518 = vmax.f32 %v1517, 0.0
    %v1519 = vld [vmem:[#allocation7 + $0x64] sm:$0x1]
    %v1521 = vlaneseq
    %v1522 = vshrl.u32 %v1521, 7
    %v1523 = vsub.s32 0, %v1522
    %v1524 = vrot.slane %v1519, %v1523
    %v1526 = vmul.f32 %v1518, %v1524
    %v1527 = vadd.f32 %v1496, %v1526
    %v1528 = vld [vmem:[#allocation3 + $0xd6] sm:$0x1]
    %v1529 = vlaneseq
    %v1530 = vshrl.u32 %v1529, 7
    %v1531 = vsub.s32 0, %v1530
    %v1532 = vrot.slane %v1528, %v1531
    %v1533 = vmul.f32 %v60, %v1532
    %v1534 = vld [vmem:[#allocation3 + $0xd7] sm:$0x1]
    %v1535 = vlaneseq
    %v1536 = vshrl.u32 %v1535, 7
    %v1537 = vsub.s32 0, %v1536
    %v1538 = vrot.slane %v1534, %v1537
    %v1539 = vmul.f32 %v64, %v1538
    %v1540 = vadd.f32 %v1533, %v1539
    %v1541 = vld [vmem:[#allocation5 + $0x6b] sm:$0x1]
    %v1543 = vlaneseq
    %v1544 = vshrl.u32 %v1543, 7
    %v1545 = vsub.s32 0, %v1544
    %v1546 = vrot.slane %v1541, %v1545
    %v1548 = vadd.f32 %v1540, %v1546
    %v1549 = vmax.f32 %v1548, 0.0
    %v1550 = vld [vmem:[#allocation7 + $0x6b] sm:$0x1]
    %v1552 = vlaneseq
    %v1553 = vshrl.u32 %v1552, 7
    %v1554 = vsub.s32 0, %v1553
    %v1555 = vrot.slane %v1550, %v1554
    %v1557 = vmul.f32 %v1549, %v1555
    %v1558 = vadd.f32 %v1527, %v1557
    %v1559 = vadd.f32 %v1558, %v562
    %v1560 = vtanh.pop %v1559
    %1561 = vst [vmem:[%s5 + $0x4] sm:$0x3] %v1560
    %v1562 = vld [vmem:[#allocation3 + $0x6] sm:$0x1]
    %v1563 = vlaneseq
    %v1564 = vshrl.u32 %v1563, 7
    %v1565 = vsub.s32 0, %v1564
    %v1566 = vrot.slane %v1562, %v1565
    %v1567 = vmul.f32 %v60, %v1566
    %v1568 = vld [vmem:[#allocation3 + $0x7] sm:$0x1]
    %v1569 = vlaneseq
    %v1570 = vshrl.u32 %v1569, 7
    %v1571 = vsub.s32 0, %v1570
    %v1572 = vrot.slane %v1568, %v1571
    %v1573 = vmul.f32 %v64, %v1572
    %v1574 = vadd.f32 %v1567, %v1573
    %v1575 = vld [vmem:[#allocation5 + $0x3] sm:$0x1]
    %v1577 = vlaneseq
    %v1578 = vshrl.u32 %v1577, 7
    %v1579 = vsub.s32 0, %v1578
    %v1580 = vrot.slane %v1575, %v1579
    %v1582 = vadd.f32 %v1574, %v1580
    %v1583 = vmax.f32 %v1582, 0.0
    %v1584 = vld [vmem:[#allocation7 + $0x3] sm:$0x1]
    %v1586 = vlaneseq
    %v1587 = vshrl.u32 %v1586, 7
    %v1588 = vsub.s32 0, %v1587
    %v1589 = vrot.slane %v1584, %v1588
    %v1591 = vmul.f32 %v1583, %v1589
    %v1592 = vld [vmem:[#allocation3 + $0x14] sm:$0x1]
    %v1593 = vlaneseq
    %v1594 = vshrl.u32 %v1593, 7
    %v1595 = vsub.s32 0, %v1594
    %v1596 = vrot.slane %v1592, %v1595
    %v1597 = vmul.f32 %v60, %v1596
    %v1598 = vld [vmem:[#allocation3 + $0x15] sm:$0x1]
    %v1599 = vlaneseq
    %v1600 = vshrl.u32 %v1599, 7
    %v1601 = vsub.s32 0, %v1600
    %v1602 = vrot.slane %v1598, %v1601
    %v1603 = vmul.f32 %v64, %v1602
    %v1604 = vadd.f32 %v1597, %v1603
    %v1605 = vld [vmem:[#allocation5 + $0xa] sm:$0x1]
    %v1607 = vlaneseq
    %v1608 = vshrl.u32 %v1607, 7
    %v1609 = vsub.s32 0, %v1608
    %v1610 = vrot.slane %v1605, %v1609
    %v1612 = vadd.f32 %v1604, %v1610
    %v1613 = vmax.f32 %v1612, 0.0
    %v1614 = vld [vmem:[#allocation7 + $0xa] sm:$0x1]
    %v1616 = vlaneseq
    %v1617 = vshrl.u32 %v1616, 7
    %v1618 = vsub.s32 0, %v1617
    %v1619 = vrot.slane %v1614, %v1618
    %v1621 = vmul.f32 %v1613, %v1619
    %v1622 = vadd.f32 %v1591, %v1621
    %v1623 = vld [vmem:[#allocation3 + $0x22] sm:$0x1]
    %v1624 = vlaneseq
    %v1625 = vshrl.u32 %v1624, 7
    %v1626 = vsub.s32 0, %v1625
    %v1627 = vrot.slane %v1623, %v1626
    %v1628 = vmul.f32 %v60, %v1627
    %v1629 = vld [vmem:[#allocation3 + $0x23] sm:$0x1]
    %v1630 = vlaneseq
    %v1631 = vshrl.u32 %v1630, 7
    %v1632 = vsub.s32 0, %v1631
    %v1633 = vrot.slane %v1629, %v1632
    %v1634 = vmul.f32 %v64, %v1633
    %v1635 = vadd.f32 %v1628, %v1634
    %v1636 = vld [vmem:[#allocation5 + $0x11] sm:$0x1]
    %v1638 = vlaneseq
    %v1639 = vshrl.u32 %v1638, 7
    %v1640 = vsub.s32 0, %v1639
    %v1641 = vrot.slane %v1636, %v1640
    %v1643 = vadd.f32 %v1635, %v1641
    %v1644 = vmax.f32 %v1643, 0.0
    %v1645 = vld [vmem:[#allocation7 + $0x11] sm:$0x1]
    %v1647 = vlaneseq
    %v1648 = vshrl.u32 %v1647, 7
    %v1649 = vsub.s32 0, %v1648
    %v1650 = vrot.slane %v1645, %v1649
    %v1652 = vmul.f32 %v1644, %v1650
    %v1653 = vadd.f32 %v1622, %v1652
    %v1654 = vld [vmem:[#allocation3 + $0x30] sm:$0x1]
    %v1655 = vlaneseq
    %v1656 = vshrl.u32 %v1655, 7
    %v1657 = vsub.s32 0, %v1656
    %v1658 = vrot.slane %v1654, %v1657
    %v1659 = vmul.f32 %v60, %v1658
    %v1660 = vld [vmem:[#allocation3 + $0x31] sm:$0x1]
    %v1661 = vlaneseq
    %v1662 = vshrl.u32 %v1661, 7
    %v1663 = vsub.s32 0, %v1662
    %v1664 = vrot.slane %v1660, %v1663
    %v1665 = vmul.f32 %v64, %v1664
    %v1666 = vadd.f32 %v1659, %v1665
    %v1667 = vld [vmem:[#allocation5 + $0x18] sm:$0x1]
    %v1669 = vlaneseq
    %v1670 = vshrl.u32 %v1669, 7
    %v1671 = vsub.s32 0, %v1670
    %v1672 = vrot.slane %v1667, %v1671
    %v1674 = vadd.f32 %v1666, %v1672
    %v1675 = vmax.f32 %v1674, 0.0
    %v1676 = vld [vmem:[#allocation7 + $0x18] sm:$0x1]
    %v1678 = vlaneseq
    %v1679 = vshrl.u32 %v1678, 7
    %v1680 = vsub.s32 0, %v1679
    %v1681 = vrot.slane %v1676, %v1680
    %v1683 = vmul.f32 %v1675, %v1681
    %v1684 = vadd.f32 %v1653, %v1683
    %v1685 = vld [vmem:[#allocation3 + $0x3e] sm:$0x1]
    %v1686 = vlaneseq
    %v1687 = vshrl.u32 %v1686, 7
    %v1688 = vsub.s32 0, %v1687
    %v1689 = vrot.slane %v1685, %v1688
    %v1690 = vmul.f32 %v60, %v1689
    %v1691 = vld [vmem:[#allocation3 + $0x3f] sm:$0x1]
    %v1692 = vlaneseq
    %v1693 = vshrl.u32 %v1692, 7
    %v1694 = vsub.s32 0, %v1693
    %v1695 = vrot.slane %v1691, %v1694
    %v1696 = vmul.f32 %v64, %v1695
    %v1697 = vadd.f32 %v1690, %v1696
    %v1698 = vld [vmem:[#allocation5 + $0x1f] sm:$0x1]
    %v1700 = vlaneseq
    %v1701 = vshrl.u32 %v1700, 7
    %v1702 = vsub.s32 0, %v1701
    %v1703 = vrot.slane %v1698, %v1702
    %v1705 = vadd.f32 %v1697, %v1703
    %v1706 = vmax.f32 %v1705, 0.0
    %v1707 = vld [vmem:[#allocation7 + $0x1f] sm:$0x1]
    %v1709 = vlaneseq
    %v1710 = vshrl.u32 %v1709, 7
    %v1711 = vsub.s32 0, %v1710
    %v1712 = vrot.slane %v1707, %v1711
    %v1714 = vmul.f32 %v1706, %v1712
    %v1715 = vadd.f32 %v1684, %v1714
    %v1716 = vld [vmem:[#allocation3 + $0x4c] sm:$0x1]
    %v1717 = vlaneseq
    %v1718 = vshrl.u32 %v1717, 7
    %v1719 = vsub.s32 0, %v1718
    %v1720 = vrot.slane %v1716, %v1719
    %v1721 = vmul.f32 %v60, %v1720
    %v1722 = vld [vmem:[#allocation3 + $0x4d] sm:$0x1]
    %v1723 = vlaneseq
    %v1724 = vshrl.u32 %v1723, 7
    %v1725 = vsub.s32 0, %v1724
    %v1726 = vrot.slane %v1722, %v1725
    %v1727 = vmul.f32 %v64, %v1726
    %v1728 = vadd.f32 %v1721, %v1727
    %v1729 = vld [vmem:[#allocation5 + $0x26] sm:$0x1]
    %v1731 = vlaneseq
    %v1732 = vshrl.u32 %v1731, 7
    %v1733 = vsub.s32 0, %v1732
    %v1734 = vrot.slane %v1729, %v1733
    %v1736 = vadd.f32 %v1728, %v1734
    %v1737 = vmax.f32 %v1736, 0.0
    %v1738 = vld [vmem:[#allocation7 + $0x26] sm:$0x1]
    %v1740 = vlaneseq
    %v1741 = vshrl.u32 %v1740, 7
    %v1742 = vsub.s32 0, %v1741
    %v1743 = vrot.slane %v1738, %v1742
    %v1745 = vmul.f32 %v1737, %v1743
    %v1746 = vadd.f32 %v1715, %v1745
    %v1747 = vld [vmem:[#allocation3 + $0x5a] sm:$0x1]
    %v1748 = vlaneseq
    %v1749 = vshrl.u32 %v1748, 7
    %v1750 = vsub.s32 0, %v1749
    %v1751 = vrot.slane %v1747, %v1750
    %v1752 = vmul.f32 %v60, %v1751
    %v1753 = vld [vmem:[#allocation3 + $0x5b] sm:$0x1]
    %v1754 = vlaneseq
    %v1755 = vshrl.u32 %v1754, 7
    %v1756 = vsub.s32 0, %v1755
    %v1757 = vrot.slane %v1753, %v1756
    %v1758 = vmul.f32 %v64, %v1757
    %v1759 = vadd.f32 %v1752, %v1758
    %v1760 = vld [vmem:[#allocation5 + $0x2d] sm:$0x1]
    %v1762 = vlaneseq
    %v1763 = vshrl.u32 %v1762, 7
    %v1764 = vsub.s32 0, %v1763
    %v1765 = vrot.slane %v1760, %v1764
    %v1767 = vadd.f32 %v1759, %v1765
    %v1768 = vmax.f32 %v1767, 0.0
    %v1769 = vld [vmem:[#allocation7 + $0x2d] sm:$0x1]
    %v1771 = vlaneseq
    %v1772 = vshrl.u32 %v1771, 7
    %v1773 = vsub.s32 0, %v1772
    %v1774 = vrot.slane %v1769, %v1773
    %v1776 = vmul.f32 %v1768, %v1774
    %v1777 = vadd.f32 %v1746, %v1776
    %v1778 = vld [vmem:[#allocation3 + $0x68] sm:$0x1]
    %v1779 = vlaneseq
    %v1780 = vshrl.u32 %v1779, 7
    %v1781 = vsub.s32 0, %v1780
    %v1782 = vrot.slane %v1778, %v1781
    %v1783 = vmul.f32 %v60, %v1782
    %v1784 = vld [vmem:[#allocation3 + $0x69] sm:$0x1]
    %v1785 = vlaneseq
    %v1786 = vshrl.u32 %v1785, 7
    %v1787 = vsub.s32 0, %v1786
    %v1788 = vrot.slane %v1784, %v1787
    %v1789 = vmul.f32 %v64, %v1788
    %v1790 = vadd.f32 %v1783, %v1789
    %v1791 = vld [vmem:[#allocation5 + $0x34] sm:$0x1]
    %v1793 = vlaneseq
    %v1794 = vshrl.u32 %v1793, 7
    %v1795 = vsub.s32 0, %v1794
    %v1796 = vrot.slane %v1791, %v1795
    %v1798 = vadd.f32 %v1790, %v1796
    %v1799 = vmax.f32 %v1798, 0.0
    %v1800 = vld [vmem:[#allocation7 + $0x34] sm:$0x1]
    %v1802 = vlaneseq
    %v1803 = vshrl.u32 %v1802, 7
    %v1804 = vsub.s32 0, %v1803
    %v1805 = vrot.slane %v1800, %v1804
    %v1807 = vmul.f32 %v1799, %v1805
    %v1808 = vadd.f32 %v1777, %v1807
    %v1809 = vld [vmem:[#allocation3 + $0x76] sm:$0x1]
    %v1810 = vlaneseq
    %v1811 = vshrl.u32 %v1810, 7
    %v1812 = vsub.s32 0, %v1811
    %v1813 = vrot.slane %v1809, %v1812
    %v1814 = vmul.f32 %v60, %v1813
    %v1815 = vld [vmem:[#allocation3 + $0x77] sm:$0x1]
    %v1816 = vlaneseq
    %v1817 = vshrl.u32 %v1816, 7
    %v1818 = vsub.s32 0, %v1817
    %v1819 = vrot.slane %v1815, %v1818
    %v1820 = vmul.f32 %v64, %v1819
    %v1821 = vadd.f32 %v1814, %v1820
    %v1822 = vld [vmem:[#allocation5 + $0x3b] sm:$0x1]
    %v1824 = vlaneseq
    %v1825 = vshrl.u32 %v1824, 7
    %v1826 = vsub.s32 0, %v1825
    %v1827 = vrot.slane %v1822, %v1826
    %v1829 = vadd.f32 %v1821, %v1827
    %v1830 = vmax.f32 %v1829, 0.0
    %v1831 = vld [vmem:[#allocation7 + $0x3b] sm:$0x1]
    %v1833 = vlaneseq
    %v1834 = vshrl.u32 %v1833, 7
    %v1835 = vsub.s32 0, %v1834
    %v1836 = vrot.slane %v1831, %v1835
    %v1838 = vmul.f32 %v1830, %v1836
    %v1839 = vadd.f32 %v1808, %v1838
    %v1840 = vld [vmem:[#allocation3 + $0x84] sm:$0x1]
    %v1841 = vlaneseq
    %v1842 = vshrl.u32 %v1841, 7
    %v1843 = vsub.s32 0, %v1842
    %v1844 = vrot.slane %v1840, %v1843
    %v1845 = vmul.f32 %v60, %v1844
    %v1846 = vld [vmem:[#allocation3 + $0x85] sm:$0x1]
    %v1847 = vlaneseq
    %v1848 = vshrl.u32 %v1847, 7
    %v1849 = vsub.s32 0, %v1848
    %v1850 = vrot.slane %v1846, %v1849
    %v1851 = vmul.f32 %v64, %v1850
    %v1852 = vadd.f32 %v1845, %v1851
    %v1853 = vld [vmem:[#allocation5 + $0x42] sm:$0x1]
    %v1855 = vlaneseq
    %v1856 = vshrl.u32 %v1855, 7
    %v1857 = vsub.s32 0, %v1856
    %v1858 = vrot.slane %v1853, %v1857
    %v1860 = vadd.f32 %v1852, %v1858
    %v1861 = vmax.f32 %v1860, 0.0
    %v1862 = vld [vmem:[#allocation7 + $0x42] sm:$0x1]
    %v1864 = vlaneseq
    %v1865 = vshrl.u32 %v1864, 7
    %v1866 = vsub.s32 0, %v1865
    %v1867 = vrot.slane %v1862, %v1866
    %v1869 = vmul.f32 %v1861, %v1867
    %v1870 = vadd.f32 %v1839, %v1869
    %v1871 = vld [vmem:[#allocation3 + $0x92] sm:$0x1]
    %v1872 = vlaneseq
    %v1873 = vshrl.u32 %v1872, 7
    %v1874 = vsub.s32 0, %v1873
    %v1875 = vrot.slane %v1871, %v1874
    %v1876 = vmul.f32 %v60, %v1875
    %v1877 = vld [vmem:[#allocation3 + $0x93] sm:$0x1]
    %v1878 = vlaneseq
    %v1879 = vshrl.u32 %v1878, 7
    %v1880 = vsub.s32 0, %v1879
    %v1881 = vrot.slane %v1877, %v1880
    %v1882 = vmul.f32 %v64, %v1881
    %v1883 = vadd.f32 %v1876, %v1882
    %v1884 = vld [vmem:[#allocation5 + $0x49] sm:$0x1]
    %v1886 = vlaneseq
    %v1887 = vshrl.u32 %v1886, 7
    %v1888 = vsub.s32 0, %v1887
    %v1889 = vrot.slane %v1884, %v1888
    %v1891 = vadd.f32 %v1883, %v1889
    %v1892 = vmax.f32 %v1891, 0.0
    %v1893 = vld [vmem:[#allocation7 + $0x49] sm:$0x1]
    %v1895 = vlaneseq
    %v1896 = vshrl.u32 %v1895, 7
    %v1897 = vsub.s32 0, %v1896
    %v1898 = vrot.slane %v1893, %v1897
    %v1900 = vmul.f32 %v1892, %v1898
    %v1901 = vadd.f32 %v1870, %v1900
    %v1902 = vld [vmem:[#allocation3 + $0xa0] sm:$0x1]
    %v1903 = vlaneseq
    %v1904 = vshrl.u32 %v1903, 7
    %v1905 = vsub.s32 0, %v1904
    %v1906 = vrot.slane %v1902, %v1905
    %v1907 = vmul.f32 %v60, %v1906
    %v1908 = vld [vmem:[#allocation3 + $0xa1] sm:$0x1]
    %v1909 = vlaneseq
    %v1910 = vshrl.u32 %v1909, 7
    %v1911 = vsub.s32 0, %v1910
    %v1912 = vrot.slane %v1908, %v1911
    %v1913 = vmul.f32 %v64, %v1912
    %v1914 = vadd.f32 %v1907, %v1913
    %v1915 = vld [vmem:[#allocation5 + $0x50] sm:$0x1]
    %v1917 = vlaneseq
    %v1918 = vshrl.u32 %v1917, 7
    %v1919 = vsub.s32 0, %v1918
    %v1920 = vrot.slane %v1915, %v1919
    %v1922 = vadd.f32 %v1914, %v1920
    %v1923 = vmax.f32 %v1922, 0.0
    %v1924 = vld [vmem:[#allocation7 + $0x50] sm:$0x1]
    %v1926 = vlaneseq
    %v1927 = vshrl.u32 %v1926, 7
    %v1928 = vsub.s32 0, %v1927
    %v1929 = vrot.slane %v1924, %v1928
    %v1931 = vmul.f32 %v1923, %v1929
    %v1932 = vadd.f32 %v1901, %v1931
    %v1933 = vld [vmem:[#allocation3 + $0xae] sm:$0x1]
    %v1934 = vlaneseq
    %v1935 = vshrl.u32 %v1934, 7
    %v1936 = vsub.s32 0, %v1935
    %v1937 = vrot.slane %v1933, %v1936
    %v1938 = vmul.f32 %v60, %v1937
    %v1939 = vld [vmem:[#allocation3 + $0xaf] sm:$0x1]
    %v1940 = vlaneseq
    %v1941 = vshrl.u32 %v1940, 7
    %v1942 = vsub.s32 0, %v1941
    %v1943 = vrot.slane %v1939, %v1942
    %v1944 = vmul.f32 %v64, %v1943
    %v1945 = vadd.f32 %v1938, %v1944
    %v1946 = vld [vmem:[#allocation5 + $0x57] sm:$0x1]
    %v1948 = vlaneseq
    %v1949 = vshrl.u32 %v1948, 7
    %v1950 = vsub.s32 0, %v1949
    %v1951 = vrot.slane %v1946, %v1950
    %v1953 = vadd.f32 %v1945, %v1951
    %v1954 = vmax.f32 %v1953, 0.0
    %v1955 = vld [vmem:[#allocation7 + $0x57] sm:$0x1]
    %v1957 = vlaneseq
    %v1958 = vshrl.u32 %v1957, 7
    %v1959 = vsub.s32 0, %v1958
    %v1960 = vrot.slane %v1955, %v1959
    %v1962 = vmul.f32 %v1954, %v1960
    %v1963 = vadd.f32 %v1932, %v1962
    %v1964 = vld [vmem:[#allocation3 + $0xbc] sm:$0x1]
    %v1965 = vlaneseq
    %v1966 = vshrl.u32 %v1965, 7
    %v1967 = vsub.s32 0, %v1966
    %v1968 = vrot.slane %v1964, %v1967
    %v1969 = vmul.f32 %v60, %v1968
    %v1970 = vld [vmem:[#allocation3 + $0xbd] sm:$0x1]
    %v1971 = vlaneseq
    %v1972 = vshrl.u32 %v1971, 7
    %v1973 = vsub.s32 0, %v1972
    %v1974 = vrot.slane %v1970, %v1973
    %v1975 = vmul.f32 %v64, %v1974
    %v1976 = vadd.f32 %v1969, %v1975
    %v1977 = vld [vmem:[#allocation5 + $0x5e] sm:$0x1]
    %v1979 = vlaneseq
    %v1980 = vshrl.u32 %v1979, 7
    %v1981 = vsub.s32 0, %v1980
    %v1982 = vrot.slane %v1977, %v1981
    %v1984 = vadd.f32 %v1976, %v1982
    %v1985 = vmax.f32 %v1984, 0.0
    %v1986 = vld [vmem:[#allocation7 + $0x5e] sm:$0x1]
    %v1988 = vlaneseq
    %v1989 = vshrl.u32 %v1988, 7
    %v1990 = vsub.s32 0, %v1989
    %v1991 = vrot.slane %v1986, %v1990
    %v1993 = vmul.f32 %v1985, %v1991
    %v1994 = vadd.f32 %v1963, %v1993
    %v1995 = vld [vmem:[#allocation3 + $0xca] sm:$0x1]
    %v1996 = vlaneseq
    %v1997 = vshrl.u32 %v1996, 7
    %v1998 = vsub.s32 0, %v1997
    %v1999 = vrot.slane %v1995, %v1998
    %v2000 = vmul.f32 %v60, %v1999
    %v2001 = vld [vmem:[#allocation3 + $0xcb] sm:$0x1]
    %v2002 = vlaneseq
    %v2003 = vshrl.u32 %v2002, 7
    %v2004 = vsub.s32 0, %v2003
    %v2005 = vrot.slane %v2001, %v2004
    %v2006 = vmul.f32 %v64, %v2005
    %v2007 = vadd.f32 %v2000, %v2006
    %v2008 = vld [vmem:[#allocation5 + $0x65] sm:$0x1]
    %v2010 = vlaneseq
    %v2011 = vshrl.u32 %v2010, 7
    %v2012 = vsub.s32 0, %v2011
    %v2013 = vrot.slane %v2008, %v2012
    %v2015 = vadd.f32 %v2007, %v2013
    %v2016 = vmax.f32 %v2015, 0.0
    %v2017 = vld [vmem:[#allocation7 + $0x65] sm:$0x1]
    %v2019 = vlaneseq
    %v2020 = vshrl.u32 %v2019, 7
    %v2021 = vsub.s32 0, %v2020
    %v2022 = vrot.slane %v2017, %v2021
    %v2024 = vmul.f32 %v2016, %v2022
    %v2025 = vadd.f32 %v1994, %v2024
    %v2026 = vld [vmem:[#allocation3 + $0xd8] sm:$0x1]
    %v2027 = vlaneseq
    %v2028 = vshrl.u32 %v2027, 7
    %v2029 = vsub.s32 0, %v2028
    %v2030 = vrot.slane %v2026, %v2029
    %v2031 = vmul.f32 %v60, %v2030
    %v2032 = vld [vmem:[#allocation3 + $0xd9] sm:$0x1]
    %v2033 = vlaneseq
    %v2034 = vshrl.u32 %v2033, 7
    %v2035 = vsub.s32 0, %v2034
    %v2036 = vrot.slane %v2032, %v2035
    %v2037 = vmul.f32 %v64, %v2036
    %v2038 = vadd.f32 %v2031, %v2037
    %v2039 = vld [vmem:[#allocation5 + $0x6c] sm:$0x1]
    %v2041 = vlaneseq
    %v2042 = vshrl.u32 %v2041, 7
    %v2043 = vsub.s32 0, %v2042
    %v2044 = vrot.slane %v2039, %v2043
    %v2046 = vadd.f32 %v2038, %v2044
    %v2047 = vmax.f32 %v2046, 0.0
    %v2048 = vld [vmem:[#allocation7 + $0x6c] sm:$0x1]
    %v2050 = vlaneseq
    %v2051 = vshrl.u32 %v2050, 7
    %v2052 = vsub.s32 0, %v2051
    %v2053 = vrot.slane %v2048, %v2052
    %v2055 = vmul.f32 %v2047, %v2053
    %v2056 = vadd.f32 %v2025, %v2055
    %v2057 = vadd.f32 %v2056, %v562
    %v2058 = vtanh.pop %v2057
    %2059 = vst [vmem:[%s5 + $0x6] sm:$0x3] %v2058
    %v2060 = vld [vmem:[#allocation3 + $0x8] sm:$0x1]
    %v2061 = vlaneseq
    %v2062 = vshrl.u32 %v2061, 7
    %v2063 = vsub.s32 0, %v2062
    %v2064 = vrot.slane %v2060, %v2063
    %v2065 = vmul.f32 %v60, %v2064
    %v2066 = vld [vmem:[#allocation3 + $0x9] sm:$0x1]
    %v2067 = vlaneseq
    %v2068 = vshrl.u32 %v2067, 7
    %v2069 = vsub.s32 0, %v2068
    %v2070 = vrot.slane %v2066, %v2069
    %v2071 = vmul.f32 %v64, %v2070
    %v2072 = vadd.f32 %v2065, %v2071
    %v2073 = vld [vmem:[#allocation5 + $0x4] sm:$0x1]
    %v2075 = vlaneseq
    %v2076 = vshrl.u32 %v2075, 7
    %v2077 = vsub.s32 0, %v2076
    %v2078 = vrot.slane %v2073, %v2077
    %v2080 = vadd.f32 %v2072, %v2078
    %v2081 = vmax.f32 %v2080, 0.0
    %v2082 = vld [vmem:[#allocation7 + $0x4] sm:$0x1]
    %v2084 = vlaneseq
    %v2085 = vshrl.u32 %v2084, 7
    %v2086 = vsub.s32 0, %v2085
    %v2087 = vrot.slane %v2082, %v2086
    %v2089 = vmul.f32 %v2081, %v2087
    %v2090 = vld [vmem:[#allocation3 + $0x16] sm:$0x1]
    %v2091 = vlaneseq
    %v2092 = vshrl.u32 %v2091, 7
    %v2093 = vsub.s32 0, %v2092
    %v2094 = vrot.slane %v2090, %v2093
    %v2095 = vmul.f32 %v60, %v2094
    %v2096 = vld [vmem:[#allocation3 + $0x17] sm:$0x1]
    %v2097 = vlaneseq
    %v2098 = vshrl.u32 %v2097, 7
    %v2099 = vsub.s32 0, %v2098
    %v2100 = vrot.slane %v2096, %v2099
    %v2101 = vmul.f32 %v64, %v2100
    %v2102 = vadd.f32 %v2095, %v2101
    %v2103 = vld [vmem:[#allocation5 + $0xb] sm:$0x1]
    %v2105 = vlaneseq
    %v2106 = vshrl.u32 %v2105, 7
    %v2107 = vsub.s32 0, %v2106
    %v2108 = vrot.slane %v2103, %v2107
    %v2110 = vadd.f32 %v2102, %v2108
    %v2111 = vmax.f32 %v2110, 0.0
    %v2112 = vld [vmem:[#allocation7 + $0xb] sm:$0x1]
    %v2114 = vlaneseq
    %v2115 = vshrl.u32 %v2114, 7
    %v2116 = vsub.s32 0, %v2115
    %v2117 = vrot.slane %v2112, %v2116
    %v2119 = vmul.f32 %v2111, %v2117
    %v2120 = vadd.f32 %v2089, %v2119
    %v2121 = vld [vmem:[#allocation3 + $0x24] sm:$0x1]
    %v2122 = vlaneseq
    %v2123 = vshrl.u32 %v2122, 7
    %v2124 = vsub.s32 0, %v2123
    %v2125 = vrot.slane %v2121, %v2124
    %v2126 = vmul.f32 %v60, %v2125
    %v2127 = vld [vmem:[#allocation3 + $0x25] sm:$0x1]
    %v2128 = vlaneseq
    %v2129 = vshrl.u32 %v2128, 7
    %v2130 = vsub.s32 0, %v2129
    %v2131 = vrot.slane %v2127, %v2130
    %v2132 = vmul.f32 %v64, %v2131
    %v2133 = vadd.f32 %v2126, %v2132
    %v2134 = vld [vmem:[#allocation5 + $0x12] sm:$0x1]
    %v2136 = vlaneseq
    %v2137 = vshrl.u32 %v2136, 7
    %v2138 = vsub.s32 0, %v2137
    %v2139 = vrot.slane %v2134, %v2138
    %v2141 = vadd.f32 %v2133, %v2139
    %v2142 = vmax.f32 %v2141, 0.0
    %v2143 = vld [vmem:[#allocation7 + $0x12] sm:$0x1]
    %v2145 = vlaneseq
    %v2146 = vshrl.u32 %v2145, 7
    %v2147 = vsub.s32 0, %v2146
    %v2148 = vrot.slane %v2143, %v2147
    %v2150 = vmul.f32 %v2142, %v2148
    %v2151 = vadd.f32 %v2120, %v2150
    %v2152 = vld [vmem:[#allocation3 + $0x32] sm:$0x1]
    %v2153 = vlaneseq
    %v2154 = vshrl.u32 %v2153, 7
    %v2155 = vsub.s32 0, %v2154
    %v2156 = vrot.slane %v2152, %v2155
    %v2157 = vmul.f32 %v60, %v2156
    %v2158 = vld [vmem:[#allocation3 + $0x33] sm:$0x1]
    %v2159 = vlaneseq
    %v2160 = vshrl.u32 %v2159, 7
    %v2161 = vsub.s32 0, %v2160
    %v2162 = vrot.slane %v2158, %v2161
    %v2163 = vmul.f32 %v64, %v2162
    %v2164 = vadd.f32 %v2157, %v2163
    %v2165 = vld [vmem:[#allocation5 + $0x19] sm:$0x1]
    %v2167 = vlaneseq
    %v2168 = vshrl.u32 %v2167, 7
    %v2169 = vsub.s32 0, %v2168
    %v2170 = vrot.slane %v2165, %v2169
    %v2172 = vadd.f32 %v2164, %v2170
    %v2173 = vmax.f32 %v2172, 0.0
    %v2174 = vld [vmem:[#allocation7 + $0x19] sm:$0x1]
    %v2176 = vlaneseq
    %v2177 = vshrl.u32 %v2176, 7
    %v2178 = vsub.s32 0, %v2177
    %v2179 = vrot.slane %v2174, %v2178
    %v2181 = vmul.f32 %v2173, %v2179
    %v2182 = vadd.f32 %v2151, %v2181
    %v2183 = vld [vmem:[#allocation3 + $0x40] sm:$0x1]
    %v2184 = vlaneseq
    %v2185 = vshrl.u32 %v2184, 7
    %v2186 = vsub.s32 0, %v2185
    %v2187 = vrot.slane %v2183, %v2186
    %v2188 = vmul.f32 %v60, %v2187
    %v2189 = vld [vmem:[#allocation3 + $0x41] sm:$0x1]
    %v2190 = vlaneseq
    %v2191 = vshrl.u32 %v2190, 7
    %v2192 = vsub.s32 0, %v2191
    %v2193 = vrot.slane %v2189, %v2192
    %v2194 = vmul.f32 %v64, %v2193
    %v2195 = vadd.f32 %v2188, %v2194
    %v2196 = vld [vmem:[#allocation5 + $0x20] sm:$0x1]
    %v2198 = vlaneseq
    %v2199 = vshrl.u32 %v2198, 7
    %v2200 = vsub.s32 0, %v2199
    %v2201 = vrot.slane %v2196, %v2200
    %v2203 = vadd.f32 %v2195, %v2201
    %v2204 = vmax.f32 %v2203, 0.0
    %v2205 = vld [vmem:[#allocation7 + $0x20] sm:$0x1]
    %v2207 = vlaneseq
    %v2208 = vshrl.u32 %v2207, 7
    %v2209 = vsub.s32 0, %v2208
    %v2210 = vrot.slane %v2205, %v2209
    %v2212 = vmul.f32 %v2204, %v2210
    %v2213 = vadd.f32 %v2182, %v2212
    %v2214 = vld [vmem:[#allocation3 + $0x4e] sm:$0x1]
    %v2215 = vlaneseq
    %v2216 = vshrl.u32 %v2215, 7
    %v2217 = vsub.s32 0, %v2216
    %v2218 = vrot.slane %v2214, %v2217
    %v2219 = vmul.f32 %v60, %v2218
    %v2220 = vld [vmem:[#allocation3 + $0x4f] sm:$0x1]
    %v2221 = vlaneseq
    %v2222 = vshrl.u32 %v2221, 7
    %v2223 = vsub.s32 0, %v2222
    %v2224 = vrot.slane %v2220, %v2223
    %v2225 = vmul.f32 %v64, %v2224
    %v2226 = vadd.f32 %v2219, %v2225
    %v2227 = vld [vmem:[#allocation5 + $0x27] sm:$0x1]
    %v2229 = vlaneseq
    %v2230 = vshrl.u32 %v2229, 7
    %v2231 = vsub.s32 0, %v2230
    %v2232 = vrot.slane %v2227, %v2231
    %v2234 = vadd.f32 %v2226, %v2232
    %v2235 = vmax.f32 %v2234, 0.0
    %v2236 = vld [vmem:[#allocation7 + $0x27] sm:$0x1]
    %v2238 = vlaneseq
    %v2239 = vshrl.u32 %v2238, 7
    %v2240 = vsub.s32 0, %v2239
    %v2241 = vrot.slane %v2236, %v2240
    %v2243 = vmul.f32 %v2235, %v2241
    %v2244 = vadd.f32 %v2213, %v2243
    %v2245 = vld [vmem:[#allocation3 + $0x5c] sm:$0x1]
    %v2246 = vlaneseq
    %v2247 = vshrl.u32 %v2246, 7
    %v2248 = vsub.s32 0, %v2247
    %v2249 = vrot.slane %v2245, %v2248
    %v2250 = vmul.f32 %v60, %v2249
    %v2251 = vld [vmem:[#allocation3 + $0x5d] sm:$0x1]
    %v2252 = vlaneseq
    %v2253 = vshrl.u32 %v2252, 7
    %v2254 = vsub.s32 0, %v2253
    %v2255 = vrot.slane %v2251, %v2254
    %v2256 = vmul.f32 %v64, %v2255
    %v2257 = vadd.f32 %v2250, %v2256
    %v2258 = vld [vmem:[#allocation5 + $0x2e] sm:$0x1]
    %v2260 = vlaneseq
    %v2261 = vshrl.u32 %v2260, 7
    %v2262 = vsub.s32 0, %v2261
    %v2263 = vrot.slane %v2258, %v2262
    %v2265 = vadd.f32 %v2257, %v2263
    %v2266 = vmax.f32 %v2265, 0.0
    %v2267 = vld [vmem:[#allocation7 + $0x2e] sm:$0x1]
    %v2269 = vlaneseq
    %v2270 = vshrl.u32 %v2269, 7
    %v2271 = vsub.s32 0, %v2270
    %v2272 = vrot.slane %v2267, %v2271
    %v2274 = vmul.f32 %v2266, %v2272
    %v2275 = vadd.f32 %v2244, %v2274
    %v2276 = vld [vmem:[#allocation3 + $0x6a] sm:$0x1]
    %v2277 = vlaneseq
    %v2278 = vshrl.u32 %v2277, 7
    %v2279 = vsub.s32 0, %v2278
    %v2280 = vrot.slane %v2276, %v2279
    %v2281 = vmul.f32 %v60, %v2280
    %v2282 = vld [vmem:[#allocation3 + $0x6b] sm:$0x1]
    %v2283 = vlaneseq
    %v2284 = vshrl.u32 %v2283, 7
    %v2285 = vsub.s32 0, %v2284
    %v2286 = vrot.slane %v2282, %v2285
    %v2287 = vmul.f32 %v64, %v2286
    %v2288 = vadd.f32 %v2281, %v2287
    %v2289 = vld [vmem:[#allocation5 + $0x35] sm:$0x1]
    %v2291 = vlaneseq
    %v2292 = vshrl.u32 %v2291, 7
    %v2293 = vsub.s32 0, %v2292
    %v2294 = vrot.slane %v2289, %v2293
    %v2296 = vadd.f32 %v2288, %v2294
    %v2297 = vmax.f32 %v2296, 0.0
    %v2298 = vld [vmem:[#allocation7 + $0x35] sm:$0x1]
    %v2300 = vlaneseq
    %v2301 = vshrl.u32 %v2300, 7
    %v2302 = vsub.s32 0, %v2301
    %v2303 = vrot.slane %v2298, %v2302
    %v2305 = vmul.f32 %v2297, %v2303
    %v2306 = vadd.f32 %v2275, %v2305
    %v2307 = vld [vmem:[#allocation3 + $0x78] sm:$0x1]
    %v2308 = vlaneseq
    %v2309 = vshrl.u32 %v2308, 7
    %v2310 = vsub.s32 0, %v2309
    %v2311 = vrot.slane %v2307, %v2310
    %v2312 = vmul.f32 %v60, %v2311
    %v2313 = vld [vmem:[#allocation3 + $0x79] sm:$0x1]
    %v2314 = vlaneseq
    %v2315 = vshrl.u32 %v2314, 7
    %v2316 = vsub.s32 0, %v2315
    %v2317 = vrot.slane %v2313, %v2316
    %v2318 = vmul.f32 %v64, %v2317
    %v2319 = vadd.f32 %v2312, %v2318
    %v2320 = vld [vmem:[#allocation5 + $0x3c] sm:$0x1]
    %v2322 = vlaneseq
    %v2323 = vshrl.u32 %v2322, 7
    %v2324 = vsub.s32 0, %v2323
    %v2325 = vrot.slane %v2320, %v2324
    %v2327 = vadd.f32 %v2319, %v2325
    %v2328 = vmax.f32 %v2327, 0.0
    %v2329 = vld [vmem:[#allocation7 + $0x3c] sm:$0x1]
    %v2331 = vlaneseq
    %v2332 = vshrl.u32 %v2331, 7
    %v2333 = vsub.s32 0, %v2332
    %v2334 = vrot.slane %v2329, %v2333
    %v2336 = vmul.f32 %v2328, %v2334
    %v2337 = vadd.f32 %v2306, %v2336
    %v2338 = vld [vmem:[#allocation3 + $0x86] sm:$0x1]
    %v2339 = vlaneseq
    %v2340 = vshrl.u32 %v2339, 7
    %v2341 = vsub.s32 0, %v2340
    %v2342 = vrot.slane %v2338, %v2341
    %v2343 = vmul.f32 %v60, %v2342
    %v2344 = vld [vmem:[#allocation3 + $0x87] sm:$0x1]
    %v2345 = vlaneseq
    %v2346 = vshrl.u32 %v2345, 7
    %v2347 = vsub.s32 0, %v2346
    %v2348 = vrot.slane %v2344, %v2347
    %v2349 = vmul.f32 %v64, %v2348
    %v2350 = vadd.f32 %v2343, %v2349
    %v2351 = vld [vmem:[#allocation5 + $0x43] sm:$0x1]
    %v2353 = vlaneseq
    %v2354 = vshrl.u32 %v2353, 7
    %v2355 = vsub.s32 0, %v2354
    %v2356 = vrot.slane %v2351, %v2355
    %v2358 = vadd.f32 %v2350, %v2356
    %v2359 = vmax.f32 %v2358, 0.0
    %v2360 = vld [vmem:[#allocation7 + $0x43] sm:$0x1]
    %v2362 = vlaneseq
    %v2363 = vshrl.u32 %v2362, 7
    %v2364 = vsub.s32 0, %v2363
    %v2365 = vrot.slane %v2360, %v2364
    %v2367 = vmul.f32 %v2359, %v2365
    %v2368 = vadd.f32 %v2337, %v2367
    %v2369 = vld [vmem:[#allocation3 + $0x94] sm:$0x1]
    %v2370 = vlaneseq
    %v2371 = vshrl.u32 %v2370, 7
    %v2372 = vsub.s32 0, %v2371
    %v2373 = vrot.slane %v2369, %v2372
    %v2374 = vmul.f32 %v60, %v2373
    %v2375 = vld [vmem:[#allocation3 + $0x95] sm:$0x1]
    %v2376 = vlaneseq
    %v2377 = vshrl.u32 %v2376, 7
    %v2378 = vsub.s32 0, %v2377
    %v2379 = vrot.slane %v2375, %v2378
    %v2380 = vmul.f32 %v64, %v2379
    %v2381 = vadd.f32 %v2374, %v2380
    %v2382 = vld [vmem:[#allocation5 + $0x4a] sm:$0x1]
    %v2384 = vlaneseq
    %v2385 = vshrl.u32 %v2384, 7
    %v2386 = vsub.s32 0, %v2385
    %v2387 = vrot.slane %v2382, %v2386
    %v2389 = vadd.f32 %v2381, %v2387
    %v2390 = vmax.f32 %v2389, 0.0
    %v2391 = vld [vmem:[#allocation7 + $0x4a] sm:$0x1]
    %v2393 = vlaneseq
    %v2394 = vshrl.u32 %v2393, 7
    %v2395 = vsub.s32 0, %v2394
    %v2396 = vrot.slane %v2391, %v2395
    %v2398 = vmul.f32 %v2390, %v2396
    %v2399 = vadd.f32 %v2368, %v2398
    %v2400 = vld [vmem:[#allocation3 + $0xa2] sm:$0x1]
    %v2401 = vlaneseq
    %v2402 = vshrl.u32 %v2401, 7
    %v2403 = vsub.s32 0, %v2402
    %v2404 = vrot.slane %v2400, %v2403
    %v2405 = vmul.f32 %v60, %v2404
    %v2406 = vld [vmem:[#allocation3 + $0xa3] sm:$0x1]
    %v2407 = vlaneseq
    %v2408 = vshrl.u32 %v2407, 7
    %v2409 = vsub.s32 0, %v2408
    %v2410 = vrot.slane %v2406, %v2409
    %v2411 = vmul.f32 %v64, %v2410
    %v2412 = vadd.f32 %v2405, %v2411
    %v2413 = vld [vmem:[#allocation5 + $0x51] sm:$0x1]
    %v2415 = vlaneseq
    %v2416 = vshrl.u32 %v2415, 7
    %v2417 = vsub.s32 0, %v2416
    %v2418 = vrot.slane %v2413, %v2417
    %v2420 = vadd.f32 %v2412, %v2418
    %v2421 = vmax.f32 %v2420, 0.0
    %v2422 = vld [vmem:[#allocation7 + $0x51] sm:$0x1]
    %v2424 = vlaneseq
    %v2425 = vshrl.u32 %v2424, 7
    %v2426 = vsub.s32 0, %v2425
    %v2427 = vrot.slane %v2422, %v2426
    %v2429 = vmul.f32 %v2421, %v2427
    %v2430 = vadd.f32 %v2399, %v2429
    %v2431 = vld [vmem:[#allocation3 + $0xb0] sm:$0x1]
    %v2432 = vlaneseq
    %v2433 = vshrl.u32 %v2432, 7
    %v2434 = vsub.s32 0, %v2433
    %v2435 = vrot.slane %v2431, %v2434
    %v2436 = vmul.f32 %v60, %v2435
    %v2437 = vld [vmem:[#allocation3 + $0xb1] sm:$0x1]
    %v2438 = vlaneseq
    %v2439 = vshrl.u32 %v2438, 7
    %v2440 = vsub.s32 0, %v2439
    %v2441 = vrot.slane %v2437, %v2440
    %v2442 = vmul.f32 %v64, %v2441
    %v2443 = vadd.f32 %v2436, %v2442
    %v2444 = vld [vmem:[#allocation5 + $0x58] sm:$0x1]
    %v2446 = vlaneseq
    %v2447 = vshrl.u32 %v2446, 7
    %v2448 = vsub.s32 0, %v2447
    %v2449 = vrot.slane %v2444, %v2448
    %v2451 = vadd.f32 %v2443, %v2449
    %v2452 = vmax.f32 %v2451, 0.0
    %v2453 = vld [vmem:[#allocation7 + $0x58] sm:$0x1]
    %v2455 = vlaneseq
    %v2456 = vshrl.u32 %v2455, 7
    %v2457 = vsub.s32 0, %v2456
    %v2458 = vrot.slane %v2453, %v2457
    %v2460 = vmul.f32 %v2452, %v2458
    %v2461 = vadd.f32 %v2430, %v2460
    %v2462 = vld [vmem:[#allocation3 + $0xbe] sm:$0x1]
    %v2463 = vlaneseq
    %v2464 = vshrl.u32 %v2463, 7
    %v2465 = vsub.s32 0, %v2464
    %v2466 = vrot.slane %v2462, %v2465
    %v2467 = vmul.f32 %v60, %v2466
    %v2468 = vld [vmem:[#allocation3 + $0xbf] sm:$0x1]
    %v2469 = vlaneseq
    %v2470 = vshrl.u32 %v2469, 7
    %v2471 = vsub.s32 0, %v2470
    %v2472 = vrot.slane %v2468, %v2471
    %v2473 = vmul.f32 %v64, %v2472
    %v2474 = vadd.f32 %v2467, %v2473
    %v2475 = vld [vmem:[#allocation5 + $0x5f] sm:$0x1]
    %v2477 = vlaneseq
    %v2478 = vshrl.u32 %v2477, 7
    %v2479 = vsub.s32 0, %v2478
    %v2480 = vrot.slane %v2475, %v2479
    %v2482 = vadd.f32 %v2474, %v2480
    %v2483 = vmax.f32 %v2482, 0.0
    %v2484 = vld [vmem:[#allocation7 + $0x5f] sm:$0x1]
    %v2486 = vlaneseq
    %v2487 = vshrl.u32 %v2486, 7
    %v2488 = vsub.s32 0, %v2487
    %v2489 = vrot.slane %v2484, %v2488
    %v2491 = vmul.f32 %v2483, %v2489
    %v2492 = vadd.f32 %v2461, %v2491
    %v2493 = vld [vmem:[#allocation3 + $0xcc] sm:$0x1]
    %v2494 = vlaneseq
    %v2495 = vshrl.u32 %v2494, 7
    %v2496 = vsub.s32 0, %v2495
    %v2497 = vrot.slane %v2493, %v2496
    %v2498 = vmul.f32 %v60, %v2497
    %v2499 = vld [vmem:[#allocation3 + $0xcd] sm:$0x1]
    %v2500 = vlaneseq
    %v2501 = vshrl.u32 %v2500, 7
    %v2502 = vsub.s32 0, %v2501
    %v2503 = vrot.slane %v2499, %v2502
    %v2504 = vmul.f32 %v64, %v2503
    %v2505 = vadd.f32 %v2498, %v2504
    %v2506 = vld [vmem:[#allocation5 + $0x66] sm:$0x1]
    %v2508 = vlaneseq
    %v2509 = vshrl.u32 %v2508, 7
    %v2510 = vsub.s32 0, %v2509
    %v2511 = vrot.slane %v2506, %v2510
    %v2513 = vadd.f32 %v2505, %v2511
    %v2514 = vmax.f32 %v2513, 0.0
    %v2515 = vld [vmem:[#allocation7 + $0x66] sm:$0x1]
    %v2517 = vlaneseq
    %v2518 = vshrl.u32 %v2517, 7
    %v2519 = vsub.s32 0, %v2518
    %v2520 = vrot.slane %v2515, %v2519
    %v2522 = vmul.f32 %v2514, %v2520
    %v2523 = vadd.f32 %v2492, %v2522
    %v2524 = vld [vmem:[#allocation3 + $0xda] sm:$0x1]
    %v2525 = vlaneseq
    %v2526 = vshrl.u32 %v2525, 7
    %v2527 = vsub.s32 0, %v2526
    %v2528 = vrot.slane %v2524, %v2527
    %v2529 = vmul.f32 %v60, %v2528
    %v2530 = vld [vmem:[#allocation3 + $0xdb] sm:$0x1]
    %v2531 = vlaneseq
    %v2532 = vshrl.u32 %v2531, 7
    %v2533 = vsub.s32 0, %v2532
    %v2534 = vrot.slane %v2530, %v2533
    %v2535 = vmul.f32 %v64, %v2534
    %v2536 = vadd.f32 %v2529, %v2535
    %v2537 = vld [vmem:[#allocation5 + $0x6d] sm:$0x1]
    %v2539 = vlaneseq
    %v2540 = vshrl.u32 %v2539, 7
    %v2541 = vsub.s32 0, %v2540
    %v2542 = vrot.slane %v2537, %v2541
    %v2544 = vadd.f32 %v2536, %v2542
    %v2545 = vmax.f32 %v2544, 0.0
    %v2546 = vld [vmem:[#allocation7 + $0x6d] sm:$0x1]
    %v2548 = vlaneseq
    %v2549 = vshrl.u32 %v2548, 7
    %v2550 = vsub.s32 0, %v2549
    %v2551 = vrot.slane %v2546, %v2550
    %v2553 = vmul.f32 %v2545, %v2551
    %v2554 = vadd.f32 %v2523, %v2553
    %v2555 = vadd.f32 %v2554, %v562
    %v2556 = vtanh.pop %v2555
    %2557 = vst [vmem:[%s5 + $0x8] sm:$0x3] %v2556
    %v2558 = vld [vmem:[#allocation3 + $0xa] sm:$0x1]
    %v2559 = vlaneseq
    %v2560 = vshrl.u32 %v2559, 7
    %v2561 = vsub.s32 0, %v2560
    %v2562 = vrot.slane %v2558, %v2561
    %v2563 = vmul.f32 %v60, %v2562
    %v2564 = vld [vmem:[#allocation3 + $0xb] sm:$0x1]
    %v2565 = vlaneseq
    %v2566 = vshrl.u32 %v2565, 7
    %v2567 = vsub.s32 0, %v2566
    %v2568 = vrot.slane %v2564, %v2567
    %v2569 = vmul.f32 %v64, %v2568
    %v2570 = vadd.f32 %v2563, %v2569
    %v2571 = vld [vmem:[#allocation5 + $0x5] sm:$0x1]
    %v2573 = vlaneseq
    %v2574 = vshrl.u32 %v2573, 7
    %v2575 = vsub.s32 0, %v2574
    %v2576 = vrot.slane %v2571, %v2575
    %v2578 = vadd.f32 %v2570, %v2576
    %v2579 = vmax.f32 %v2578, 0.0
    %v2580 = vld [vmem:[#allocation7 + $0x5] sm:$0x1]
    %v2582 = vlaneseq
    %v2583 = vshrl.u32 %v2582, 7
    %v2584 = vsub.s32 0, %v2583
    %v2585 = vrot.slane %v2580, %v2584
    %v2587 = vmul.f32 %v2579, %v2585
    %v2588 = vld [vmem:[#allocation3 + $0x18] sm:$0x1]
    %v2589 = vlaneseq
    %v2590 = vshrl.u32 %v2589, 7
    %v2591 = vsub.s32 0, %v2590
    %v2592 = vrot.slane %v2588, %v2591
    %v2593 = vmul.f32 %v60, %v2592
    %v2594 = vld [vmem:[#allocation3 + $0x19] sm:$0x1]
    %v2595 = vlaneseq
    %v2596 = vshrl.u32 %v2595, 7
    %v2597 = vsub.s32 0, %v2596
    %v2598 = vrot.slane %v2594, %v2597
    %v2599 = vmul.f32 %v64, %v2598
    %v2600 = vadd.f32 %v2593, %v2599
    %v2601 = vld [vmem:[#allocation5 + $0xc] sm:$0x1]
    %v2603 = vlaneseq
    %v2604 = vshrl.u32 %v2603, 7
    %v2605 = vsub.s32 0, %v2604
    %v2606 = vrot.slane %v2601, %v2605
    %v2608 = vadd.f32 %v2600, %v2606
    %v2609 = vmax.f32 %v2608, 0.0
    %v2610 = vld [vmem:[#allocation7 + $0xc] sm:$0x1]
    %v2612 = vlaneseq
    %v2613 = vshrl.u32 %v2612, 7
    %v2614 = vsub.s32 0, %v2613
    %v2615 = vrot.slane %v2610, %v2614
    %v2617 = vmul.f32 %v2609, %v2615
    %v2618 = vadd.f32 %v2587, %v2617
    %v2619 = vld [vmem:[#allocation3 + $0x26] sm:$0x1]
    %v2620 = vlaneseq
    %v2621 = vshrl.u32 %v2620, 7
    %v2622 = vsub.s32 0, %v2621
    %v2623 = vrot.slane %v2619, %v2622
    %v2624 = vmul.f32 %v60, %v2623
    %v2625 = vld [vmem:[#allocation3 + $0x27] sm:$0x1]
    %v2626 = vlaneseq
    %v2627 = vshrl.u32 %v2626, 7
    %v2628 = vsub.s32 0, %v2627
    %v2629 = vrot.slane %v2625, %v2628
    %v2630 = vmul.f32 %v64, %v2629
    %v2631 = vadd.f32 %v2624, %v2630
    %v2632 = vld [vmem:[#allocation5 + $0x13] sm:$0x1]
    %v2634 = vlaneseq
    %v2635 = vshrl.u32 %v2634, 7
    %v2636 = vsub.s32 0, %v2635
    %v2637 = vrot.slane %v2632, %v2636
    %v2639 = vadd.f32 %v2631, %v2637
    %v2640 = vmax.f32 %v2639, 0.0
    %v2641 = vld [vmem:[#allocation7 + $0x13] sm:$0x1]
    %v2643 = vlaneseq
    %v2644 = vshrl.u32 %v2643, 7
    %v2645 = vsub.s32 0, %v2644
    %v2646 = vrot.slane %v2641, %v2645
    %v2648 = vmul.f32 %v2640, %v2646
    %v2649 = vadd.f32 %v2618, %v2648
    %v2650 = vld [vmem:[#allocation3 + $0x34] sm:$0x1]
    %v2651 = vlaneseq
    %v2652 = vshrl.u32 %v2651, 7
    %v2653 = vsub.s32 0, %v2652
    %v2654 = vrot.slane %v2650, %v2653
    %v2655 = vmul.f32 %v60, %v2654
    %v2656 = vld [vmem:[#allocation3 + $0x35] sm:$0x1]
    %v2657 = vlaneseq
    %v2658 = vshrl.u32 %v2657, 7
    %v2659 = vsub.s32 0, %v2658
    %v2660 = vrot.slane %v2656, %v2659
    %v2661 = vmul.f32 %v64, %v2660
    %v2662 = vadd.f32 %v2655, %v2661
    %v2663 = vld [vmem:[#allocation5 + $0x1a] sm:$0x1]
    %v2665 = vlaneseq
    %v2666 = vshrl.u32 %v2665, 7
    %v2667 = vsub.s32 0, %v2666
    %v2668 = vrot.slane %v2663, %v2667
    %v2670 = vadd.f32 %v2662, %v2668
    %v2671 = vmax.f32 %v2670, 0.0
    %v2672 = vld [vmem:[#allocation7 + $0x1a] sm:$0x1]
    %v2674 = vlaneseq
    %v2675 = vshrl.u32 %v2674, 7
    %v2676 = vsub.s32 0, %v2675
    %v2677 = vrot.slane %v2672, %v2676
    %v2679 = vmul.f32 %v2671, %v2677
    %v2680 = vadd.f32 %v2649, %v2679
    %v2681 = vld [vmem:[#allocation3 + $0x42] sm:$0x1]
    %v2682 = vlaneseq
    %v2683 = vshrl.u32 %v2682, 7
    %v2684 = vsub.s32 0, %v2683
    %v2685 = vrot.slane %v2681, %v2684
    %v2686 = vmul.f32 %v60, %v2685
    %v2687 = vld [vmem:[#allocation3 + $0x43] sm:$0x1]
    %v2688 = vlaneseq
    %v2689 = vshrl.u32 %v2688, 7
    %v2690 = vsub.s32 0, %v2689
    %v2691 = vrot.slane %v2687, %v2690
    %v2692 = vmul.f32 %v64, %v2691
    %v2693 = vadd.f32 %v2686, %v2692
    %v2694 = vld [vmem:[#allocation5 + $0x21] sm:$0x1]
    %v2696 = vlaneseq
    %v2697 = vshrl.u32 %v2696, 7
    %v2698 = vsub.s32 0, %v2697
    %v2699 = vrot.slane %v2694, %v2698
    %v2701 = vadd.f32 %v2693, %v2699
    %v2702 = vmax.f32 %v2701, 0.0
    %v2703 = vld [vmem:[#allocation7 + $0x21] sm:$0x1]
    %v2705 = vlaneseq
    %v2706 = vshrl.u32 %v2705, 7
    %v2707 = vsub.s32 0, %v2706
    %v2708 = vrot.slane %v2703, %v2707
    %v2710 = vmul.f32 %v2702, %v2708
    %v2711 = vadd.f32 %v2680, %v2710
    %v2712 = vld [vmem:[#allocation3 + $0x50] sm:$0x1]
    %v2713 = vlaneseq
    %v2714 = vshrl.u32 %v2713, 7
    %v2715 = vsub.s32 0, %v2714
    %v2716 = vrot.slane %v2712, %v2715
    %v2717 = vmul.f32 %v60, %v2716
    %v2718 = vld [vmem:[#allocation3 + $0x51] sm:$0x1]
    %v2719 = vlaneseq
    %v2720 = vshrl.u32 %v2719, 7
    %v2721 = vsub.s32 0, %v2720
    %v2722 = vrot.slane %v2718, %v2721
    %v2723 = vmul.f32 %v64, %v2722
    %v2724 = vadd.f32 %v2717, %v2723
    %v2725 = vld [vmem:[#allocation5 + $0x28] sm:$0x1]
    %v2727 = vlaneseq
    %v2728 = vshrl.u32 %v2727, 7
    %v2729 = vsub.s32 0, %v2728
    %v2730 = vrot.slane %v2725, %v2729
    %v2732 = vadd.f32 %v2724, %v2730
    %v2733 = vmax.f32 %v2732, 0.0
    %v2734 = vld [vmem:[#allocation7 + $0x28] sm:$0x1]
    %v2736 = vlaneseq
    %v2737 = vshrl.u32 %v2736, 7
    %v2738 = vsub.s32 0, %v2737
    %v2739 = vrot.slane %v2734, %v2738
    %v2741 = vmul.f32 %v2733, %v2739
    %v2742 = vadd.f32 %v2711, %v2741
    %v2743 = vld [vmem:[#allocation3 + $0x5e] sm:$0x1]
    %v2744 = vlaneseq
    %v2745 = vshrl.u32 %v2744, 7
    %v2746 = vsub.s32 0, %v2745
    %v2747 = vrot.slane %v2743, %v2746
    %v2748 = vmul.f32 %v60, %v2747
    %v2749 = vld [vmem:[#allocation3 + $0x5f] sm:$0x1]
    %v2750 = vlaneseq
    %v2751 = vshrl.u32 %v2750, 7
    %v2752 = vsub.s32 0, %v2751
    %v2753 = vrot.slane %v2749, %v2752
    %v2754 = vmul.f32 %v64, %v2753
    %v2755 = vadd.f32 %v2748, %v2754
    %v2756 = vld [vmem:[#allocation5 + $0x2f] sm:$0x1]
    %v2758 = vlaneseq
    %v2759 = vshrl.u32 %v2758, 7
    %v2760 = vsub.s32 0, %v2759
    %v2761 = vrot.slane %v2756, %v2760
    %v2763 = vadd.f32 %v2755, %v2761
    %v2764 = vmax.f32 %v2763, 0.0
    %v2765 = vld [vmem:[#allocation7 + $0x2f] sm:$0x1]
    %v2767 = vlaneseq
    %v2768 = vshrl.u32 %v2767, 7
    %v2769 = vsub.s32 0, %v2768
    %v2770 = vrot.slane %v2765, %v2769
    %v2772 = vmul.f32 %v2764, %v2770
    %v2773 = vadd.f32 %v2742, %v2772
    %v2774 = vld [vmem:[#allocation3 + $0x6c] sm:$0x1]
    %v2775 = vlaneseq
    %v2776 = vshrl.u32 %v2775, 7
    %v2777 = vsub.s32 0, %v2776
    %v2778 = vrot.slane %v2774, %v2777
    %v2779 = vmul.f32 %v60, %v2778
    %v2780 = vld [vmem:[#allocation3 + $0x6d] sm:$0x1]
    %v2781 = vlaneseq
    %v2782 = vshrl.u32 %v2781, 7
    %v2783 = vsub.s32 0, %v2782
    %v2784 = vrot.slane %v2780, %v2783
    %v2785 = vmul.f32 %v64, %v2784
    %v2786 = vadd.f32 %v2779, %v2785
    %v2787 = vld [vmem:[#allocation5 + $0x36] sm:$0x1]
    %v2789 = vlaneseq
    %v2790 = vshrl.u32 %v2789, 7
    %v2791 = vsub.s32 0, %v2790
    %v2792 = vrot.slane %v2787, %v2791
    %v2794 = vadd.f32 %v2786, %v2792
    %v2795 = vmax.f32 %v2794, 0.0
    %v2796 = vld [vmem:[#allocation7 + $0x36] sm:$0x1]
    %v2798 = vlaneseq
    %v2799 = vshrl.u32 %v2798, 7
    %v2800 = vsub.s32 0, %v2799
    %v2801 = vrot.slane %v2796, %v2800
    %v2803 = vmul.f32 %v2795, %v2801
    %v2804 = vadd.f32 %v2773, %v2803
    %v2805 = vld [vmem:[#allocation3 + $0x7a] sm:$0x1]
    %v2806 = vlaneseq
    %v2807 = vshrl.u32 %v2806, 7
    %v2808 = vsub.s32 0, %v2807
    %v2809 = vrot.slane %v2805, %v2808
    %v2810 = vmul.f32 %v60, %v2809
    %v2811 = vld [vmem:[#allocation3 + $0x7b] sm:$0x1]
    %v2812 = vlaneseq
    %v2813 = vshrl.u32 %v2812, 7
    %v2814 = vsub.s32 0, %v2813
    %v2815 = vrot.slane %v2811, %v2814
    %v2816 = vmul.f32 %v64, %v2815
    %v2817 = vadd.f32 %v2810, %v2816
    %v2818 = vld [vmem:[#allocation5 + $0x3d] sm:$0x1]
    %v2820 = vlaneseq
    %v2821 = vshrl.u32 %v2820, 7
    %v2822 = vsub.s32 0, %v2821
    %v2823 = vrot.slane %v2818, %v2822
    %v2825 = vadd.f32 %v2817, %v2823
    %v2826 = vmax.f32 %v2825, 0.0
    %v2827 = vld [vmem:[#allocation7 + $0x3d] sm:$0x1]
    %v2829 = vlaneseq
    %v2830 = vshrl.u32 %v2829, 7
    %v2831 = vsub.s32 0, %v2830
    %v2832 = vrot.slane %v2827, %v2831
    %v2834 = vmul.f32 %v2826, %v2832
    %v2835 = vadd.f32 %v2804, %v2834
    %v2836 = vld [vmem:[#allocation3 + $0x88] sm:$0x1]
    %v2837 = vlaneseq
    %v2838 = vshrl.u32 %v2837, 7
    %v2839 = vsub.s32 0, %v2838
    %v2840 = vrot.slane %v2836, %v2839
    %v2841 = vmul.f32 %v60, %v2840
    %v2842 = vld [vmem:[#allocation3 + $0x89] sm:$0x1]
    %v2843 = vlaneseq
    %v2844 = vshrl.u32 %v2843, 7
    %v2845 = vsub.s32 0, %v2844
    %v2846 = vrot.slane %v2842, %v2845
    %v2847 = vmul.f32 %v64, %v2846
    %v2848 = vadd.f32 %v2841, %v2847
    %v2849 = vld [vmem:[#allocation5 + $0x44] sm:$0x1]
    %v2851 = vlaneseq
    %v2852 = vshrl.u32 %v2851, 7
    %v2853 = vsub.s32 0, %v2852
    %v2854 = vrot.slane %v2849, %v2853
    %v2856 = vadd.f32 %v2848, %v2854
    %v2857 = vmax.f32 %v2856, 0.0
    %v2858 = vld [vmem:[#allocation7 + $0x44] sm:$0x1]
    %v2860 = vlaneseq
    %v2861 = vshrl.u32 %v2860, 7
    %v2862 = vsub.s32 0, %v2861
    %v2863 = vrot.slane %v2858, %v2862
    %v2865 = vmul.f32 %v2857, %v2863
    %v2866 = vadd.f32 %v2835, %v2865
    %v2867 = vld [vmem:[#allocation3 + $0x96] sm:$0x1]
    %v2868 = vlaneseq
    %v2869 = vshrl.u32 %v2868, 7
    %v2870 = vsub.s32 0, %v2869
    %v2871 = vrot.slane %v2867, %v2870
    %v2872 = vmul.f32 %v60, %v2871
    %v2873 = vld [vmem:[#allocation3 + $0x97] sm:$0x1]
    %v2874 = vlaneseq
    %v2875 = vshrl.u32 %v2874, 7
    %v2876 = vsub.s32 0, %v2875
    %v2877 = vrot.slane %v2873, %v2876
    %v2878 = vmul.f32 %v64, %v2877
    %v2879 = vadd.f32 %v2872, %v2878
    %v2880 = vld [vmem:[#allocation5 + $0x4b] sm:$0x1]
    %v2882 = vlaneseq
    %v2883 = vshrl.u32 %v2882, 7
    %v2884 = vsub.s32 0, %v2883
    %v2885 = vrot.slane %v2880, %v2884
    %v2887 = vadd.f32 %v2879, %v2885
    %v2888 = vmax.f32 %v2887, 0.0
    %v2889 = vld [vmem:[#allocation7 + $0x4b] sm:$0x1]
    %v2891 = vlaneseq
    %v2892 = vshrl.u32 %v2891, 7
    %v2893 = vsub.s32 0, %v2892
    %v2894 = vrot.slane %v2889, %v2893
    %v2896 = vmul.f32 %v2888, %v2894
    %v2897 = vadd.f32 %v2866, %v2896
    %v2898 = vld [vmem:[#allocation3 + $0xa4] sm:$0x1]
    %v2899 = vlaneseq
    %v2900 = vshrl.u32 %v2899, 7
    %v2901 = vsub.s32 0, %v2900
    %v2902 = vrot.slane %v2898, %v2901
    %v2903 = vmul.f32 %v60, %v2902
    %v2904 = vld [vmem:[#allocation3 + $0xa5] sm:$0x1]
    %v2905 = vlaneseq
    %v2906 = vshrl.u32 %v2905, 7
    %v2907 = vsub.s32 0, %v2906
    %v2908 = vrot.slane %v2904, %v2907
    %v2909 = vmul.f32 %v64, %v2908
    %v2910 = vadd.f32 %v2903, %v2909
    %v2911 = vld [vmem:[#allocation5 + $0x52] sm:$0x1]
    %v2913 = vlaneseq
    %v2914 = vshrl.u32 %v2913, 7
    %v2915 = vsub.s32 0, %v2914
    %v2916 = vrot.slane %v2911, %v2915
    %v2918 = vadd.f32 %v2910, %v2916
    %v2919 = vmax.f32 %v2918, 0.0
    %v2920 = vld [vmem:[#allocation7 + $0x52] sm:$0x1]
    %v2922 = vlaneseq
    %v2923 = vshrl.u32 %v2922, 7
    %v2924 = vsub.s32 0, %v2923
    %v2925 = vrot.slane %v2920, %v2924
    %v2927 = vmul.f32 %v2919, %v2925
    %v2928 = vadd.f32 %v2897, %v2927
    %v2929 = vld [vmem:[#allocation3 + $0xb2] sm:$0x1]
    %v2930 = vlaneseq
    %v2931 = vshrl.u32 %v2930, 7
    %v2932 = vsub.s32 0, %v2931
    %v2933 = vrot.slane %v2929, %v2932
    %v2934 = vmul.f32 %v60, %v2933
    %v2935 = vld [vmem:[#allocation3 + $0xb3] sm:$0x1]
    %v2936 = vlaneseq
    %v2937 = vshrl.u32 %v2936, 7
    %v2938 = vsub.s32 0, %v2937
    %v2939 = vrot.slane %v2935, %v2938
    %v2940 = vmul.f32 %v64, %v2939
    %v2941 = vadd.f32 %v2934, %v2940
    %v2942 = vld [vmem:[#allocation5 + $0x59] sm:$0x1]
    %v2944 = vlaneseq
    %v2945 = vshrl.u32 %v2944, 7
    %v2946 = vsub.s32 0, %v2945
    %v2947 = vrot.slane %v2942, %v2946
    %v2949 = vadd.f32 %v2941, %v2947
    %v2950 = vmax.f32 %v2949, 0.0
    %v2951 = vld [vmem:[#allocation7 + $0x59] sm:$0x1]
    %v2953 = vlaneseq
    %v2954 = vshrl.u32 %v2953, 7
    %v2955 = vsub.s32 0, %v2954
    %v2956 = vrot.slane %v2951, %v2955
    %v2958 = vmul.f32 %v2950, %v2956
    %v2959 = vadd.f32 %v2928, %v2958
    %v2960 = vld [vmem:[#allocation3 + $0xc0] sm:$0x1]
    %v2961 = vlaneseq
    %v2962 = vshrl.u32 %v2961, 7
    %v2963 = vsub.s32 0, %v2962
    %v2964 = vrot.slane %v2960, %v2963
    %v2965 = vmul.f32 %v60, %v2964
    %v2966 = vld [vmem:[#allocation3 + $0xc1] sm:$0x1]
    %v2967 = vlaneseq
    %v2968 = vshrl.u32 %v2967, 7
    %v2969 = vsub.s32 0, %v2968
    %v2970 = vrot.slane %v2966, %v2969
    %v2971 = vmul.f32 %v64, %v2970
    %v2972 = vadd.f32 %v2965, %v2971
    %v2973 = vld [vmem:[#allocation5 + $0x60] sm:$0x1]
    %v2975 = vlaneseq
    %v2976 = vshrl.u32 %v2975, 7
    %v2977 = vsub.s32 0, %v2976
    %v2978 = vrot.slane %v2973, %v2977
    %v2980 = vadd.f32 %v2972, %v2978
    %v2981 = vmax.f32 %v2980, 0.0
    %v2982 = vld [vmem:[#allocation7 + $0x60] sm:$0x1]
    %v2984 = vlaneseq
    %v2985 = vshrl.u32 %v2984, 7
    %v2986 = vsub.s32 0, %v2985
    %v2987 = vrot.slane %v2982, %v2986
    %v2989 = vmul.f32 %v2981, %v2987
    %v2990 = vadd.f32 %v2959, %v2989
    %v2991 = vld [vmem:[#allocation3 + $0xce] sm:$0x1]
    %v2992 = vlaneseq
    %v2993 = vshrl.u32 %v2992, 7
    %v2994 = vsub.s32 0, %v2993
    %v2995 = vrot.slane %v2991, %v2994
    %v2996 = vmul.f32 %v60, %v2995
    %v2997 = vld [vmem:[#allocation3 + $0xcf] sm:$0x1]
    %v2998 = vlaneseq
    %v2999 = vshrl.u32 %v2998, 7
    %v3000 = vsub.s32 0, %v2999
    %v3001 = vrot.slane %v2997, %v3000
    %v3002 = vmul.f32 %v64, %v3001
    %v3003 = vadd.f32 %v2996, %v3002
    %v3004 = vld [vmem:[#allocation5 + $0x67] sm:$0x1]
    %v3006 = vlaneseq
    %v3007 = vshrl.u32 %v3006, 7
    %v3008 = vsub.s32 0, %v3007
    %v3009 = vrot.slane %v3004, %v3008
    %v3011 = vadd.f32 %v3003, %v3009
    %v3012 = vmax.f32 %v3011, 0.0
    %v3013 = vld [vmem:[#allocation7 + $0x67] sm:$0x1]
    %v3015 = vlaneseq
    %v3016 = vshrl.u32 %v3015, 7
    %v3017 = vsub.s32 0, %v3016
    %v3018 = vrot.slane %v3013, %v3017
    %v3020 = vmul.f32 %v3012, %v3018
    %v3021 = vadd.f32 %v2990, %v3020
    %v3022 = vld [vmem:[#allocation3 + $0xdc] sm:$0x1]
    %v3023 = vlaneseq
    %v3024 = vshrl.u32 %v3023, 7
    %v3025 = vsub.s32 0, %v3024
    %v3026 = vrot.slane %v3022, %v3025
    %v3027 = vmul.f32 %v60, %v3026
    %v3028 = vld [vmem:[#allocation3 + $0xdd] sm:$0x1]
    %v3029 = vlaneseq
    %v3030 = vshrl.u32 %v3029, 7
    %v3031 = vsub.s32 0, %v3030
    %v3032 = vrot.slane %v3028, %v3031
    %v3033 = vmul.f32 %v64, %v3032
    %v3034 = vadd.f32 %v3027, %v3033
    %v3035 = vld [vmem:[#allocation5 + $0x6e] sm:$0x1]
    %v3037 = vlaneseq
    %v3038 = vshrl.u32 %v3037, 7
    %v3039 = vsub.s32 0, %v3038
    %v3040 = vrot.slane %v3035, %v3039
    %v3042 = vadd.f32 %v3034, %v3040
    %v3043 = vmax.f32 %v3042, 0.0
    %v3044 = vld [vmem:[#allocation7 + $0x6e] sm:$0x1]
    %v3046 = vlaneseq
    %v3047 = vshrl.u32 %v3046, 7
    %v3048 = vsub.s32 0, %v3047
    %v3049 = vrot.slane %v3044, %v3048
    %v3051 = vmul.f32 %v3043, %v3049
    %v3052 = vadd.f32 %v3021, %v3051
    %v3053 = vadd.f32 %v3052, %v562
    %v3054 = vtanh.pop %v3053
    %3055 = vst [vmem:[%s5 + $0xa] sm:$0x3] %v3054
    %v3056 = vld [vmem:[#allocation3 + $0xc] sm:$0x1]
    %v3057 = vlaneseq
    %v3058 = vshrl.u32 %v3057, 7
    %v3059 = vsub.s32 0, %v3058
    %v3060 = vrot.slane %v3056, %v3059
    %v3061 = vmul.f32 %v60, %v3060
    %v3062 = vld [vmem:[#allocation3 + $0xd] sm:$0x1]
    %v3063 = vlaneseq
    %v3064 = vshrl.u32 %v3063, 7
    %v3065 = vsub.s32 0, %v3064
    %v3066 = vrot.slane %v3062, %v3065
    %v3067 = vmul.f32 %v64, %v3066
    %v3068 = vadd.f32 %v3061, %v3067
    %v3069 = vld [vmem:[#allocation5 + $0x6] sm:$0x1]
    %v3071 = vlaneseq
    %v3072 = vshrl.u32 %v3071, 7
    %v3073 = vsub.s32 0, %v3072
    %v3074 = vrot.slane %v3069, %v3073
    %v3076 = vadd.f32 %v3068, %v3074
    %v3077 = vmax.f32 %v3076, 0.0
    %v3078 = vld [vmem:[#allocation7 + $0x6] sm:$0x1]
    %v3080 = vlaneseq
    %v3081 = vshrl.u32 %v3080, 7
    %v3082 = vsub.s32 0, %v3081
    %v3083 = vrot.slane %v3078, %v3082
    %v3085 = vmul.f32 %v3077, %v3083
    %v3086 = vld [vmem:[#allocation3 + $0x1a] sm:$0x1]
    %v3087 = vlaneseq
    %v3088 = vshrl.u32 %v3087, 7
    %v3089 = vsub.s32 0, %v3088
    %v3090 = vrot.slane %v3086, %v3089
    %v3091 = vmul.f32 %v60, %v3090
    %v3092 = vld [vmem:[#allocation3 + $0x1b] sm:$0x1]
    %v3093 = vlaneseq
    %v3094 = vshrl.u32 %v3093, 7
    %v3095 = vsub.s32 0, %v3094
    %v3096 = vrot.slane %v3092, %v3095
    %v3097 = vmul.f32 %v64, %v3096
    %v3098 = vadd.f32 %v3091, %v3097
    %v3099 = vld [vmem:[#allocation5 + $0xd] sm:$0x1]
    %v3101 = vlaneseq
    %v3102 = vshrl.u32 %v3101, 7
    %v3103 = vsub.s32 0, %v3102
    %v3104 = vrot.slane %v3099, %v3103
    %v3106 = vadd.f32 %v3098, %v3104
    %v3107 = vmax.f32 %v3106, 0.0
    %v3108 = vld [vmem:[#allocation7 + $0xd] sm:$0x1]
    %v3110 = vlaneseq
    %v3111 = vshrl.u32 %v3110, 7
    %v3112 = vsub.s32 0, %v3111
    %v3113 = vrot.slane %v3108, %v3112
    %v3115 = vmul.f32 %v3107, %v3113
    %v3116 = vadd.f32 %v3085, %v3115
    %v3117 = vld [vmem:[#allocation3 + $0x28] sm:$0x1]
    %v3118 = vlaneseq
    %v3119 = vshrl.u32 %v3118, 7
    %v3120 = vsub.s32 0, %v3119
    %v3121 = vrot.slane %v3117, %v3120
    %v3122 = vmul.f32 %v60, %v3121
    %v3123 = vld [vmem:[#allocation3 + $0x29] sm:$0x1]
    %v3124 = vlaneseq
    %v3125 = vshrl.u32 %v3124, 7
    %v3126 = vsub.s32 0, %v3125
    %v3127 = vrot.slane %v3123, %v3126
    %v3128 = vmul.f32 %v64, %v3127
    %v3129 = vadd.f32 %v3122, %v3128
    %v3130 = vld [vmem:[#allocation5 + $0x14] sm:$0x1]
    %v3132 = vlaneseq
    %v3133 = vshrl.u32 %v3132, 7
    %v3134 = vsub.s32 0, %v3133
    %v3135 = vrot.slane %v3130, %v3134
    %v3137 = vadd.f32 %v3129, %v3135
    %v3138 = vmax.f32 %v3137, 0.0
    %v3139 = vld [vmem:[#allocation7 + $0x14] sm:$0x1]
    %v3141 = vlaneseq
    %v3142 = vshrl.u32 %v3141, 7
    %v3143 = vsub.s32 0, %v3142
    %v3144 = vrot.slane %v3139, %v3143
    %v3146 = vmul.f32 %v3138, %v3144
    %v3147 = vadd.f32 %v3116, %v3146
    %v3148 = vld [vmem:[#allocation3 + $0x36] sm:$0x1]
    %v3149 = vlaneseq
    %v3150 = vshrl.u32 %v3149, 7
    %v3151 = vsub.s32 0, %v3150
    %v3152 = vrot.slane %v3148, %v3151
    %v3153 = vmul.f32 %v60, %v3152
    %v3154 = vld [vmem:[#allocation3 + $0x37] sm:$0x1]
    %v3155 = vlaneseq
    %v3156 = vshrl.u32 %v3155, 7
    %v3157 = vsub.s32 0, %v3156
    %v3158 = vrot.slane %v3154, %v3157
    %v3159 = vmul.f32 %v64, %v3158
    %v3160 = vadd.f32 %v3153, %v3159
    %v3161 = vld [vmem:[#allocation5 + $0x1b] sm:$0x1]
    %v3163 = vlaneseq
    %v3164 = vshrl.u32 %v3163, 7
    %v3165 = vsub.s32 0, %v3164
    %v3166 = vrot.slane %v3161, %v3165
    %v3168 = vadd.f32 %v3160, %v3166
    %v3169 = vmax.f32 %v3168, 0.0
    %v3170 = vld [vmem:[#allocation7 + $0x1b] sm:$0x1]
    %v3172 = vlaneseq
    %v3173 = vshrl.u32 %v3172, 7
    %v3174 = vsub.s32 0, %v3173
    %v3175 = vrot.slane %v3170, %v3174
    %v3177 = vmul.f32 %v3169, %v3175
    %v3178 = vadd.f32 %v3147, %v3177
    %v3179 = vld [vmem:[#allocation3 + $0x44] sm:$0x1]
    %v3180 = vlaneseq
    %v3181 = vshrl.u32 %v3180, 7
    %v3182 = vsub.s32 0, %v3181
    %v3183 = vrot.slane %v3179, %v3182
    %v3184 = vmul.f32 %v60, %v3183
    %v3185 = vld [vmem:[#allocation3 + $0x45] sm:$0x1]
    %v3186 = vlaneseq
    %v3187 = vshrl.u32 %v3186, 7
    %v3188 = vsub.s32 0, %v3187
    %v3189 = vrot.slane %v3185, %v3188
    %v3190 = vmul.f32 %v64, %v3189
    %v3191 = vadd.f32 %v3184, %v3190
    %v3192 = vld [vmem:[#allocation5 + $0x22] sm:$0x1]
    %v3194 = vlaneseq
    %v3195 = vshrl.u32 %v3194, 7
    %v3196 = vsub.s32 0, %v3195
    %v3197 = vrot.slane %v3192, %v3196
    %v3199 = vadd.f32 %v3191, %v3197
    %v3200 = vmax.f32 %v3199, 0.0
    %v3201 = vld [vmem:[#allocation7 + $0x22] sm:$0x1]
    %v3203 = vlaneseq
    %v3204 = vshrl.u32 %v3203, 7
    %v3205 = vsub.s32 0, %v3204
    %v3206 = vrot.slane %v3201, %v3205
    %v3208 = vmul.f32 %v3200, %v3206
    %v3209 = vadd.f32 %v3178, %v3208
    %v3210 = vld [vmem:[#allocation3 + $0x52] sm:$0x1]
    %v3211 = vlaneseq
    %v3212 = vshrl.u32 %v3211, 7
    %v3213 = vsub.s32 0, %v3212
    %v3214 = vrot.slane %v3210, %v3213
    %v3215 = vmul.f32 %v60, %v3214
    %v3216 = vld [vmem:[#allocation3 + $0x53] sm:$0x1]
    %v3217 = vlaneseq
    %v3218 = vshrl.u32 %v3217, 7
    %v3219 = vsub.s32 0, %v3218
    %v3220 = vrot.slane %v3216, %v3219
    %v3221 = vmul.f32 %v64, %v3220
    %v3222 = vadd.f32 %v3215, %v3221
    %v3223 = vld [vmem:[#allocation5 + $0x29] sm:$0x1]
    %v3225 = vlaneseq
    %v3226 = vshrl.u32 %v3225, 7
    %v3227 = vsub.s32 0, %v3226
    %v3228 = vrot.slane %v3223, %v3227
    %v3230 = vadd.f32 %v3222, %v3228
    %v3231 = vmax.f32 %v3230, 0.0
    %v3232 = vld [vmem:[#allocation7 + $0x29] sm:$0x1]
    %v3234 = vlaneseq
    %v3235 = vshrl.u32 %v3234, 7
    %v3236 = vsub.s32 0, %v3235
    %v3237 = vrot.slane %v3232, %v3236
    %v3239 = vmul.f32 %v3231, %v3237
    %v3240 = vadd.f32 %v3209, %v3239
    %v3241 = vld [vmem:[#allocation3 + $0x60] sm:$0x1]
    %v3242 = vlaneseq
    %v3243 = vshrl.u32 %v3242, 7
    %v3244 = vsub.s32 0, %v3243
    %v3245 = vrot.slane %v3241, %v3244
    %v3246 = vmul.f32 %v60, %v3245
    %v3247 = vld [vmem:[#allocation3 + $0x61] sm:$0x1]
    %v3248 = vlaneseq
    %v3249 = vshrl.u32 %v3248, 7
    %v3250 = vsub.s32 0, %v3249
    %v3251 = vrot.slane %v3247, %v3250
    %v3252 = vmul.f32 %v64, %v3251
    %v3253 = vadd.f32 %v3246, %v3252
    %v3254 = vld [vmem:[#allocation5 + $0x30] sm:$0x1]
    %v3256 = vlaneseq
    %v3257 = vshrl.u32 %v3256, 7
    %v3258 = vsub.s32 0, %v3257
    %v3259 = vrot.slane %v3254, %v3258
    %v3261 = vadd.f32 %v3253, %v3259
    %v3262 = vmax.f32 %v3261, 0.0
    %v3263 = vld [vmem:[#allocation7 + $0x30] sm:$0x1]
    %v3265 = vlaneseq
    %v3266 = vshrl.u32 %v3265, 7
    %v3267 = vsub.s32 0, %v3266
    %v3268 = vrot.slane %v3263, %v3267
    %v3270 = vmul.f32 %v3262, %v3268
    %v3271 = vadd.f32 %v3240, %v3270
    %v3272 = vld [vmem:[#allocation3 + $0x6e] sm:$0x1]
    %v3273 = vlaneseq
    %v3274 = vshrl.u32 %v3273, 7
    %v3275 = vsub.s32 0, %v3274
    %v3276 = vrot.slane %v3272, %v3275
    %v3277 = vmul.f32 %v60, %v3276
    %v3278 = vld [vmem:[#allocation3 + $0x6f] sm:$0x1]
    %v3279 = vlaneseq
    %v3280 = vshrl.u32 %v3279, 7
    %v3281 = vsub.s32 0, %v3280
    %v3282 = vrot.slane %v3278, %v3281
    %v3283 = vmul.f32 %v64, %v3282
    %v3284 = vadd.f32 %v3277, %v3283
    %v3285 = vld [vmem:[#allocation5 + $0x37] sm:$0x1]
    %v3287 = vlaneseq
    %v3288 = vshrl.u32 %v3287, 7
    %v3289 = vsub.s32 0, %v3288
    %v3290 = vrot.slane %v3285, %v3289
    %v3292 = vadd.f32 %v3284, %v3290
    %v3293 = vmax.f32 %v3292, 0.0
    %v3294 = vld [vmem:[#allocation7 + $0x37] sm:$0x1]
    %v3296 = vlaneseq
    %v3297 = vshrl.u32 %v3296, 7
    %v3298 = vsub.s32 0, %v3297
    %v3299 = vrot.slane %v3294, %v3298
    %v3301 = vmul.f32 %v3293, %v3299
    %v3302 = vadd.f32 %v3271, %v3301
    %v3303 = vld [vmem:[#allocation3 + $0x7c] sm:$0x1]
    %v3304 = vlaneseq
    %v3305 = vshrl.u32 %v3304, 7
    %v3306 = vsub.s32 0, %v3305
    %v3307 = vrot.slane %v3303, %v3306
    %v3308 = vmul.f32 %v60, %v3307
    %v3309 = vld [vmem:[#allocation3 + $0x7d] sm:$0x1]
    %v3310 = vlaneseq
    %v3311 = vshrl.u32 %v3310, 7
    %v3312 = vsub.s32 0, %v3311
    %v3313 = vrot.slane %v3309, %v3312
    %v3314 = vmul.f32 %v64, %v3313
    %v3315 = vadd.f32 %v3308, %v3314
    %v3316 = vld [vmem:[#allocation5 + $0x3e] sm:$0x1]
    %v3318 = vlaneseq
    %v3319 = vshrl.u32 %v3318, 7
    %v3320 = vsub.s32 0, %v3319
    %v3321 = vrot.slane %v3316, %v3320
    %v3323 = vadd.f32 %v3315, %v3321
    %v3324 = vmax.f32 %v3323, 0.0
    %v3325 = vld [vmem:[#allocation7 + $0x3e] sm:$0x1]
    %v3327 = vlaneseq
    %v3328 = vshrl.u32 %v3327, 7
    %v3329 = vsub.s32 0, %v3328
    %v3330 = vrot.slane %v3325, %v3329
    %v3332 = vmul.f32 %v3324, %v3330
    %v3333 = vadd.f32 %v3302, %v3332
    %v3334 = vld [vmem:[#allocation3 + $0x8a] sm:$0x1]
    %v3335 = vlaneseq
    %v3336 = vshrl.u32 %v3335, 7
    %v3337 = vsub.s32 0, %v3336
    %v3338 = vrot.slane %v3334, %v3337
    %v3339 = vmul.f32 %v60, %v3338
    %v3340 = vld [vmem:[#allocation3 + $0x8b] sm:$0x1]
    %v3341 = vlaneseq
    %v3342 = vshrl.u32 %v3341, 7
    %v3343 = vsub.s32 0, %v3342
    %v3344 = vrot.slane %v3340, %v3343
    %v3345 = vmul.f32 %v64, %v3344
    %v3346 = vadd.f32 %v3339, %v3345
    %v3347 = vld [vmem:[#allocation5 + $0x45] sm:$0x1]
    %v3349 = vlaneseq
    %v3350 = vshrl.u32 %v3349, 7
    %v3351 = vsub.s32 0, %v3350
    %v3352 = vrot.slane %v3347, %v3351
    %v3354 = vadd.f32 %v3346, %v3352
    %v3355 = vmax.f32 %v3354, 0.0
    %v3356 = vld [vmem:[#allocation7 + $0x45] sm:$0x1]
    %v3358 = vlaneseq
    %v3359 = vshrl.u32 %v3358, 7
    %v3360 = vsub.s32 0, %v3359
    %v3361 = vrot.slane %v3356, %v3360
    %v3363 = vmul.f32 %v3355, %v3361
    %v3364 = vadd.f32 %v3333, %v3363
    %v3365 = vld [vmem:[#allocation3 + $0x98] sm:$0x1]
    %v3366 = vlaneseq
    %v3367 = vshrl.u32 %v3366, 7
    %v3368 = vsub.s32 0, %v3367
    %v3369 = vrot.slane %v3365, %v3368
    %v3370 = vmul.f32 %v60, %v3369
    %v3371 = vld [vmem:[#allocation3 + $0x99] sm:$0x1]
    %v3372 = vlaneseq
    %v3373 = vshrl.u32 %v3372, 7
    %v3374 = vsub.s32 0, %v3373
    %v3375 = vrot.slane %v3371, %v3374
    %v3376 = vmul.f32 %v64, %v3375
    %v3377 = vadd.f32 %v3370, %v3376
    %v3378 = vld [vmem:[#allocation5 + $0x4c] sm:$0x1]
    %v3380 = vlaneseq
    %v3381 = vshrl.u32 %v3380, 7
    %v3382 = vsub.s32 0, %v3381
    %v3383 = vrot.slane %v3378, %v3382
    %v3385 = vadd.f32 %v3377, %v3383
    %v3386 = vmax.f32 %v3385, 0.0
    %v3387 = vld [vmem:[#allocation7 + $0x4c] sm:$0x1]
    %v3389 = vlaneseq
    %v3390 = vshrl.u32 %v3389, 7
    %v3391 = vsub.s32 0, %v3390
    %v3392 = vrot.slane %v3387, %v3391
    %v3394 = vmul.f32 %v3386, %v3392
    %v3395 = vadd.f32 %v3364, %v3394
    %v3396 = vld [vmem:[#allocation3 + $0xa6] sm:$0x1]
    %v3397 = vlaneseq
    %v3398 = vshrl.u32 %v3397, 7
    %v3399 = vsub.s32 0, %v3398
    %v3400 = vrot.slane %v3396, %v3399
    %v3401 = vmul.f32 %v60, %v3400
    %v3402 = vld [vmem:[#allocation3 + $0xa7] sm:$0x1]
    %v3403 = vlaneseq
    %v3404 = vshrl.u32 %v3403, 7
    %v3405 = vsub.s32 0, %v3404
    %v3406 = vrot.slane %v3402, %v3405
    %v3407 = vmul.f32 %v64, %v3406
    %v3408 = vadd.f32 %v3401, %v3407
    %v3409 = vld [vmem:[#allocation5 + $0x53] sm:$0x1]
    %v3411 = vlaneseq
    %v3412 = vshrl.u32 %v3411, 7
    %v3413 = vsub.s32 0, %v3412
    %v3414 = vrot.slane %v3409, %v3413
    %v3416 = vadd.f32 %v3408, %v3414
    %v3417 = vmax.f32 %v3416, 0.0
    %v3418 = vld [vmem:[#allocation7 + $0x53] sm:$0x1]
    %v3420 = vlaneseq
    %v3421 = vshrl.u32 %v3420, 7
    %v3422 = vsub.s32 0, %v3421
    %v3423 = vrot.slane %v3418, %v3422
    %v3425 = vmul.f32 %v3417, %v3423
    %v3426 = vadd.f32 %v3395, %v3425
    %v3427 = vld [vmem:[#allocation3 + $0xb4] sm:$0x1]
    %v3428 = vlaneseq
    %v3429 = vshrl.u32 %v3428, 7
    %v3430 = vsub.s32 0, %v3429
    %v3431 = vrot.slane %v3427, %v3430
    %v3432 = vmul.f32 %v60, %v3431
    %v3433 = vld [vmem:[#allocation3 + $0xb5] sm:$0x1]
    %v3434 = vlaneseq
    %v3435 = vshrl.u32 %v3434, 7
    %v3436 = vsub.s32 0, %v3435
    %v3437 = vrot.slane %v3433, %v3436
    %v3438 = vmul.f32 %v64, %v3437
    %v3439 = vadd.f32 %v3432, %v3438
    %v3440 = vld [vmem:[#allocation5 + $0x5a] sm:$0x1]
    %v3442 = vlaneseq
    %v3443 = vshrl.u32 %v3442, 7
    %v3444 = vsub.s32 0, %v3443
    %v3445 = vrot.slane %v3440, %v3444
    %v3447 = vadd.f32 %v3439, %v3445
    %v3448 = vmax.f32 %v3447, 0.0
    %v3449 = vld [vmem:[#allocation7 + $0x5a] sm:$0x1]
    %v3451 = vlaneseq
    %v3452 = vshrl.u32 %v3451, 7
    %v3453 = vsub.s32 0, %v3452
    %v3454 = vrot.slane %v3449, %v3453
    %v3456 = vmul.f32 %v3448, %v3454
    %v3457 = vadd.f32 %v3426, %v3456
    %v3458 = vld [vmem:[#allocation3 + $0xc2] sm:$0x1]
    %v3459 = vlaneseq
    %v3460 = vshrl.u32 %v3459, 7
    %v3461 = vsub.s32 0, %v3460
    %v3462 = vrot.slane %v3458, %v3461
    %v3463 = vmul.f32 %v60, %v3462
    %v3464 = vld [vmem:[#allocation3 + $0xc3] sm:$0x1]
    %v3465 = vlaneseq
    %v3466 = vshrl.u32 %v3465, 7
    %v3467 = vsub.s32 0, %v3466
    %v3468 = vrot.slane %v3464, %v3467
    %v3469 = vmul.f32 %v64, %v3468
    %v3470 = vadd.f32 %v3463, %v3469
    %v3471 = vld [vmem:[#allocation5 + $0x61] sm:$0x1]
    %v3473 = vlaneseq
    %v3474 = vshrl.u32 %v3473, 7
    %v3475 = vsub.s32 0, %v3474
    %v3476 = vrot.slane %v3471, %v3475
    %v3478 = vadd.f32 %v3470, %v3476
    %v3479 = vmax.f32 %v3478, 0.0
    %v3480 = vld [vmem:[#allocation7 + $0x61] sm:$0x1]
    %v3482 = vlaneseq
    %v3483 = vshrl.u32 %v3482, 7
    %v3484 = vsub.s32 0, %v3483
    %v3485 = vrot.slane %v3480, %v3484
    %v3487 = vmul.f32 %v3479, %v3485
    %v3488 = vadd.f32 %v3457, %v3487
    %v3489 = vld [vmem:[#allocation3 + $0xd0] sm:$0x1]
    %v3490 = vlaneseq
    %v3491 = vshrl.u32 %v3490, 7
    %v3492 = vsub.s32 0, %v3491
    %v3493 = vrot.slane %v3489, %v3492
    %v3494 = vmul.f32 %v60, %v3493
    %v3495 = vld [vmem:[#allocation3 + $0xd1] sm:$0x1]
    %v3496 = vlaneseq
    %v3497 = vshrl.u32 %v3496, 7
    %v3498 = vsub.s32 0, %v3497
    %v3499 = vrot.slane %v3495, %v3498
    %v3500 = vmul.f32 %v64, %v3499
    %v3501 = vadd.f32 %v3494, %v3500
    %v3502 = vld [vmem:[#allocation5 + $0x68] sm:$0x1]
    %v3504 = vlaneseq
    %v3505 = vshrl.u32 %v3504, 7
    %v3506 = vsub.s32 0, %v3505
    %v3507 = vrot.slane %v3502, %v3506
    %v3509 = vadd.f32 %v3501, %v3507
    %v3510 = vmax.f32 %v3509, 0.0
    %v3511 = vld [vmem:[#allocation7 + $0x68] sm:$0x1]
    %v3513 = vlaneseq
    %v3514 = vshrl.u32 %v3513, 7
    %v3515 = vsub.s32 0, %v3514
    %v3516 = vrot.slane %v3511, %v3515
    %v3518 = vmul.f32 %v3510, %v3516
    %v3519 = vadd.f32 %v3488, %v3518
    %v3520 = vld [vmem:[#allocation3 + $0xde] sm:$0x1]
    %v3521 = vlaneseq
    %v3522 = vshrl.u32 %v3521, 7
    %v3523 = vsub.s32 0, %v3522
    %v3524 = vrot.slane %v3520, %v3523
    %v3525 = vmul.f32 %v60, %v3524
    %v3526 = vld [vmem:[#allocation3 + $0xdf] sm:$0x1]
    %v3527 = vlaneseq
    %v3528 = vshrl.u32 %v3527, 7
    %v3529 = vsub.s32 0, %v3528
    %v3530 = vrot.slane %v3526, %v3529
    %v3531 = vmul.f32 %v64, %v3530
    %v3532 = vadd.f32 %v3525, %v3531
    %v3533 = vld [vmem:[#allocation5 + $0x6f] sm:$0x1]
    %v3535 = vlaneseq
    %v3536 = vshrl.u32 %v3535, 7
    %v3537 = vsub.s32 0, %v3536
    %v3538 = vrot.slane %v3533, %v3537
    %v3540 = vadd.f32 %v3532, %v3538
    %v3541 = vmax.f32 %v3540, 0.0
    %v3542 = vld [vmem:[#allocation7 + $0x6f] sm:$0x1]
    %v3544 = vlaneseq
    %v3545 = vshrl.u32 %v3544, 7
    %v3546 = vsub.s32 0, %v3545
    %v3547 = vrot.slane %v3542, %v3546
    %v3549 = vmul.f32 %v3541, %v3547
    %v3550 = vadd.f32 %v3519, %v3549
    %v3551 = vadd.f32 %v3550, %v562
    %v3552 = vtanh.pop %v3551
    %vm3553 = vcmask 123904
    %3554 = vst.msk [vmem:[%s5 + $0xc] sm:$0x3] %vm3553, %v3552
    // Predicated region
    $region34: #{decoder_forward.1} parent=1 // pred_check
      _
    $region35: #{decoder_forward.1} parent=1 // pred_check_branch
      %3556 = sbr.rel (0) target = $region37
    $region36: #{decoder_forward.1} parent=1 // pred_region
      _
    $region37: #{decoder_forward.1} parent=1 // pred_fallthru
      _
    // Predicated region
    $region38: #{decoder_forward.1} parent=1 // pred_check
      _
    $region39: #{decoder_forward.1} parent=1 // pred_check_branch
      %3558 = sbr.rel (0) target = $region41
    $region40: #{decoder_forward.1} parent=1 // pred_region
      _
    $region41: #{decoder_forward.1} parent=1 // pred_fallthru
      _
    %3559 = vsyncpa [#allocation4], 1
    %3560 = vsyncpa [#allocation6], 1

</llo_original>
